<compile_context>
chip_gen: v6e
topology: v6e:2x2x1
jax: 0.10.0
libtpu: 0.0.40
codegen_flags: <defaults>
</compile_context>

<pallas_src>
import jax
import jax.numpy as jnp
from jax.experimental import pallas as pl
from jax.experimental.pallas import tpu as pltpu


N_LAYERS = 8  # 3 encoder + 1 encoder_mid + 4 decoder, each Linear+Tanh


# ---------------------------------------------------------------------------
# Fused kernel: one grid step processes one tile of batch rows through all
# 8 layers.  Weights/scales/biases are VMEM-resident (constant index_map).
# refs = (x, scales_packed, biases_packed, w0..w7, decoded_out, encoded_mid_out)
# ---------------------------------------------------------------------------
def _fused_ae_kernel(x_ref, scales_ref, biases_ref, *rest):
    w_refs = rest[:N_LAYERS]
    dec_ref, mid_ref = rest[N_LAYERS:]

    h = x_ref[...].astype(jnp.bfloat16)  # bf16 activations between layers
    for i in range(N_LAYERS):
        w = w_refs[i][...].astype(jnp.bfloat16)   # int8 -> bf16 dequant (VPU, hidden)
        n = w.shape[1]
        y = jnp.dot(h, w, preferred_element_type=jnp.float32)  # MXU, f32 accum
        s = scales_ref[i:i + 1, :n]               # (1, n) per-output-channel scale
        b = biases_ref[i:i + 1, :n]               # (1, n) bias
        act = jnp.tanh(y * s + b)                 # f32 scale + bias + tanh (EUP)
        if i == 3:                                # end of encoder_mid
            mid_ref[...] = act.astype(mid_ref.dtype)
        if i == N_LAYERS - 1:
            dec_ref[...] = act.astype(dec_ref.dtype)
        else:
            h = act.astype(jnp.bfloat16)


def autoencoder_forward_fused(x, w_qs, scales_packed, biases_packed, *, block_m=256):
    """x: (M, D) f32.
    w_qs: list of 8 int8 (K_i, N_i) pre-transposed quantized weights.
    scales_packed / biases_packed: (8, max_N) f32, row i holds layer i's vector.
    Returns (decoded (M, D), encoded_mid (M, 512))."""
    M, D = x.shape
    mid_dim = w_qs[3].shape[1]  # layer4_dim = 512

    # Batch tile: full batch if it is small, else block_m (multiple of 8) rows.
    tm = M if M <= block_m else block_m
    grid_m = pl.cdiv(M, tm)

    def _const_spec(shape):
        # Full-array block, constant index -> DMA'd once, reused for all tiles.
        return pl.BlockSpec(shape, lambda i: (0,) * len(shape))

    in_specs = [
        pl.BlockSpec((tm, D), lambda i: (i, 0)),        # x: tiled over batch
        _const_spec(scales_packed.shape),               # packed scales (resident)
        _const_spec(biases_packed.shape),               # packed biases (resident)
    ] + [_const_spec(w.shape) for w in w_qs]            # int8 weights (resident)

    out_specs = (
        pl.BlockSpec((tm, D), lambda i: (i, 0)),        # decoded
        pl.BlockSpec((tm, mid_dim), lambda i: (i, 0)),  # encoded_mid
    )

    total_w = sum(int(w.size) for w in w_qs)            # int8 => bytes == elements
    total_n = sum(int(w.shape[1]) for w in w_qs)
    cost = pl.CostEstimate(
        flops=2 * M * total_w,
        transcendentals=M * total_n,
        bytes_accessed=(total_w
                        + 4 * int(scales_packed.size) + 4 * int(biases_packed.size)
                        + 4 * int(x.size) + 4 * M * D + 4 * M * mid_dim),
    )

    return pl.pallas_call(
        _fused_ae_kernel,
        grid=(grid_m,),
        in_specs=in_specs,
        out_specs=out_specs,
        out_shape=(
            jax.ShapeDtypeStruct((M, D), x.dtype),        # decoded
            jax.ShapeDtypeStruct((M, mid_dim), x.dtype),  # encoded_mid
        ),
        compiler_params=pltpu.CompilerParams(
            dimension_semantics=("parallel",),            # megacore split on v7x
            vmem_limit_bytes=48 * 1024 * 1024,            # headroom; < 64 MiB v7x physical
        ),
        cost_estimate=cost,
    )(x, scales_packed, biases_packed, *w_qs)


# ---------------------------------------------------------------------------
# Parameter construction (deterministic, PyTorch-Linear-style init) + int8
# symmetric per-output-channel quantization.
# ---------------------------------------------------------------------------
def make_linear_params(key, in_dim, out_dim):
    kw, kb = jax.random.split(key)
    bound = float(in_dim) ** -0.5
    # Pre-transposed to (in_dim, out_dim) == weight.T
    w_t = jax.random.uniform(kw, (in_dim, out_dim), jnp.float32, -bound, bound)
    b = jax.random.uniform(kb, (1, out_dim), jnp.float32, -bound, bound)
    # Symmetric per-output-channel int8 quantization.
    amax = jnp.max(jnp.abs(w_t), axis=0, keepdims=True)           # (1, out_dim)
    scale = jnp.maximum(amax, 1e-8) / 127.0
    w_q = jnp.clip(jnp.round(w_t / scale), -127.0, 127.0).astype(jnp.int8)
    return w_q, scale, b


def make_autoencoder_params(key, representation_dim):
    l1, l2, l3, l4 = 1536, 1024, 768, 512
    dims = [
        (representation_dim, l1), (l1, l2), (l2, l3),   # encoder
        (l3, l4),                                        # encoder_mid
        (l4, l3), (l3, l2), (l2, l1), (l1, representation_dim),  # decoder
    ]
    keys = jax.random.split(key, len(dims))
    w_qs, scales, biases = [], [], []
    for k, (i, o) in zip(keys, dims):
        w_q, s, b = make_linear_params(k, i, o)
        w_qs.append(w_q)
        scales.append(s)
        biases.append(b)
    return w_qs, scales, biases


def pack_rows(rows, width):
    """Pack a list of (1, N_i) vectors into one (len(rows), width) array."""
    return jnp.concatenate(
        [jnp.pad(r, ((0, 0), (0, width - r.shape[1]))) for r in rows], axis=0)


# ---------------------------------------------------------------------------
# Pure-JAX reference doing the identical math (int8 weights, bf16 activations,
# f32 accumulation / scale / bias / tanh).
# ---------------------------------------------------------------------------
def _reference_forward(x, w_qs, scales, biases):
    h = x.astype(jnp.bfloat16)
    out, mid = None, None
    for i in range(N_LAYERS):
        w = w_qs[i].astype(jnp.bfloat16)
        y = jnp.dot(h, w, preferred_element_type=jnp.float32)
        a = jnp.tanh(y * scales[i] + biases[i])
        if i == 3:
            mid = a
        if i == N_LAYERS - 1:
            out = a
        else:
            h = a.astype(jnp.bfloat16)
    return out, mid


if __name__ == "__main__":
    representation_dim = 256   # small, 128-aligned stand-in for the fused rep
    batch = 16                 # 16 rows -> full bf16 sublane packing

    key = jax.random.PRNGKey(0)
    k_params, k_x = jax.random.split(key)

    w_qs, scales, biases = make_autoencoder_params(k_params, representation_dim)
    max_out = max(w.shape[1] for w in w_qs)
    scales_packed = pack_rows(scales, max_out)
    biases_packed = pack_rows(biases, max_out)

    x = jax.random.normal(k_x, (batch, representation_dim), jnp.float32)

    fwd = jax.jit(autoencoder_forward_fused)
    decoded, encoded_mid = fwd(x, w_qs, scales_packed, biases_packed)
    jax.block_until_ready((decoded, encoded_mid))

    # Sanity check against a pure-JAX reference doing the same quantized math.
    ref_dec, ref_mid = _reference_forward(x, w_qs, scales, biases)
    assert decoded.shape == (batch, representation_dim)
    assert encoded_mid.shape == (batch, 512)
    assert jnp.allclose(decoded, ref_dec, atol=1e-2, rtol=1e-2)
    assert jnp.allclose(encoded_mid, ref_mid, atol=1e-2, rtol=1e-2)

    print("KERNEL_OK")
</pallas_src>

<mosaic_0001>
module attributes {stable_mosaic.version = 11 : i64} {
  func.func @_fused_ae_kernel(%arg0: i32, %arg1: memref<16x256xf32, #tpu.memory_space<vmem>>, %arg2: memref<8x1536xf32, #tpu.memory_space<vmem>>, %arg3: memref<8x1536xf32, #tpu.memory_space<vmem>>, %arg4: memref<256x1536xi8, #tpu.memory_space<vmem>>, %arg5: memref<1536x1024xi8, #tpu.memory_space<vmem>>, %arg6: memref<1024x768xi8, #tpu.memory_space<vmem>>, %arg7: memref<768x512xi8, #tpu.memory_space<vmem>>, %arg8: memref<512x768xi8, #tpu.memory_space<vmem>>, %arg9: memref<768x1024xi8, #tpu.memory_space<vmem>>, %arg10: memref<1024x1536xi8, #tpu.memory_space<vmem>>, %arg11: memref<1536x256xi8, #tpu.memory_space<vmem>>, %arg12: memref<16x256xf32, #tpu.memory_space<vmem>>, %arg13: memref<16x512xf32, #tpu.memory_space<vmem>>) attributes {dimension_semantics = [#tpu.dimension_semantics<parallel>], iteration_bounds = array<i64: 1>, scalar_prefetch = 0 : i64, scratch_operands = 0 : i64, tpu.core_type = #tpu.core_type<tc>, window_params = [{transform_indices = @transform_0, window_bounds = array<i64: 16, 256>}, {pipeline_mode = #tpu.pipeline_mode<synchronous>, transform_indices = @transform_1, window_bounds = array<i64: 8, 1536>}, {pipeline_mode = #tpu.pipeline_mode<synchronous>, transform_indices = @transform_2, window_bounds = array<i64: 8, 1536>}, {pipeline_mode = #tpu.pipeline_mode<synchronous>, transform_indices = @transform_3, window_bounds = array<i64: 256, 1536>}, {pipeline_mode = #tpu.pipeline_mode<synchronous>, transform_indices = @transform_4, window_bounds = array<i64: 1536, 1024>}, {pipeline_mode = #tpu.pipeline_mode<synchronous>, transform_indices = @transform_5, window_bounds = array<i64: 1024, 768>}, {pipeline_mode = #tpu.pipeline_mode<synchronous>, transform_indices = @transform_6, window_bounds = array<i64: 768, 512>}, {pipeline_mode = #tpu.pipeline_mode<synchronous>, transform_indices = @transform_7, window_bounds = array<i64: 512, 768>}, {pipeline_mode = #tpu.pipeline_mode<synchronous>, transform_indices = @transform_8, window_bounds = array<i64: 768, 1024>}, {pipeline_mode = #tpu.pipeline_mode<synchronous>, transform_indices = @transform_9, window_bounds = array<i64: 1024, 1536>}, {pipeline_mode = #tpu.pipeline_mode<synchronous>, transform_indices = @transform_10, window_bounds = array<i64: 1536, 256>}, {transform_indices = @transform_11, window_bounds = array<i64: 16, 256>}, {transform_indices = @transform_12, window_bounds = array<i64: 16, 512>}]} {
    %c0 = arith.constant 0 : index
    %c0_0 = arith.constant 0 : index
    %0 = vector.load %arg1[%c0, %c0_0] : memref<16x256xf32, #tpu.memory_space<vmem>>, vector<16x256xf32>
    %1 = arith.truncf %0 : vector<16x256xf32> to vector<16x256xbf16>
    %c0_1 = arith.constant 0 : index
    %c0_2 = arith.constant 0 : index
    %2 = vector.load %arg4[%c0_1, %c0_2] : memref<256x1536xi8, #tpu.memory_space<vmem>>, vector<256x1536xi8>
    %3 = arith.sitofp %2 : vector<256x1536xi8> to vector<256x1536xbf16>
    %cst = arith.constant dense<0.000000e+00> : vector<16x1536xf32>
    %4 = tpu.matmul %1, %3, %cst {dimension_numbers = #tpu.dot_dimension_numbers<[1], [0], [0], [1], [0, 0, 1, 1], [], []>} : vector<16x256xbf16>, vector<256x1536xbf16>, vector<16x1536xf32> -> vector<16x1536xf32>
    %c0_3 = arith.constant 0 : index
    %c0_4 = arith.constant 0 : index
    %5 = vector.load %arg2[%c0_3, %c0_4] : memref<8x1536xf32, #tpu.memory_space<vmem>>, vector<1x1536xf32>
    %c0_5 = arith.constant 0 : index
    %c0_6 = arith.constant 0 : index
    %6 = vector.load %arg3[%c0_5, %c0_6] : memref<8x1536xf32, #tpu.memory_space<vmem>>, vector<1x1536xf32>
    %7 = vector.broadcast %5 : vector<1x1536xf32> to vector<16x1536xf32>
    %8 = arith.mulf %4, %7 : vector<16x1536xf32>
    %9 = vector.broadcast %6 : vector<1x1536xf32> to vector<16x1536xf32>
    %10 = arith.addf %8, %9 : vector<16x1536xf32>
    %11 = math.tanh %10 : vector<16x1536xf32>
    %12 = arith.truncf %11 : vector<16x1536xf32> to vector<16x1536xbf16>
    %c0_7 = arith.constant 0 : index
    %c0_8 = arith.constant 0 : index
    %13 = vector.load %arg5[%c0_7, %c0_8] : memref<1536x1024xi8, #tpu.memory_space<vmem>>, vector<1536x1024xi8>
    %14 = arith.sitofp %13 : vector<1536x1024xi8> to vector<1536x1024xbf16>
    %cst_9 = arith.constant dense<0.000000e+00> : vector<16x1024xf32>
    %15 = tpu.matmul %12, %14, %cst_9 {dimension_numbers = #tpu.dot_dimension_numbers<[1], [0], [0], [1], [0, 0, 1, 1], [], []>} : vector<16x1536xbf16>, vector<1536x1024xbf16>, vector<16x1024xf32> -> vector<16x1024xf32>
    %c1 = arith.constant 1 : index
    %c0_10 = arith.constant 0 : index
    %16 = vector.load %arg2[%c1, %c0_10] : memref<8x1536xf32, #tpu.memory_space<vmem>>, vector<1x1024xf32>
    %c1_11 = arith.constant 1 : index
    %c0_12 = arith.constant 0 : index
    %17 = vector.load %arg3[%c1_11, %c0_12] : memref<8x1536xf32, #tpu.memory_space<vmem>>, vector<1x1024xf32>
    %18 = vector.broadcast %16 : vector<1x1024xf32> to vector<16x1024xf32>
    %19 = arith.mulf %15, %18 : vector<16x1024xf32>
    %20 = vector.broadcast %17 : vector<1x1024xf32> to vector<16x1024xf32>
    %21 = arith.addf %19, %20 : vector<16x1024xf32>
    %22 = math.tanh %21 : vector<16x1024xf32>
    %23 = arith.truncf %22 : vector<16x1024xf32> to vector<16x1024xbf16>
    %c0_13 = arith.constant 0 : index
    %c0_14 = arith.constant 0 : index
    %24 = vector.load %arg6[%c0_13, %c0_14] : memref<1024x768xi8, #tpu.memory_space<vmem>>, vector<1024x768xi8>
    %25 = arith.sitofp %24 : vector<1024x768xi8> to vector<1024x768xbf16>
    %cst_15 = arith.constant dense<0.000000e+00> : vector<16x768xf32>
    %26 = tpu.matmul %23, %25, %cst_15 {dimension_numbers = #tpu.dot_dimension_numbers<[1], [0], [0], [1], [0, 0, 1, 1], [], []>} : vector<16x1024xbf16>, vector<1024x768xbf16>, vector<16x768xf32> -> vector<16x768xf32>
    %c2 = arith.constant 2 : index
    %c0_16 = arith.constant 0 : index
    %27 = vector.load %arg2[%c2, %c0_16] : memref<8x1536xf32, #tpu.memory_space<vmem>>, vector<1x768xf32>
    %c2_17 = arith.constant 2 : index
    %c0_18 = arith.constant 0 : index
    %28 = vector.load %arg3[%c2_17, %c0_18] : memref<8x1536xf32, #tpu.memory_space<vmem>>, vector<1x768xf32>
    %29 = vector.broadcast %27 : vector<1x768xf32> to vector<16x768xf32>
    %30 = arith.mulf %26, %29 : vector<16x768xf32>
    %31 = vector.broadcast %28 : vector<1x768xf32> to vector<16x768xf32>
    %32 = arith.addf %30, %31 : vector<16x768xf32>
    %33 = math.tanh %32 : vector<16x768xf32>
    %34 = arith.truncf %33 : vector<16x768xf32> to vector<16x768xbf16>
    %c0_19 = arith.constant 0 : index
    %c0_20 = arith.constant 0 : index
    %35 = vector.load %arg7[%c0_19, %c0_20] : memref<768x512xi8, #tpu.memory_space<vmem>>, vector<768x512xi8>
    %36 = arith.sitofp %35 : vector<768x512xi8> to vector<768x512xbf16>
    %cst_21 = arith.constant dense<0.000000e+00> : vector<16x512xf32>
    %37 = tpu.matmul %34, %36, %cst_21 {dimension_numbers = #tpu.dot_dimension_numbers<[1], [0], [0], [1], [0, 0, 1, 1], [], []>} : vector<16x768xbf16>, vector<768x512xbf16>, vector<16x512xf32> -> vector<16x512xf32>
    %c3 = arith.constant 3 : index
    %c0_22 = arith.constant 0 : index
    %38 = vector.load %arg2[%c3, %c0_22] : memref<8x1536xf32, #tpu.memory_space<vmem>>, vector<1x512xf32>
    %c3_23 = arith.constant 3 : index
    %c0_24 = arith.constant 0 : index
    %39 = vector.load %arg3[%c3_23, %c0_24] : memref<8x1536xf32, #tpu.memory_space<vmem>>, vector<1x512xf32>
    %40 = vector.broadcast %38 : vector<1x512xf32> to vector<16x512xf32>
    %41 = arith.mulf %37, %40 : vector<16x512xf32>
    %42 = vector.broadcast %39 : vector<1x512xf32> to vector<16x512xf32>
    %43 = arith.addf %41, %42 : vector<16x512xf32>
    %44 = math.tanh %43 : vector<16x512xf32>
    %c0_25 = arith.constant 0 : index
    %c0_26 = arith.constant 0 : index
    %45 = vector.load %arg13[%c0_25, %c0_26] : memref<16x512xf32, #tpu.memory_space<vmem>>, vector<16x512xf32>
    tpu.vector_store %arg13[%c0_25, %c0_26], %44 {strides = array<i32>} : memref<16x512xf32, #tpu.memory_space<vmem>>, vector<16x512xf32>,
    %46 = arith.truncf %44 : vector<16x512xf32> to vector<16x512xbf16>
    %c0_27 = arith.constant 0 : index
    %c0_28 = arith.constant 0 : index
    %47 = vector.load %arg8[%c0_27, %c0_28] : memref<512x768xi8, #tpu.memory_space<vmem>>, vector<512x768xi8>
    %48 = arith.sitofp %47 : vector<512x768xi8> to vector<512x768xbf16>
    %cst_29 = arith.constant dense<0.000000e+00> : vector<16x768xf32>
    %49 = tpu.matmul %46, %48, %cst_29 {dimension_numbers = #tpu.dot_dimension_numbers<[1], [0], [0], [1], [0, 0, 1, 1], [], []>} : vector<16x512xbf16>, vector<512x768xbf16>, vector<16x768xf32> -> vector<16x768xf32>
    %c4 = arith.constant 4 : index
    %c0_30 = arith.constant 0 : index
    %50 = vector.load %arg2[%c4, %c0_30] : memref<8x1536xf32, #tpu.memory_space<vmem>>, vector<1x768xf32>
    %c4_31 = arith.constant 4 : index
    %c0_32 = arith.constant 0 : index
    %51 = vector.load %arg3[%c4_31, %c0_32] : memref<8x1536xf32, #tpu.memory_space<vmem>>, vector<1x768xf32>
    %52 = vector.broadcast %50 : vector<1x768xf32> to vector<16x768xf32>
    %53 = arith.mulf %49, %52 : vector<16x768xf32>
    %54 = vector.broadcast %51 : vector<1x768xf32> to vector<16x768xf32>
    %55 = arith.addf %53, %54 : vector<16x768xf32>
    %56 = math.tanh %55 : vector<16x768xf32>
    %57 = arith.truncf %56 : vector<16x768xf32> to vector<16x768xbf16>
    %c0_33 = arith.constant 0 : index
    %c0_34 = arith.constant 0 : index
    %58 = vector.load %arg9[%c0_33, %c0_34] : memref<768x1024xi8, #tpu.memory_space<vmem>>, vector<768x1024xi8>
    %59 = arith.sitofp %58 : vector<768x1024xi8> to vector<768x1024xbf16>
    %cst_35 = arith.constant dense<0.000000e+00> : vector<16x1024xf32>
    %60 = tpu.matmul %57, %59, %cst_35 {dimension_numbers = #tpu.dot_dimension_numbers<[1], [0], [0], [1], [0, 0, 1, 1], [], []>} : vector<16x768xbf16>, vector<768x1024xbf16>, vector<16x1024xf32> -> vector<16x1024xf32>
    %c5 = arith.constant 5 : index
    %c0_36 = arith.constant 0 : index
    %61 = vector.load %arg2[%c5, %c0_36] : memref<8x1536xf32, #tpu.memory_space<vmem>>, vector<1x1024xf32>
    %c5_37 = arith.constant 5 : index
    %c0_38 = arith.constant 0 : index
    %62 = vector.load %arg3[%c5_37, %c0_38] : memref<8x1536xf32, #tpu.memory_space<vmem>>, vector<1x1024xf32>
    %63 = vector.broadcast %61 : vector<1x1024xf32> to vector<16x1024xf32>
    %64 = arith.mulf %60, %63 : vector<16x1024xf32>
    %65 = vector.broadcast %62 : vector<1x1024xf32> to vector<16x1024xf32>
    %66 = arith.addf %64, %65 : vector<16x1024xf32>
    %67 = math.tanh %66 : vector<16x1024xf32>
    %68 = arith.truncf %67 : vector<16x1024xf32> to vector<16x1024xbf16>
    %c0_39 = arith.constant 0 : index
    %c0_40 = arith.constant 0 : index
    %69 = vector.load %arg10[%c0_39, %c0_40] : memref<1024x1536xi8, #tpu.memory_space<vmem>>, vector<1024x1536xi8>
    %70 = arith.sitofp %69 : vector<1024x1536xi8> to vector<1024x1536xbf16>
    %cst_41 = arith.constant dense<0.000000e+00> : vector<16x1536xf32>
    %71 = tpu.matmul %68, %70, %cst_41 {dimension_numbers = #tpu.dot_dimension_numbers<[1], [0], [0], [1], [0, 0, 1, 1], [], []>} : vector<16x1024xbf16>, vector<1024x1536xbf16>, vector<16x1536xf32> -> vector<16x1536xf32>
    %c6 = arith.constant 6 : index
    %c0_42 = arith.constant 0 : index
    %72 = vector.load %arg2[%c6, %c0_42] : memref<8x1536xf32, #tpu.memory_space<vmem>>, vector<1x1536xf32>
    %c6_43 = arith.constant 6 : index
    %c0_44 = arith.constant 0 : index
    %73 = vector.load %arg3[%c6_43, %c0_44] : memref<8x1536xf32, #tpu.memory_space<vmem>>, vector<1x1536xf32>
    %74 = vector.broadcast %72 : vector<1x1536xf32> to vector<16x1536xf32>
    %75 = arith.mulf %71, %74 : vector<16x1536xf32>
    %76 = vector.broadcast %73 : vector<1x1536xf32> to vector<16x1536xf32>
    %77 = arith.addf %75, %76 : vector<16x1536xf32>
    %78 = math.tanh %77 : vector<16x1536xf32>
    %79 = arith.truncf %78 : vector<16x1536xf32> to vector<16x1536xbf16>
    %c0_45 = arith.constant 0 : index
    %c0_46 = arith.constant 0 : index
    %80 = vector.load %arg11[%c0_45, %c0_46] : memref<1536x256xi8, #tpu.memory_space<vmem>>, vector<1536x256xi8>
    %81 = arith.sitofp %80 : vector<1536x256xi8> to vector<1536x256xbf16>
    %cst_47 = arith.constant dense<0.000000e+00> : vector<16x256xf32>
    %82 = tpu.matmul %79, %81, %cst_47 {dimension_numbers = #tpu.dot_dimension_numbers<[1], [0], [0], [1], [0, 0, 1, 1], [], []>} : vector<16x1536xbf16>, vector<1536x256xbf16>, vector<16x256xf32> -> vector<16x256xf32>
    %c7 = arith.constant 7 : index
    %c0_48 = arith.constant 0 : index
    %83 = vector.load %arg2[%c7, %c0_48] : memref<8x1536xf32, #tpu.memory_space<vmem>>, vector<1x256xf32>
    %c7_49 = arith.constant 7 : index
    %c0_50 = arith.constant 0 : index
    %84 = vector.load %arg3[%c7_49, %c0_50] : memref<8x1536xf32, #tpu.memory_space<vmem>>, vector<1x256xf32>
    %85 = vector.broadcast %83 : vector<1x256xf32> to vector<16x256xf32>
    %86 = arith.mulf %82, %85 : vector<16x256xf32>
    %87 = vector.broadcast %84 : vector<1x256xf32> to vector<16x256xf32>
    %88 = arith.addf %86, %87 : vector<16x256xf32>
    %89 = math.tanh %88 : vector<16x256xf32>
    %c0_51 = arith.constant 0 : index
    %c0_52 = arith.constant 0 : index
    %90 = vector.load %arg12[%c0_51, %c0_52] : memref<16x256xf32, #tpu.memory_space<vmem>>, vector<16x256xf32>
    tpu.vector_store %arg12[%c0_51, %c0_52], %89 {strides = array<i32>} : memref<16x256xf32, #tpu.memory_space<vmem>>, vector<16x256xf32>,
    return
  }
  func.func @transform_0(%arg0: i32) -> (i32, i32) {
    %c0_i32 = arith.constant 0 : i32
    %c0_i32_0 = arith.constant 0 : i32
    return %arg0, %c0_i32 : i32, i32
  }
  func.func @transform_1(%arg0: i32) -> (i32, i32) {
    %c0_i32 = arith.constant 0 : i32
    %c0_i32_0 = arith.constant 0 : i32
    %c0_i32_1 = arith.constant 0 : i32
    return %c0_i32, %c0_i32_0 : i32, i32
  }
  func.func @transform_2(%arg0: i32) -> (i32, i32) {
    %c0_i32 = arith.constant 0 : i32
    %c0_i32_0 = arith.constant 0 : i32
    %c0_i32_1 = arith.constant 0 : i32
    return %c0_i32, %c0_i32_0 : i32, i32
  }
  func.func @transform_3(%arg0: i32) -> (i32, i32) {
    %c0_i32 = arith.constant 0 : i32
    %c0_i32_0 = arith.constant 0 : i32
    %c0_i32_1 = arith.constant 0 : i32
    return %c0_i32, %c0_i32_0 : i32, i32
  }
  func.func @transform_4(%arg0: i32) -> (i32, i32) {
    %c0_i32 = arith.constant 0 : i32
    %c0_i32_0 = arith.constant 0 : i32
    %c0_i32_1 = arith.constant 0 : i32
    return %c0_i32, %c0_i32_0 : i32, i32
  }
  func.func @transform_5(%arg0: i32) -> (i32, i32) {
    %c0_i32 = arith.constant 0 : i32
    %c0_i32_0 = arith.constant 0 : i32
    %c0_i32_1 = arith.constant 0 : i32
    return %c0_i32, %c0_i32_0 : i32, i32
  }
  func.func @transform_6(%arg0: i32) -> (i32, i32) {
    %c0_i32 = arith.constant 0 : i32
    %c0_i32_0 = arith.constant 0 : i32
    %c0_i32_1 = arith.constant 0 : i32
    return %c0_i32, %c0_i32_0 : i32, i32
  }
  func.func @transform_7(%arg0: i32) -> (i32, i32) {
    %c0_i32 = arith.constant 0 : i32
    %c0_i32_0 = arith.constant 0 : i32
    %c0_i32_1 = arith.constant 0 : i32
    return %c0_i32, %c0_i32_0 : i32, i32
  }
  func.func @transform_8(%arg0: i32) -> (i32, i32) {
    %c0_i32 = arith.constant 0 : i32
    %c0_i32_0 = arith.constant 0 : i32
    %c0_i32_1 = arith.constant 0 : i32
    return %c0_i32, %c0_i32_0 : i32, i32
  }
  func.func @transform_9(%arg0: i32) -> (i32, i32) {
    %c0_i32 = arith.constant 0 : i32
    %c0_i32_0 = arith.constant 0 : i32
    %c0_i32_1 = arith.constant 0 : i32
    return %c0_i32, %c0_i32_0 : i32, i32
  }
  func.func @transform_10(%arg0: i32) -> (i32, i32) {
    %c0_i32 = arith.constant 0 : i32
    %c0_i32_0 = arith.constant 0 : i32
    %c0_i32_1 = arith.constant 0 : i32
    return %c0_i32, %c0_i32_0 : i32, i32
  }
  func.func @transform_11(%arg0: i32) -> (i32, i32) {
    %c0_i32 = arith.constant 0 : i32
    %c0_i32_0 = arith.constant 0 : i32
    return %arg0, %c0_i32 : i32, i32
  }
  func.func @transform_12(%arg0: i32) -> (i32, i32) {
    %c0_i32 = arith.constant 0 : i32
    %c0_i32_0 = arith.constant 0 : i32
    return %arg0, %c0_i32 : i32, i32
  }
}

</mosaic_0001>

<llo_original>
// kernel: autoencoder_forward_fused.1
$region0: #{autoencoder_forward_fused.1}
  #allocation0 [shape = 'u32[]', space=smem, size = 0x4, offset = 0x4, fixed_abs, tag = 'smem constant byte address 0x4 - core index']
  #allocation1 [shape = 'u32[144,128]{1,0:T(1,128)}', space=vmem, size = 0x12000, scoped, tag = 'internal scratch']
  %s0 = inlined_call_operand.hbm [shape: f32[16,256], index: 0, kind: input, shape index: {}]
  %s1 = inlined_call_operand.hbm [shape: f32[8,1536], index: 1, kind: input, shape index: {}]
  %s2 = inlined_call_operand.hbm [shape: f32[8,1536], index: 2, kind: input, shape index: {}]
  %s3 = inlined_call_operand.hbm [shape: s8[256,1536], index: 3, kind: input, shape index: {}]
  %s4 = inlined_call_operand.hbm [shape: s8[1536,1024], index: 4, kind: input, shape index: {}]
  %s5 = inlined_call_operand.hbm [shape: s8[1024,768], index: 5, kind: input, shape index: {}]
  %s6 = inlined_call_operand.hbm [shape: s8[768,512], index: 6, kind: input, shape index: {}]
  %s7 = inlined_call_operand.hbm [shape: s8[512,768], index: 7, kind: input, shape index: {}]
  %s8 = inlined_call_operand.hbm [shape: s8[768,1024], index: 8, kind: input, shape index: {}]
  %s9 = inlined_call_operand.hbm [shape: s8[1024,1536], index: 9, kind: input, shape index: {}]
  %s10 = inlined_call_operand.hbm [shape: s8[1536,256], index: 10, kind: input, shape index: {}]
  %s11 = inlined_call_operand.hbm [shape: f32[16,256], index: 11, kind: output, shape index: {0}]
  %s12 = inlined_call_operand.hbm [shape: f32[16,512], index: 12, kind: output, shape index: {1}]
  %13 = xla_tuple %s11, %s12
  %s14 = sld [smem:[#allocation0]]
  $region106: #{autoencoder_forward_fused.1} parent=0
    _
  %s16 = ssub.s32 1, %s14
  %s17 = scalar_select 0, %s16, %s14
  $region1: #{autoencoder_forward_fused.1} parent=0
    #allocation2 [shape = 'u8[16384]{0}', space=vmem, size = 0x4000, scoped, tag = 'input window, operand 0, single buffered']
    #allocation3 [shape = 's32[1]{0}', space=sflag, size = 0x4, scoped, tag = 'scoped memory for autoencoder_forward_fused.1']
    #allocation4 [shape = 's32[1]{0}', space=sflag, size = 0x4, scoped, tag = 'scoped memory for autoencoder_forward_fused.1']
    #allocation5 [shape = 'u8[49152]{0}', space=vmem, size = 0xc000, scoped, tag = 'input window, operand 1, single buffered']
    #allocation6 [shape = 's32[1]{0}', space=sflag, size = 0x4, scoped, tag = 'scoped memory for autoencoder_forward_fused.1']
    #allocation7 [shape = 'u8[49152]{0}', space=vmem, size = 0xc000, scoped, tag = 'input window, operand 2, single buffered']
    #allocation8 [shape = 'u8[393216]{0}', space=vmem, size = 0x60000, scoped, tag = 'input window, operand 3, single buffered']
    #allocation9 [shape = 's32[1]{0}', space=sflag, size = 0x4, scoped, tag = 'scoped memory for autoencoder_forward_fused.1']
    #allocation10 [shape = 'u8[1572864]{0}', space=vmem, size = 0x180000, scoped, tag = 'input window, operand 4, single buffered']
    #allocation11 [shape = 'u8[786432]{0}', space=vmem, size = 0xc0000, scoped, tag = 'input window, operand 5, single buffered']
    #allocation12 [shape = 's32[1]{0}', space=sflag, size = 0x4, scoped, tag = 'scoped memory for autoencoder_forward_fused.1']
    #allocation13 [shape = 'u8[393216]{0}', space=vmem, size = 0x60000, scoped, tag = 'input window, operand 6, single buffered']
    #allocation14 [shape = 'u8[393216]{0}', space=vmem, size = 0x60000, scoped, tag = 'input window, operand 7, single buffered']
    #allocation15 [shape = 's32[1]{0}', space=sflag, size = 0x4, scoped, tag = 'scoped memory for autoencoder_forward_fused.1']
    #allocation16 [shape = 'u8[786432]{0}', space=vmem, size = 0xc0000, scoped, tag = 'input window, operand 8, single buffered']
    #allocation17 [shape = 'u8[1572864]{0}', space=vmem, size = 0x180000, scoped, tag = 'input window, operand 9, single buffered']
    #allocation18 [shape = 's32[1]{0}', space=sflag, size = 0x4, scoped, tag = 'scoped memory for autoencoder_forward_fused.1']
    #allocation19 [shape = 'u8[393216]{0}', space=vmem, size = 0x60000, scoped, tag = 'input window, operand 10, single buffered']
    #allocation20 [shape = 'u8[16384]{0}', space=vmem, size = 0x4000, scoped, tag = 'output window, operand 0, single buffered']
    #allocation21 [shape = 'u8[32768]{0}', space=vmem, size = 0x8000, scoped, tag = 'output window, operand 1, single buffered']
    #allocation22 [shape = 's32[1]{0}', space=sflag, size = 0x4, scoped, tag = 'scoped memory for autoencoder_forward_fused.1']
    %18 = vsyncpa [#allocation3], 0
    %19 = vsyncpa [#allocation6], 0
    %20 = vsyncpa [#allocation9], 0
    %21 = vsyncpa [#allocation12], 0
    %22 = vsyncpa [#allocation15], 0
    %23 = vsyncpa [#allocation18], 0
    %24 = vsyncpa [#allocation4], 0
    %25 = vsyncpa [#allocation22], 0
    // Predicated region
    $region2: #{autoencoder_forward_fused.1} parent=1 // pred_check
      _
    $region3: #{autoencoder_forward_fused.1} parent=1 // pred_check_branch
      %27 = sbr.rel (0) target = $region5
    $region4: #{autoencoder_forward_fused.1} parent=1 // pred_region
      %s29 = ssub.s32 512, 512
      %30 = vsyncadd [#allocation3], %s29
      %s31 = sshll.u32 [#allocation2], 4
      %s32 = int_to_ptr.vmem [resolvable:$true] %s31
      %37 = dma.hbm_to_vmem [thread:$0]  %s0, 512, %s32, [#allocation3], 256, 256, 16
    $region5: #{autoencoder_forward_fused.1} parent=1 // pred_fallthru
      _
    // Predicated region
    $region6: #{autoencoder_forward_fused.1} parent=1 // pred_check
      _
    $region7: #{autoencoder_forward_fused.1} parent=1 // pred_check_branch
      %39 = sbr.rel (0) target = $region9
    $region8: #{autoencoder_forward_fused.1} parent=1 // pred_region
      %s41 = ssub.s32 1536, 1536
      %42 = vsyncadd [#allocation6], %s41
      %s44 = sshll.u32 [#allocation5], 4
      %s45 = int_to_ptr.vmem [resolvable:$true] %s44
      %47 = dma.hbm_to_vmem [thread:$0]  %s1, 1536, %s45, [#allocation6]
    $region9: #{autoencoder_forward_fused.1} parent=1 // pred_fallthru
      _
    // Predicated region
    $region10: #{autoencoder_forward_fused.1} parent=1 // pred_check
      _
    $region11: #{autoencoder_forward_fused.1} parent=1 // pred_check_branch
      %49 = sbr.rel (0) target = $region13
    $region12: #{autoencoder_forward_fused.1} parent=1 // pred_region
      %s51 = ssub.s32 1536, 1536
      %52 = vsyncadd [#allocation6], %s51
      %s54 = sshll.u32 [#allocation7], 4
      %s55 = int_to_ptr.vmem [resolvable:$true] %s54
      %57 = dma.hbm_to_vmem [thread:$0]  %s2, 1536, %s55, [#allocation6]
    $region13: #{autoencoder_forward_fused.1} parent=1 // pred_fallthru
      _
    // Predicated region
    $region14: #{autoencoder_forward_fused.1} parent=1 // pred_check
      _
    $region15: #{autoencoder_forward_fused.1} parent=1 // pred_check_branch
      %59 = sbr.rel (0) target = $region17
    $region16: #{autoencoder_forward_fused.1} parent=1 // pred_region
      %s61 = ssub.s32 12288, 12288
      %62 = vsyncadd [#allocation9], %s61
      %s63 = sshll.u32 [#allocation8], 4
      %s64 = int_to_ptr.vmem [resolvable:$true] %s63
      %69 = dma.hbm_to_vmem [thread:$0]  %s3, 12288, %s64, [#allocation9], 1536, 1536, 96
    $region17: #{autoencoder_forward_fused.1} parent=1 // pred_fallthru
      _
    // Predicated region
    $region18: #{autoencoder_forward_fused.1} parent=1 // pred_check
      _
    $region19: #{autoencoder_forward_fused.1} parent=1 // pred_check_branch
      %71 = sbr.rel (0) target = $region21
    $region20: #{autoencoder_forward_fused.1} parent=1 // pred_region
      %s73 = ssub.s32 49152, 49152
      %74 = vsyncadd [#allocation9], %s73
      %s75 = sshll.u32 [#allocation10], 4
      %s76 = int_to_ptr.vmem [resolvable:$true] %s75
      %81 = dma.hbm_to_vmem [thread:$0]  %s4, 49152, %s76, [#allocation9], 1024, 1024, 64
    $region21: #{autoencoder_forward_fused.1} parent=1 // pred_fallthru
      _
    // Predicated region
    $region22: #{autoencoder_forward_fused.1} parent=1 // pred_check
      _
    $region23: #{autoencoder_forward_fused.1} parent=1 // pred_check_branch
      %83 = sbr.rel (0) target = $region25
    $region24: #{autoencoder_forward_fused.1} parent=1 // pred_region
      %s85 = ssub.s32 24576, 24576
      %86 = vsyncadd [#allocation12], %s85
      %s87 = sshll.u32 [#allocation11], 4
      %s88 = int_to_ptr.vmem [resolvable:$true] %s87
      %93 = dma.hbm_to_vmem [thread:$0]  %s5, 24576, %s88, [#allocation12], 768, 768, 48
    $region25: #{autoencoder_forward_fused.1} parent=1 // pred_fallthru
      _
    // Predicated region
    $region26: #{autoencoder_forward_fused.1} parent=1 // pred_check
      _
    $region27: #{autoencoder_forward_fused.1} parent=1 // pred_check_branch
      %95 = sbr.rel (0) target = $region29
    $region28: #{autoencoder_forward_fused.1} parent=1 // pred_region
      %s97 = ssub.s32 12288, 12288
      %98 = vsyncadd [#allocation12], %s97
      %s99 = sshll.u32 [#allocation13], 4
      %s100 = int_to_ptr.vmem [resolvable:$true] %s99
      %105 = dma.hbm_to_vmem [thread:$0]  %s6, 12288, %s100, [#allocation12], 512, 512, 32
    $region29: #{autoencoder_forward_fused.1} parent=1 // pred_fallthru
      _
    // Predicated region
    $region30: #{autoencoder_forward_fused.1} parent=1 // pred_check
      _
    $region31: #{autoencoder_forward_fused.1} parent=1 // pred_check_branch
      %107 = sbr.rel (0) target = $region33
    $region32: #{autoencoder_forward_fused.1} parent=1 // pred_region
      %s109 = ssub.s32 12288, 12288
      %110 = vsyncadd [#allocation15], %s109
      %s111 = sshll.u32 [#allocation14], 4
      %s112 = int_to_ptr.vmem [resolvable:$true] %s111
      %117 = dma.hbm_to_vmem [thread:$0]  %s7, 12288, %s112, [#allocation15], 768, 768, 48
    $region33: #{autoencoder_forward_fused.1} parent=1 // pred_fallthru
      _
    // Predicated region
    $region34: #{autoencoder_forward_fused.1} parent=1 // pred_check
      _
    $region35: #{autoencoder_forward_fused.1} parent=1 // pred_check_branch
      %119 = sbr.rel (0) target = $region37
    $region36: #{autoencoder_forward_fused.1} parent=1 // pred_region
      %s121 = ssub.s32 24576, 24576
      %122 = vsyncadd [#allocation15], %s121
      %s123 = sshll.u32 [#allocation16], 4
      %s124 = int_to_ptr.vmem [resolvable:$true] %s123
      %129 = dma.hbm_to_vmem [thread:$0]  %s8, 24576, %s124, [#allocation15], 1024, 1024, 64
    $region37: #{autoencoder_forward_fused.1} parent=1 // pred_fallthru
      _
    // Predicated region
    $region38: #{autoencoder_forward_fused.1} parent=1 // pred_check
      _
    $region39: #{autoencoder_forward_fused.1} parent=1 // pred_check_branch
      %131 = sbr.rel (0) target = $region41
    $region40: #{autoencoder_forward_fused.1} parent=1 // pred_region
      %s133 = ssub.s32 49152, 49152
      %134 = vsyncadd [#allocation18], %s133
      %s135 = sshll.u32 [#allocation17], 4
      %s136 = int_to_ptr.vmem [resolvable:$true] %s135
      %141 = dma.hbm_to_vmem [thread:$0]  %s9, 49152, %s136, [#allocation18], 1536, 1536, 96
    $region41: #{autoencoder_forward_fused.1} parent=1 // pred_fallthru
      _
    // Predicated region
    $region42: #{autoencoder_forward_fused.1} parent=1 // pred_check
      _
    $region43: #{autoencoder_forward_fused.1} parent=1 // pred_check_branch
      %143 = sbr.rel (0) target = $region45
    $region44: #{autoencoder_forward_fused.1} parent=1 // pred_region
      %s145 = ssub.s32 12288, 12288
      %146 = vsyncadd [#allocation18], %s145
      %s147 = sshll.u32 [#allocation19], 4
      %s148 = int_to_ptr.vmem [resolvable:$true] %s147
      %153 = dma.hbm_to_vmem [thread:$0]  %s10, 12288, %s148, [#allocation18], 256, 256, 16
    $region45: #{autoencoder_forward_fused.1} parent=1 // pred_fallthru
      _
    // Predicated region
    $region46: #{autoencoder_forward_fused.1} parent=1 // pred_check
      _
    $region47: #{autoencoder_forward_fused.1} parent=1 // pred_check_branch
      %155 = sbr.rel (0) target = $region49
    $region48: #{autoencoder_forward_fused.1} parent=1 // pred_region
      %156 = dma.done [#allocation3], 512
    $region49: #{autoencoder_forward_fused.1} parent=1 // pred_fallthru
      _
    // Predicated region
    $region50: #{autoencoder_forward_fused.1} parent=1 // pred_check
      _
    $region51: #{autoencoder_forward_fused.1} parent=1 // pred_check_branch
      %158 = sbr.rel (0) target = $region53
    $region52: #{autoencoder_forward_fused.1} parent=1 // pred_region
      %159 = dma.done [#allocation6], 1536
    $region53: #{autoencoder_forward_fused.1} parent=1 // pred_fallthru
      _
    // Predicated region
    $region54: #{autoencoder_forward_fused.1} parent=1 // pred_check
      _
    $region55: #{autoencoder_forward_fused.1} parent=1 // pred_check_branch
      %161 = sbr.rel (0) target = $region57
    $region56: #{autoencoder_forward_fused.1} parent=1 // pred_region
      %162 = dma.done [#allocation6], 1536
    $region57: #{autoencoder_forward_fused.1} parent=1 // pred_fallthru
      _
    // Predicated region
    $region58: #{autoencoder_forward_fused.1} parent=1 // pred_check
      _
    $region59: #{autoencoder_forward_fused.1} parent=1 // pred_check_branch
      %164 = sbr.rel (0) target = $region61
    $region60: #{autoencoder_forward_fused.1} parent=1 // pred_region
      %165 = dma.done [#allocation9], 12288
    $region61: #{autoencoder_forward_fused.1} parent=1 // pred_fallthru
      _
    // Predicated region
    $region62: #{autoencoder_forward_fused.1} parent=1 // pred_check
      _
    $region63: #{autoencoder_forward_fused.1} parent=1 // pred_check_branch
      %167 = sbr.rel (0) target = $region65
    $region64: #{autoencoder_forward_fused.1} parent=1 // pred_region
      %168 = dma.done [#allocation9], 49152
    $region65: #{autoencoder_forward_fused.1} parent=1 // pred_fallthru
      _
    // Predicated region
    $region66: #{autoencoder_forward_fused.1} parent=1 // pred_check
      _
    $region67: #{autoencoder_forward_fused.1} parent=1 // pred_check_branch
      %170 = sbr.rel (0) target = $region69
    $region68: #{autoencoder_forward_fused.1} parent=1 // pred_region
      %171 = dma.done [#allocation12], 24576
    $region69: #{autoencoder_forward_fused.1} parent=1 // pred_fallthru
      _
    // Predicated region
    $region70: #{autoencoder_forward_fused.1} parent=1 // pred_check
      _
    $region71: #{autoencoder_forward_fused.1} parent=1 // pred_check_branch
      %173 = sbr.rel (0) target = $region73
    $region72: #{autoencoder_forward_fused.1} parent=1 // pred_region
      %174 = dma.done [#allocation12], 12288
    $region73: #{autoencoder_forward_fused.1} parent=1 // pred_fallthru
      _
    // Predicated region
    $region74: #{autoencoder_forward_fused.1} parent=1 // pred_check
      _
    $region75: #{autoencoder_forward_fused.1} parent=1 // pred_check_branch
      %176 = sbr.rel (0) target = $region77
    $region76: #{autoencoder_forward_fused.1} parent=1 // pred_region
      %177 = dma.done [#allocation15], 12288
    $region77: #{autoencoder_forward_fused.1} parent=1 // pred_fallthru
      _
    // Predicated region
    $region78: #{autoencoder_forward_fused.1} parent=1 // pred_check
      _
    $region79: #{autoencoder_forward_fused.1} parent=1 // pred_check_branch
      %179 = sbr.rel (0) target = $region81
    $region80: #{autoencoder_forward_fused.1} parent=1 // pred_region
      %180 = dma.done [#allocation15], 24576
    $region81: #{autoencoder_forward_fused.1} parent=1 // pred_fallthru
      _
    // Predicated region
    $region82: #{autoencoder_forward_fused.1} parent=1 // pred_check
      _
    $region83: #{autoencoder_forward_fused.1} parent=1 // pred_check_branch
      %182 = sbr.rel (0) target = $region85
    $region84: #{autoencoder_forward_fused.1} parent=1 // pred_region
      %183 = dma.done [#allocation18], 49152
    $region85: #{autoencoder_forward_fused.1} parent=1 // pred_fallthru
      _
    // Predicated region
    $region86: #{autoencoder_forward_fused.1} parent=1 // pred_check
      _
    $region87: #{autoencoder_forward_fused.1} parent=1 // pred_check_branch
      %185 = sbr.rel (0) target = $region89
    $region88: #{autoencoder_forward_fused.1} parent=1 // pred_region
      %186 = dma.done [#allocation18], 12288
    $region89: #{autoencoder_forward_fused.1} parent=1 // pred_fallthru
      _
    %v187 = vld [vmem:[#allocation2] sm:$0xff]
    %v188 = vld [vmem:[#allocation2 + $0x8] sm:$0xff]
    %v189 = vld [vmem:[#allocation2 + $0x10] sm:$0xff]
    %v190 = vld [vmem:[#allocation2 + $0x18] sm:$0xff]
    %v191 = vpack.c.bf16 %v189, %v187
    %v192 = vpack.c.bf16 %v190, %v188
    %v193 = vld [vmem:[#allocation8] sm:$0xff]
    %v194 = vld [vmem:[#allocation8 + $0x8] sm:$0xff]
    %v195 = vld [vmem:[#allocation8 + $0x10] sm:$0xff]
    %v196 = vld [vmem:[#allocation8 + $0x18] sm:$0xff]
    %v197 = vld [vmem:[#allocation8 + $0x20] sm:$0xff]
    %v198 = vld [vmem:[#allocation8 + $0x28] sm:$0xff]
    %v199 = vld [vmem:[#allocation8 + $0x30] sm:$0xff]
    %v200 = vld [vmem:[#allocation8 + $0x38] sm:$0xff]
    %v201 = vld [vmem:[#allocation8 + $0x40] sm:$0xff]
    %v202 = vld [vmem:[#allocation8 + $0x48] sm:$0xff]
    %v203 = vld [vmem:[#allocation8 + $0x50] sm:$0xff]
    %v204 = vld [vmem:[#allocation8 + $0x58] sm:$0xff]
    %v205 = vld [vmem:[#allocation8 + $0x60] sm:$0xff]
    %v206 = vld [vmem:[#allocation8 + $0x68] sm:$0xff]
    %v207 = vld [vmem:[#allocation8 + $0x70] sm:$0xff]
    %v208 = vld [vmem:[#allocation8 + $0x78] sm:$0xff]
    %v209 = vld [vmem:[#allocation8 + $0x80] sm:$0xff]
    %v210 = vld [vmem:[#allocation8 + $0x88] sm:$0xff]
    %v211 = vld [vmem:[#allocation8 + $0x90] sm:$0xff]
    %v212 = vld [vmem:[#allocation8 + $0x98] sm:$0xff]
    %v213 = vld [vmem:[#allocation8 + $0xa0] sm:$0xff]
    %v214 = vld [vmem:[#allocation8 + $0xa8] sm:$0xff]
    %v215 = vld [vmem:[#allocation8 + $0xb0] sm:$0xff]
    %v216 = vld [vmem:[#allocation8 + $0xb8] sm:$0xff]
    %v217 = vld [vmem:[#allocation8 + $0xc0] sm:$0xff]
    %v218 = vld [vmem:[#allocation8 + $0xc8] sm:$0xff]
    %v219 = vld [vmem:[#allocation8 + $0xd0] sm:$0xff]
    %v220 = vld [vmem:[#allocation8 + $0xd8] sm:$0xff]
    %v221 = vld [vmem:[#allocation8 + $0xe0] sm:$0xff]
    %v222 = vld [vmem:[#allocation8 + $0xe8] sm:$0xff]
    %v223 = vld [vmem:[#allocation8 + $0xf0] sm:$0xff]
    %v224 = vld [vmem:[#allocation8 + $0xf8] sm:$0xff]
    %v225 = vld [vmem:[#allocation8 + $0x100] sm:$0xff]
    %v226 = vld [vmem:[#allocation8 + $0x108] sm:$0xff]
    %v227 = vld [vmem:[#allocation8 + $0x110] sm:$0xff]
    %v228 = vld [vmem:[#allocation8 + $0x118] sm:$0xff]
    %v229 = vld [vmem:[#allocation8 + $0x120] sm:$0xff]
    %v230 = vld [vmem:[#allocation8 + $0x128] sm:$0xff]
    %v231 = vld [vmem:[#allocation8 + $0x130] sm:$0xff]
    %v232 = vld [vmem:[#allocation8 + $0x138] sm:$0xff]
    %v233 = vld [vmem:[#allocation8 + $0x140] sm:$0xff]
    %v234 = vld [vmem:[#allocation8 + $0x148] sm:$0xff]
    %v235 = vld [vmem:[#allocation8 + $0x150] sm:$0xff]
    %v236 = vld [vmem:[#allocation8 + $0x158] sm:$0xff]
    %v237 = vld [vmem:[#allocation8 + $0x160] sm:$0xff]
    %v238 = vld [vmem:[#allocation8 + $0x168] sm:$0xff]
    %v239 = vld [vmem:[#allocation8 + $0x170] sm:$0xff]
    %v240 = vld [vmem:[#allocation8 + $0x178] sm:$0xff]
    %v241 = vld [vmem:[#allocation8 + $0x180] sm:$0xff]
    %v242 = vld [vmem:[#allocation8 + $0x188] sm:$0xff]
    %v243 = vld [vmem:[#allocation8 + $0x190] sm:$0xff]
    %v244 = vld [vmem:[#allocation8 + $0x198] sm:$0xff]
    %v245 = vld [vmem:[#allocation8 + $0x1a0] sm:$0xff]
    %v246 = vld [vmem:[#allocation8 + $0x1a8] sm:$0xff]
    %v247 = vld [vmem:[#allocation8 + $0x1b0] sm:$0xff]
    %v248 = vld [vmem:[#allocation8 + $0x1b8] sm:$0xff]
    %v249 = vld [vmem:[#allocation8 + $0x1c0] sm:$0xff]
    %v250 = vld [vmem:[#allocation8 + $0x1c8] sm:$0xff]
    %v251 = vld [vmem:[#allocation8 + $0x1d0] sm:$0xff]
    %v252 = vld [vmem:[#allocation8 + $0x1d8] sm:$0xff]
    %v253 = vld [vmem:[#allocation8 + $0x1e0] sm:$0xff]
    %v254 = vld [vmem:[#allocation8 + $0x1e8] sm:$0xff]
    %v255 = vld [vmem:[#allocation8 + $0x1f0] sm:$0xff]
    %v256 = vld [vmem:[#allocation8 + $0x1f8] sm:$0xff]
    %v257 = vld [vmem:[#allocation8 + $0x200] sm:$0xff]
    %v258 = vld [vmem:[#allocation8 + $0x208] sm:$0xff]
    %v259 = vld [vmem:[#allocation8 + $0x210] sm:$0xff]
    %v260 = vld [vmem:[#allocation8 + $0x218] sm:$0xff]
    %v261 = vld [vmem:[#allocation8 + $0x220] sm:$0xff]
    %v262 = vld [vmem:[#allocation8 + $0x228] sm:$0xff]
    %v263 = vld [vmem:[#allocation8 + $0x230] sm:$0xff]
    %v264 = vld [vmem:[#allocation8 + $0x238] sm:$0xff]
    %v265 = vld [vmem:[#allocation8 + $0x240] sm:$0xff]
    %v266 = vld [vmem:[#allocation8 + $0x248] sm:$0xff]
    %v267 = vld [vmem:[#allocation8 + $0x250] sm:$0xff]
    %v268 = vld [vmem:[#allocation8 + $0x258] sm:$0xff]
    %v269 = vld [vmem:[#allocation8 + $0x260] sm:$0xff]
    %v270 = vld [vmem:[#allocation8 + $0x268] sm:$0xff]
    %v271 = vld [vmem:[#allocation8 + $0x270] sm:$0xff]
    %v272 = vld [vmem:[#allocation8 + $0x278] sm:$0xff]
    %v273 = vld [vmem:[#allocation8 + $0x280] sm:$0xff]
    %v274 = vld [vmem:[#allocation8 + $0x288] sm:$0xff]
    %v275 = vld [vmem:[#allocation8 + $0x290] sm:$0xff]
    %v276 = vld [vmem:[#allocation8 + $0x298] sm:$0xff]
    %v277 = vld [vmem:[#allocation8 + $0x2a0] sm:$0xff]
    %v278 = vld [vmem:[#allocation8 + $0x2a8] sm:$0xff]
    %v279 = vld [vmem:[#allocation8 + $0x2b0] sm:$0xff]
    %v280 = vld [vmem:[#allocation8 + $0x2b8] sm:$0xff]
    %v281 = vld [vmem:[#allocation8 + $0x2c0] sm:$0xff]
    %v282 = vld [vmem:[#allocation8 + $0x2c8] sm:$0xff]
    %v283 = vld [vmem:[#allocation8 + $0x2d0] sm:$0xff]
    %v284 = vld [vmem:[#allocation8 + $0x2d8] sm:$0xff]
    %v285 = vld [vmem:[#allocation8 + $0x2e0] sm:$0xff]
    %v286 = vld [vmem:[#allocation8 + $0x2e8] sm:$0xff]
    %v287 = vld [vmem:[#allocation8 + $0x2f0] sm:$0xff]
    %v288 = vld [vmem:[#allocation8 + $0x2f8] sm:$0xff]
    %v289 = vunpack.c.l.s8.bf16 %v193
    %v290 = vunpack.c.l.s8.bf16 %v194
    %v291 = vunpack.c.l.s8.bf16 %v195
    %v292 = vunpack.c.l.s8.bf16 %v196
    %v293 = vunpack.c.l.s8.bf16 %v197
    %v294 = vunpack.c.l.s8.bf16 %v198
    %v295 = vunpack.c.l.s8.bf16 %v199
    %v296 = vunpack.c.l.s8.bf16 %v200
    %v297 = vunpack.c.l.s8.bf16 %v201
    %v298 = vunpack.c.l.s8.bf16 %v202
    %v299 = vunpack.c.l.s8.bf16 %v203
    %v300 = vunpack.c.l.s8.bf16 %v204
    %v301 = vunpack.c.h.s8.bf16 %v193
    %v302 = vunpack.c.h.s8.bf16 %v194
    %v303 = vunpack.c.h.s8.bf16 %v195
    %v304 = vunpack.c.h.s8.bf16 %v196
    %v305 = vunpack.c.h.s8.bf16 %v197
    %v306 = vunpack.c.h.s8.bf16 %v198
    %v307 = vunpack.c.h.s8.bf16 %v199
    %v308 = vunpack.c.h.s8.bf16 %v200
    %v309 = vunpack.c.h.s8.bf16 %v201
    %v310 = vunpack.c.h.s8.bf16 %v202
    %v311 = vunpack.c.h.s8.bf16 %v203
    %v312 = vunpack.c.h.s8.bf16 %v204
    %v313 = vunpack.c.l.s8.bf16 %v205
    %v314 = vunpack.c.l.s8.bf16 %v206
    %v315 = vunpack.c.l.s8.bf16 %v207
    %v316 = vunpack.c.l.s8.bf16 %v208
    %v317 = vunpack.c.l.s8.bf16 %v209
    %v318 = vunpack.c.l.s8.bf16 %v210
    %v319 = vunpack.c.l.s8.bf16 %v211
    %v320 = vunpack.c.l.s8.bf16 %v212
    %v321 = vunpack.c.l.s8.bf16 %v213
    %v322 = vunpack.c.l.s8.bf16 %v214
    %v323 = vunpack.c.l.s8.bf16 %v215
    %v324 = vunpack.c.l.s8.bf16 %v216
    %v325 = vunpack.c.h.s8.bf16 %v205
    %v326 = vunpack.c.h.s8.bf16 %v206
    %v327 = vunpack.c.h.s8.bf16 %v207
    %v328 = vunpack.c.h.s8.bf16 %v208
    %v329 = vunpack.c.h.s8.bf16 %v209
    %v330 = vunpack.c.h.s8.bf16 %v210
    %v331 = vunpack.c.h.s8.bf16 %v211
    %v332 = vunpack.c.h.s8.bf16 %v212
    %v333 = vunpack.c.h.s8.bf16 %v213
    %v334 = vunpack.c.h.s8.bf16 %v214
    %v335 = vunpack.c.h.s8.bf16 %v215
    %v336 = vunpack.c.h.s8.bf16 %v216
    %v337 = vunpack.c.l.s8.bf16 %v217
    %v338 = vunpack.c.l.s8.bf16 %v218
    %v339 = vunpack.c.l.s8.bf16 %v219
    %v340 = vunpack.c.l.s8.bf16 %v220
    %v341 = vunpack.c.l.s8.bf16 %v221
    %v342 = vunpack.c.l.s8.bf16 %v222
    %v343 = vunpack.c.l.s8.bf16 %v223
    %v344 = vunpack.c.l.s8.bf16 %v224
    %v345 = vunpack.c.l.s8.bf16 %v225
    %v346 = vunpack.c.l.s8.bf16 %v226
    %v347 = vunpack.c.l.s8.bf16 %v227
    %v348 = vunpack.c.l.s8.bf16 %v228
    %v349 = vunpack.c.h.s8.bf16 %v217
    %v350 = vunpack.c.h.s8.bf16 %v218
    %v351 = vunpack.c.h.s8.bf16 %v219
    %v352 = vunpack.c.h.s8.bf16 %v220
    %v353 = vunpack.c.h.s8.bf16 %v221
    %v354 = vunpack.c.h.s8.bf16 %v222
    %v355 = vunpack.c.h.s8.bf16 %v223
    %v356 = vunpack.c.h.s8.bf16 %v224
    %v357 = vunpack.c.h.s8.bf16 %v225
    %v358 = vunpack.c.h.s8.bf16 %v226
    %v359 = vunpack.c.h.s8.bf16 %v227
    %v360 = vunpack.c.h.s8.bf16 %v228
    %v361 = vunpack.c.l.s8.bf16 %v229
    %v362 = vunpack.c.l.s8.bf16 %v230
    %v363 = vunpack.c.l.s8.bf16 %v231
    %v364 = vunpack.c.l.s8.bf16 %v232
    %v365 = vunpack.c.l.s8.bf16 %v233
    %v366 = vunpack.c.l.s8.bf16 %v234
    %v367 = vunpack.c.l.s8.bf16 %v235
    %v368 = vunpack.c.l.s8.bf16 %v236
    %v369 = vunpack.c.l.s8.bf16 %v237
    %v370 = vunpack.c.l.s8.bf16 %v238
    %v371 = vunpack.c.l.s8.bf16 %v239
    %v372 = vunpack.c.l.s8.bf16 %v240
    %v373 = vunpack.c.h.s8.bf16 %v229
    %v374 = vunpack.c.h.s8.bf16 %v230
    %v375 = vunpack.c.h.s8.bf16 %v231
    %v376 = vunpack.c.h.s8.bf16 %v232
    %v377 = vunpack.c.h.s8.bf16 %v233
    %v378 = vunpack.c.h.s8.bf16 %v234
    %v379 = vunpack.c.h.s8.bf16 %v235
    %v380 = vunpack.c.h.s8.bf16 %v236
    %v381 = vunpack.c.h.s8.bf16 %v237
    %v382 = vunpack.c.h.s8.bf16 %v238
    %v383 = vunpack.c.h.s8.bf16 %v239
    %v384 = vunpack.c.h.s8.bf16 %v240
    %v385 = vunpack.c.l.s8.bf16 %v241
    %v386 = vunpack.c.l.s8.bf16 %v242
    %v387 = vunpack.c.l.s8.bf16 %v243
    %v388 = vunpack.c.l.s8.bf16 %v244
    %v389 = vunpack.c.l.s8.bf16 %v245
    %v390 = vunpack.c.l.s8.bf16 %v246
    %v391 = vunpack.c.l.s8.bf16 %v247
    %v392 = vunpack.c.l.s8.bf16 %v248
    %v393 = vunpack.c.l.s8.bf16 %v249
    %v394 = vunpack.c.l.s8.bf16 %v250
    %v395 = vunpack.c.l.s8.bf16 %v251
    %v396 = vunpack.c.l.s8.bf16 %v252
    %v397 = vunpack.c.h.s8.bf16 %v241
    %v398 = vunpack.c.h.s8.bf16 %v242
    %v399 = vunpack.c.h.s8.bf16 %v243
    %v400 = vunpack.c.h.s8.bf16 %v244
    %v401 = vunpack.c.h.s8.bf16 %v245
    %v402 = vunpack.c.h.s8.bf16 %v246
    %v403 = vunpack.c.h.s8.bf16 %v247
    %v404 = vunpack.c.h.s8.bf16 %v248
    %v405 = vunpack.c.h.s8.bf16 %v249
    %v406 = vunpack.c.h.s8.bf16 %v250
    %v407 = vunpack.c.h.s8.bf16 %v251
    %v408 = vunpack.c.h.s8.bf16 %v252
    %v409 = vunpack.c.l.s8.bf16 %v253
    %v410 = vunpack.c.l.s8.bf16 %v254
    %v411 = vunpack.c.l.s8.bf16 %v255
    %v412 = vunpack.c.l.s8.bf16 %v256
    %v413 = vunpack.c.l.s8.bf16 %v257
    %v414 = vunpack.c.l.s8.bf16 %v258
    %v415 = vunpack.c.l.s8.bf16 %v259
    %v416 = vunpack.c.l.s8.bf16 %v260
    %v417 = vunpack.c.l.s8.bf16 %v261
    %v418 = vunpack.c.l.s8.bf16 %v262
    %v419 = vunpack.c.l.s8.bf16 %v263
    %v420 = vunpack.c.l.s8.bf16 %v264
    %v421 = vunpack.c.h.s8.bf16 %v253
    %v422 = vunpack.c.h.s8.bf16 %v254
    %v423 = vunpack.c.h.s8.bf16 %v255
    %v424 = vunpack.c.h.s8.bf16 %v256
    %v425 = vunpack.c.h.s8.bf16 %v257
    %v426 = vunpack.c.h.s8.bf16 %v258
    %v427 = vunpack.c.h.s8.bf16 %v259
    %v428 = vunpack.c.h.s8.bf16 %v260
    %v429 = vunpack.c.h.s8.bf16 %v261
    %v430 = vunpack.c.h.s8.bf16 %v262
    %v431 = vunpack.c.h.s8.bf16 %v263
    %v432 = vunpack.c.h.s8.bf16 %v264
    %v433 = vunpack.c.l.s8.bf16 %v265
    %v434 = vunpack.c.l.s8.bf16 %v266
    %v435 = vunpack.c.l.s8.bf16 %v267
    %v436 = vunpack.c.l.s8.bf16 %v268
    %v437 = vunpack.c.l.s8.bf16 %v269
    %v438 = vunpack.c.l.s8.bf16 %v270
    %v439 = vunpack.c.l.s8.bf16 %v271
    %v440 = vunpack.c.l.s8.bf16 %v272
    %v441 = vunpack.c.l.s8.bf16 %v273
    %v442 = vunpack.c.l.s8.bf16 %v274
    %v443 = vunpack.c.l.s8.bf16 %v275
    %v444 = vunpack.c.l.s8.bf16 %v276
    %v445 = vunpack.c.h.s8.bf16 %v265
    %v446 = vunpack.c.h.s8.bf16 %v266
    %v447 = vunpack.c.h.s8.bf16 %v267
    %v448 = vunpack.c.h.s8.bf16 %v268
    %v449 = vunpack.c.h.s8.bf16 %v269
    %v450 = vunpack.c.h.s8.bf16 %v270
    %v451 = vunpack.c.h.s8.bf16 %v271
    %v452 = vunpack.c.h.s8.bf16 %v272
    %v453 = vunpack.c.h.s8.bf16 %v273
    %v454 = vunpack.c.h.s8.bf16 %v274
    %v455 = vunpack.c.h.s8.bf16 %v275
    %v456 = vunpack.c.h.s8.bf16 %v276
    %v457 = vunpack.c.l.s8.bf16 %v277
    %v458 = vunpack.c.l.s8.bf16 %v278
    %v459 = vunpack.c.l.s8.bf16 %v279
    %v460 = vunpack.c.l.s8.bf16 %v280
    %v461 = vunpack.c.l.s8.bf16 %v281
    %v462 = vunpack.c.l.s8.bf16 %v282
    %v463 = vunpack.c.l.s8.bf16 %v283
    %v464 = vunpack.c.l.s8.bf16 %v284
    %v465 = vunpack.c.l.s8.bf16 %v285
    %v466 = vunpack.c.l.s8.bf16 %v286
    %v467 = vunpack.c.l.s8.bf16 %v287
    %v468 = vunpack.c.l.s8.bf16 %v288
    %v469 = vunpack.c.h.s8.bf16 %v277
    %v470 = vunpack.c.h.s8.bf16 %v278
    %v471 = vunpack.c.h.s8.bf16 %v279
    %v472 = vunpack.c.h.s8.bf16 %v280
    %v473 = vunpack.c.h.s8.bf16 %v281
    %v474 = vunpack.c.h.s8.bf16 %v282
    %v475 = vunpack.c.h.s8.bf16 %v283
    %v476 = vunpack.c.h.s8.bf16 %v284
    %v477 = vunpack.c.h.s8.bf16 %v285
    %v478 = vunpack.c.h.s8.bf16 %v286
    %v479 = vunpack.c.h.s8.bf16 %v287
    %v480 = vunpack.c.h.s8.bf16 %v288
    %481 = vmatprep.subr.bf16.mxu0 %v374
    %482 = vmatpush1.bf16.msra.mxu0 %v373
    %483 = vmatprep.subr.bf16.mxu0 %v362
    %484 = vmatpush1.bf16.msra.mxu0 %v361
    %485 = vmatprep.subr.bf16.mxu0 %v350
    %486 = vmatpush1.bf16.msra.mxu0 %v349
    %487 = vmatprep.subr.bf16.mxu0 %v338
    %488 = vmatpush1.bf16.msra.mxu0 %v337
    %489 = vmatprep.subr.bf16.mxu0 %v326
    %490 = vmatpush1.bf16.msra.mxu0 %v325
    %491 = vmatprep.subr.bf16.mxu0 %v314
    %492 = vmatpush1.bf16.msra.mxu0 %v313
    %493 = vmatprep.subr.bf16.mxu0 %v302
    %494 = vmatpush1.bf16.msra.mxu0 %v301
    %495 = vmatprep.subr.bf16.mxu0 %v290
    %496 = vmatpush1.bf16.msra.mxu0 %v289
    %497 = vmatprep.subr.bf16.mxu0 %v470
    %498 = vmatpush2.bf16.msra.mxu0 %v469
    %499 = vmatprep.subr.bf16.mxu0 %v458
    %500 = vmatpush2.bf16.msra.mxu0 %v457
    %501 = vmatprep.subr.bf16.mxu0 %v446
    %502 = vmatpush2.bf16.msra.mxu0 %v445
    %503 = vmatprep.subr.bf16.mxu0 %v434
    %504 = vmatpush2.bf16.msra.mxu0 %v433
    %505 = vmatprep.subr.bf16.mxu0 %v422
    %506 = vmatpush2.bf16.msra.mxu0 %v421
    %507 = vmatprep.subr.bf16.mxu0 %v410
    %508 = vmatpush2.bf16.msra.mxu0 %v409
    %509 = vmatprep.subr.bf16.mxu0 %v398
    %510 = vmatpush2.bf16.msra.mxu0 %v397
    %511 = vmatprep.subr.bf16.mxu0 %v386
    %512 = vmatpush2.bf16.msra.mxu0 %v385
    %513 = vmatprep.mubr.bf16.mxu0 %v192
    %514 = vmatmul.mubr.bf16.gmra.mxu0 %v191
    %v515 = vpop.f32.mrf.mxu0
    %v516 = vadd.f32 0.0, %v515
    %v517 = vpop.f32.mrf.mxu0
    %v518 = vadd.f32 0.0, %v517
    %v519 = vpop.f32.mrf.mxu0
    %v520 = vadd.f32 0.0, %v519
    %v521 = vpop.f32.mrf.mxu0
    %v522 = vadd.f32 0.0, %v521
    %523 = vdwg.mxu0
    %524 = vmatprep.subr.bf16.mxu0 %v376
    %525 = vmatpush1.bf16.msra.mxu0 %v375
    %526 = vmatprep.subr.bf16.mxu0 %v364
    %527 = vmatpush1.bf16.msra.mxu0 %v363
    %528 = vmatprep.subr.bf16.mxu0 %v352
    %529 = vmatpush1.bf16.msra.mxu0 %v351
    %530 = vmatprep.subr.bf16.mxu0 %v340
    %531 = vmatpush1.bf16.msra.mxu0 %v339
    %532 = vmatprep.subr.bf16.mxu0 %v328
    %533 = vmatpush1.bf16.msra.mxu0 %v327
    %534 = vmatprep.subr.bf16.mxu0 %v316
    %535 = vmatpush1.bf16.msra.mxu0 %v315
    %536 = vmatprep.subr.bf16.mxu0 %v304
    %537 = vmatpush1.bf16.msra.mxu0 %v303
    %538 = vmatprep.subr.bf16.mxu0 %v292
    %539 = vmatpush1.bf16.msra.mxu0 %v291
    %540 = vmatprep.subr.bf16.mxu0 %v472
    %541 = vmatpush2.bf16.msra.mxu0 %v471
    %542 = vmatprep.subr.bf16.mxu0 %v460
    %543 = vmatpush2.bf16.msra.mxu0 %v459
    %544 = vmatprep.subr.bf16.mxu0 %v448
    %545 = vmatpush2.bf16.msra.mxu0 %v447
    %546 = vmatprep.subr.bf16.mxu0 %v436
    %547 = vmatpush2.bf16.msra.mxu0 %v435
    %548 = vmatprep.subr.bf16.mxu0 %v424
    %549 = vmatpush2.bf16.msra.mxu0 %v423
    %550 = vmatprep.subr.bf16.mxu0 %v412
    %551 = vmatpush2.bf16.msra.mxu0 %v411
    %552 = vmatprep.subr.bf16.mxu0 %v400
    %553 = vmatpush2.bf16.msra.mxu0 %v399
    %554 = vmatprep.subr.bf16.mxu0 %v388
    %555 = vmatpush2.bf16.msra.mxu0 %v387
    %556 = vmatprep.mubr.bf16.mxu0 %v192
    %557 = vmatmul.mubr.bf16.gmra.mxu0 %v191
    %v558 = vpop.f32.mrf.mxu0
    %v559 = vadd.f32 0.0, %v558
    %v560 = vpop.f32.mrf.mxu0
    %v561 = vadd.f32 0.0, %v560
    %v562 = vpop.f32.mrf.mxu0
    %v563 = vadd.f32 0.0, %v562
    %v564 = vpop.f32.mrf.mxu0
    %v565 = vadd.f32 0.0, %v564
    %566 = vdwg.mxu0
    %567 = vmatprep.subr.bf16.mxu0 %v378
    %568 = vmatpush1.bf16.msra.mxu0 %v377
    %569 = vmatprep.subr.bf16.mxu0 %v366
    %570 = vmatpush1.bf16.msra.mxu0 %v365
    %571 = vmatprep.subr.bf16.mxu0 %v354
    %572 = vmatpush1.bf16.msra.mxu0 %v353
    %573 = vmatprep.subr.bf16.mxu0 %v342
    %574 = vmatpush1.bf16.msra.mxu0 %v341
    %575 = vmatprep.subr.bf16.mxu0 %v330
    %576 = vmatpush1.bf16.msra.mxu0 %v329
    %577 = vmatprep.subr.bf16.mxu0 %v318
    %578 = vmatpush1.bf16.msra.mxu0 %v317
    %579 = vmatprep.subr.bf16.mxu0 %v306
    %580 = vmatpush1.bf16.msra.mxu0 %v305
    %581 = vmatprep.subr.bf16.mxu0 %v294
    %582 = vmatpush1.bf16.msra.mxu0 %v293
    %583 = vmatprep.subr.bf16.mxu0 %v474
    %584 = vmatpush2.bf16.msra.mxu0 %v473
    %585 = vmatprep.subr.bf16.mxu0 %v462
    %586 = vmatpush2.bf16.msra.mxu0 %v461
    %587 = vmatprep.subr.bf16.mxu0 %v450
    %588 = vmatpush2.bf16.msra.mxu0 %v449
    %589 = vmatprep.subr.bf16.mxu0 %v438
    %590 = vmatpush2.bf16.msra.mxu0 %v437
    %591 = vmatprep.subr.bf16.mxu0 %v426
    %592 = vmatpush2.bf16.msra.mxu0 %v425
    %593 = vmatprep.subr.bf16.mxu0 %v414
    %594 = vmatpush2.bf16.msra.mxu0 %v413
    %595 = vmatprep.subr.bf16.mxu0 %v402
    %596 = vmatpush2.bf16.msra.mxu0 %v401
    %597 = vmatprep.subr.bf16.mxu0 %v390
    %598 = vmatpush2.bf16.msra.mxu0 %v389
    %599 = vmatprep.mubr.bf16.mxu0 %v192
    %600 = vmatmul.mubr.bf16.gmra.mxu0 %v191
    %v601 = vpop.f32.mrf.mxu0
    %v602 = vadd.f32 0.0, %v601
    %v603 = vpop.f32.mrf.mxu0
    %v604 = vadd.f32 0.0, %v603
    %v605 = vpop.f32.mrf.mxu0
    %v606 = vadd.f32 0.0, %v605
    %v607 = vpop.f32.mrf.mxu0
    %v608 = vadd.f32 0.0, %v607
    %609 = vdwg.mxu0
    %610 = vmatprep.subr.bf16.mxu0 %v380
    %611 = vmatpush1.bf16.msra.mxu0 %v379
    %612 = vmatprep.subr.bf16.mxu0 %v368
    %613 = vmatpush1.bf16.msra.mxu0 %v367
    %614 = vmatprep.subr.bf16.mxu0 %v356
    %615 = vmatpush1.bf16.msra.mxu0 %v355
    %616 = vmatprep.subr.bf16.mxu0 %v344
    %617 = vmatpush1.bf16.msra.mxu0 %v343
    %618 = vmatprep.subr.bf16.mxu0 %v332
    %619 = vmatpush1.bf16.msra.mxu0 %v331
    %620 = vmatprep.subr.bf16.mxu0 %v320
    %621 = vmatpush1.bf16.msra.mxu0 %v319
    %622 = vmatprep.subr.bf16.mxu0 %v308
    %623 = vmatpush1.bf16.msra.mxu0 %v307
    %624 = vmatprep.subr.bf16.mxu0 %v296
    %625 = vmatpush1.bf16.msra.mxu0 %v295
    %626 = vmatprep.subr.bf16.mxu0 %v476
    %627 = vmatpush2.bf16.msra.mxu0 %v475
    %628 = vmatprep.subr.bf16.mxu0 %v464
    %629 = vmatpush2.bf16.msra.mxu0 %v463
    %630 = vmatprep.subr.bf16.mxu0 %v452
    %631 = vmatpush2.bf16.msra.mxu0 %v451
    %632 = vmatprep.subr.bf16.mxu0 %v440
    %633 = vmatpush2.bf16.msra.mxu0 %v439
    %634 = vmatprep.subr.bf16.mxu0 %v428
    %635 = vmatpush2.bf16.msra.mxu0 %v427
    %636 = vmatprep.subr.bf16.mxu0 %v416
    %637 = vmatpush2.bf16.msra.mxu0 %v415
    %638 = vmatprep.subr.bf16.mxu0 %v404
    %639 = vmatpush2.bf16.msra.mxu0 %v403
    %640 = vmatprep.subr.bf16.mxu0 %v392
    %641 = vmatpush2.bf16.msra.mxu0 %v391
    %642 = vmatprep.mubr.bf16.mxu0 %v192
    %643 = vmatmul.mubr.bf16.gmra.mxu0 %v191
    %v644 = vpop.f32.mrf.mxu0
    %v645 = vadd.f32 0.0, %v644
    %v646 = vpop.f32.mrf.mxu0
    %v647 = vadd.f32 0.0, %v646
    %v648 = vpop.f32.mrf.mxu0
    %v649 = vadd.f32 0.0, %v648
    %v650 = vpop.f32.mrf.mxu0
    %v651 = vadd.f32 0.0, %v650
    %652 = vdwg.mxu0
    %653 = vmatprep.subr.bf16.mxu0 %v382
    %654 = vmatpush1.bf16.msra.mxu0 %v381
    %655 = vmatprep.subr.bf16.mxu0 %v370
    %656 = vmatpush1.bf16.msra.mxu0 %v369
    %657 = vmatprep.subr.bf16.mxu0 %v358
    %658 = vmatpush1.bf16.msra.mxu0 %v357
    %659 = vmatprep.subr.bf16.mxu0 %v346
    %660 = vmatpush1.bf16.msra.mxu0 %v345
    %661 = vmatprep.subr.bf16.mxu0 %v334
    %662 = vmatpush1.bf16.msra.mxu0 %v333
    %663 = vmatprep.subr.bf16.mxu0 %v322
    %664 = vmatpush1.bf16.msra.mxu0 %v321
    %665 = vmatprep.subr.bf16.mxu0 %v310
    %666 = vmatpush1.bf16.msra.mxu0 %v309
    %667 = vmatprep.subr.bf16.mxu0 %v298
    %668 = vmatpush1.bf16.msra.mxu0 %v297
    %669 = vmatprep.subr.bf16.mxu0 %v478
    %670 = vmatpush2.bf16.msra.mxu0 %v477
    %671 = vmatprep.subr.bf16.mxu0 %v466
    %672 = vmatpush2.bf16.msra.mxu0 %v465
    %673 = vmatprep.subr.bf16.mxu0 %v454
    %674 = vmatpush2.bf16.msra.mxu0 %v453
    %675 = vmatprep.subr.bf16.mxu0 %v442
    %676 = vmatpush2.bf16.msra.mxu0 %v441
    %677 = vmatprep.subr.bf16.mxu0 %v430
    %678 = vmatpush2.bf16.msra.mxu0 %v429
    %679 = vmatprep.subr.bf16.mxu0 %v418
    %680 = vmatpush2.bf16.msra.mxu0 %v417
    %681 = vmatprep.subr.bf16.mxu0 %v406
    %682 = vmatpush2.bf16.msra.mxu0 %v405
    %683 = vmatprep.subr.bf16.mxu0 %v394
    %684 = vmatpush2.bf16.msra.mxu0 %v393
    %685 = vmatprep.mubr.bf16.mxu0 %v192
    %686 = vmatmul.mubr.bf16.gmra.mxu0 %v191
    %v687 = vpop.f32.mrf.mxu0
    %v688 = vadd.f32 0.0, %v687
    %v689 = vpop.f32.mrf.mxu0
    %v690 = vadd.f32 0.0, %v689
    %v691 = vpop.f32.mrf.mxu0
    %v692 = vadd.f32 0.0, %v691
    %v693 = vpop.f32.mrf.mxu0
    %v694 = vadd.f32 0.0, %v693
    %695 = vdwg.mxu0
    %696 = vmatprep.subr.bf16.mxu0 %v384
    %697 = vmatpush1.bf16.msra.mxu0 %v383
    %698 = vmatprep.subr.bf16.mxu0 %v372
    %699 = vmatpush1.bf16.msra.mxu0 %v371
    %700 = vmatprep.subr.bf16.mxu0 %v360
    %701 = vmatpush1.bf16.msra.mxu0 %v359
    %702 = vmatprep.subr.bf16.mxu0 %v348
    %703 = vmatpush1.bf16.msra.mxu0 %v347
    %704 = vmatprep.subr.bf16.mxu0 %v336
    %705 = vmatpush1.bf16.msra.mxu0 %v335
    %706 = vmatprep.subr.bf16.mxu0 %v324
    %707 = vmatpush1.bf16.msra.mxu0 %v323
    %708 = vmatprep.subr.bf16.mxu0 %v312
    %709 = vmatpush1.bf16.msra.mxu0 %v311
    %710 = vmatprep.subr.bf16.mxu0 %v300
    %711 = vmatpush1.bf16.msra.mxu0 %v299
    %712 = vmatprep.subr.bf16.mxu0 %v480
    %713 = vmatpush2.bf16.msra.mxu0 %v479
    %714 = vmatprep.subr.bf16.mxu0 %v468
    %715 = vmatpush2.bf16.msra.mxu0 %v467
    %716 = vmatprep.subr.bf16.mxu0 %v456
    %717 = vmatpush2.bf16.msra.mxu0 %v455
    %718 = vmatprep.subr.bf16.mxu0 %v444
    %719 = vmatpush2.bf16.msra.mxu0 %v443
    %720 = vmatprep.subr.bf16.mxu0 %v432
    %721 = vmatpush2.bf16.msra.mxu0 %v431
    %722 = vmatprep.subr.bf16.mxu0 %v420
    %723 = vmatpush2.bf16.msra.mxu0 %v419
    %724 = vmatprep.subr.bf16.mxu0 %v408
    %725 = vmatpush2.bf16.msra.mxu0 %v407
    %726 = vmatprep.subr.bf16.mxu0 %v396
    %727 = vmatpush2.bf16.msra.mxu0 %v395
    %728 = vmatprep.mubr.bf16.mxu0 %v192
    %729 = vmatmul.mubr.bf16.gmra.mxu0 %v191
    %v730 = vpop.f32.mrf.mxu0
    %v731 = vadd.f32 0.0, %v730
    %v732 = vpop.f32.mrf.mxu0
    %v733 = vadd.f32 0.0, %v732
    %v734 = vpop.f32.mrf.mxu0
    %v735 = vadd.f32 0.0, %v734
    %v736 = vpop.f32.mrf.mxu0
    %v737 = vadd.f32 0.0, %v736
    %738 = vdwg.mxu0
    %v739 = vld [vmem:[#allocation5] ss:$8 sm:$0xf]
    %v740 = vld [vmem:[#allocation5] ss:$8 sm:$0xf0]
    %v741 = vor.u32 %v739, %v740
    %s742 = scalar_lea.vmem [#allocation5], 64
    %v743 = vld [vmem:[%s742] ss:$8 sm:$0xf]
    %v744 = vld [vmem:[#allocation7] ss:$8 sm:$0xf]
    %v745 = vld [vmem:[#allocation7] ss:$8 sm:$0xf0]
    %v746 = vor.u32 %v744, %v745
    %s747 = scalar_lea.vmem [#allocation7], 64
    %v748 = vld [vmem:[%s747] ss:$8 sm:$0xf]
    %v751 = vlaneseq
    %v752 = vshrl.u32 %v751, 7
    %v753 = vsub.s32 0, %v752
    %v754 = vrot.slane %v741, %v753
    %v755 = vlaneseq
    %v756 = vshrl.u32 %v755, 7
    %v757 = vsub.s32 1, %v756
    %v758 = vrot.slane %v741, %v757
    %v759 = vlaneseq
    %v760 = vshrl.u32 %v759, 7
    %v761 = vsub.s32 2, %v760
    %v762 = vrot.slane %v741, %v761
    %v763 = vlaneseq
    %v764 = vshrl.u32 %v763, 7
    %v765 = vsub.s32 3, %v764
    %v766 = vrot.slane %v741, %v765
    %v767 = vlaneseq
    %v768 = vshrl.u32 %v767, 7
    %v769 = vsub.s32 4, %v768
    %v770 = vrot.slane %v741, %v769
    %v771 = vlaneseq
    %v772 = vshrl.u32 %v771, 7
    %v773 = vsub.s32 5, %v772
    %v774 = vrot.slane %v741, %v773
    %v775 = vlaneseq
    %v776 = vshrl.u32 %v775, 7
    %v777 = vsub.s32 6, %v776
    %v778 = vrot.slane %v741, %v777
    %v779 = vlaneseq
    %v780 = vshrl.u32 %v779, 7
    %v781 = vsub.s32 7, %v780
    %v782 = vrot.slane %v741, %v781
    %v783 = vlaneseq
    %v784 = vshrl.u32 %v783, 7
    %v785 = vsub.s32 0, %v784
    %v786 = vrot.slane %v743, %v785
    %v787 = vlaneseq
    %v788 = vshrl.u32 %v787, 7
    %v789 = vsub.s32 1, %v788
    %v790 = vrot.slane %v743, %v789
    %v791 = vlaneseq
    %v792 = vshrl.u32 %v791, 7
    %v793 = vsub.s32 2, %v792
    %v794 = vrot.slane %v743, %v793
    %v795 = vlaneseq
    %v796 = vshrl.u32 %v795, 7
    %v797 = vsub.s32 3, %v796
    %v798 = vrot.slane %v743, %v797
    %v811 = vmul.f32 %v516, %v754
    %v812 = vmul.f32 %v518, %v758
    %v813 = vmul.f32 %v559, %v762
    %v814 = vmul.f32 %v561, %v766
    %v815 = vmul.f32 %v602, %v770
    %v816 = vmul.f32 %v604, %v774
    %v817 = vmul.f32 %v645, %v778
    %v818 = vmul.f32 %v647, %v782
    %v819 = vmul.f32 %v688, %v786
    %v820 = vmul.f32 %v690, %v790
    %v821 = vmul.f32 %v731, %v794
    %v822 = vmul.f32 %v733, %v798
    %v823 = vmul.f32 %v520, %v754
    %v824 = vmul.f32 %v522, %v758
    %v825 = vmul.f32 %v563, %v762
    %v826 = vmul.f32 %v565, %v766
    %v827 = vmul.f32 %v606, %v770
    %v828 = vmul.f32 %v608, %v774
    %v829 = vmul.f32 %v649, %v778
    %v830 = vmul.f32 %v651, %v782
    %v831 = vmul.f32 %v692, %v786
    %v832 = vmul.f32 %v694, %v790
    %v833 = vmul.f32 %v735, %v794
    %v834 = vmul.f32 %v737, %v798
    %v837 = vlaneseq
    %v838 = vshrl.u32 %v837, 7
    %v839 = vsub.s32 0, %v838
    %v840 = vrot.slane %v746, %v839
    %v841 = vlaneseq
    %v842 = vshrl.u32 %v841, 7
    %v843 = vsub.s32 1, %v842
    %v844 = vrot.slane %v746, %v843
    %v845 = vlaneseq
    %v846 = vshrl.u32 %v845, 7
    %v847 = vsub.s32 2, %v846
    %v848 = vrot.slane %v746, %v847
    %v849 = vlaneseq
    %v850 = vshrl.u32 %v849, 7
    %v851 = vsub.s32 3, %v850
    %v852 = vrot.slane %v746, %v851
    %v853 = vlaneseq
    %v854 = vshrl.u32 %v853, 7
    %v855 = vsub.s32 4, %v854
    %v856 = vrot.slane %v746, %v855
    %v857 = vlaneseq
    %v858 = vshrl.u32 %v857, 7
    %v859 = vsub.s32 5, %v858
    %v860 = vrot.slane %v746, %v859
    %v861 = vlaneseq
    %v862 = vshrl.u32 %v861, 7
    %v863 = vsub.s32 6, %v862
    %v864 = vrot.slane %v746, %v863
    %v865 = vlaneseq
    %v866 = vshrl.u32 %v865, 7
    %v867 = vsub.s32 7, %v866
    %v868 = vrot.slane %v746, %v867
    %v869 = vlaneseq
    %v870 = vshrl.u32 %v869, 7
    %v871 = vsub.s32 0, %v870
    %v872 = vrot.slane %v748, %v871
    %v873 = vlaneseq
    %v874 = vshrl.u32 %v873, 7
    %v875 = vsub.s32 1, %v874
    %v876 = vrot.slane %v748, %v875
    %v877 = vlaneseq
    %v878 = vshrl.u32 %v877, 7
    %v879 = vsub.s32 2, %v878
    %v880 = vrot.slane %v748, %v879
    %v881 = vlaneseq
    %v882 = vshrl.u32 %v881, 7
    %v883 = vsub.s32 3, %v882
    %v884 = vrot.slane %v748, %v883
    %v897 = vadd.f32 %v811, %v840
    %v898 = vadd.f32 %v812, %v844
    %v899 = vadd.f32 %v813, %v848
    %v900 = vadd.f32 %v814, %v852
    %v901 = vadd.f32 %v815, %v856
    %v902 = vadd.f32 %v816, %v860
    %v903 = vadd.f32 %v817, %v864
    %v904 = vadd.f32 %v818, %v868
    %v905 = vadd.f32 %v819, %v872
    %v906 = vadd.f32 %v820, %v876
    %v907 = vadd.f32 %v821, %v880
    %v908 = vadd.f32 %v822, %v884
    %v909 = vadd.f32 %v823, %v840
    %v910 = vadd.f32 %v824, %v844
    %v911 = vadd.f32 %v825, %v848
    %v912 = vadd.f32 %v826, %v852
    %v913 = vadd.f32 %v827, %v856
    %v914 = vadd.f32 %v828, %v860
    %v915 = vadd.f32 %v829, %v864
    %v916 = vadd.f32 %v830, %v868
    %v917 = vadd.f32 %v831, %v872
    %v918 = vadd.f32 %v832, %v876
    %v919 = vadd.f32 %v833, %v880
    %v920 = vadd.f32 %v834, %v884
    %v921 = vtanh.pop %v897
    %v922 = vtanh.pop %v898
    %v923 = vtanh.pop %v899
    %v924 = vtanh.pop %v900
    %v925 = vtanh.pop %v901
    %v926 = vtanh.pop %v902
    %v927 = vtanh.pop %v903
    %v928 = vtanh.pop %v904
    %v929 = vtanh.pop %v905
    %v930 = vtanh.pop %v906
    %v931 = vtanh.pop %v907
    %v932 = vtanh.pop %v908
    %v933 = vtanh.pop %v909
    %v934 = vtanh.pop %v910
    %v935 = vtanh.pop %v911
    %v936 = vtanh.pop %v912
    %v937 = vtanh.pop %v913
    %v938 = vtanh.pop %v914
    %v939 = vtanh.pop %v915
    %v940 = vtanh.pop %v916
    %v941 = vtanh.pop %v917
    %v942 = vtanh.pop %v918
    %v943 = vtanh.pop %v919
    %v944 = vtanh.pop %v920
    %v945 = vpack.c.bf16 %v933, %v921
    %v946 = vpack.c.bf16 %v934, %v922
    %v947 = vpack.c.bf16 %v935, %v923
    %v948 = vpack.c.bf16 %v936, %v924
    %v949 = vpack.c.bf16 %v937, %v925
    %v950 = vpack.c.bf16 %v938, %v926
    %v951 = vpack.c.bf16 %v939, %v927
    %v952 = vpack.c.bf16 %v940, %v928
    %v953 = vpack.c.bf16 %v941, %v929
    %v954 = vpack.c.bf16 %v942, %v930
    %v955 = vpack.c.bf16 %v943, %v931
    %v956 = vpack.c.bf16 %v944, %v932
    %v957 = vld [vmem:[#allocation10] sm:$0xff]
    %v958 = vld [vmem:[#allocation10 + $0x8] sm:$0xff]
    %v959 = vld [vmem:[#allocation10 + $0x10] sm:$0xff]
    %v960 = vld [vmem:[#allocation10 + $0x18] sm:$0xff]
    %v961 = vld [vmem:[#allocation10 + $0x20] sm:$0xff]
    %v962 = vld [vmem:[#allocation10 + $0x28] sm:$0xff]
    %v963 = vld [vmem:[#allocation10 + $0x30] sm:$0xff]
    %v964 = vld [vmem:[#allocation10 + $0x38] sm:$0xff]
    %v965 = vld [vmem:[#allocation10 + $0x40] sm:$0xff]
    %v966 = vld [vmem:[#allocation10 + $0x48] sm:$0xff]
    %v967 = vld [vmem:[#allocation10 + $0x50] sm:$0xff]
    %v968 = vld [vmem:[#allocation10 + $0x58] sm:$0xff]
    %v969 = vld [vmem:[#allocation10 + $0x60] sm:$0xff]
    %v970 = vld [vmem:[#allocation10 + $0x68] sm:$0xff]
    %v971 = vld [vmem:[#allocation10 + $0x70] sm:$0xff]
    %v972 = vld [vmem:[#allocation10 + $0x78] sm:$0xff]
    %v973 = vld [vmem:[#allocation10 + $0x80] sm:$0xff]
    %v974 = vld [vmem:[#allocation10 + $0x88] sm:$0xff]
    %v975 = vld [vmem:[#allocation10 + $0x90] sm:$0xff]
    %v976 = vld [vmem:[#allocation10 + $0x98] sm:$0xff]
    %v977 = vld [vmem:[#allocation10 + $0xa0] sm:$0xff]
    %v978 = vld [vmem:[#allocation10 + $0xa8] sm:$0xff]
    %v979 = vld [vmem:[#allocation10 + $0xb0] sm:$0xff]
    %v980 = vld [vmem:[#allocation10 + $0xb8] sm:$0xff]
    %v981 = vld [vmem:[#allocation10 + $0xc0] sm:$0xff]
    %v982 = vld [vmem:[#allocation10 + $0xc8] sm:$0xff]
    %v983 = vld [vmem:[#allocation10 + $0xd0] sm:$0xff]
    %v984 = vld [vmem:[#allocation10 + $0xd8] sm:$0xff]
    %v985 = vld [vmem:[#allocation10 + $0xe0] sm:$0xff]
    %v986 = vld [vmem:[#allocation10 + $0xe8] sm:$0xff]
    %v987 = vld [vmem:[#allocation10 + $0xf0] sm:$0xff]
    %v988 = vld [vmem:[#allocation10 + $0xf8] sm:$0xff]
    %v989 = vld [vmem:[#allocation10 + $0x100] sm:$0xff]
    %v990 = vld [vmem:[#allocation10 + $0x108] sm:$0xff]
    %v991 = vld [vmem:[#allocation10 + $0x110] sm:$0xff]
    %v992 = vld [vmem:[#allocation10 + $0x118] sm:$0xff]
    %v993 = vld [vmem:[#allocation10 + $0x120] sm:$0xff]
    %v994 = vld [vmem:[#allocation10 + $0x128] sm:$0xff]
    %v995 = vld [vmem:[#allocation10 + $0x130] sm:$0xff]
    %v996 = vld [vmem:[#allocation10 + $0x138] sm:$0xff]
    %v997 = vld [vmem:[#allocation10 + $0x140] sm:$0xff]
    %v998 = vld [vmem:[#allocation10 + $0x148] sm:$0xff]
    %v999 = vld [vmem:[#allocation10 + $0x150] sm:$0xff]
    %v1000 = vld [vmem:[#allocation10 + $0x158] sm:$0xff]
    %v1001 = vld [vmem:[#allocation10 + $0x160] sm:$0xff]
    %v1002 = vld [vmem:[#allocation10 + $0x168] sm:$0xff]
    %v1003 = vld [vmem:[#allocation10 + $0x170] sm:$0xff]
    %v1004 = vld [vmem:[#allocation10 + $0x178] sm:$0xff]
    %v1005 = vld [vmem:[#allocation10 + $0x180] sm:$0xff]
    %v1006 = vld [vmem:[#allocation10 + $0x188] sm:$0xff]
    %v1007 = vld [vmem:[#allocation10 + $0x190] sm:$0xff]
    %v1008 = vld [vmem:[#allocation10 + $0x198] sm:$0xff]
    %v1009 = vld [vmem:[#allocation10 + $0x1a0] sm:$0xff]
    %v1010 = vld [vmem:[#allocation10 + $0x1a8] sm:$0xff]
    %v1011 = vld [vmem:[#allocation10 + $0x1b0] sm:$0xff]
    %v1012 = vld [vmem:[#allocation10 + $0x1b8] sm:$0xff]
    %v1013 = vld [vmem:[#allocation10 + $0x1c0] sm:$0xff]
    %v1014 = vld [vmem:[#allocation10 + $0x1c8] sm:$0xff]
    %v1015 = vld [vmem:[#allocation10 + $0x1d0] sm:$0xff]
    %v1016 = vld [vmem:[#allocation10 + $0x1d8] sm:$0xff]
    %v1017 = vld [vmem:[#allocation10 + $0x1e0] sm:$0xff]
    %v1018 = vld [vmem:[#allocation10 + $0x1e8] sm:$0xff]
    %v1019 = vld [vmem:[#allocation10 + $0x1f0] sm:$0xff]
    %v1020 = vld [vmem:[#allocation10 + $0x1f8] sm:$0xff]
    %v1021 = vld [vmem:[#allocation10 + $0x200] sm:$0xff]
    %v1022 = vld [vmem:[#allocation10 + $0x208] sm:$0xff]
    %v1023 = vld [vmem:[#allocation10 + $0x210] sm:$0xff]
    %v1024 = vld [vmem:[#allocation10 + $0x218] sm:$0xff]
    %v1025 = vld [vmem:[#allocation10 + $0x220] sm:$0xff]
    %v1026 = vld [vmem:[#allocation10 + $0x228] sm:$0xff]
    %v1027 = vld [vmem:[#allocation10 + $0x230] sm:$0xff]
    %v1028 = vld [vmem:[#allocation10 + $0x238] sm:$0xff]
    %v1029 = vld [vmem:[#allocation10 + $0x240] sm:$0xff]
    %v1030 = vld [vmem:[#allocation10 + $0x248] sm:$0xff]
    %v1031 = vld [vmem:[#allocation10 + $0x250] sm:$0xff]
    %v1032 = vld [vmem:[#allocation10 + $0x258] sm:$0xff]
    %v1033 = vld [vmem:[#allocation10 + $0x260] sm:$0xff]
    %v1034 = vld [vmem:[#allocation10 + $0x268] sm:$0xff]
    %v1035 = vld [vmem:[#allocation10 + $0x270] sm:$0xff]
    %v1036 = vld [vmem:[#allocation10 + $0x278] sm:$0xff]
    %v1037 = vld [vmem:[#allocation10 + $0x280] sm:$0xff]
    %v1038 = vld [vmem:[#allocation10 + $0x288] sm:$0xff]
    %v1039 = vld [vmem:[#allocation10 + $0x290] sm:$0xff]
    %v1040 = vld [vmem:[#allocation10 + $0x298] sm:$0xff]
    %v1041 = vld [vmem:[#allocation10 + $0x2a0] sm:$0xff]
    %v1042 = vld [vmem:[#allocation10 + $0x2a8] sm:$0xff]
    %v1043 = vld [vmem:[#allocation10 + $0x2b0] sm:$0xff]
    %v1044 = vld [vmem:[#allocation10 + $0x2b8] sm:$0xff]
    %v1045 = vld [vmem:[#allocation10 + $0x2c0] sm:$0xff]
    %v1046 = vld [vmem:[#allocation10 + $0x2c8] sm:$0xff]
    %v1047 = vld [vmem:[#allocation10 + $0x2d0] sm:$0xff]
    %v1048 = vld [vmem:[#allocation10 + $0x2d8] sm:$0xff]
    %v1049 = vld [vmem:[#allocation10 + $0x2e0] sm:$0xff]
    %v1050 = vld [vmem:[#allocation10 + $0x2e8] sm:$0xff]
    %v1051 = vld [vmem:[#allocation10 + $0x2f0] sm:$0xff]
    %v1052 = vld [vmem:[#allocation10 + $0x2f8] sm:$0xff]
    %v1053 = vld [vmem:[#allocation10 + $0x300] sm:$0xff]
    %v1054 = vld [vmem:[#allocation10 + $0x308] sm:$0xff]
    %v1055 = vld [vmem:[#allocation10 + $0x310] sm:$0xff]
    %v1056 = vld [vmem:[#allocation10 + $0x318] sm:$0xff]
    %v1057 = vld [vmem:[#allocation10 + $0x320] sm:$0xff]
    %v1058 = vld [vmem:[#allocation10 + $0x328] sm:$0xff]
    %v1059 = vld [vmem:[#allocation10 + $0x330] sm:$0xff]
    %v1060 = vld [vmem:[#allocation10 + $0x338] sm:$0xff]
    %v1061 = vld [vmem:[#allocation10 + $0x340] sm:$0xff]
    %v1062 = vld [vmem:[#allocation10 + $0x348] sm:$0xff]
    %v1063 = vld [vmem:[#allocation10 + $0x350] sm:$0xff]
    %v1064 = vld [vmem:[#allocation10 + $0x358] sm:$0xff]
    %v1065 = vld [vmem:[#allocation10 + $0x360] sm:$0xff]
    %v1066 = vld [vmem:[#allocation10 + $0x368] sm:$0xff]
    %v1067 = vld [vmem:[#allocation10 + $0x370] sm:$0xff]
    %v1068 = vld [vmem:[#allocation10 + $0x378] sm:$0xff]
    %v1069 = vld [vmem:[#allocation10 + $0x380] sm:$0xff]
    %v1070 = vld [vmem:[#allocation10 + $0x388] sm:$0xff]
    %v1071 = vld [vmem:[#allocation10 + $0x390] sm:$0xff]
    %v1072 = vld [vmem:[#allocation10 + $0x398] sm:$0xff]
    %v1073 = vld [vmem:[#allocation10 + $0x3a0] sm:$0xff]
    %v1074 = vld [vmem:[#allocation10 + $0x3a8] sm:$0xff]
    %v1075 = vld [vmem:[#allocation10 + $0x3b0] sm:$0xff]
    %v1076 = vld [vmem:[#allocation10 + $0x3b8] sm:$0xff]
    %v1077 = vld [vmem:[#allocation10 + $0x3c0] sm:$0xff]
    %v1078 = vld [vmem:[#allocation10 + $0x3c8] sm:$0xff]
    %v1079 = vld [vmem:[#allocation10 + $0x3d0] sm:$0xff]
    %v1080 = vld [vmem:[#allocation10 + $0x3d8] sm:$0xff]
    %v1081 = vld [vmem:[#allocation10 + $0x3e0] sm:$0xff]
    %v1082 = vld [vmem:[#allocation10 + $0x3e8] sm:$0xff]
    %v1083 = vld [vmem:[#allocation10 + $0x3f0] sm:$0xff]
    %v1084 = vld [vmem:[#allocation10 + $0x3f8] sm:$0xff]
    %v1085 = vld [vmem:[#allocation10 + $0x400] sm:$0xff]
    %v1086 = vld [vmem:[#allocation10 + $0x408] sm:$0xff]
    %v1087 = vld [vmem:[#allocation10 + $0x410] sm:$0xff]
    %v1088 = vld [vmem:[#allocation10 + $0x418] sm:$0xff]
    %v1089 = vld [vmem:[#allocation10 + $0x420] sm:$0xff]
    %v1090 = vld [vmem:[#allocation10 + $0x428] sm:$0xff]
    %v1091 = vld [vmem:[#allocation10 + $0x430] sm:$0xff]
    %v1092 = vld [vmem:[#allocation10 + $0x438] sm:$0xff]
    %v1093 = vld [vmem:[#allocation10 + $0x440] sm:$0xff]
    %v1094 = vld [vmem:[#allocation10 + $0x448] sm:$0xff]
    %v1095 = vld [vmem:[#allocation10 + $0x450] sm:$0xff]
    %v1096 = vld [vmem:[#allocation10 + $0x458] sm:$0xff]
    %v1097 = vld [vmem:[#allocation10 + $0x460] sm:$0xff]
    %v1098 = vld [vmem:[#allocation10 + $0x468] sm:$0xff]
    %v1099 = vld [vmem:[#allocation10 + $0x470] sm:$0xff]
    %v1100 = vld [vmem:[#allocation10 + $0x478] sm:$0xff]
    %v1101 = vld [vmem:[#allocation10 + $0x480] sm:$0xff]
    %v1102 = vld [vmem:[#allocation10 + $0x488] sm:$0xff]
    %v1103 = vld [vmem:[#allocation10 + $0x490] sm:$0xff]
    %v1104 = vld [vmem:[#allocation10 + $0x498] sm:$0xff]
    %v1105 = vld [vmem:[#allocation10 + $0x4a0] sm:$0xff]
    %v1106 = vld [vmem:[#allocation10 + $0x4a8] sm:$0xff]
    %v1107 = vld [vmem:[#allocation10 + $0x4b0] sm:$0xff]
    %v1108 = vld [vmem:[#allocation10 + $0x4b8] sm:$0xff]
    %v1109 = vld [vmem:[#allocation10 + $0x4c0] sm:$0xff]
    %v1110 = vld [vmem:[#allocation10 + $0x4c8] sm:$0xff]
    %v1111 = vld [vmem:[#allocation10 + $0x4d0] sm:$0xff]
    %v1112 = vld [vmem:[#allocation10 + $0x4d8] sm:$0xff]
    %v1113 = vld [vmem:[#allocation10 + $0x4e0] sm:$0xff]
    %v1114 = vld [vmem:[#allocation10 + $0x4e8] sm:$0xff]
    %v1115 = vld [vmem:[#allocation10 + $0x4f0] sm:$0xff]
    %v1116 = vld [vmem:[#allocation10 + $0x4f8] sm:$0xff]
    %v1117 = vld [vmem:[#allocation10 + $0x500] sm:$0xff]
    %v1118 = vld [vmem:[#allocation10 + $0x508] sm:$0xff]
    %v1119 = vld [vmem:[#allocation10 + $0x510] sm:$0xff]
    %v1120 = vld [vmem:[#allocation10 + $0x518] sm:$0xff]
    %v1121 = vld [vmem:[#allocation10 + $0x520] sm:$0xff]
    %v1122 = vld [vmem:[#allocation10 + $0x528] sm:$0xff]
    %v1123 = vld [vmem:[#allocation10 + $0x530] sm:$0xff]
    %v1124 = vld [vmem:[#allocation10 + $0x538] sm:$0xff]
    %v1125 = vld [vmem:[#allocation10 + $0x540] sm:$0xff]
    %v1126 = vld [vmem:[#allocation10 + $0x548] sm:$0xff]
    %v1127 = vld [vmem:[#allocation10 + $0x550] sm:$0xff]
    %v1128 = vld [vmem:[#allocation10 + $0x558] sm:$0xff]
    %v1129 = vld [vmem:[#allocation10 + $0x560] sm:$0xff]
    %v1130 = vld [vmem:[#allocation10 + $0x568] sm:$0xff]
    %v1131 = vld [vmem:[#allocation10 + $0x570] sm:$0xff]
    %v1132 = vld [vmem:[#allocation10 + $0x578] sm:$0xff]
    %v1133 = vld [vmem:[#allocation10 + $0x580] sm:$0xff]
    %v1134 = vld [vmem:[#allocation10 + $0x588] sm:$0xff]
    %v1135 = vld [vmem:[#allocation10 + $0x590] sm:$0xff]
    %v1136 = vld [vmem:[#allocation10 + $0x598] sm:$0xff]
    %v1137 = vld [vmem:[#allocation10 + $0x5a0] sm:$0xff]
    %v1138 = vld [vmem:[#allocation10 + $0x5a8] sm:$0xff]
    %v1139 = vld [vmem:[#allocation10 + $0x5b0] sm:$0xff]
    %v1140 = vld [vmem:[#allocation10 + $0x5b8] sm:$0xff]
    %v1141 = vld [vmem:[#allocation10 + $0x5c0] sm:$0xff]
    %v1142 = vld [vmem:[#allocation10 + $0x5c8] sm:$0xff]
    %v1143 = vld [vmem:[#allocation10 + $0x5d0] sm:$0xff]
    %v1144 = vld [vmem:[#allocation10 + $0x5d8] sm:$0xff]
    %v1145 = vld [vmem:[#allocation10 + $0x5e0] sm:$0xff]
    %v1146 = vld [vmem:[#allocation10 + $0x5e8] sm:$0xff]
    %v1147 = vld [vmem:[#allocation10 + $0x5f0] sm:$0xff]
    %v1148 = vld [vmem:[#allocation10 + $0x5f8] sm:$0xff]
    %v1149 = vld [vmem:[#allocation10 + $0x600] sm:$0xff]
    %v1150 = vld [vmem:[#allocation10 + $0x608] sm:$0xff]
    %v1151 = vld [vmem:[#allocation10 + $0x610] sm:$0xff]
    %v1152 = vld [vmem:[#allocation10 + $0x618] sm:$0xff]
    %v1153 = vld [vmem:[#allocation10 + $0x620] sm:$0xff]
    %v1154 = vld [vmem:[#allocation10 + $0x628] sm:$0xff]
    %v1155 = vld [vmem:[#allocation10 + $0x630] sm:$0xff]
    %v1156 = vld [vmem:[#allocation10 + $0x638] sm:$0xff]
    %v1157 = vld [vmem:[#allocation10 + $0x640] sm:$0xff]
    %v1158 = vld [vmem:[#allocation10 + $0x648] sm:$0xff]
    %v1159 = vld [vmem:[#allocation10 + $0x650] sm:$0xff]
    %v1160 = vld [vmem:[#allocation10 + $0x658] sm:$0xff]
    %v1161 = vld [vmem:[#allocation10 + $0x660] sm:$0xff]
    %v1162 = vld [vmem:[#allocation10 + $0x668] sm:$0xff]
    %v1163 = vld [vmem:[#allocation10 + $0x670] sm:$0xff]
    %v1164 = vld [vmem:[#allocation10 + $0x678] sm:$0xff]
    %v1165 = vld [vmem:[#allocation10 + $0x680] sm:$0xff]
    %v1166 = vld [vmem:[#allocation10 + $0x688] sm:$0xff]
    %v1167 = vld [vmem:[#allocation10 + $0x690] sm:$0xff]
    %v1168 = vld [vmem:[#allocation10 + $0x698] sm:$0xff]
    %v1169 = vld [vmem:[#allocation10 + $0x6a0] sm:$0xff]
    %v1170 = vld [vmem:[#allocation10 + $0x6a8] sm:$0xff]
    %v1171 = vld [vmem:[#allocation10 + $0x6b0] sm:$0xff]
    %v1172 = vld [vmem:[#allocation10 + $0x6b8] sm:$0xff]
    %v1173 = vld [vmem:[#allocation10 + $0x6c0] sm:$0xff]
    %v1174 = vld [vmem:[#allocation10 + $0x6c8] sm:$0xff]
    %v1175 = vld [vmem:[#allocation10 + $0x6d0] sm:$0xff]
    %v1176 = vld [vmem:[#allocation10 + $0x6d8] sm:$0xff]
    %v1177 = vld [vmem:[#allocation10 + $0x6e0] sm:$0xff]
    %v1178 = vld [vmem:[#allocation10 + $0x6e8] sm:$0xff]
    %v1179 = vld [vmem:[#allocation10 + $0x6f0] sm:$0xff]
    %v1180 = vld [vmem:[#allocation10 + $0x6f8] sm:$0xff]
    %v1181 = vld [vmem:[#allocation10 + $0x700] sm:$0xff]
    %v1182 = vld [vmem:[#allocation10 + $0x708] sm:$0xff]
    %v1183 = vld [vmem:[#allocation10 + $0x710] sm:$0xff]
    %v1184 = vld [vmem:[#allocation10 + $0x718] sm:$0xff]
    %v1185 = vld [vmem:[#allocation10 + $0x720] sm:$0xff]
    %v1186 = vld [vmem:[#allocation10 + $0x728] sm:$0xff]
    %v1187 = vld [vmem:[#allocation10 + $0x730] sm:$0xff]
    %v1188 = vld [vmem:[#allocation10 + $0x738] sm:$0xff]
    %v1189 = vld [vmem:[#allocation10 + $0x740] sm:$0xff]
    %v1190 = vld [vmem:[#allocation10 + $0x748] sm:$0xff]
    %v1191 = vld [vmem:[#allocation10 + $0x750] sm:$0xff]
    %v1192 = vld [vmem:[#allocation10 + $0x758] sm:$0xff]
    %v1193 = vld [vmem:[#allocation10 + $0x760] sm:$0xff]
    %v1194 = vld [vmem:[#allocation10 + $0x768] sm:$0xff]
    %v1195 = vld [vmem:[#allocation10 + $0x770] sm:$0xff]
    %v1196 = vld [vmem:[#allocation10 + $0x778] sm:$0xff]
    %v1197 = vld [vmem:[#allocation10 + $0x780] sm:$0xff]
    %v1198 = vld [vmem:[#allocation10 + $0x788] sm:$0xff]
    %v1199 = vld [vmem:[#allocation10 + $0x790] sm:$0xff]
    %v1200 = vld [vmem:[#allocation10 + $0x798] sm:$0xff]
    %v1201 = vld [vmem:[#allocation10 + $0x7a0] sm:$0xff]
    %v1202 = vld [vmem:[#allocation10 + $0x7a8] sm:$0xff]
    %v1203 = vld [vmem:[#allocation10 + $0x7b0] sm:$0xff]
    %v1204 = vld [vmem:[#allocation10 + $0x7b8] sm:$0xff]
    %v1205 = vld [vmem:[#allocation10 + $0x7c0] sm:$0xff]
    %v1206 = vld [vmem:[#allocation10 + $0x7c8] sm:$0xff]
    %v1207 = vld [vmem:[#allocation10 + $0x7d0] sm:$0xff]
    %v1208 = vld [vmem:[#allocation10 + $0x7d8] sm:$0xff]
    %v1209 = vld [vmem:[#allocation10 + $0x7e0] sm:$0xff]
    %v1210 = vld [vmem:[#allocation10 + $0x7e8] sm:$0xff]
    %v1211 = vld [vmem:[#allocation10 + $0x7f0] sm:$0xff]
    %v1212 = vld [vmem:[#allocation10 + $0x7f8] sm:$0xff]
    %v1213 = vld [vmem:[#allocation10 + $0x800] sm:$0xff]
    %v1214 = vld [vmem:[#allocation10 + $0x808] sm:$0xff]
    %v1215 = vld [vmem:[#allocation10 + $0x810] sm:$0xff]
    %v1216 = vld [vmem:[#allocation10 + $0x818] sm:$0xff]
    %v1217 = vld [vmem:[#allocation10 + $0x820] sm:$0xff]
    %v1218 = vld [vmem:[#allocation10 + $0x828] sm:$0xff]
    %v1219 = vld [vmem:[#allocation10 + $0x830] sm:$0xff]
    %v1220 = vld [vmem:[#allocation10 + $0x838] sm:$0xff]
    %v1221 = vld [vmem:[#allocation10 + $0x840] sm:$0xff]
    %v1222 = vld [vmem:[#allocation10 + $0x848] sm:$0xff]
    %v1223 = vld [vmem:[#allocation10 + $0x850] sm:$0xff]
    %v1224 = vld [vmem:[#allocation10 + $0x858] sm:$0xff]
    %v1225 = vld [vmem:[#allocation10 + $0x860] sm:$0xff]
    %v1226 = vld [vmem:[#allocation10 + $0x868] sm:$0xff]
    %v1227 = vld [vmem:[#allocation10 + $0x870] sm:$0xff]
    %v1228 = vld [vmem:[#allocation10 + $0x878] sm:$0xff]
    %v1229 = vld [vmem:[#allocation10 + $0x880] sm:$0xff]
    %v1230 = vld [vmem:[#allocation10 + $0x888] sm:$0xff]
    %v1231 = vld [vmem:[#allocation10 + $0x890] sm:$0xff]
    %v1232 = vld [vmem:[#allocation10 + $0x898] sm:$0xff]
    %v1233 = vld [vmem:[#allocation10 + $0x8a0] sm:$0xff]
    %v1234 = vld [vmem:[#allocation10 + $0x8a8] sm:$0xff]
    %v1235 = vld [vmem:[#allocation10 + $0x8b0] sm:$0xff]
    %v1236 = vld [vmem:[#allocation10 + $0x8b8] sm:$0xff]
    %v1237 = vld [vmem:[#allocation10 + $0x8c0] sm:$0xff]
    %v1238 = vld [vmem:[#allocation10 + $0x8c8] sm:$0xff]
    %v1239 = vld [vmem:[#allocation10 + $0x8d0] sm:$0xff]
    %v1240 = vld [vmem:[#allocation10 + $0x8d8] sm:$0xff]
    %v1241 = vld [vmem:[#allocation10 + $0x8e0] sm:$0xff]
    %v1242 = vld [vmem:[#allocation10 + $0x8e8] sm:$0xff]
    %v1243 = vld [vmem:[#allocation10 + $0x8f0] sm:$0xff]
    %v1244 = vld [vmem:[#allocation10 + $0x8f8] sm:$0xff]
    %v1245 = vld [vmem:[#allocation10 + $0x900] sm:$0xff]
    %v1246 = vld [vmem:[#allocation10 + $0x908] sm:$0xff]
    %v1247 = vld [vmem:[#allocation10 + $0x910] sm:$0xff]
    %v1248 = vld [vmem:[#allocation10 + $0x918] sm:$0xff]
    %v1249 = vld [vmem:[#allocation10 + $0x920] sm:$0xff]
    %v1250 = vld [vmem:[#allocation10 + $0x928] sm:$0xff]
    %v1251 = vld [vmem:[#allocation10 + $0x930] sm:$0xff]
    %v1252 = vld [vmem:[#allocation10 + $0x938] sm:$0xff]
    %v1253 = vld [vmem:[#allocation10 + $0x940] sm:$0xff]
    %v1254 = vld [vmem:[#allocation10 + $0x948] sm:$0xff]
    %v1255 = vld [vmem:[#allocation10 + $0x950] sm:$0xff]
    %v1256 = vld [vmem:[#allocation10 + $0x958] sm:$0xff]
    %v1257 = vld [vmem:[#allocation10 + $0x960] sm:$0xff]
    %v1258 = vld [vmem:[#allocation10 + $0x968] sm:$0xff]
    %v1259 = vld [vmem:[#allocation10 + $0x970] sm:$0xff]
    %v1260 = vld [vmem:[#allocation10 + $0x978] sm:$0xff]
    %v1261 = vld [vmem:[#allocation10 + $0x980] sm:$0xff]
    %v1262 = vld [vmem:[#allocation10 + $0x988] sm:$0xff]
    %v1263 = vld [vmem:[#allocation10 + $0x990] sm:$0xff]
    %v1264 = vld [vmem:[#allocation10 + $0x998] sm:$0xff]
    %v1265 = vld [vmem:[#allocation10 + $0x9a0] sm:$0xff]
    %v1266 = vld [vmem:[#allocation10 + $0x9a8] sm:$0xff]
    %v1267 = vld [vmem:[#allocation10 + $0x9b0] sm:$0xff]
    %v1268 = vld [vmem:[#allocation10 + $0x9b8] sm:$0xff]
    %v1269 = vld [vmem:[#allocation10 + $0x9c0] sm:$0xff]
    %v1270 = vld [vmem:[#allocation10 + $0x9c8] sm:$0xff]
    %v1271 = vld [vmem:[#allocation10 + $0x9d0] sm:$0xff]
    %v1272 = vld [vmem:[#allocation10 + $0x9d8] sm:$0xff]
    %v1273 = vld [vmem:[#allocation10 + $0x9e0] sm:$0xff]
    %v1274 = vld [vmem:[#allocation10 + $0x9e8] sm:$0xff]
    %v1275 = vld [vmem:[#allocation10 + $0x9f0] sm:$0xff]
    %v1276 = vld [vmem:[#allocation10 + $0x9f8] sm:$0xff]
    %v1277 = vld [vmem:[#allocation10 + $0xa00] sm:$0xff]
    %v1278 = vld [vmem:[#allocation10 + $0xa08] sm:$0xff]
    %v1279 = vld [vmem:[#allocation10 + $0xa10] sm:$0xff]
    %v1280 = vld [vmem:[#allocation10 + $0xa18] sm:$0xff]
    %v1281 = vld [vmem:[#allocation10 + $0xa20] sm:$0xff]
    %v1282 = vld [vmem:[#allocation10 + $0xa28] sm:$0xff]
    %v1283 = vld [vmem:[#allocation10 + $0xa30] sm:$0xff]
    %v1284 = vld [vmem:[#allocation10 + $0xa38] sm:$0xff]
    %v1285 = vld [vmem:[#allocation10 + $0xa40] sm:$0xff]
    %v1286 = vld [vmem:[#allocation10 + $0xa48] sm:$0xff]
    %v1287 = vld [vmem:[#allocation10 + $0xa50] sm:$0xff]
    %v1288 = vld [vmem:[#allocation10 + $0xa58] sm:$0xff]
    %v1289 = vld [vmem:[#allocation10 + $0xa60] sm:$0xff]
    %v1290 = vld [vmem:[#allocation10 + $0xa68] sm:$0xff]
    %v1291 = vld [vmem:[#allocation10 + $0xa70] sm:$0xff]
    %v1292 = vld [vmem:[#allocation10 + $0xa78] sm:$0xff]
    %v1293 = vld [vmem:[#allocation10 + $0xa80] sm:$0xff]
    %v1294 = vld [vmem:[#allocation10 + $0xa88] sm:$0xff]
    %v1295 = vld [vmem:[#allocation10 + $0xa90] sm:$0xff]
    %v1296 = vld [vmem:[#allocation10 + $0xa98] sm:$0xff]
    %v1297 = vld [vmem:[#allocation10 + $0xaa0] sm:$0xff]
    %v1298 = vld [vmem:[#allocation10 + $0xaa8] sm:$0xff]
    %v1299 = vld [vmem:[#allocation10 + $0xab0] sm:$0xff]
    %v1300 = vld [vmem:[#allocation10 + $0xab8] sm:$0xff]
    %v1301 = vld [vmem:[#allocation10 + $0xac0] sm:$0xff]
    %v1302 = vld [vmem:[#allocation10 + $0xac8] sm:$0xff]
    %v1303 = vld [vmem:[#allocation10 + $0xad0] sm:$0xff]
    %v1304 = vld [vmem:[#allocation10 + $0xad8] sm:$0xff]
    %v1305 = vld [vmem:[#allocation10 + $0xae0] sm:$0xff]
    %v1306 = vld [vmem:[#allocation10 + $0xae8] sm:$0xff]
    %v1307 = vld [vmem:[#allocation10 + $0xaf0] sm:$0xff]
    %v1308 = vld [vmem:[#allocation10 + $0xaf8] sm:$0xff]
    %v1309 = vld [vmem:[#allocation10 + $0xb00] sm:$0xff]
    %v1310 = vld [vmem:[#allocation10 + $0xb08] sm:$0xff]
    %v1311 = vld [vmem:[#allocation10 + $0xb10] sm:$0xff]
    %v1312 = vld [vmem:[#allocation10 + $0xb18] sm:$0xff]
    %v1313 = vld [vmem:[#allocation10 + $0xb20] sm:$0xff]
    %v1314 = vld [vmem:[#allocation10 + $0xb28] sm:$0xff]
    %v1315 = vld [vmem:[#allocation10 + $0xb30] sm:$0xff]
    %v1316 = vld [vmem:[#allocation10 + $0xb38] sm:$0xff]
    %v1317 = vld [vmem:[#allocation10 + $0xb40] sm:$0xff]
    %v1318 = vld [vmem:[#allocation10 + $0xb48] sm:$0xff]
    %v1319 = vld [vmem:[#allocation10 + $0xb50] sm:$0xff]
    %v1320 = vld [vmem:[#allocation10 + $0xb58] sm:$0xff]
    %v1321 = vld [vmem:[#allocation10 + $0xb60] sm:$0xff]
    %v1322 = vld [vmem:[#allocation10 + $0xb68] sm:$0xff]
    %v1323 = vld [vmem:[#allocation10 + $0xb70] sm:$0xff]
    %v1324 = vld [vmem:[#allocation10 + $0xb78] sm:$0xff]
    %v1325 = vld [vmem:[#allocation10 + $0xb80] sm:$0xff]
    %v1326 = vld [vmem:[#allocation10 + $0xb88] sm:$0xff]
    %v1327 = vld [vmem:[#allocation10 + $0xb90] sm:$0xff]
    %v1328 = vld [vmem:[#allocation10 + $0xb98] sm:$0xff]
    %v1329 = vld [vmem:[#allocation10 + $0xba0] sm:$0xff]
    %v1330 = vld [vmem:[#allocation10 + $0xba8] sm:$0xff]
    %v1331 = vld [vmem:[#allocation10 + $0xbb0] sm:$0xff]
    %v1332 = vld [vmem:[#allocation10 + $0xbb8] sm:$0xff]
    %v1333 = vld [vmem:[#allocation10 + $0xbc0] sm:$0xff]
    %v1334 = vld [vmem:[#allocation10 + $0xbc8] sm:$0xff]
    %v1335 = vld [vmem:[#allocation10 + $0xbd0] sm:$0xff]
    %v1336 = vld [vmem:[#allocation10 + $0xbd8] sm:$0xff]
    %v1337 = vld [vmem:[#allocation10 + $0xbe0] sm:$0xff]
    %v1338 = vld [vmem:[#allocation10 + $0xbe8] sm:$0xff]
    %v1339 = vld [vmem:[#allocation10 + $0xbf0] sm:$0xff]
    %v1340 = vld [vmem:[#allocation10 + $0xbf8] sm:$0xff]
    %v1341 = vunpack.c.l.s8.bf16 %v957
    %v1342 = vunpack.c.l.s8.bf16 %v958
    %v1343 = vunpack.c.l.s8.bf16 %v959
    %v1344 = vunpack.c.l.s8.bf16 %v960
    %v1345 = vunpack.c.l.s8.bf16 %v961
    %v1346 = vunpack.c.l.s8.bf16 %v962
    %v1347 = vunpack.c.l.s8.bf16 %v963
    %v1348 = vunpack.c.l.s8.bf16 %v964
    %v1349 = vunpack.c.h.s8.bf16 %v957
    %v1350 = vunpack.c.h.s8.bf16 %v958
    %v1351 = vunpack.c.h.s8.bf16 %v959
    %v1352 = vunpack.c.h.s8.bf16 %v960
    %v1353 = vunpack.c.h.s8.bf16 %v961
    %v1354 = vunpack.c.h.s8.bf16 %v962
    %v1355 = vunpack.c.h.s8.bf16 %v963
    %v1356 = vunpack.c.h.s8.bf16 %v964
    %v1357 = vunpack.c.l.s8.bf16 %v965
    %v1358 = vunpack.c.l.s8.bf16 %v966
    %v1359 = vunpack.c.l.s8.bf16 %v967
    %v1360 = vunpack.c.l.s8.bf16 %v968
    %v1361 = vunpack.c.l.s8.bf16 %v969
    %v1362 = vunpack.c.l.s8.bf16 %v970
    %v1363 = vunpack.c.l.s8.bf16 %v971
    %v1364 = vunpack.c.l.s8.bf16 %v972
    %v1365 = vunpack.c.h.s8.bf16 %v965
    %v1366 = vunpack.c.h.s8.bf16 %v966
    %v1367 = vunpack.c.h.s8.bf16 %v967
    %v1368 = vunpack.c.h.s8.bf16 %v968
    %v1369 = vunpack.c.h.s8.bf16 %v969
    %v1370 = vunpack.c.h.s8.bf16 %v970
    %v1371 = vunpack.c.h.s8.bf16 %v971
    %v1372 = vunpack.c.h.s8.bf16 %v972
    %v1373 = vunpack.c.l.s8.bf16 %v973
    %v1374 = vunpack.c.l.s8.bf16 %v974
    %v1375 = vunpack.c.l.s8.bf16 %v975
    %v1376 = vunpack.c.l.s8.bf16 %v976
    %v1377 = vunpack.c.l.s8.bf16 %v977
    %v1378 = vunpack.c.l.s8.bf16 %v978
    %v1379 = vunpack.c.l.s8.bf16 %v979
    %v1380 = vunpack.c.l.s8.bf16 %v980
    %v1381 = vunpack.c.h.s8.bf16 %v973
    %v1382 = vunpack.c.h.s8.bf16 %v974
    %v1383 = vunpack.c.h.s8.bf16 %v975
    %v1384 = vunpack.c.h.s8.bf16 %v976
    %v1385 = vunpack.c.h.s8.bf16 %v977
    %v1386 = vunpack.c.h.s8.bf16 %v978
    %v1387 = vunpack.c.h.s8.bf16 %v979
    %v1388 = vunpack.c.h.s8.bf16 %v980
    %v1389 = vunpack.c.l.s8.bf16 %v981
    %v1390 = vunpack.c.l.s8.bf16 %v982
    %v1391 = vunpack.c.l.s8.bf16 %v983
    %v1392 = vunpack.c.l.s8.bf16 %v984
    %v1393 = vunpack.c.l.s8.bf16 %v985
    %v1394 = vunpack.c.l.s8.bf16 %v986
    %v1395 = vunpack.c.l.s8.bf16 %v987
    %v1396 = vunpack.c.l.s8.bf16 %v988
    %v1397 = vunpack.c.h.s8.bf16 %v981
    %v1398 = vunpack.c.h.s8.bf16 %v982
    %v1399 = vunpack.c.h.s8.bf16 %v983
    %v1400 = vunpack.c.h.s8.bf16 %v984
    %v1401 = vunpack.c.h.s8.bf16 %v985
    %v1402 = vunpack.c.h.s8.bf16 %v986
    %v1403 = vunpack.c.h.s8.bf16 %v987
    %v1404 = vunpack.c.h.s8.bf16 %v988
    %v1405 = vunpack.c.l.s8.bf16 %v989
    %v1406 = vunpack.c.l.s8.bf16 %v990
    %v1407 = vunpack.c.l.s8.bf16 %v991
    %v1408 = vunpack.c.l.s8.bf16 %v992
    %v1409 = vunpack.c.l.s8.bf16 %v993
    %v1410 = vunpack.c.l.s8.bf16 %v994
    %v1411 = vunpack.c.l.s8.bf16 %v995
    %v1412 = vunpack.c.l.s8.bf16 %v996
    %v1413 = vunpack.c.h.s8.bf16 %v989
    %v1414 = vunpack.c.h.s8.bf16 %v990
    %v1415 = vunpack.c.h.s8.bf16 %v991
    %v1416 = vunpack.c.h.s8.bf16 %v992
    %v1417 = vunpack.c.h.s8.bf16 %v993
    %v1418 = vunpack.c.h.s8.bf16 %v994
    %v1419 = vunpack.c.h.s8.bf16 %v995
    %v1420 = vunpack.c.h.s8.bf16 %v996
    %v1421 = vunpack.c.l.s8.bf16 %v997
    %v1422 = vunpack.c.l.s8.bf16 %v998
    %v1423 = vunpack.c.l.s8.bf16 %v999
    %v1424 = vunpack.c.l.s8.bf16 %v1000
    %v1425 = vunpack.c.l.s8.bf16 %v1001
    %v1426 = vunpack.c.l.s8.bf16 %v1002
    %v1427 = vunpack.c.l.s8.bf16 %v1003
    %v1428 = vunpack.c.l.s8.bf16 %v1004
    %v1429 = vunpack.c.h.s8.bf16 %v997
    %v1430 = vunpack.c.h.s8.bf16 %v998
    %v1431 = vunpack.c.h.s8.bf16 %v999
    %v1432 = vunpack.c.h.s8.bf16 %v1000
    %v1433 = vunpack.c.h.s8.bf16 %v1001
    %v1434 = vunpack.c.h.s8.bf16 %v1002
    %v1435 = vunpack.c.h.s8.bf16 %v1003
    %v1436 = vunpack.c.h.s8.bf16 %v1004
    %v1437 = vunpack.c.l.s8.bf16 %v1005
    %v1438 = vunpack.c.l.s8.bf16 %v1006
    %v1439 = vunpack.c.l.s8.bf16 %v1007
    %v1440 = vunpack.c.l.s8.bf16 %v1008
    %v1441 = vunpack.c.l.s8.bf16 %v1009
    %v1442 = vunpack.c.l.s8.bf16 %v1010
    %v1443 = vunpack.c.l.s8.bf16 %v1011
    %v1444 = vunpack.c.l.s8.bf16 %v1012
    %v1445 = vunpack.c.h.s8.bf16 %v1005
    %v1446 = vunpack.c.h.s8.bf16 %v1006
    %v1447 = vunpack.c.h.s8.bf16 %v1007
    %v1448 = vunpack.c.h.s8.bf16 %v1008
    %v1449 = vunpack.c.h.s8.bf16 %v1009
    %v1450 = vunpack.c.h.s8.bf16 %v1010
    %v1451 = vunpack.c.h.s8.bf16 %v1011
    %v1452 = vunpack.c.h.s8.bf16 %v1012
    %v1453 = vunpack.c.l.s8.bf16 %v1013
    %v1454 = vunpack.c.l.s8.bf16 %v1014
    %v1455 = vunpack.c.l.s8.bf16 %v1015
    %v1456 = vunpack.c.l.s8.bf16 %v1016
    %v1457 = vunpack.c.l.s8.bf16 %v1017
    %v1458 = vunpack.c.l.s8.bf16 %v1018
    %v1459 = vunpack.c.l.s8.bf16 %v1019
    %v1460 = vunpack.c.l.s8.bf16 %v1020
    %v1461 = vunpack.c.h.s8.bf16 %v1013
    %v1462 = vunpack.c.h.s8.bf16 %v1014
    %v1463 = vunpack.c.h.s8.bf16 %v1015
    %v1464 = vunpack.c.h.s8.bf16 %v1016
    %v1465 = vunpack.c.h.s8.bf16 %v1017
    %v1466 = vunpack.c.h.s8.bf16 %v1018
    %v1467 = vunpack.c.h.s8.bf16 %v1019
    %v1468 = vunpack.c.h.s8.bf16 %v1020
    %v1469 = vunpack.c.l.s8.bf16 %v1021
    %v1470 = vunpack.c.l.s8.bf16 %v1022
    %v1471 = vunpack.c.l.s8.bf16 %v1023
    %v1472 = vunpack.c.l.s8.bf16 %v1024
    %v1473 = vunpack.c.l.s8.bf16 %v1025
    %v1474 = vunpack.c.l.s8.bf16 %v1026
    %v1475 = vunpack.c.l.s8.bf16 %v1027
    %v1476 = vunpack.c.l.s8.bf16 %v1028
    %v1477 = vunpack.c.h.s8.bf16 %v1021
    %v1478 = vunpack.c.h.s8.bf16 %v1022
    %v1479 = vunpack.c.h.s8.bf16 %v1023
    %v1480 = vunpack.c.h.s8.bf16 %v1024
    %v1481 = vunpack.c.h.s8.bf16 %v1025
    %v1482 = vunpack.c.h.s8.bf16 %v1026
    %v1483 = vunpack.c.h.s8.bf16 %v1027
    %v1484 = vunpack.c.h.s8.bf16 %v1028
    %v1485 = vunpack.c.l.s8.bf16 %v1029
    %v1486 = vunpack.c.l.s8.bf16 %v1030
    %v1487 = vunpack.c.l.s8.bf16 %v1031
    %v1488 = vunpack.c.l.s8.bf16 %v1032
    %v1489 = vunpack.c.l.s8.bf16 %v1033
    %v1490 = vunpack.c.l.s8.bf16 %v1034
    %v1491 = vunpack.c.l.s8.bf16 %v1035
    %v1492 = vunpack.c.l.s8.bf16 %v1036
    %v1493 = vunpack.c.h.s8.bf16 %v1029
    %v1494 = vunpack.c.h.s8.bf16 %v1030
    %v1495 = vunpack.c.h.s8.bf16 %v1031
    %v1496 = vunpack.c.h.s8.bf16 %v1032
    %v1497 = vunpack.c.h.s8.bf16 %v1033
    %v1498 = vunpack.c.h.s8.bf16 %v1034
    %v1499 = vunpack.c.h.s8.bf16 %v1035
    %v1500 = vunpack.c.h.s8.bf16 %v1036
    %v1501 = vunpack.c.l.s8.bf16 %v1037
    %v1502 = vunpack.c.l.s8.bf16 %v1038
    %v1503 = vunpack.c.l.s8.bf16 %v1039
    %v1504 = vunpack.c.l.s8.bf16 %v1040
    %v1505 = vunpack.c.l.s8.bf16 %v1041
    %v1506 = vunpack.c.l.s8.bf16 %v1042
    %v1507 = vunpack.c.l.s8.bf16 %v1043
    %v1508 = vunpack.c.l.s8.bf16 %v1044
    %v1509 = vunpack.c.h.s8.bf16 %v1037
    %v1510 = vunpack.c.h.s8.bf16 %v1038
    %v1511 = vunpack.c.h.s8.bf16 %v1039
    %v1512 = vunpack.c.h.s8.bf16 %v1040
    %v1513 = vunpack.c.h.s8.bf16 %v1041
    %v1514 = vunpack.c.h.s8.bf16 %v1042
    %v1515 = vunpack.c.h.s8.bf16 %v1043
    %v1516 = vunpack.c.h.s8.bf16 %v1044
    %v1517 = vunpack.c.l.s8.bf16 %v1045
    %v1518 = vunpack.c.l.s8.bf16 %v1046
    %v1519 = vunpack.c.l.s8.bf16 %v1047
    %v1520 = vunpack.c.l.s8.bf16 %v1048
    %v1521 = vunpack.c.l.s8.bf16 %v1049
    %v1522 = vunpack.c.l.s8.bf16 %v1050
    %v1523 = vunpack.c.l.s8.bf16 %v1051
    %v1524 = vunpack.c.l.s8.bf16 %v1052
    %v1525 = vunpack.c.h.s8.bf16 %v1045
    %v1526 = vunpack.c.h.s8.bf16 %v1046
    %v1527 = vunpack.c.h.s8.bf16 %v1047
    %v1528 = vunpack.c.h.s8.bf16 %v1048
    %v1529 = vunpack.c.h.s8.bf16 %v1049
    %v1530 = vunpack.c.h.s8.bf16 %v1050
    %v1531 = vunpack.c.h.s8.bf16 %v1051
    %v1532 = vunpack.c.h.s8.bf16 %v1052
    %v1533 = vunpack.c.l.s8.bf16 %v1053
    %v1534 = vunpack.c.l.s8.bf16 %v1054
    %v1535 = vunpack.c.l.s8.bf16 %v1055
    %v1536 = vunpack.c.l.s8.bf16 %v1056
    %v1537 = vunpack.c.l.s8.bf16 %v1057
    %v1538 = vunpack.c.l.s8.bf16 %v1058
    %v1539 = vunpack.c.l.s8.bf16 %v1059
    %v1540 = vunpack.c.l.s8.bf16 %v1060
    %v1541 = vunpack.c.h.s8.bf16 %v1053
    %v1542 = vunpack.c.h.s8.bf16 %v1054
    %v1543 = vunpack.c.h.s8.bf16 %v1055
    %v1544 = vunpack.c.h.s8.bf16 %v1056
    %v1545 = vunpack.c.h.s8.bf16 %v1057
    %v1546 = vunpack.c.h.s8.bf16 %v1058
    %v1547 = vunpack.c.h.s8.bf16 %v1059
    %v1548 = vunpack.c.h.s8.bf16 %v1060
    %v1549 = vunpack.c.l.s8.bf16 %v1061
    %v1550 = vunpack.c.l.s8.bf16 %v1062
    %v1551 = vunpack.c.l.s8.bf16 %v1063
    %v1552 = vunpack.c.l.s8.bf16 %v1064
    %v1553 = vunpack.c.l.s8.bf16 %v1065
    %v1554 = vunpack.c.l.s8.bf16 %v1066
    %v1555 = vunpack.c.l.s8.bf16 %v1067
    %v1556 = vunpack.c.l.s8.bf16 %v1068
    %v1557 = vunpack.c.h.s8.bf16 %v1061
    %v1558 = vunpack.c.h.s8.bf16 %v1062
    %v1559 = vunpack.c.h.s8.bf16 %v1063
    %v1560 = vunpack.c.h.s8.bf16 %v1064
    %v1561 = vunpack.c.h.s8.bf16 %v1065
    %v1562 = vunpack.c.h.s8.bf16 %v1066
    %v1563 = vunpack.c.h.s8.bf16 %v1067
    %v1564 = vunpack.c.h.s8.bf16 %v1068
    %v1565 = vunpack.c.l.s8.bf16 %v1069
    %v1566 = vunpack.c.l.s8.bf16 %v1070
    %v1567 = vunpack.c.l.s8.bf16 %v1071
    %v1568 = vunpack.c.l.s8.bf16 %v1072
    %v1569 = vunpack.c.l.s8.bf16 %v1073
    %v1570 = vunpack.c.l.s8.bf16 %v1074
    %v1571 = vunpack.c.l.s8.bf16 %v1075
    %v1572 = vunpack.c.l.s8.bf16 %v1076
    %v1573 = vunpack.c.h.s8.bf16 %v1069
    %v1574 = vunpack.c.h.s8.bf16 %v1070
    %v1575 = vunpack.c.h.s8.bf16 %v1071
    %v1576 = vunpack.c.h.s8.bf16 %v1072
    %v1577 = vunpack.c.h.s8.bf16 %v1073
    %v1578 = vunpack.c.h.s8.bf16 %v1074
    %v1579 = vunpack.c.h.s8.bf16 %v1075
    %v1580 = vunpack.c.h.s8.bf16 %v1076
    %v1581 = vunpack.c.l.s8.bf16 %v1077
    %v1582 = vunpack.c.l.s8.bf16 %v1078
    %v1583 = vunpack.c.l.s8.bf16 %v1079
    %v1584 = vunpack.c.l.s8.bf16 %v1080
    %v1585 = vunpack.c.l.s8.bf16 %v1081
    %v1586 = vunpack.c.l.s8.bf16 %v1082
    %v1587 = vunpack.c.l.s8.bf16 %v1083
    %v1588 = vunpack.c.l.s8.bf16 %v1084
    %v1589 = vunpack.c.h.s8.bf16 %v1077
    %v1590 = vunpack.c.h.s8.bf16 %v1078
    %v1591 = vunpack.c.h.s8.bf16 %v1079
    %v1592 = vunpack.c.h.s8.bf16 %v1080
    %v1593 = vunpack.c.h.s8.bf16 %v1081
    %v1594 = vunpack.c.h.s8.bf16 %v1082
    %v1595 = vunpack.c.h.s8.bf16 %v1083
    %v1596 = vunpack.c.h.s8.bf16 %v1084
    %v1597 = vunpack.c.l.s8.bf16 %v1085
    %v1598 = vunpack.c.l.s8.bf16 %v1086
    %v1599 = vunpack.c.l.s8.bf16 %v1087
    %v1600 = vunpack.c.l.s8.bf16 %v1088
    %v1601 = vunpack.c.l.s8.bf16 %v1089
    %v1602 = vunpack.c.l.s8.bf16 %v1090
    %v1603 = vunpack.c.l.s8.bf16 %v1091
    %v1604 = vunpack.c.l.s8.bf16 %v1092
    %v1605 = vunpack.c.h.s8.bf16 %v1085
    %v1606 = vunpack.c.h.s8.bf16 %v1086
    %v1607 = vunpack.c.h.s8.bf16 %v1087
    %v1608 = vunpack.c.h.s8.bf16 %v1088
    %v1609 = vunpack.c.h.s8.bf16 %v1089
    %v1610 = vunpack.c.h.s8.bf16 %v1090
    %v1611 = vunpack.c.h.s8.bf16 %v1091
    %v1612 = vunpack.c.h.s8.bf16 %v1092
    %v1613 = vunpack.c.l.s8.bf16 %v1093
    %v1614 = vunpack.c.l.s8.bf16 %v1094
    %v1615 = vunpack.c.l.s8.bf16 %v1095
    %v1616 = vunpack.c.l.s8.bf16 %v1096
    %v1617 = vunpack.c.l.s8.bf16 %v1097
    %v1618 = vunpack.c.l.s8.bf16 %v1098
    %v1619 = vunpack.c.l.s8.bf16 %v1099
    %v1620 = vunpack.c.l.s8.bf16 %v1100
    %v1621 = vunpack.c.h.s8.bf16 %v1093
    %v1622 = vunpack.c.h.s8.bf16 %v1094
    %v1623 = vunpack.c.h.s8.bf16 %v1095
    %v1624 = vunpack.c.h.s8.bf16 %v1096
    %v1625 = vunpack.c.h.s8.bf16 %v1097
    %v1626 = vunpack.c.h.s8.bf16 %v1098
    %v1627 = vunpack.c.h.s8.bf16 %v1099
    %v1628 = vunpack.c.h.s8.bf16 %v1100
    %v1629 = vunpack.c.l.s8.bf16 %v1101
    %v1630 = vunpack.c.l.s8.bf16 %v1102
    %v1631 = vunpack.c.l.s8.bf16 %v1103
    %v1632 = vunpack.c.l.s8.bf16 %v1104
    %v1633 = vunpack.c.l.s8.bf16 %v1105
    %v1634 = vunpack.c.l.s8.bf16 %v1106
    %v1635 = vunpack.c.l.s8.bf16 %v1107
    %v1636 = vunpack.c.l.s8.bf16 %v1108
    %v1637 = vunpack.c.h.s8.bf16 %v1101
    %v1638 = vunpack.c.h.s8.bf16 %v1102
    %v1639 = vunpack.c.h.s8.bf16 %v1103
    %v1640 = vunpack.c.h.s8.bf16 %v1104
    %v1641 = vunpack.c.h.s8.bf16 %v1105
    %v1642 = vunpack.c.h.s8.bf16 %v1106
    %v1643 = vunpack.c.h.s8.bf16 %v1107
    %v1644 = vunpack.c.h.s8.bf16 %v1108
    %v1645 = vunpack.c.l.s8.bf16 %v1109
    %v1646 = vunpack.c.l.s8.bf16 %v1110
    %v1647 = vunpack.c.l.s8.bf16 %v1111
    %v1648 = vunpack.c.l.s8.bf16 %v1112
    %v1649 = vunpack.c.l.s8.bf16 %v1113
    %v1650 = vunpack.c.l.s8.bf16 %v1114
    %v1651 = vunpack.c.l.s8.bf16 %v1115
    %v1652 = vunpack.c.l.s8.bf16 %v1116
    %v1653 = vunpack.c.h.s8.bf16 %v1109
    %v1654 = vunpack.c.h.s8.bf16 %v1110
    %v1655 = vunpack.c.h.s8.bf16 %v1111
    %v1656 = vunpack.c.h.s8.bf16 %v1112
    %v1657 = vunpack.c.h.s8.bf16 %v1113
    %v1658 = vunpack.c.h.s8.bf16 %v1114
    %v1659 = vunpack.c.h.s8.bf16 %v1115
    %v1660 = vunpack.c.h.s8.bf16 %v1116
    %v1661 = vunpack.c.l.s8.bf16 %v1117
    %v1662 = vunpack.c.l.s8.bf16 %v1118
    %v1663 = vunpack.c.l.s8.bf16 %v1119
    %v1664 = vunpack.c.l.s8.bf16 %v1120
    %v1665 = vunpack.c.l.s8.bf16 %v1121
    %v1666 = vunpack.c.l.s8.bf16 %v1122
    %v1667 = vunpack.c.l.s8.bf16 %v1123
    %v1668 = vunpack.c.l.s8.bf16 %v1124
    %v1669 = vunpack.c.h.s8.bf16 %v1117
    %v1670 = vunpack.c.h.s8.bf16 %v1118
    %v1671 = vunpack.c.h.s8.bf16 %v1119
    %v1672 = vunpack.c.h.s8.bf16 %v1120
    %v1673 = vunpack.c.h.s8.bf16 %v1121
    %v1674 = vunpack.c.h.s8.bf16 %v1122
    %v1675 = vunpack.c.h.s8.bf16 %v1123
    %v1676 = vunpack.c.h.s8.bf16 %v1124
    %v1677 = vunpack.c.l.s8.bf16 %v1125
    %v1678 = vunpack.c.l.s8.bf16 %v1126
    %v1679 = vunpack.c.l.s8.bf16 %v1127
    %v1680 = vunpack.c.l.s8.bf16 %v1128
    %v1681 = vunpack.c.l.s8.bf16 %v1129
    %v1682 = vunpack.c.l.s8.bf16 %v1130
    %v1683 = vunpack.c.l.s8.bf16 %v1131
    %v1684 = vunpack.c.l.s8.bf16 %v1132
    %v1685 = vunpack.c.h.s8.bf16 %v1125
    %v1686 = vunpack.c.h.s8.bf16 %v1126
    %v1687 = vunpack.c.h.s8.bf16 %v1127
    %v1688 = vunpack.c.h.s8.bf16 %v1128
    %v1689 = vunpack.c.h.s8.bf16 %v1129
    %v1690 = vunpack.c.h.s8.bf16 %v1130
    %v1691 = vunpack.c.h.s8.bf16 %v1131
    %v1692 = vunpack.c.h.s8.bf16 %v1132
    %v1693 = vunpack.c.l.s8.bf16 %v1133
    %v1694 = vunpack.c.l.s8.bf16 %v1134
    %v1695 = vunpack.c.l.s8.bf16 %v1135
    %v1696 = vunpack.c.l.s8.bf16 %v1136
    %v1697 = vunpack.c.l.s8.bf16 %v1137
    %v1698 = vunpack.c.l.s8.bf16 %v1138
    %v1699 = vunpack.c.l.s8.bf16 %v1139
    %v1700 = vunpack.c.l.s8.bf16 %v1140
    %v1701 = vunpack.c.h.s8.bf16 %v1133
    %v1702 = vunpack.c.h.s8.bf16 %v1134
    %v1703 = vunpack.c.h.s8.bf16 %v1135
    %v1704 = vunpack.c.h.s8.bf16 %v1136
    %v1705 = vunpack.c.h.s8.bf16 %v1137
    %v1706 = vunpack.c.h.s8.bf16 %v1138
    %v1707 = vunpack.c.h.s8.bf16 %v1139
    %v1708 = vunpack.c.h.s8.bf16 %v1140
    %v1709 = vunpack.c.l.s8.bf16 %v1141
    %v1710 = vunpack.c.l.s8.bf16 %v1142
    %v1711 = vunpack.c.l.s8.bf16 %v1143
    %v1712 = vunpack.c.l.s8.bf16 %v1144
    %v1713 = vunpack.c.l.s8.bf16 %v1145
    %v1714 = vunpack.c.l.s8.bf16 %v1146
    %v1715 = vunpack.c.l.s8.bf16 %v1147
    %v1716 = vunpack.c.l.s8.bf16 %v1148
    %v1717 = vunpack.c.h.s8.bf16 %v1141
    %v1718 = vunpack.c.h.s8.bf16 %v1142
    %v1719 = vunpack.c.h.s8.bf16 %v1143
    %v1720 = vunpack.c.h.s8.bf16 %v1144
    %v1721 = vunpack.c.h.s8.bf16 %v1145
    %v1722 = vunpack.c.h.s8.bf16 %v1146
    %v1723 = vunpack.c.h.s8.bf16 %v1147
    %v1724 = vunpack.c.h.s8.bf16 %v1148
    %v1725 = vunpack.c.l.s8.bf16 %v1149
    %v1726 = vunpack.c.l.s8.bf16 %v1150
    %v1727 = vunpack.c.l.s8.bf16 %v1151
    %v1728 = vunpack.c.l.s8.bf16 %v1152
    %v1729 = vunpack.c.l.s8.bf16 %v1153
    %v1730 = vunpack.c.l.s8.bf16 %v1154
    %v1731 = vunpack.c.l.s8.bf16 %v1155
    %v1732 = vunpack.c.l.s8.bf16 %v1156
    %v1733 = vunpack.c.h.s8.bf16 %v1149
    %v1734 = vunpack.c.h.s8.bf16 %v1150
    %v1735 = vunpack.c.h.s8.bf16 %v1151
    %v1736 = vunpack.c.h.s8.bf16 %v1152
    %v1737 = vunpack.c.h.s8.bf16 %v1153
    %v1738 = vunpack.c.h.s8.bf16 %v1154
    %v1739 = vunpack.c.h.s8.bf16 %v1155
    %v1740 = vunpack.c.h.s8.bf16 %v1156
    %v1741 = vunpack.c.l.s8.bf16 %v1157
    %v1742 = vunpack.c.l.s8.bf16 %v1158
    %v1743 = vunpack.c.l.s8.bf16 %v1159
    %v1744 = vunpack.c.l.s8.bf16 %v1160
    %v1745 = vunpack.c.l.s8.bf16 %v1161
    %v1746 = vunpack.c.l.s8.bf16 %v1162
    %v1747 = vunpack.c.l.s8.bf16 %v1163
    %v1748 = vunpack.c.l.s8.bf16 %v1164
    %v1749 = vunpack.c.h.s8.bf16 %v1157
    %v1750 = vunpack.c.h.s8.bf16 %v1158
    %v1751 = vunpack.c.h.s8.bf16 %v1159
    %v1752 = vunpack.c.h.s8.bf16 %v1160
    %v1753 = vunpack.c.h.s8.bf16 %v1161
    %v1754 = vunpack.c.h.s8.bf16 %v1162
    %v1755 = vunpack.c.h.s8.bf16 %v1163
    %v1756 = vunpack.c.h.s8.bf16 %v1164
    %v1757 = vunpack.c.l.s8.bf16 %v1165
    %v1758 = vunpack.c.l.s8.bf16 %v1166
    %v1759 = vunpack.c.l.s8.bf16 %v1167
    %v1760 = vunpack.c.l.s8.bf16 %v1168
    %v1761 = vunpack.c.l.s8.bf16 %v1169
    %v1762 = vunpack.c.l.s8.bf16 %v1170
    %v1763 = vunpack.c.l.s8.bf16 %v1171
    %v1764 = vunpack.c.l.s8.bf16 %v1172
    %v1765 = vunpack.c.h.s8.bf16 %v1165
    %v1766 = vunpack.c.h.s8.bf16 %v1166
    %v1767 = vunpack.c.h.s8.bf16 %v1167
    %v1768 = vunpack.c.h.s8.bf16 %v1168
    %v1769 = vunpack.c.h.s8.bf16 %v1169
    %v1770 = vunpack.c.h.s8.bf16 %v1170
    %v1771 = vunpack.c.h.s8.bf16 %v1171
    %v1772 = vunpack.c.h.s8.bf16 %v1172
    %v1773 = vunpack.c.l.s8.bf16 %v1173
    %v1774 = vunpack.c.l.s8.bf16 %v1174
    %v1775 = vunpack.c.l.s8.bf16 %v1175
    %v1776 = vunpack.c.l.s8.bf16 %v1176
    %v1777 = vunpack.c.l.s8.bf16 %v1177
    %v1778 = vunpack.c.l.s8.bf16 %v1178
    %v1779 = vunpack.c.l.s8.bf16 %v1179
    %v1780 = vunpack.c.l.s8.bf16 %v1180
    %v1781 = vunpack.c.h.s8.bf16 %v1173
    %v1782 = vunpack.c.h.s8.bf16 %v1174
    %v1783 = vunpack.c.h.s8.bf16 %v1175
    %v1784 = vunpack.c.h.s8.bf16 %v1176
    %v1785 = vunpack.c.h.s8.bf16 %v1177
    %v1786 = vunpack.c.h.s8.bf16 %v1178
    %v1787 = vunpack.c.h.s8.bf16 %v1179
    %v1788 = vunpack.c.h.s8.bf16 %v1180
    %v1789 = vunpack.c.l.s8.bf16 %v1181
    %v1790 = vunpack.c.l.s8.bf16 %v1182
    %v1791 = vunpack.c.l.s8.bf16 %v1183
    %v1792 = vunpack.c.l.s8.bf16 %v1184
    %v1793 = vunpack.c.l.s8.bf16 %v1185
    %v1794 = vunpack.c.l.s8.bf16 %v1186
    %v1795 = vunpack.c.l.s8.bf16 %v1187
    %v1796 = vunpack.c.l.s8.bf16 %v1188
    %v1797 = vunpack.c.h.s8.bf16 %v1181
    %v1798 = vunpack.c.h.s8.bf16 %v1182
    %v1799 = vunpack.c.h.s8.bf16 %v1183
    %v1800 = vunpack.c.h.s8.bf16 %v1184
    %v1801 = vunpack.c.h.s8.bf16 %v1185
    %v1802 = vunpack.c.h.s8.bf16 %v1186
    %v1803 = vunpack.c.h.s8.bf16 %v1187
    %v1804 = vunpack.c.h.s8.bf16 %v1188
    %v1805 = vunpack.c.l.s8.bf16 %v1189
    %v1806 = vunpack.c.l.s8.bf16 %v1190
    %v1807 = vunpack.c.l.s8.bf16 %v1191
    %v1808 = vunpack.c.l.s8.bf16 %v1192
    %v1809 = vunpack.c.l.s8.bf16 %v1193
    %v1810 = vunpack.c.l.s8.bf16 %v1194
    %v1811 = vunpack.c.l.s8.bf16 %v1195
    %v1812 = vunpack.c.l.s8.bf16 %v1196
    %v1813 = vunpack.c.h.s8.bf16 %v1189
    %v1814 = vunpack.c.h.s8.bf16 %v1190
    %v1815 = vunpack.c.h.s8.bf16 %v1191
    %v1816 = vunpack.c.h.s8.bf16 %v1192
    %v1817 = vunpack.c.h.s8.bf16 %v1193
    %v1818 = vunpack.c.h.s8.bf16 %v1194
    %v1819 = vunpack.c.h.s8.bf16 %v1195
    %v1820 = vunpack.c.h.s8.bf16 %v1196
    %v1821 = vunpack.c.l.s8.bf16 %v1197
    %v1822 = vunpack.c.l.s8.bf16 %v1198
    %v1823 = vunpack.c.l.s8.bf16 %v1199
    %v1824 = vunpack.c.l.s8.bf16 %v1200
    %v1825 = vunpack.c.l.s8.bf16 %v1201
    %v1826 = vunpack.c.l.s8.bf16 %v1202
    %v1827 = vunpack.c.l.s8.bf16 %v1203
    %v1828 = vunpack.c.l.s8.bf16 %v1204
    %v1829 = vunpack.c.h.s8.bf16 %v1197
    %v1830 = vunpack.c.h.s8.bf16 %v1198
    %v1831 = vunpack.c.h.s8.bf16 %v1199
    %v1832 = vunpack.c.h.s8.bf16 %v1200
    %v1833 = vunpack.c.h.s8.bf16 %v1201
    %v1834 = vunpack.c.h.s8.bf16 %v1202
    %v1835 = vunpack.c.h.s8.bf16 %v1203
    %v1836 = vunpack.c.h.s8.bf16 %v1204
    %v1837 = vunpack.c.l.s8.bf16 %v1205
    %v1838 = vunpack.c.l.s8.bf16 %v1206
    %v1839 = vunpack.c.l.s8.bf16 %v1207
    %v1840 = vunpack.c.l.s8.bf16 %v1208
    %v1841 = vunpack.c.l.s8.bf16 %v1209
    %v1842 = vunpack.c.l.s8.bf16 %v1210
    %v1843 = vunpack.c.l.s8.bf16 %v1211
    %v1844 = vunpack.c.l.s8.bf16 %v1212
    %v1845 = vunpack.c.h.s8.bf16 %v1205
    %v1846 = vunpack.c.h.s8.bf16 %v1206
    %v1847 = vunpack.c.h.s8.bf16 %v1207
    %v1848 = vunpack.c.h.s8.bf16 %v1208
    %v1849 = vunpack.c.h.s8.bf16 %v1209
    %v1850 = vunpack.c.h.s8.bf16 %v1210
    %v1851 = vunpack.c.h.s8.bf16 %v1211
    %v1852 = vunpack.c.h.s8.bf16 %v1212
    %v1853 = vunpack.c.l.s8.bf16 %v1213
    %v1854 = vunpack.c.l.s8.bf16 %v1214
    %v1855 = vunpack.c.l.s8.bf16 %v1215
    %v1856 = vunpack.c.l.s8.bf16 %v1216
    %v1857 = vunpack.c.l.s8.bf16 %v1217
    %v1858 = vunpack.c.l.s8.bf16 %v1218
    %v1859 = vunpack.c.l.s8.bf16 %v1219
    %v1860 = vunpack.c.l.s8.bf16 %v1220
    %v1861 = vunpack.c.h.s8.bf16 %v1213
    %v1862 = vunpack.c.h.s8.bf16 %v1214
    %v1863 = vunpack.c.h.s8.bf16 %v1215
    %v1864 = vunpack.c.h.s8.bf16 %v1216
    %v1865 = vunpack.c.h.s8.bf16 %v1217
    %v1866 = vunpack.c.h.s8.bf16 %v1218
    %v1867 = vunpack.c.h.s8.bf16 %v1219
    %v1868 = vunpack.c.h.s8.bf16 %v1220
    %v1869 = vunpack.c.l.s8.bf16 %v1221
    %v1870 = vunpack.c.l.s8.bf16 %v1222
    %v1871 = vunpack.c.l.s8.bf16 %v1223
    %v1872 = vunpack.c.l.s8.bf16 %v1224
    %v1873 = vunpack.c.l.s8.bf16 %v1225
    %v1874 = vunpack.c.l.s8.bf16 %v1226
    %v1875 = vunpack.c.l.s8.bf16 %v1227
    %v1876 = vunpack.c.l.s8.bf16 %v1228
    %v1877 = vunpack.c.h.s8.bf16 %v1221
    %v1878 = vunpack.c.h.s8.bf16 %v1222
    %v1879 = vunpack.c.h.s8.bf16 %v1223
    %v1880 = vunpack.c.h.s8.bf16 %v1224
    %v1881 = vunpack.c.h.s8.bf16 %v1225
    %v1882 = vunpack.c.h.s8.bf16 %v1226
    %v1883 = vunpack.c.h.s8.bf16 %v1227
    %v1884 = vunpack.c.h.s8.bf16 %v1228
    %v1885 = vunpack.c.l.s8.bf16 %v1229
    %v1886 = vunpack.c.l.s8.bf16 %v1230
    %v1887 = vunpack.c.l.s8.bf16 %v1231
    %v1888 = vunpack.c.l.s8.bf16 %v1232
    %v1889 = vunpack.c.l.s8.bf16 %v1233
    %v1890 = vunpack.c.l.s8.bf16 %v1234
    %v1891 = vunpack.c.l.s8.bf16 %v1235
    %v1892 = vunpack.c.l.s8.bf16 %v1236
    %v1893 = vunpack.c.h.s8.bf16 %v1229
    %v1894 = vunpack.c.h.s8.bf16 %v1230
    %v1895 = vunpack.c.h.s8.bf16 %v1231
    %v1896 = vunpack.c.h.s8.bf16 %v1232
    %v1897 = vunpack.c.h.s8.bf16 %v1233
    %v1898 = vunpack.c.h.s8.bf16 %v1234
    %v1899 = vunpack.c.h.s8.bf16 %v1235
    %v1900 = vunpack.c.h.s8.bf16 %v1236
    %v1901 = vunpack.c.l.s8.bf16 %v1237
    %v1902 = vunpack.c.l.s8.bf16 %v1238
    %v1903 = vunpack.c.l.s8.bf16 %v1239
    %v1904 = vunpack.c.l.s8.bf16 %v1240
    %v1905 = vunpack.c.l.s8.bf16 %v1241
    %v1906 = vunpack.c.l.s8.bf16 %v1242
    %v1907 = vunpack.c.l.s8.bf16 %v1243
    %v1908 = vunpack.c.l.s8.bf16 %v1244
    %v1909 = vunpack.c.h.s8.bf16 %v1237
    %v1910 = vunpack.c.h.s8.bf16 %v1238
    %v1911 = vunpack.c.h.s8.bf16 %v1239
    %v1912 = vunpack.c.h.s8.bf16 %v1240
    %v1913 = vunpack.c.h.s8.bf16 %v1241
    %v1914 = vunpack.c.h.s8.bf16 %v1242
    %v1915 = vunpack.c.h.s8.bf16 %v1243
    %v1916 = vunpack.c.h.s8.bf16 %v1244
    %v1917 = vunpack.c.l.s8.bf16 %v1245
    %v1918 = vunpack.c.l.s8.bf16 %v1246
    %v1919 = vunpack.c.l.s8.bf16 %v1247
    %v1920 = vunpack.c.l.s8.bf16 %v1248
    %v1921 = vunpack.c.l.s8.bf16 %v1249
    %v1922 = vunpack.c.l.s8.bf16 %v1250
    %v1923 = vunpack.c.l.s8.bf16 %v1251
    %v1924 = vunpack.c.l.s8.bf16 %v1252
    %v1925 = vunpack.c.h.s8.bf16 %v1245
    %v1926 = vunpack.c.h.s8.bf16 %v1246
    %v1927 = vunpack.c.h.s8.bf16 %v1247
    %v1928 = vunpack.c.h.s8.bf16 %v1248
    %v1929 = vunpack.c.h.s8.bf16 %v1249
    %v1930 = vunpack.c.h.s8.bf16 %v1250
    %v1931 = vunpack.c.h.s8.bf16 %v1251
    %v1932 = vunpack.c.h.s8.bf16 %v1252
    %v1933 = vunpack.c.l.s8.bf16 %v1253
    %v1934 = vunpack.c.l.s8.bf16 %v1254
    %v1935 = vunpack.c.l.s8.bf16 %v1255
    %v1936 = vunpack.c.l.s8.bf16 %v1256
    %v1937 = vunpack.c.l.s8.bf16 %v1257
    %v1938 = vunpack.c.l.s8.bf16 %v1258
    %v1939 = vunpack.c.l.s8.bf16 %v1259
    %v1940 = vunpack.c.l.s8.bf16 %v1260
    %v1941 = vunpack.c.h.s8.bf16 %v1253
    %v1942 = vunpack.c.h.s8.bf16 %v1254
    %v1943 = vunpack.c.h.s8.bf16 %v1255
    %v1944 = vunpack.c.h.s8.bf16 %v1256
    %v1945 = vunpack.c.h.s8.bf16 %v1257
    %v1946 = vunpack.c.h.s8.bf16 %v1258
    %v1947 = vunpack.c.h.s8.bf16 %v1259
    %v1948 = vunpack.c.h.s8.bf16 %v1260
    %v1949 = vunpack.c.l.s8.bf16 %v1261
    %v1950 = vunpack.c.l.s8.bf16 %v1262
    %v1951 = vunpack.c.l.s8.bf16 %v1263
    %v1952 = vunpack.c.l.s8.bf16 %v1264
    %v1953 = vunpack.c.l.s8.bf16 %v1265
    %v1954 = vunpack.c.l.s8.bf16 %v1266
    %v1955 = vunpack.c.l.s8.bf16 %v1267
    %v1956 = vunpack.c.l.s8.bf16 %v1268
    %v1957 = vunpack.c.h.s8.bf16 %v1261
    %v1958 = vunpack.c.h.s8.bf16 %v1262
    %v1959 = vunpack.c.h.s8.bf16 %v1263
    %v1960 = vunpack.c.h.s8.bf16 %v1264
    %v1961 = vunpack.c.h.s8.bf16 %v1265
    %v1962 = vunpack.c.h.s8.bf16 %v1266
    %v1963 = vunpack.c.h.s8.bf16 %v1267
    %v1964 = vunpack.c.h.s8.bf16 %v1268
    %v1965 = vunpack.c.l.s8.bf16 %v1269
    %v1966 = vunpack.c.l.s8.bf16 %v1270
    %v1967 = vunpack.c.l.s8.bf16 %v1271
    %v1968 = vunpack.c.l.s8.bf16 %v1272
    %v1969 = vunpack.c.l.s8.bf16 %v1273
    %v1970 = vunpack.c.l.s8.bf16 %v1274
    %v1971 = vunpack.c.l.s8.bf16 %v1275
    %v1972 = vunpack.c.l.s8.bf16 %v1276
    %v1973 = vunpack.c.h.s8.bf16 %v1269
    %v1974 = vunpack.c.h.s8.bf16 %v1270
    %v1975 = vunpack.c.h.s8.bf16 %v1271
    %v1976 = vunpack.c.h.s8.bf16 %v1272
    %v1977 = vunpack.c.h.s8.bf16 %v1273
    %v1978 = vunpack.c.h.s8.bf16 %v1274
    %v1979 = vunpack.c.h.s8.bf16 %v1275
    %v1980 = vunpack.c.h.s8.bf16 %v1276
    %v1981 = vunpack.c.l.s8.bf16 %v1277
    %v1982 = vunpack.c.l.s8.bf16 %v1278
    %v1983 = vunpack.c.l.s8.bf16 %v1279
    %v1984 = vunpack.c.l.s8.bf16 %v1280
    %v1985 = vunpack.c.l.s8.bf16 %v1281
    %v1986 = vunpack.c.l.s8.bf16 %v1282
    %v1987 = vunpack.c.l.s8.bf16 %v1283
    %v1988 = vunpack.c.l.s8.bf16 %v1284
    %v1989 = vunpack.c.h.s8.bf16 %v1277
    %v1990 = vunpack.c.h.s8.bf16 %v1278
    %v1991 = vunpack.c.h.s8.bf16 %v1279
    %v1992 = vunpack.c.h.s8.bf16 %v1280
    %v1993 = vunpack.c.h.s8.bf16 %v1281
    %v1994 = vunpack.c.h.s8.bf16 %v1282
    %v1995 = vunpack.c.h.s8.bf16 %v1283
    %v1996 = vunpack.c.h.s8.bf16 %v1284
    %v1997 = vunpack.c.l.s8.bf16 %v1285
    %v1998 = vunpack.c.l.s8.bf16 %v1286
    %v1999 = vunpack.c.l.s8.bf16 %v1287
    %v2000 = vunpack.c.l.s8.bf16 %v1288
    %v2001 = vunpack.c.l.s8.bf16 %v1289
    %v2002 = vunpack.c.l.s8.bf16 %v1290
    %v2003 = vunpack.c.l.s8.bf16 %v1291
    %v2004 = vunpack.c.l.s8.bf16 %v1292
    %v2005 = vunpack.c.h.s8.bf16 %v1285
    %v2006 = vunpack.c.h.s8.bf16 %v1286
    %v2007 = vunpack.c.h.s8.bf16 %v1287
    %v2008 = vunpack.c.h.s8.bf16 %v1288
    %v2009 = vunpack.c.h.s8.bf16 %v1289
    %v2010 = vunpack.c.h.s8.bf16 %v1290
    %v2011 = vunpack.c.h.s8.bf16 %v1291
    %v2012 = vunpack.c.h.s8.bf16 %v1292
    %v2013 = vunpack.c.l.s8.bf16 %v1293
    %v2014 = vunpack.c.l.s8.bf16 %v1294
    %v2015 = vunpack.c.l.s8.bf16 %v1295
    %v2016 = vunpack.c.l.s8.bf16 %v1296
    %v2017 = vunpack.c.l.s8.bf16 %v1297
    %v2018 = vunpack.c.l.s8.bf16 %v1298
    %v2019 = vunpack.c.l.s8.bf16 %v1299
    %v2020 = vunpack.c.l.s8.bf16 %v1300
    %v2021 = vunpack.c.h.s8.bf16 %v1293
    %v2022 = vunpack.c.h.s8.bf16 %v1294
    %v2023 = vunpack.c.h.s8.bf16 %v1295
    %v2024 = vunpack.c.h.s8.bf16 %v1296
    %v2025 = vunpack.c.h.s8.bf16 %v1297
    %v2026 = vunpack.c.h.s8.bf16 %v1298
    %v2027 = vunpack.c.h.s8.bf16 %v1299
    %v2028 = vunpack.c.h.s8.bf16 %v1300
    %v2029 = vunpack.c.l.s8.bf16 %v1301
    %v2030 = vunpack.c.l.s8.bf16 %v1302
    %v2031 = vunpack.c.l.s8.bf16 %v1303
    %v2032 = vunpack.c.l.s8.bf16 %v1304
    %v2033 = vunpack.c.l.s8.bf16 %v1305
    %v2034 = vunpack.c.l.s8.bf16 %v1306
    %v2035 = vunpack.c.l.s8.bf16 %v1307
    %v2036 = vunpack.c.l.s8.bf16 %v1308
    %v2037 = vunpack.c.h.s8.bf16 %v1301
    %v2038 = vunpack.c.h.s8.bf16 %v1302
    %v2039 = vunpack.c.h.s8.bf16 %v1303
    %v2040 = vunpack.c.h.s8.bf16 %v1304
    %v2041 = vunpack.c.h.s8.bf16 %v1305
    %v2042 = vunpack.c.h.s8.bf16 %v1306
    %v2043 = vunpack.c.h.s8.bf16 %v1307
    %v2044 = vunpack.c.h.s8.bf16 %v1308
    %v2045 = vunpack.c.l.s8.bf16 %v1309
    %v2046 = vunpack.c.l.s8.bf16 %v1310
    %v2047 = vunpack.c.l.s8.bf16 %v1311
    %v2048 = vunpack.c.l.s8.bf16 %v1312
    %v2049 = vunpack.c.l.s8.bf16 %v1313
    %v2050 = vunpack.c.l.s8.bf16 %v1314
    %v2051 = vunpack.c.l.s8.bf16 %v1315
    %v2052 = vunpack.c.l.s8.bf16 %v1316
    %v2053 = vunpack.c.h.s8.bf16 %v1309
    %v2054 = vunpack.c.h.s8.bf16 %v1310
    %v2055 = vunpack.c.h.s8.bf16 %v1311
    %v2056 = vunpack.c.h.s8.bf16 %v1312
    %v2057 = vunpack.c.h.s8.bf16 %v1313
    %v2058 = vunpack.c.h.s8.bf16 %v1314
    %v2059 = vunpack.c.h.s8.bf16 %v1315
    %v2060 = vunpack.c.h.s8.bf16 %v1316
    %v2061 = vunpack.c.l.s8.bf16 %v1317
    %v2062 = vunpack.c.l.s8.bf16 %v1318
    %v2063 = vunpack.c.l.s8.bf16 %v1319
    %v2064 = vunpack.c.l.s8.bf16 %v1320
    %v2065 = vunpack.c.l.s8.bf16 %v1321
    %v2066 = vunpack.c.l.s8.bf16 %v1322
    %v2067 = vunpack.c.l.s8.bf16 %v1323
    %v2068 = vunpack.c.l.s8.bf16 %v1324
    %v2069 = vunpack.c.h.s8.bf16 %v1317
    %v2070 = vunpack.c.h.s8.bf16 %v1318
    %v2071 = vunpack.c.h.s8.bf16 %v1319
    %v2072 = vunpack.c.h.s8.bf16 %v1320
    %v2073 = vunpack.c.h.s8.bf16 %v1321
    %v2074 = vunpack.c.h.s8.bf16 %v1322
    %v2075 = vunpack.c.h.s8.bf16 %v1323
    %v2076 = vunpack.c.h.s8.bf16 %v1324
    %v2077 = vunpack.c.l.s8.bf16 %v1325
    %v2078 = vunpack.c.l.s8.bf16 %v1326
    %v2079 = vunpack.c.l.s8.bf16 %v1327
    %v2080 = vunpack.c.l.s8.bf16 %v1328
    %v2081 = vunpack.c.l.s8.bf16 %v1329
    %v2082 = vunpack.c.l.s8.bf16 %v1330
    %v2083 = vunpack.c.l.s8.bf16 %v1331
    %v2084 = vunpack.c.l.s8.bf16 %v1332
    %v2085 = vunpack.c.h.s8.bf16 %v1325
    %v2086 = vunpack.c.h.s8.bf16 %v1326
    %v2087 = vunpack.c.h.s8.bf16 %v1327
    %v2088 = vunpack.c.h.s8.bf16 %v1328
    %v2089 = vunpack.c.h.s8.bf16 %v1329
    %v2090 = vunpack.c.h.s8.bf16 %v1330
    %v2091 = vunpack.c.h.s8.bf16 %v1331
    %v2092 = vunpack.c.h.s8.bf16 %v1332
    %v2093 = vunpack.c.l.s8.bf16 %v1333
    %v2094 = vunpack.c.l.s8.bf16 %v1334
    %v2095 = vunpack.c.l.s8.bf16 %v1335
    %v2096 = vunpack.c.l.s8.bf16 %v1336
    %v2097 = vunpack.c.l.s8.bf16 %v1337
    %v2098 = vunpack.c.l.s8.bf16 %v1338
    %v2099 = vunpack.c.l.s8.bf16 %v1339
    %v2100 = vunpack.c.l.s8.bf16 %v1340
    %v2101 = vunpack.c.h.s8.bf16 %v1333
    %v2102 = vunpack.c.h.s8.bf16 %v1334
    %v2103 = vunpack.c.h.s8.bf16 %v1335
    %v2104 = vunpack.c.h.s8.bf16 %v1336
    %v2105 = vunpack.c.h.s8.bf16 %v1337
    %v2106 = vunpack.c.h.s8.bf16 %v1338
    %v2107 = vunpack.c.h.s8.bf16 %v1339
    %v2108 = vunpack.c.h.s8.bf16 %v1340
    %2109 = vmatprep.subr.bf16.mxu0 %v1398
    %2110 = vmatpush1.bf16.msra.mxu0 %v1397
    %2111 = vmatprep.subr.bf16.mxu0 %v1390
    %2112 = vmatpush1.bf16.msra.mxu0 %v1389
    %2113 = vmatprep.subr.bf16.mxu0 %v1382
    %2114 = vmatpush1.bf16.msra.mxu0 %v1381
    %2115 = vmatprep.subr.bf16.mxu0 %v1374
    %2116 = vmatpush1.bf16.msra.mxu0 %v1373
    %2117 = vmatprep.subr.bf16.mxu0 %v1366
    %2118 = vmatpush1.bf16.msra.mxu0 %v1365
    %2119 = vmatprep.subr.bf16.mxu0 %v1358
    %2120 = vmatpush1.bf16.msra.mxu0 %v1357
    %2121 = vmatprep.subr.bf16.mxu0 %v1350
    %2122 = vmatpush1.bf16.msra.mxu0 %v1349
    %2123 = vmatprep.subr.bf16.mxu0 %v1342
    %2124 = vmatpush1.bf16.msra.mxu0 %v1341
    %2125 = vmatprep.subr.bf16.mxu0 %v1462
    %2126 = vmatpush2.bf16.msra.mxu0 %v1461
    %2127 = vmatprep.subr.bf16.mxu0 %v1454
    %2128 = vmatpush2.bf16.msra.mxu0 %v1453
    %2129 = vmatprep.subr.bf16.mxu0 %v1446
    %2130 = vmatpush2.bf16.msra.mxu0 %v1445
    %2131 = vmatprep.subr.bf16.mxu0 %v1438
    %2132 = vmatpush2.bf16.msra.mxu0 %v1437
    %2133 = vmatprep.subr.bf16.mxu0 %v1430
    %2134 = vmatpush2.bf16.msra.mxu0 %v1429
    %2135 = vmatprep.subr.bf16.mxu0 %v1422
    %2136 = vmatpush2.bf16.msra.mxu0 %v1421
    %2137 = vmatprep.subr.bf16.mxu0 %v1414
    %2138 = vmatpush2.bf16.msra.mxu0 %v1413
    %2139 = vmatprep.subr.bf16.mxu0 %v1406
    %2140 = vmatpush2.bf16.msra.mxu0 %v1405
    %2141 = vmatprep.mubr.bf16.mxu0 %v946
    %2142 = vmatmul.mubr.bf16.gmra.mxu0 %v945
    %v2143 = vpop.f32.mrf.mxu0
    %v2144 = vadd.f32 0.0, %v2143
    %v2145 = vpop.f32.mrf.mxu0
    %v2146 = vadd.f32 0.0, %v2145
    %v2147 = vpop.f32.mrf.mxu0
    %v2148 = vadd.f32 0.0, %v2147
    %v2149 = vpop.f32.mrf.mxu0
    %v2150 = vadd.f32 0.0, %v2149
    %2151 = vdwg.mxu0
    %2152 = vmatprep.subr.bf16.mxu0 %v1526
    %2153 = vmatpush1.bf16.msra.mxu0 %v1525
    %2154 = vmatprep.subr.bf16.mxu0 %v1518
    %2155 = vmatpush1.bf16.msra.mxu0 %v1517
    %2156 = vmatprep.subr.bf16.mxu0 %v1510
    %2157 = vmatpush1.bf16.msra.mxu0 %v1509
    %2158 = vmatprep.subr.bf16.mxu0 %v1502
    %2159 = vmatpush1.bf16.msra.mxu0 %v1501
    %2160 = vmatprep.subr.bf16.mxu0 %v1494
    %2161 = vmatpush1.bf16.msra.mxu0 %v1493
    %2162 = vmatprep.subr.bf16.mxu0 %v1486
    %2163 = vmatpush1.bf16.msra.mxu0 %v1485
    %2164 = vmatprep.subr.bf16.mxu0 %v1478
    %2165 = vmatpush1.bf16.msra.mxu0 %v1477
    %2166 = vmatprep.subr.bf16.mxu0 %v1470
    %2167 = vmatpush1.bf16.msra.mxu0 %v1469
    %2168 = vmatprep.subr.bf16.mxu0 %v1590
    %2169 = vmatpush2.bf16.msra.mxu0 %v1589
    %2170 = vmatprep.subr.bf16.mxu0 %v1582
    %2171 = vmatpush2.bf16.msra.mxu0 %v1581
    %2172 = vmatprep.subr.bf16.mxu0 %v1574
    %2173 = vmatpush2.bf16.msra.mxu0 %v1573
    %2174 = vmatprep.subr.bf16.mxu0 %v1566
    %2175 = vmatpush2.bf16.msra.mxu0 %v1565
    %2176 = vmatprep.subr.bf16.mxu0 %v1558
    %2177 = vmatpush2.bf16.msra.mxu0 %v1557
    %2178 = vmatprep.subr.bf16.mxu0 %v1550
    %2179 = vmatpush2.bf16.msra.mxu0 %v1549
    %2180 = vmatprep.subr.bf16.mxu0 %v1542
    %2181 = vmatpush2.bf16.msra.mxu0 %v1541
    %2182 = vmatprep.subr.bf16.mxu0 %v1534
    %2183 = vmatpush2.bf16.msra.mxu0 %v1533
    %2184 = vmatprep.mubr.bf16.mxu0 %v948
    %2185 = vmatmul.mubr.bf16.gmra.mxu0 %v947
    %v2186 = vpop.f32.mrf.mxu0
    %v2187 = vadd.f32 %v2144, %v2186
    %v2188 = vpop.f32.mrf.mxu0
    %v2189 = vadd.f32 %v2146, %v2188
    %v2190 = vpop.f32.mrf.mxu0
    %v2191 = vadd.f32 %v2148, %v2190
    %v2192 = vpop.f32.mrf.mxu0
    %v2193 = vadd.f32 %v2150, %v2192
    %2194 = vdwg.mxu0
    %2195 = vmatprep.subr.bf16.mxu0 %v1654
    %2196 = vmatpush1.bf16.msra.mxu0 %v1653
    %2197 = vmatprep.subr.bf16.mxu0 %v1646
    %2198 = vmatpush1.bf16.msra.mxu0 %v1645
    %2199 = vmatprep.subr.bf16.mxu0 %v1638
    %2200 = vmatpush1.bf16.msra.mxu0 %v1637
    %2201 = vmatprep.subr.bf16.mxu0 %v1630
    %2202 = vmatpush1.bf16.msra.mxu0 %v1629
    %2203 = vmatprep.subr.bf16.mxu0 %v1622
    %2204 = vmatpush1.bf16.msra.mxu0 %v1621
    %2205 = vmatprep.subr.bf16.mxu0 %v1614
    %2206 = vmatpush1.bf16.msra.mxu0 %v1613
    %2207 = vmatprep.subr.bf16.mxu0 %v1606
    %2208 = vmatpush1.bf16.msra.mxu0 %v1605
    %2209 = vmatprep.subr.bf16.mxu0 %v1598
    %2210 = vmatpush1.bf16.msra.mxu0 %v1597
    %2211 = vmatprep.subr.bf16.mxu0 %v1718
    %2212 = vmatpush2.bf16.msra.mxu0 %v1717
    %2213 = vmatprep.subr.bf16.mxu0 %v1710
    %2214 = vmatpush2.bf16.msra.mxu0 %v1709
    %2215 = vmatprep.subr.bf16.mxu0 %v1702
    %2216 = vmatpush2.bf16.msra.mxu0 %v1701
    %2217 = vmatprep.subr.bf16.mxu0 %v1694
    %2218 = vmatpush2.bf16.msra.mxu0 %v1693
    %2219 = vmatprep.subr.bf16.mxu0 %v1686
    %2220 = vmatpush2.bf16.msra.mxu0 %v1685
    %2221 = vmatprep.subr.bf16.mxu0 %v1678
    %2222 = vmatpush2.bf16.msra.mxu0 %v1677
    %2223 = vmatprep.subr.bf16.mxu0 %v1670
    %2224 = vmatpush2.bf16.msra.mxu0 %v1669
    %2225 = vmatprep.subr.bf16.mxu0 %v1662
    %2226 = vmatpush2.bf16.msra.mxu0 %v1661
    %2227 = vmatprep.mubr.bf16.mxu0 %v950
    %2228 = vmatmul.mubr.bf16.gmra.mxu0 %v949
    %v2229 = vpop.f32.mrf.mxu0
    %v2230 = vadd.f32 %v2187, %v2229
    %v2231 = vpop.f32.mrf.mxu0
    %v2232 = vadd.f32 %v2189, %v2231
    %v2233 = vpop.f32.mrf.mxu0
    %v2234 = vadd.f32 %v2191, %v2233
    %v2235 = vpop.f32.mrf.mxu0
    %v2236 = vadd.f32 %v2193, %v2235
    %2237 = vdwg.mxu0
    %2238 = vmatprep.subr.bf16.mxu0 %v1782
    %2239 = vmatpush1.bf16.msra.mxu0 %v1781
    %2240 = vmatprep.subr.bf16.mxu0 %v1774
    %2241 = vmatpush1.bf16.msra.mxu0 %v1773
    %2242 = vmatprep.subr.bf16.mxu0 %v1766
    %2243 = vmatpush1.bf16.msra.mxu0 %v1765
    %2244 = vmatprep.subr.bf16.mxu0 %v1758
    %2245 = vmatpush1.bf16.msra.mxu0 %v1757
    %2246 = vmatprep.subr.bf16.mxu0 %v1750
    %2247 = vmatpush1.bf16.msra.mxu0 %v1749
    %2248 = vmatprep.subr.bf16.mxu0 %v1742
    %2249 = vmatpush1.bf16.msra.mxu0 %v1741
    %2250 = vmatprep.subr.bf16.mxu0 %v1734
    %2251 = vmatpush1.bf16.msra.mxu0 %v1733
    %2252 = vmatprep.subr.bf16.mxu0 %v1726
    %2253 = vmatpush1.bf16.msra.mxu0 %v1725
    %2254 = vmatprep.subr.bf16.mxu0 %v1846
    %2255 = vmatpush2.bf16.msra.mxu0 %v1845
    %2256 = vmatprep.subr.bf16.mxu0 %v1838
    %2257 = vmatpush2.bf16.msra.mxu0 %v1837
    %2258 = vmatprep.subr.bf16.mxu0 %v1830
    %2259 = vmatpush2.bf16.msra.mxu0 %v1829
    %2260 = vmatprep.subr.bf16.mxu0 %v1822
    %2261 = vmatpush2.bf16.msra.mxu0 %v1821
    %2262 = vmatprep.subr.bf16.mxu0 %v1814
    %2263 = vmatpush2.bf16.msra.mxu0 %v1813
    %2264 = vmatprep.subr.bf16.mxu0 %v1806
    %2265 = vmatpush2.bf16.msra.mxu0 %v1805
    %2266 = vmatprep.subr.bf16.mxu0 %v1798
    %2267 = vmatpush2.bf16.msra.mxu0 %v1797
    %2268 = vmatprep.subr.bf16.mxu0 %v1790
    %2269 = vmatpush2.bf16.msra.mxu0 %v1789
    %2270 = vmatprep.mubr.bf16.mxu0 %v952
    %2271 = vmatmul.mubr.bf16.gmra.mxu0 %v951
    %v2272 = vpop.f32.mrf.mxu0
    %v2273 = vadd.f32 %v2230, %v2272
    %v2274 = vpop.f32.mrf.mxu0
    %v2275 = vadd.f32 %v2232, %v2274
    %v2276 = vpop.f32.mrf.mxu0
    %v2277 = vadd.f32 %v2234, %v2276
    %v2278 = vpop.f32.mrf.mxu0
    %v2279 = vadd.f32 %v2236, %v2278
    %2280 = vdwg.mxu0
    %2281 = vmatprep.subr.bf16.mxu0 %v1910
    %2282 = vmatpush1.bf16.msra.mxu0 %v1909
    %2283 = vmatprep.subr.bf16.mxu0 %v1902
    %2284 = vmatpush1.bf16.msra.mxu0 %v1901
    %2285 = vmatprep.subr.bf16.mxu0 %v1894
    %2286 = vmatpush1.bf16.msra.mxu0 %v1893
    %2287 = vmatprep.subr.bf16.mxu0 %v1886
    %2288 = vmatpush1.bf16.msra.mxu0 %v1885
    %2289 = vmatprep.subr.bf16.mxu0 %v1878
    %2290 = vmatpush1.bf16.msra.mxu0 %v1877
    %2291 = vmatprep.subr.bf16.mxu0 %v1870
    %2292 = vmatpush1.bf16.msra.mxu0 %v1869
    %2293 = vmatprep.subr.bf16.mxu0 %v1862
    %2294 = vmatpush1.bf16.msra.mxu0 %v1861
    %2295 = vmatprep.subr.bf16.mxu0 %v1854
    %2296 = vmatpush1.bf16.msra.mxu0 %v1853
    %2297 = vmatprep.subr.bf16.mxu0 %v1974
    %2298 = vmatpush2.bf16.msra.mxu0 %v1973
    %2299 = vmatprep.subr.bf16.mxu0 %v1966
    %2300 = vmatpush2.bf16.msra.mxu0 %v1965
    %2301 = vmatprep.subr.bf16.mxu0 %v1958
    %2302 = vmatpush2.bf16.msra.mxu0 %v1957
    %2303 = vmatprep.subr.bf16.mxu0 %v1950
    %2304 = vmatpush2.bf16.msra.mxu0 %v1949
    %2305 = vmatprep.subr.bf16.mxu0 %v1942
    %2306 = vmatpush2.bf16.msra.mxu0 %v1941
    %2307 = vmatprep.subr.bf16.mxu0 %v1934
    %2308 = vmatpush2.bf16.msra.mxu0 %v1933
    %2309 = vmatprep.subr.bf16.mxu0 %v1926
    %2310 = vmatpush2.bf16.msra.mxu0 %v1925
    %2311 = vmatprep.subr.bf16.mxu0 %v1918
    %2312 = vmatpush2.bf16.msra.mxu0 %v1917
    %2313 = vmatprep.mubr.bf16.mxu0 %v954
    %2314 = vmatmul.mubr.bf16.gmra.mxu0 %v953
    %v2315 = vpop.f32.mrf.mxu0
    %v2316 = vadd.f32 %v2273, %v2315
    %v2317 = vpop.f32.mrf.mxu0
    %v2318 = vadd.f32 %v2275, %v2317
    %v2319 = vpop.f32.mrf.mxu0
    %v2320 = vadd.f32 %v2277, %v2319
    %v2321 = vpop.f32.mrf.mxu0
    %v2322 = vadd.f32 %v2279, %v2321
    %2323 = vdwg.mxu0
    %2324 = vmatprep.subr.bf16.mxu0 %v2038
    %2325 = vmatpush1.bf16.msra.mxu0 %v2037
    %2326 = vmatprep.subr.bf16.mxu0 %v2030
    %2327 = vmatpush1.bf16.msra.mxu0 %v2029
    %2328 = vmatprep.subr.bf16.mxu0 %v2022
    %2329 = vmatpush1.bf16.msra.mxu0 %v2021
    %2330 = vmatprep.subr.bf16.mxu0 %v2014
    %2331 = vmatpush1.bf16.msra.mxu0 %v2013
    %2332 = vmatprep.subr.bf16.mxu0 %v2006
    %2333 = vmatpush1.bf16.msra.mxu0 %v2005
    %2334 = vmatprep.subr.bf16.mxu0 %v1998
    %2335 = vmatpush1.bf16.msra.mxu0 %v1997
    %2336 = vmatprep.subr.bf16.mxu0 %v1990
    %2337 = vmatpush1.bf16.msra.mxu0 %v1989
    %2338 = vmatprep.subr.bf16.mxu0 %v1982
    %2339 = vmatpush1.bf16.msra.mxu0 %v1981
    %2340 = vmatprep.subr.bf16.mxu0 %v2102
    %2341 = vmatpush2.bf16.msra.mxu0 %v2101
    %2342 = vmatprep.subr.bf16.mxu0 %v2094
    %2343 = vmatpush2.bf16.msra.mxu0 %v2093
    %2344 = vmatprep.subr.bf16.mxu0 %v2086
    %2345 = vmatpush2.bf16.msra.mxu0 %v2085
    %2346 = vmatprep.subr.bf16.mxu0 %v2078
    %2347 = vmatpush2.bf16.msra.mxu0 %v2077
    %2348 = vmatprep.subr.bf16.mxu0 %v2070
    %2349 = vmatpush2.bf16.msra.mxu0 %v2069
    %2350 = vmatprep.subr.bf16.mxu0 %v2062
    %2351 = vmatpush2.bf16.msra.mxu0 %v2061
    %2352 = vmatprep.subr.bf16.mxu0 %v2054
    %2353 = vmatpush2.bf16.msra.mxu0 %v2053
    %2354 = vmatprep.subr.bf16.mxu0 %v2046
    %2355 = vmatpush2.bf16.msra.mxu0 %v2045
    %2356 = vmatprep.mubr.bf16.mxu0 %v956
    %2357 = vmatmul.mubr.bf16.gmra.mxu0 %v955
    %v2358 = vpop.f32.mrf.mxu0
    %v2359 = vadd.f32 %v2316, %v2358
    %v2360 = vpop.f32.mrf.mxu0
    %v2361 = vadd.f32 %v2318, %v2360
    %v2362 = vpop.f32.mrf.mxu0
    %v2363 = vadd.f32 %v2320, %v2362
    %v2364 = vpop.f32.mrf.mxu0
    %v2365 = vadd.f32 %v2322, %v2364
    %2366 = vdwg.mxu0
    %2367 = vmatprep.subr.bf16.mxu0 %v1400
    %2368 = vmatpush1.bf16.msra.mxu0 %v1399
    %2369 = vmatprep.subr.bf16.mxu0 %v1392
    %2370 = vmatpush1.bf16.msra.mxu0 %v1391
    %2371 = vmatprep.subr.bf16.mxu0 %v1384
    %2372 = vmatpush1.bf16.msra.mxu0 %v1383
    %2373 = vmatprep.subr.bf16.mxu0 %v1376
    %2374 = vmatpush1.bf16.msra.mxu0 %v1375
    %2375 = vmatprep.subr.bf16.mxu0 %v1368
    %2376 = vmatpush1.bf16.msra.mxu0 %v1367
    %2377 = vmatprep.subr.bf16.mxu0 %v1360
    %2378 = vmatpush1.bf16.msra.mxu0 %v1359
    %2379 = vmatprep.subr.bf16.mxu0 %v1352
    %2380 = vmatpush1.bf16.msra.mxu0 %v1351
    %2381 = vmatprep.subr.bf16.mxu0 %v1344
    %2382 = vmatpush1.bf16.msra.mxu0 %v1343
    %2383 = vmatprep.subr.bf16.mxu0 %v1464
    %2384 = vmatpush2.bf16.msra.mxu0 %v1463
    %2385 = vmatprep.subr.bf16.mxu0 %v1456
    %2386 = vmatpush2.bf16.msra.mxu0 %v1455
    %2387 = vmatprep.subr.bf16.mxu0 %v1448
    %2388 = vmatpush2.bf16.msra.mxu0 %v1447
    %2389 = vmatprep.subr.bf16.mxu0 %v1440
    %2390 = vmatpush2.bf16.msra.mxu0 %v1439
    %2391 = vmatprep.subr.bf16.mxu0 %v1432
    %2392 = vmatpush2.bf16.msra.mxu0 %v1431
    %2393 = vmatprep.subr.bf16.mxu0 %v1424
    %2394 = vmatpush2.bf16.msra.mxu0 %v1423
    %2395 = vmatprep.subr.bf16.mxu0 %v1416
    %2396 = vmatpush2.bf16.msra.mxu0 %v1415
    %2397 = vmatprep.subr.bf16.mxu0 %v1408
    %2398 = vmatpush2.bf16.msra.mxu0 %v1407
    %2399 = vmatprep.mubr.bf16.mxu0 %v946
    %2400 = vmatmul.mubr.bf16.gmra.mxu0 %v945
    %v2401 = vpop.f32.mrf.mxu0
    %v2402 = vadd.f32 0.0, %v2401
    %v2403 = vpop.f32.mrf.mxu0
    %v2404 = vadd.f32 0.0, %v2403
    %v2405 = vpop.f32.mrf.mxu0
    %v2406 = vadd.f32 0.0, %v2405
    %v2407 = vpop.f32.mrf.mxu0
    %v2408 = vadd.f32 0.0, %v2407
    %2409 = vdwg.mxu0
    %2410 = vmatprep.subr.bf16.mxu0 %v1528
    %2411 = vmatpush1.bf16.msra.mxu0 %v1527
    %2412 = vmatprep.subr.bf16.mxu0 %v1520
    %2413 = vmatpush1.bf16.msra.mxu0 %v1519
    %2414 = vmatprep.subr.bf16.mxu0 %v1512
    %2415 = vmatpush1.bf16.msra.mxu0 %v1511
    %2416 = vmatprep.subr.bf16.mxu0 %v1504
    %2417 = vmatpush1.bf16.msra.mxu0 %v1503
    %2418 = vmatprep.subr.bf16.mxu0 %v1496
    %2419 = vmatpush1.bf16.msra.mxu0 %v1495
    %2420 = vmatprep.subr.bf16.mxu0 %v1488
    %2421 = vmatpush1.bf16.msra.mxu0 %v1487
    %2422 = vmatprep.subr.bf16.mxu0 %v1480
    %2423 = vmatpush1.bf16.msra.mxu0 %v1479
    %2424 = vmatprep.subr.bf16.mxu0 %v1472
    %2425 = vmatpush1.bf16.msra.mxu0 %v1471
    %2426 = vmatprep.subr.bf16.mxu0 %v1592
    %2427 = vmatpush2.bf16.msra.mxu0 %v1591
    %2428 = vmatprep.subr.bf16.mxu0 %v1584
    %2429 = vmatpush2.bf16.msra.mxu0 %v1583
    %2430 = vmatprep.subr.bf16.mxu0 %v1576
    %2431 = vmatpush2.bf16.msra.mxu0 %v1575
    %2432 = vmatprep.subr.bf16.mxu0 %v1568
    %2433 = vmatpush2.bf16.msra.mxu0 %v1567
    %2434 = vmatprep.subr.bf16.mxu0 %v1560
    %2435 = vmatpush2.bf16.msra.mxu0 %v1559
    %2436 = vmatprep.subr.bf16.mxu0 %v1552
    %2437 = vmatpush2.bf16.msra.mxu0 %v1551
    %2438 = vmatprep.subr.bf16.mxu0 %v1544
    %2439 = vmatpush2.bf16.msra.mxu0 %v1543
    %2440 = vmatprep.subr.bf16.mxu0 %v1536
    %2441 = vmatpush2.bf16.msra.mxu0 %v1535
    %2442 = vmatprep.mubr.bf16.mxu0 %v948
    %2443 = vmatmul.mubr.bf16.gmra.mxu0 %v947
    %v2444 = vpop.f32.mrf.mxu0
    %v2445 = vadd.f32 %v2402, %v2444
    %v2446 = vpop.f32.mrf.mxu0
    %v2447 = vadd.f32 %v2404, %v2446
    %v2448 = vpop.f32.mrf.mxu0
    %v2449 = vadd.f32 %v2406, %v2448
    %v2450 = vpop.f32.mrf.mxu0
    %v2451 = vadd.f32 %v2408, %v2450
    %2452 = vdwg.mxu0
    %2453 = vmatprep.subr.bf16.mxu0 %v1656
    %2454 = vmatpush1.bf16.msra.mxu0 %v1655
    %2455 = vmatprep.subr.bf16.mxu0 %v1648
    %2456 = vmatpush1.bf16.msra.mxu0 %v1647
    %2457 = vmatprep.subr.bf16.mxu0 %v1640
    %2458 = vmatpush1.bf16.msra.mxu0 %v1639
    %2459 = vmatprep.subr.bf16.mxu0 %v1632
    %2460 = vmatpush1.bf16.msra.mxu0 %v1631
    %2461 = vmatprep.subr.bf16.mxu0 %v1624
    %2462 = vmatpush1.bf16.msra.mxu0 %v1623
    %2463 = vmatprep.subr.bf16.mxu0 %v1616
    %2464 = vmatpush1.bf16.msra.mxu0 %v1615
    %2465 = vmatprep.subr.bf16.mxu0 %v1608
    %2466 = vmatpush1.bf16.msra.mxu0 %v1607
    %2467 = vmatprep.subr.bf16.mxu0 %v1600
    %2468 = vmatpush1.bf16.msra.mxu0 %v1599
    %2469 = vmatprep.subr.bf16.mxu0 %v1720
    %2470 = vmatpush2.bf16.msra.mxu0 %v1719
    %2471 = vmatprep.subr.bf16.mxu0 %v1712
    %2472 = vmatpush2.bf16.msra.mxu0 %v1711
    %2473 = vmatprep.subr.bf16.mxu0 %v1704
    %2474 = vmatpush2.bf16.msra.mxu0 %v1703
    %2475 = vmatprep.subr.bf16.mxu0 %v1696
    %2476 = vmatpush2.bf16.msra.mxu0 %v1695
    %2477 = vmatprep.subr.bf16.mxu0 %v1688
    %2478 = vmatpush2.bf16.msra.mxu0 %v1687
    %2479 = vmatprep.subr.bf16.mxu0 %v1680
    %2480 = vmatpush2.bf16.msra.mxu0 %v1679
    %2481 = vmatprep.subr.bf16.mxu0 %v1672
    %2482 = vmatpush2.bf16.msra.mxu0 %v1671
    %2483 = vmatprep.subr.bf16.mxu0 %v1664
    %2484 = vmatpush2.bf16.msra.mxu0 %v1663
    %2485 = vmatprep.mubr.bf16.mxu0 %v950
    %2486 = vmatmul.mubr.bf16.gmra.mxu0 %v949
    %v2487 = vpop.f32.mrf.mxu0
    %v2488 = vadd.f32 %v2445, %v2487
    %v2489 = vpop.f32.mrf.mxu0
    %v2490 = vadd.f32 %v2447, %v2489
    %v2491 = vpop.f32.mrf.mxu0
    %v2492 = vadd.f32 %v2449, %v2491
    %v2493 = vpop.f32.mrf.mxu0
    %v2494 = vadd.f32 %v2451, %v2493
    %2495 = vdwg.mxu0
    %2496 = vmatprep.subr.bf16.mxu0 %v1784
    %2497 = vmatpush1.bf16.msra.mxu0 %v1783
    %2498 = vmatprep.subr.bf16.mxu0 %v1776
    %2499 = vmatpush1.bf16.msra.mxu0 %v1775
    %2500 = vmatprep.subr.bf16.mxu0 %v1768
    %2501 = vmatpush1.bf16.msra.mxu0 %v1767
    %2502 = vmatprep.subr.bf16.mxu0 %v1760
    %2503 = vmatpush1.bf16.msra.mxu0 %v1759
    %2504 = vmatprep.subr.bf16.mxu0 %v1752
    %2505 = vmatpush1.bf16.msra.mxu0 %v1751
    %2506 = vmatprep.subr.bf16.mxu0 %v1744
    %2507 = vmatpush1.bf16.msra.mxu0 %v1743
    %2508 = vmatprep.subr.bf16.mxu0 %v1736
    %2509 = vmatpush1.bf16.msra.mxu0 %v1735
    %2510 = vmatprep.subr.bf16.mxu0 %v1728
    %2511 = vmatpush1.bf16.msra.mxu0 %v1727
    %2512 = vmatprep.subr.bf16.mxu0 %v1848
    %2513 = vmatpush2.bf16.msra.mxu0 %v1847
    %2514 = vmatprep.subr.bf16.mxu0 %v1840
    %2515 = vmatpush2.bf16.msra.mxu0 %v1839
    %2516 = vmatprep.subr.bf16.mxu0 %v1832
    %2517 = vmatpush2.bf16.msra.mxu0 %v1831
    %2518 = vmatprep.subr.bf16.mxu0 %v1824
    %2519 = vmatpush2.bf16.msra.mxu0 %v1823
    %2520 = vmatprep.subr.bf16.mxu0 %v1816
    %2521 = vmatpush2.bf16.msra.mxu0 %v1815
    %2522 = vmatprep.subr.bf16.mxu0 %v1808
    %2523 = vmatpush2.bf16.msra.mxu0 %v1807
    %2524 = vmatprep.subr.bf16.mxu0 %v1800
    %2525 = vmatpush2.bf16.msra.mxu0 %v1799
    %2526 = vmatprep.subr.bf16.mxu0 %v1792
    %2527 = vmatpush2.bf16.msra.mxu0 %v1791
    %2528 = vmatprep.mubr.bf16.mxu0 %v952
    %2529 = vmatmul.mubr.bf16.gmra.mxu0 %v951
    %v2530 = vpop.f32.mrf.mxu0
    %v2531 = vadd.f32 %v2488, %v2530
    %v2532 = vpop.f32.mrf.mxu0
    %v2533 = vadd.f32 %v2490, %v2532
    %v2534 = vpop.f32.mrf.mxu0
    %v2535 = vadd.f32 %v2492, %v2534
    %v2536 = vpop.f32.mrf.mxu0
    %v2537 = vadd.f32 %v2494, %v2536
    %2538 = vdwg.mxu0
    %2539 = vmatprep.subr.bf16.mxu0 %v1912
    %2540 = vmatpush1.bf16.msra.mxu0 %v1911
    %2541 = vmatprep.subr.bf16.mxu0 %v1904
    %2542 = vmatpush1.bf16.msra.mxu0 %v1903
    %2543 = vmatprep.subr.bf16.mxu0 %v1896
    %2544 = vmatpush1.bf16.msra.mxu0 %v1895
    %2545 = vmatprep.subr.bf16.mxu0 %v1888
    %2546 = vmatpush1.bf16.msra.mxu0 %v1887
    %2547 = vmatprep.subr.bf16.mxu0 %v1880
    %2548 = vmatpush1.bf16.msra.mxu0 %v1879
    %2549 = vmatprep.subr.bf16.mxu0 %v1872
    %2550 = vmatpush1.bf16.msra.mxu0 %v1871
    %2551 = vmatprep.subr.bf16.mxu0 %v1864
    %2552 = vmatpush1.bf16.msra.mxu0 %v1863
    %2553 = vmatprep.subr.bf16.mxu0 %v1856
    %2554 = vmatpush1.bf16.msra.mxu0 %v1855
    %2555 = vmatprep.subr.bf16.mxu0 %v1976
    %2556 = vmatpush2.bf16.msra.mxu0 %v1975
    %2557 = vmatprep.subr.bf16.mxu0 %v1968
    %2558 = vmatpush2.bf16.msra.mxu0 %v1967
    %2559 = vmatprep.subr.bf16.mxu0 %v1960
    %2560 = vmatpush2.bf16.msra.mxu0 %v1959
    %2561 = vmatprep.subr.bf16.mxu0 %v1952
    %2562 = vmatpush2.bf16.msra.mxu0 %v1951
    %2563 = vmatprep.subr.bf16.mxu0 %v1944
    %2564 = vmatpush2.bf16.msra.mxu0 %v1943
    %2565 = vmatprep.subr.bf16.mxu0 %v1936
    %2566 = vmatpush2.bf16.msra.mxu0 %v1935
    %2567 = vmatprep.subr.bf16.mxu0 %v1928
    %2568 = vmatpush2.bf16.msra.mxu0 %v1927
    %2569 = vmatprep.subr.bf16.mxu0 %v1920
    %2570 = vmatpush2.bf16.msra.mxu0 %v1919
    %2571 = vmatprep.mubr.bf16.mxu0 %v954
    %2572 = vmatmul.mubr.bf16.gmra.mxu0 %v953
    %v2573 = vpop.f32.mrf.mxu0
    %v2574 = vadd.f32 %v2531, %v2573
    %v2575 = vpop.f32.mrf.mxu0
    %v2576 = vadd.f32 %v2533, %v2575
    %v2577 = vpop.f32.mrf.mxu0
    %v2578 = vadd.f32 %v2535, %v2577
    %v2579 = vpop.f32.mrf.mxu0
    %v2580 = vadd.f32 %v2537, %v2579
    %2581 = vdwg.mxu0
    %2582 = vmatprep.subr.bf16.mxu0 %v2040
    %2583 = vmatpush1.bf16.msra.mxu0 %v2039
    %2584 = vmatprep.subr.bf16.mxu0 %v2032
    %2585 = vmatpush1.bf16.msra.mxu0 %v2031
    %2586 = vmatprep.subr.bf16.mxu0 %v2024
    %2587 = vmatpush1.bf16.msra.mxu0 %v2023
    %2588 = vmatprep.subr.bf16.mxu0 %v2016
    %2589 = vmatpush1.bf16.msra.mxu0 %v2015
    %2590 = vmatprep.subr.bf16.mxu0 %v2008
    %2591 = vmatpush1.bf16.msra.mxu0 %v2007
    %2592 = vmatprep.subr.bf16.mxu0 %v2000
    %2593 = vmatpush1.bf16.msra.mxu0 %v1999
    %2594 = vmatprep.subr.bf16.mxu0 %v1992
    %2595 = vmatpush1.bf16.msra.mxu0 %v1991
    %2596 = vmatprep.subr.bf16.mxu0 %v1984
    %2597 = vmatpush1.bf16.msra.mxu0 %v1983
    %2598 = vmatprep.subr.bf16.mxu0 %v2104
    %2599 = vmatpush2.bf16.msra.mxu0 %v2103
    %2600 = vmatprep.subr.bf16.mxu0 %v2096
    %2601 = vmatpush2.bf16.msra.mxu0 %v2095
    %2602 = vmatprep.subr.bf16.mxu0 %v2088
    %2603 = vmatpush2.bf16.msra.mxu0 %v2087
    %2604 = vmatprep.subr.bf16.mxu0 %v2080
    %2605 = vmatpush2.bf16.msra.mxu0 %v2079
    %2606 = vmatprep.subr.bf16.mxu0 %v2072
    %2607 = vmatpush2.bf16.msra.mxu0 %v2071
    %2608 = vmatprep.subr.bf16.mxu0 %v2064
    %2609 = vmatpush2.bf16.msra.mxu0 %v2063
    %2610 = vmatprep.subr.bf16.mxu0 %v2056
    %2611 = vmatpush2.bf16.msra.mxu0 %v2055
    %2612 = vmatprep.subr.bf16.mxu0 %v2048
    %2613 = vmatpush2.bf16.msra.mxu0 %v2047
    %2614 = vmatprep.mubr.bf16.mxu0 %v956
    %2615 = vmatmul.mubr.bf16.gmra.mxu0 %v955
    %v2616 = vpop.f32.mrf.mxu0
    %v2617 = vadd.f32 %v2574, %v2616
    %v2618 = vpop.f32.mrf.mxu0
    %v2619 = vadd.f32 %v2576, %v2618
    %v2620 = vpop.f32.mrf.mxu0
    %v2621 = vadd.f32 %v2578, %v2620
    %v2622 = vpop.f32.mrf.mxu0
    %v2623 = vadd.f32 %v2580, %v2622
    %2624 = vdwg.mxu0
    %2625 = vmatprep.subr.bf16.mxu0 %v1402
    %2626 = vmatpush1.bf16.msra.mxu0 %v1401
    %2627 = vmatprep.subr.bf16.mxu0 %v1394
    %2628 = vmatpush1.bf16.msra.mxu0 %v1393
    %2629 = vmatprep.subr.bf16.mxu0 %v1386
    %2630 = vmatpush1.bf16.msra.mxu0 %v1385
    %2631 = vmatprep.subr.bf16.mxu0 %v1378
    %2632 = vmatpush1.bf16.msra.mxu0 %v1377
    %2633 = vmatprep.subr.bf16.mxu0 %v1370
    %2634 = vmatpush1.bf16.msra.mxu0 %v1369
    %2635 = vmatprep.subr.bf16.mxu0 %v1362
    %2636 = vmatpush1.bf16.msra.mxu0 %v1361
    %2637 = vmatprep.subr.bf16.mxu0 %v1354
    %2638 = vmatpush1.bf16.msra.mxu0 %v1353
    %2639 = vmatprep.subr.bf16.mxu0 %v1346
    %2640 = vmatpush1.bf16.msra.mxu0 %v1345
    %2641 = vmatprep.subr.bf16.mxu0 %v1466
    %2642 = vmatpush2.bf16.msra.mxu0 %v1465
    %2643 = vmatprep.subr.bf16.mxu0 %v1458
    %2644 = vmatpush2.bf16.msra.mxu0 %v1457
    %2645 = vmatprep.subr.bf16.mxu0 %v1450
    %2646 = vmatpush2.bf16.msra.mxu0 %v1449
    %2647 = vmatprep.subr.bf16.mxu0 %v1442
    %2648 = vmatpush2.bf16.msra.mxu0 %v1441
    %2649 = vmatprep.subr.bf16.mxu0 %v1434
    %2650 = vmatpush2.bf16.msra.mxu0 %v1433
    %2651 = vmatprep.subr.bf16.mxu0 %v1426
    %2652 = vmatpush2.bf16.msra.mxu0 %v1425
    %2653 = vmatprep.subr.bf16.mxu0 %v1418
    %2654 = vmatpush2.bf16.msra.mxu0 %v1417
    %2655 = vmatprep.subr.bf16.mxu0 %v1410
    %2656 = vmatpush2.bf16.msra.mxu0 %v1409
    %2657 = vmatprep.mubr.bf16.mxu0 %v946
    %2658 = vmatmul.mubr.bf16.gmra.mxu0 %v945
    %v2659 = vpop.f32.mrf.mxu0
    %v2660 = vadd.f32 0.0, %v2659
    %v2661 = vpop.f32.mrf.mxu0
    %v2662 = vadd.f32 0.0, %v2661
    %v2663 = vpop.f32.mrf.mxu0
    %v2664 = vadd.f32 0.0, %v2663
    %v2665 = vpop.f32.mrf.mxu0
    %v2666 = vadd.f32 0.0, %v2665
    %2667 = vdwg.mxu0
    %2668 = vmatprep.subr.bf16.mxu0 %v1530
    %2669 = vmatpush1.bf16.msra.mxu0 %v1529
    %2670 = vmatprep.subr.bf16.mxu0 %v1522
    %2671 = vmatpush1.bf16.msra.mxu0 %v1521
    %2672 = vmatprep.subr.bf16.mxu0 %v1514
    %2673 = vmatpush1.bf16.msra.mxu0 %v1513
    %2674 = vmatprep.subr.bf16.mxu0 %v1506
    %2675 = vmatpush1.bf16.msra.mxu0 %v1505
    %2676 = vmatprep.subr.bf16.mxu0 %v1498
    %2677 = vmatpush1.bf16.msra.mxu0 %v1497
    %2678 = vmatprep.subr.bf16.mxu0 %v1490
    %2679 = vmatpush1.bf16.msra.mxu0 %v1489
    %2680 = vmatprep.subr.bf16.mxu0 %v1482
    %2681 = vmatpush1.bf16.msra.mxu0 %v1481
    %2682 = vmatprep.subr.bf16.mxu0 %v1474
    %2683 = vmatpush1.bf16.msra.mxu0 %v1473
    %2684 = vmatprep.subr.bf16.mxu0 %v1594
    %2685 = vmatpush2.bf16.msra.mxu0 %v1593
    %2686 = vmatprep.subr.bf16.mxu0 %v1586
    %2687 = vmatpush2.bf16.msra.mxu0 %v1585
    %2688 = vmatprep.subr.bf16.mxu0 %v1578
    %2689 = vmatpush2.bf16.msra.mxu0 %v1577
    %2690 = vmatprep.subr.bf16.mxu0 %v1570
    %2691 = vmatpush2.bf16.msra.mxu0 %v1569
    %2692 = vmatprep.subr.bf16.mxu0 %v1562
    %2693 = vmatpush2.bf16.msra.mxu0 %v1561
    %2694 = vmatprep.subr.bf16.mxu0 %v1554
    %2695 = vmatpush2.bf16.msra.mxu0 %v1553
    %2696 = vmatprep.subr.bf16.mxu0 %v1546
    %2697 = vmatpush2.bf16.msra.mxu0 %v1545
    %2698 = vmatprep.subr.bf16.mxu0 %v1538
    %2699 = vmatpush2.bf16.msra.mxu0 %v1537
    %2700 = vmatprep.mubr.bf16.mxu0 %v948
    %2701 = vmatmul.mubr.bf16.gmra.mxu0 %v947
    %v2702 = vpop.f32.mrf.mxu0
    %v2703 = vadd.f32 %v2660, %v2702
    %v2704 = vpop.f32.mrf.mxu0
    %v2705 = vadd.f32 %v2662, %v2704
    %v2706 = vpop.f32.mrf.mxu0
    %v2707 = vadd.f32 %v2664, %v2706
    %v2708 = vpop.f32.mrf.mxu0
    %v2709 = vadd.f32 %v2666, %v2708
    %2710 = vdwg.mxu0
    %2711 = vmatprep.subr.bf16.mxu0 %v1658
    %2712 = vmatpush1.bf16.msra.mxu0 %v1657
    %2713 = vmatprep.subr.bf16.mxu0 %v1650
    %2714 = vmatpush1.bf16.msra.mxu0 %v1649
    %2715 = vmatprep.subr.bf16.mxu0 %v1642
    %2716 = vmatpush1.bf16.msra.mxu0 %v1641
    %2717 = vmatprep.subr.bf16.mxu0 %v1634
    %2718 = vmatpush1.bf16.msra.mxu0 %v1633
    %2719 = vmatprep.subr.bf16.mxu0 %v1626
    %2720 = vmatpush1.bf16.msra.mxu0 %v1625
    %2721 = vmatprep.subr.bf16.mxu0 %v1618
    %2722 = vmatpush1.bf16.msra.mxu0 %v1617
    %2723 = vmatprep.subr.bf16.mxu0 %v1610
    %2724 = vmatpush1.bf16.msra.mxu0 %v1609
    %2725 = vmatprep.subr.bf16.mxu0 %v1602
    %2726 = vmatpush1.bf16.msra.mxu0 %v1601
    %2727 = vmatprep.subr.bf16.mxu0 %v1722
    %2728 = vmatpush2.bf16.msra.mxu0 %v1721
    %2729 = vmatprep.subr.bf16.mxu0 %v1714
    %2730 = vmatpush2.bf16.msra.mxu0 %v1713
    %2731 = vmatprep.subr.bf16.mxu0 %v1706
    %2732 = vmatpush2.bf16.msra.mxu0 %v1705
    %2733 = vmatprep.subr.bf16.mxu0 %v1698
    %2734 = vmatpush2.bf16.msra.mxu0 %v1697
    %2735 = vmatprep.subr.bf16.mxu0 %v1690
    %2736 = vmatpush2.bf16.msra.mxu0 %v1689
    %2737 = vmatprep.subr.bf16.mxu0 %v1682
    %2738 = vmatpush2.bf16.msra.mxu0 %v1681
    %2739 = vmatprep.subr.bf16.mxu0 %v1674
    %2740 = vmatpush2.bf16.msra.mxu0 %v1673
    %2741 = vmatprep.subr.bf16.mxu0 %v1666
    %2742 = vmatpush2.bf16.msra.mxu0 %v1665
    %2743 = vmatprep.mubr.bf16.mxu0 %v950
    %2744 = vmatmul.mubr.bf16.gmra.mxu0 %v949
    %v2745 = vpop.f32.mrf.mxu0
    %v2746 = vadd.f32 %v2703, %v2745
    %v2747 = vpop.f32.mrf.mxu0
    %v2748 = vadd.f32 %v2705, %v2747
    %v2749 = vpop.f32.mrf.mxu0
    %v2750 = vadd.f32 %v2707, %v2749
    %v2751 = vpop.f32.mrf.mxu0
    %v2752 = vadd.f32 %v2709, %v2751
    %2753 = vdwg.mxu0
    %2754 = vmatprep.subr.bf16.mxu0 %v1786
    %2755 = vmatpush1.bf16.msra.mxu0 %v1785
    %2756 = vmatprep.subr.bf16.mxu0 %v1778
    %2757 = vmatpush1.bf16.msra.mxu0 %v1777
    %2758 = vmatprep.subr.bf16.mxu0 %v1770
    %2759 = vmatpush1.bf16.msra.mxu0 %v1769
    %2760 = vmatprep.subr.bf16.mxu0 %v1762
    %2761 = vmatpush1.bf16.msra.mxu0 %v1761
    %2762 = vmatprep.subr.bf16.mxu0 %v1754
    %2763 = vmatpush1.bf16.msra.mxu0 %v1753
    %2764 = vmatprep.subr.bf16.mxu0 %v1746
    %2765 = vmatpush1.bf16.msra.mxu0 %v1745
    %2766 = vmatprep.subr.bf16.mxu0 %v1738
    %2767 = vmatpush1.bf16.msra.mxu0 %v1737
    %2768 = vmatprep.subr.bf16.mxu0 %v1730
    %2769 = vmatpush1.bf16.msra.mxu0 %v1729
    %2770 = vmatprep.subr.bf16.mxu0 %v1850
    %2771 = vmatpush2.bf16.msra.mxu0 %v1849
    %2772 = vmatprep.subr.bf16.mxu0 %v1842
    %2773 = vmatpush2.bf16.msra.mxu0 %v1841
    %2774 = vmatprep.subr.bf16.mxu0 %v1834
    %2775 = vmatpush2.bf16.msra.mxu0 %v1833
    %2776 = vmatprep.subr.bf16.mxu0 %v1826
    %2777 = vmatpush2.bf16.msra.mxu0 %v1825
    %2778 = vmatprep.subr.bf16.mxu0 %v1818
    %2779 = vmatpush2.bf16.msra.mxu0 %v1817
    %2780 = vmatprep.subr.bf16.mxu0 %v1810
    %2781 = vmatpush2.bf16.msra.mxu0 %v1809
    %2782 = vmatprep.subr.bf16.mxu0 %v1802
    %2783 = vmatpush2.bf16.msra.mxu0 %v1801
    %2784 = vmatprep.subr.bf16.mxu0 %v1794
    %2785 = vmatpush2.bf16.msra.mxu0 %v1793
    %2786 = vmatprep.mubr.bf16.mxu0 %v952
    %2787 = vmatmul.mubr.bf16.gmra.mxu0 %v951
    %v2788 = vpop.f32.mrf.mxu0
    %v2789 = vadd.f32 %v2746, %v2788
    %v2790 = vpop.f32.mrf.mxu0
    %v2791 = vadd.f32 %v2748, %v2790
    %v2792 = vpop.f32.mrf.mxu0
    %v2793 = vadd.f32 %v2750, %v2792
    %v2794 = vpop.f32.mrf.mxu0
    %v2795 = vadd.f32 %v2752, %v2794
    %2796 = vdwg.mxu0
    %2797 = vmatprep.subr.bf16.mxu0 %v1914
    %2798 = vmatpush1.bf16.msra.mxu0 %v1913
    %2799 = vmatprep.subr.bf16.mxu0 %v1906
    %2800 = vmatpush1.bf16.msra.mxu0 %v1905
    %2801 = vmatprep.subr.bf16.mxu0 %v1898
    %2802 = vmatpush1.bf16.msra.mxu0 %v1897
    %2803 = vmatprep.subr.bf16.mxu0 %v1890
    %2804 = vmatpush1.bf16.msra.mxu0 %v1889
    %2805 = vmatprep.subr.bf16.mxu0 %v1882
    %2806 = vmatpush1.bf16.msra.mxu0 %v1881
    %2807 = vmatprep.subr.bf16.mxu0 %v1874
    %2808 = vmatpush1.bf16.msra.mxu0 %v1873
    %2809 = vmatprep.subr.bf16.mxu0 %v1866
    %2810 = vmatpush1.bf16.msra.mxu0 %v1865
    %2811 = vmatprep.subr.bf16.mxu0 %v1858
    %2812 = vmatpush1.bf16.msra.mxu0 %v1857
    %2813 = vmatprep.subr.bf16.mxu0 %v1978
    %2814 = vmatpush2.bf16.msra.mxu0 %v1977
    %2815 = vmatprep.subr.bf16.mxu0 %v1970
    %2816 = vmatpush2.bf16.msra.mxu0 %v1969
    %2817 = vmatprep.subr.bf16.mxu0 %v1962
    %2818 = vmatpush2.bf16.msra.mxu0 %v1961
    %2819 = vmatprep.subr.bf16.mxu0 %v1954
    %2820 = vmatpush2.bf16.msra.mxu0 %v1953
    %2821 = vmatprep.subr.bf16.mxu0 %v1946
    %2822 = vmatpush2.bf16.msra.mxu0 %v1945
    %2823 = vmatprep.subr.bf16.mxu0 %v1938
    %2824 = vmatpush2.bf16.msra.mxu0 %v1937
    %2825 = vmatprep.subr.bf16.mxu0 %v1930
    %2826 = vmatpush2.bf16.msra.mxu0 %v1929
    %2827 = vmatprep.subr.bf16.mxu0 %v1922
    %2828 = vmatpush2.bf16.msra.mxu0 %v1921
    %2829 = vmatprep.mubr.bf16.mxu0 %v954
    %2830 = vmatmul.mubr.bf16.gmra.mxu0 %v953
    %v2831 = vpop.f32.mrf.mxu0
    %v2832 = vadd.f32 %v2789, %v2831
    %v2833 = vpop.f32.mrf.mxu0
    %v2834 = vadd.f32 %v2791, %v2833
    %v2835 = vpop.f32.mrf.mxu0
    %v2836 = vadd.f32 %v2793, %v2835
    %v2837 = vpop.f32.mrf.mxu0
    %v2838 = vadd.f32 %v2795, %v2837
    %2839 = vdwg.mxu0
    %2840 = vmatprep.subr.bf16.mxu0 %v2042
    %2841 = vmatpush1.bf16.msra.mxu0 %v2041
    %2842 = vmatprep.subr.bf16.mxu0 %v2034
    %2843 = vmatpush1.bf16.msra.mxu0 %v2033
    %2844 = vmatprep.subr.bf16.mxu0 %v2026
    %2845 = vmatpush1.bf16.msra.mxu0 %v2025
    %2846 = vmatprep.subr.bf16.mxu0 %v2018
    %2847 = vmatpush1.bf16.msra.mxu0 %v2017
    %2848 = vmatprep.subr.bf16.mxu0 %v2010
    %2849 = vmatpush1.bf16.msra.mxu0 %v2009
    %2850 = vmatprep.subr.bf16.mxu0 %v2002
    %2851 = vmatpush1.bf16.msra.mxu0 %v2001
    %2852 = vmatprep.subr.bf16.mxu0 %v1994
    %2853 = vmatpush1.bf16.msra.mxu0 %v1993
    %2854 = vmatprep.subr.bf16.mxu0 %v1986
    %2855 = vmatpush1.bf16.msra.mxu0 %v1985
    %2856 = vmatprep.subr.bf16.mxu0 %v2106
    %2857 = vmatpush2.bf16.msra.mxu0 %v2105
    %2858 = vmatprep.subr.bf16.mxu0 %v2098
    %2859 = vmatpush2.bf16.msra.mxu0 %v2097
    %2860 = vmatprep.subr.bf16.mxu0 %v2090
    %2861 = vmatpush2.bf16.msra.mxu0 %v2089
    %2862 = vmatprep.subr.bf16.mxu0 %v2082
    %2863 = vmatpush2.bf16.msra.mxu0 %v2081
    %2864 = vmatprep.subr.bf16.mxu0 %v2074
    %2865 = vmatpush2.bf16.msra.mxu0 %v2073
    %2866 = vmatprep.subr.bf16.mxu0 %v2066
    %2867 = vmatpush2.bf16.msra.mxu0 %v2065
    %2868 = vmatprep.subr.bf16.mxu0 %v2058
    %2869 = vmatpush2.bf16.msra.mxu0 %v2057
    %2870 = vmatprep.subr.bf16.mxu0 %v2050
    %2871 = vmatpush2.bf16.msra.mxu0 %v2049
    %2872 = vmatprep.mubr.bf16.mxu0 %v956
    %2873 = vmatmul.mubr.bf16.gmra.mxu0 %v955
    %v2874 = vpop.f32.mrf.mxu0
    %v2875 = vadd.f32 %v2832, %v2874
    %v2876 = vpop.f32.mrf.mxu0
    %v2877 = vadd.f32 %v2834, %v2876
    %v2878 = vpop.f32.mrf.mxu0
    %v2879 = vadd.f32 %v2836, %v2878
    %v2880 = vpop.f32.mrf.mxu0
    %v2881 = vadd.f32 %v2838, %v2880
    %2882 = vdwg.mxu0
    %2883 = vmatprep.subr.bf16.mxu0 %v1404
    %2884 = vmatpush1.bf16.msra.mxu0 %v1403
    %2885 = vmatprep.subr.bf16.mxu0 %v1396
    %2886 = vmatpush1.bf16.msra.mxu0 %v1395
    %2887 = vmatprep.subr.bf16.mxu0 %v1388
    %2888 = vmatpush1.bf16.msra.mxu0 %v1387
    %2889 = vmatprep.subr.bf16.mxu0 %v1380
    %2890 = vmatpush1.bf16.msra.mxu0 %v1379
    %2891 = vmatprep.subr.bf16.mxu0 %v1372
    %2892 = vmatpush1.bf16.msra.mxu0 %v1371
    %2893 = vmatprep.subr.bf16.mxu0 %v1364
    %2894 = vmatpush1.bf16.msra.mxu0 %v1363
    %2895 = vmatprep.subr.bf16.mxu0 %v1356
    %2896 = vmatpush1.bf16.msra.mxu0 %v1355
    %2897 = vmatprep.subr.bf16.mxu0 %v1348
    %2898 = vmatpush1.bf16.msra.mxu0 %v1347
    %2899 = vmatprep.subr.bf16.mxu0 %v1468
    %2900 = vmatpush2.bf16.msra.mxu0 %v1467
    %2901 = vmatprep.subr.bf16.mxu0 %v1460
    %2902 = vmatpush2.bf16.msra.mxu0 %v1459
    %2903 = vmatprep.subr.bf16.mxu0 %v1452
    %2904 = vmatpush2.bf16.msra.mxu0 %v1451
    %2905 = vmatprep.subr.bf16.mxu0 %v1444
    %2906 = vmatpush2.bf16.msra.mxu0 %v1443
    %2907 = vmatprep.subr.bf16.mxu0 %v1436
    %2908 = vmatpush2.bf16.msra.mxu0 %v1435
    %2909 = vmatprep.subr.bf16.mxu0 %v1428
    %2910 = vmatpush2.bf16.msra.mxu0 %v1427
    %2911 = vmatprep.subr.bf16.mxu0 %v1420
    %2912 = vmatpush2.bf16.msra.mxu0 %v1419
    %2913 = vmatprep.subr.bf16.mxu0 %v1412
    %2914 = vmatpush2.bf16.msra.mxu0 %v1411
    %2915 = vmatprep.mubr.bf16.mxu0 %v946
    %2916 = vmatmul.mubr.bf16.gmra.mxu0 %v945
    %v2917 = vpop.f32.mrf.mxu0
    %v2918 = vadd.f32 0.0, %v2917
    %v2919 = vpop.f32.mrf.mxu0
    %v2920 = vadd.f32 0.0, %v2919
    %v2921 = vpop.f32.mrf.mxu0
    %v2922 = vadd.f32 0.0, %v2921
    %v2923 = vpop.f32.mrf.mxu0
    %v2924 = vadd.f32 0.0, %v2923
    %2925 = vdwg.mxu0
    %2926 = vmatprep.subr.bf16.mxu0 %v1532
    %2927 = vmatpush1.bf16.msra.mxu0 %v1531
    %2928 = vmatprep.subr.bf16.mxu0 %v1524
    %2929 = vmatpush1.bf16.msra.mxu0 %v1523
    %2930 = vmatprep.subr.bf16.mxu0 %v1516
    %2931 = vmatpush1.bf16.msra.mxu0 %v1515
    %2932 = vmatprep.subr.bf16.mxu0 %v1508
    %2933 = vmatpush1.bf16.msra.mxu0 %v1507
    %2934 = vmatprep.subr.bf16.mxu0 %v1500
    %2935 = vmatpush1.bf16.msra.mxu0 %v1499
    %2936 = vmatprep.subr.bf16.mxu0 %v1492
    %2937 = vmatpush1.bf16.msra.mxu0 %v1491
    %2938 = vmatprep.subr.bf16.mxu0 %v1484
    %2939 = vmatpush1.bf16.msra.mxu0 %v1483
    %2940 = vmatprep.subr.bf16.mxu0 %v1476
    %2941 = vmatpush1.bf16.msra.mxu0 %v1475
    %2942 = vmatprep.subr.bf16.mxu0 %v1596
    %2943 = vmatpush2.bf16.msra.mxu0 %v1595
    %2944 = vmatprep.subr.bf16.mxu0 %v1588
    %2945 = vmatpush2.bf16.msra.mxu0 %v1587
    %2946 = vmatprep.subr.bf16.mxu0 %v1580
    %2947 = vmatpush2.bf16.msra.mxu0 %v1579
    %2948 = vmatprep.subr.bf16.mxu0 %v1572
    %2949 = vmatpush2.bf16.msra.mxu0 %v1571
    %2950 = vmatprep.subr.bf16.mxu0 %v1564
    %2951 = vmatpush2.bf16.msra.mxu0 %v1563
    %2952 = vmatprep.subr.bf16.mxu0 %v1556
    %2953 = vmatpush2.bf16.msra.mxu0 %v1555
    %2954 = vmatprep.subr.bf16.mxu0 %v1548
    %2955 = vmatpush2.bf16.msra.mxu0 %v1547
    %2956 = vmatprep.subr.bf16.mxu0 %v1540
    %2957 = vmatpush2.bf16.msra.mxu0 %v1539
    %2958 = vmatprep.mubr.bf16.mxu0 %v948
    %2959 = vmatmul.mubr.bf16.gmra.mxu0 %v947
    %v2960 = vpop.f32.mrf.mxu0
    %v2961 = vadd.f32 %v2918, %v2960
    %v2962 = vpop.f32.mrf.mxu0
    %v2963 = vadd.f32 %v2920, %v2962
    %v2964 = vpop.f32.mrf.mxu0
    %v2965 = vadd.f32 %v2922, %v2964
    %v2966 = vpop.f32.mrf.mxu0
    %v2967 = vadd.f32 %v2924, %v2966
    %2968 = vdwg.mxu0
    %2969 = vmatprep.subr.bf16.mxu0 %v1660
    %2970 = vmatpush1.bf16.msra.mxu0 %v1659
    %2971 = vmatprep.subr.bf16.mxu0 %v1652
    %2972 = vmatpush1.bf16.msra.mxu0 %v1651
    %2973 = vmatprep.subr.bf16.mxu0 %v1644
    %2974 = vmatpush1.bf16.msra.mxu0 %v1643
    %2975 = vmatprep.subr.bf16.mxu0 %v1636
    %2976 = vmatpush1.bf16.msra.mxu0 %v1635
    %2977 = vmatprep.subr.bf16.mxu0 %v1628
    %2978 = vmatpush1.bf16.msra.mxu0 %v1627
    %2979 = vmatprep.subr.bf16.mxu0 %v1620
    %2980 = vmatpush1.bf16.msra.mxu0 %v1619
    %2981 = vmatprep.subr.bf16.mxu0 %v1612
    %2982 = vmatpush1.bf16.msra.mxu0 %v1611
    %2983 = vmatprep.subr.bf16.mxu0 %v1604
    %2984 = vmatpush1.bf16.msra.mxu0 %v1603
    %2985 = vmatprep.subr.bf16.mxu0 %v1724
    %2986 = vmatpush2.bf16.msra.mxu0 %v1723
    %2987 = vmatprep.subr.bf16.mxu0 %v1716
    %2988 = vmatpush2.bf16.msra.mxu0 %v1715
    %2989 = vmatprep.subr.bf16.mxu0 %v1708
    %2990 = vmatpush2.bf16.msra.mxu0 %v1707
    %2991 = vmatprep.subr.bf16.mxu0 %v1700
    %2992 = vmatpush2.bf16.msra.mxu0 %v1699
    %2993 = vmatprep.subr.bf16.mxu0 %v1692
    %2994 = vmatpush2.bf16.msra.mxu0 %v1691
    %2995 = vmatprep.subr.bf16.mxu0 %v1684
    %2996 = vmatpush2.bf16.msra.mxu0 %v1683
    %2997 = vmatprep.subr.bf16.mxu0 %v1676
    %2998 = vmatpush2.bf16.msra.mxu0 %v1675
    %2999 = vmatprep.subr.bf16.mxu0 %v1668
    %3000 = vmatpush2.bf16.msra.mxu0 %v1667
    %3001 = vmatprep.mubr.bf16.mxu0 %v950
    %3002 = vmatmul.mubr.bf16.gmra.mxu0 %v949
    %v3003 = vpop.f32.mrf.mxu0
    %v3004 = vadd.f32 %v2961, %v3003
    %v3005 = vpop.f32.mrf.mxu0
    %v3006 = vadd.f32 %v2963, %v3005
    %v3007 = vpop.f32.mrf.mxu0
    %v3008 = vadd.f32 %v2965, %v3007
    %v3009 = vpop.f32.mrf.mxu0
    %v3010 = vadd.f32 %v2967, %v3009
    %3011 = vdwg.mxu0
    %3012 = vmatprep.subr.bf16.mxu0 %v1788
    %3013 = vmatpush1.bf16.msra.mxu0 %v1787
    %3014 = vmatprep.subr.bf16.mxu0 %v1780
    %3015 = vmatpush1.bf16.msra.mxu0 %v1779
    %3016 = vmatprep.subr.bf16.mxu0 %v1772
    %3017 = vmatpush1.bf16.msra.mxu0 %v1771
    %3018 = vmatprep.subr.bf16.mxu0 %v1764
    %3019 = vmatpush1.bf16.msra.mxu0 %v1763
    %3020 = vmatprep.subr.bf16.mxu0 %v1756
    %3021 = vmatpush1.bf16.msra.mxu0 %v1755
    %3022 = vmatprep.subr.bf16.mxu0 %v1748
    %3023 = vmatpush1.bf16.msra.mxu0 %v1747
    %3024 = vmatprep.subr.bf16.mxu0 %v1740
    %3025 = vmatpush1.bf16.msra.mxu0 %v1739
    %3026 = vmatprep.subr.bf16.mxu0 %v1732
    %3027 = vmatpush1.bf16.msra.mxu0 %v1731
    %3028 = vmatprep.subr.bf16.mxu0 %v1852
    %3029 = vmatpush2.bf16.msra.mxu0 %v1851
    %3030 = vmatprep.subr.bf16.mxu0 %v1844
    %3031 = vmatpush2.bf16.msra.mxu0 %v1843
    %3032 = vmatprep.subr.bf16.mxu0 %v1836
    %3033 = vmatpush2.bf16.msra.mxu0 %v1835
    %3034 = vmatprep.subr.bf16.mxu0 %v1828
    %3035 = vmatpush2.bf16.msra.mxu0 %v1827
    %3036 = vmatprep.subr.bf16.mxu0 %v1820
    %3037 = vmatpush2.bf16.msra.mxu0 %v1819
    %3038 = vmatprep.subr.bf16.mxu0 %v1812
    %3039 = vmatpush2.bf16.msra.mxu0 %v1811
    %3040 = vmatprep.subr.bf16.mxu0 %v1804
    %3041 = vmatpush2.bf16.msra.mxu0 %v1803
    %3042 = vmatprep.subr.bf16.mxu0 %v1796
    %3043 = vmatpush2.bf16.msra.mxu0 %v1795
    %3044 = vmatprep.mubr.bf16.mxu0 %v952
    %3045 = vmatmul.mubr.bf16.gmra.mxu0 %v951
    %v3046 = vpop.f32.mrf.mxu0
    %v3047 = vadd.f32 %v3004, %v3046
    %v3048 = vpop.f32.mrf.mxu0
    %v3049 = vadd.f32 %v3006, %v3048
    %v3050 = vpop.f32.mrf.mxu0
    %v3051 = vadd.f32 %v3008, %v3050
    %v3052 = vpop.f32.mrf.mxu0
    %v3053 = vadd.f32 %v3010, %v3052
    %3054 = vdwg.mxu0
    %3055 = vmatprep.subr.bf16.mxu0 %v1916
    %3056 = vmatpush1.bf16.msra.mxu0 %v1915
    %3057 = vmatprep.subr.bf16.mxu0 %v1908
    %3058 = vmatpush1.bf16.msra.mxu0 %v1907
    %3059 = vmatprep.subr.bf16.mxu0 %v1900
    %3060 = vmatpush1.bf16.msra.mxu0 %v1899
    %3061 = vmatprep.subr.bf16.mxu0 %v1892
    %3062 = vmatpush1.bf16.msra.mxu0 %v1891
    %3063 = vmatprep.subr.bf16.mxu0 %v1884
    %3064 = vmatpush1.bf16.msra.mxu0 %v1883
    %3065 = vmatprep.subr.bf16.mxu0 %v1876
    %3066 = vmatpush1.bf16.msra.mxu0 %v1875
    %3067 = vmatprep.subr.bf16.mxu0 %v1868
    %3068 = vmatpush1.bf16.msra.mxu0 %v1867
    %3069 = vmatprep.subr.bf16.mxu0 %v1860
    %3070 = vmatpush1.bf16.msra.mxu0 %v1859
    %3071 = vmatprep.subr.bf16.mxu0 %v1980
    %3072 = vmatpush2.bf16.msra.mxu0 %v1979
    %3073 = vmatprep.subr.bf16.mxu0 %v1972
    %3074 = vmatpush2.bf16.msra.mxu0 %v1971
    %3075 = vmatprep.subr.bf16.mxu0 %v1964
    %3076 = vmatpush2.bf16.msra.mxu0 %v1963
    %3077 = vmatprep.subr.bf16.mxu0 %v1956
    %3078 = vmatpush2.bf16.msra.mxu0 %v1955
    %3079 = vmatprep.subr.bf16.mxu0 %v1948
    %3080 = vmatpush2.bf16.msra.mxu0 %v1947
    %3081 = vmatprep.subr.bf16.mxu0 %v1940
    %3082 = vmatpush2.bf16.msra.mxu0 %v1939
    %3083 = vmatprep.subr.bf16.mxu0 %v1932
    %3084 = vmatpush2.bf16.msra.mxu0 %v1931
    %3085 = vmatprep.subr.bf16.mxu0 %v1924
    %3086 = vmatpush2.bf16.msra.mxu0 %v1923
    %3087 = vmatprep.mubr.bf16.mxu0 %v954
    %3088 = vmatmul.mubr.bf16.gmra.mxu0 %v953
    %v3089 = vpop.f32.mrf.mxu0
    %v3090 = vadd.f32 %v3047, %v3089
    %v3091 = vpop.f32.mrf.mxu0
    %v3092 = vadd.f32 %v3049, %v3091
    %v3093 = vpop.f32.mrf.mxu0
    %v3094 = vadd.f32 %v3051, %v3093
    %v3095 = vpop.f32.mrf.mxu0
    %v3096 = vadd.f32 %v3053, %v3095
    %3097 = vdwg.mxu0
    %3098 = vmatprep.subr.bf16.mxu0 %v2044
    %3099 = vmatpush1.bf16.msra.mxu0 %v2043
    %3100 = vmatprep.subr.bf16.mxu0 %v2036
    %3101 = vmatpush1.bf16.msra.mxu0 %v2035
    %3102 = vmatprep.subr.bf16.mxu0 %v2028
    %3103 = vmatpush1.bf16.msra.mxu0 %v2027
    %3104 = vmatprep.subr.bf16.mxu0 %v2020
    %3105 = vmatpush1.bf16.msra.mxu0 %v2019
    %3106 = vmatprep.subr.bf16.mxu0 %v2012
    %3107 = vmatpush1.bf16.msra.mxu0 %v2011
    %3108 = vmatprep.subr.bf16.mxu0 %v2004
    %3109 = vmatpush1.bf16.msra.mxu0 %v2003
    %3110 = vmatprep.subr.bf16.mxu0 %v1996
    %3111 = vmatpush1.bf16.msra.mxu0 %v1995
    %3112 = vmatprep.subr.bf16.mxu0 %v1988
    %3113 = vmatpush1.bf16.msra.mxu0 %v1987
    %3114 = vmatprep.subr.bf16.mxu0 %v2108
    %3115 = vmatpush2.bf16.msra.mxu0 %v2107
    %3116 = vmatprep.subr.bf16.mxu0 %v2100
    %3117 = vmatpush2.bf16.msra.mxu0 %v2099
    %3118 = vmatprep.subr.bf16.mxu0 %v2092
    %3119 = vmatpush2.bf16.msra.mxu0 %v2091
    %3120 = vmatprep.subr.bf16.mxu0 %v2084
    %3121 = vmatpush2.bf16.msra.mxu0 %v2083
    %3122 = vmatprep.subr.bf16.mxu0 %v2076
    %3123 = vmatpush2.bf16.msra.mxu0 %v2075
    %3124 = vmatprep.subr.bf16.mxu0 %v2068
    %3125 = vmatpush2.bf16.msra.mxu0 %v2067
    %3126 = vmatprep.subr.bf16.mxu0 %v2060
    %3127 = vmatpush2.bf16.msra.mxu0 %v2059
    %3128 = vmatprep.subr.bf16.mxu0 %v2052
    %3129 = vmatpush2.bf16.msra.mxu0 %v2051
    %3130 = vmatprep.mubr.bf16.mxu0 %v956
    %3131 = vmatmul.mubr.bf16.gmra.mxu0 %v955
    %v3132 = vpop.f32.mrf.mxu0
    %v3133 = vadd.f32 %v3090, %v3132
    %v3134 = vpop.f32.mrf.mxu0
    %v3135 = vadd.f32 %v3092, %v3134
    %v3136 = vpop.f32.mrf.mxu0
    %v3137 = vadd.f32 %v3094, %v3136
    %v3138 = vpop.f32.mrf.mxu0
    %v3139 = vadd.f32 %v3096, %v3138
    %3140 = vdwg.mxu0
    %s3141 = scalar_lea.vmem [#allocation5], 1
    %v3142 = vld [vmem:[%s3141] ss:$8 sm:$0xf]
    %v3143 = vld [vmem:[%s3141] ss:$8 sm:$0xf0]
    %v3144 = vor.u32 %v3142, %v3143
    %s3145 = scalar_lea.vmem [#allocation7], 1
    %v3146 = vld [vmem:[%s3145] ss:$8 sm:$0xf]
    %v3147 = vld [vmem:[%s3145] ss:$8 sm:$0xf0]
    %v3148 = vor.u32 %v3146, %v3147
    %v3150 = vlaneseq
    %v3151 = vshrl.u32 %v3150, 7
    %v3152 = vsub.s32 0, %v3151
    %v3153 = vrot.slane %v3144, %v3152
    %v3154 = vlaneseq
    %v3155 = vshrl.u32 %v3154, 7
    %v3156 = vsub.s32 1, %v3155
    %v3157 = vrot.slane %v3144, %v3156
    %v3158 = vlaneseq
    %v3159 = vshrl.u32 %v3158, 7
    %v3160 = vsub.s32 2, %v3159
    %v3161 = vrot.slane %v3144, %v3160
    %v3162 = vlaneseq
    %v3163 = vshrl.u32 %v3162, 7
    %v3164 = vsub.s32 3, %v3163
    %v3165 = vrot.slane %v3144, %v3164
    %v3166 = vlaneseq
    %v3167 = vshrl.u32 %v3166, 7
    %v3168 = vsub.s32 4, %v3167
    %v3169 = vrot.slane %v3144, %v3168
    %v3170 = vlaneseq
    %v3171 = vshrl.u32 %v3170, 7
    %v3172 = vsub.s32 5, %v3171
    %v3173 = vrot.slane %v3144, %v3172
    %v3174 = vlaneseq
    %v3175 = vshrl.u32 %v3174, 7
    %v3176 = vsub.s32 6, %v3175
    %v3177 = vrot.slane %v3144, %v3176
    %v3178 = vlaneseq
    %v3179 = vshrl.u32 %v3178, 7
    %v3180 = vsub.s32 7, %v3179
    %v3181 = vrot.slane %v3144, %v3180
    %v3190 = vmul.f32 %v2359, %v3153
    %v3191 = vmul.f32 %v2361, %v3157
    %v3192 = vmul.f32 %v2617, %v3161
    %v3193 = vmul.f32 %v2619, %v3165
    %v3194 = vmul.f32 %v2875, %v3169
    %v3195 = vmul.f32 %v2877, %v3173
    %v3196 = vmul.f32 %v3133, %v3177
    %v3197 = vmul.f32 %v3135, %v3181
    %v3198 = vmul.f32 %v2363, %v3153
    %v3199 = vmul.f32 %v2365, %v3157
    %v3200 = vmul.f32 %v2621, %v3161
    %v3201 = vmul.f32 %v2623, %v3165
    %v3202 = vmul.f32 %v2879, %v3169
    %v3203 = vmul.f32 %v2881, %v3173
    %v3204 = vmul.f32 %v3137, %v3177
    %v3205 = vmul.f32 %v3139, %v3181
    %v3207 = vlaneseq
    %v3208 = vshrl.u32 %v3207, 7
    %v3209 = vsub.s32 0, %v3208
    %v3210 = vrot.slane %v3148, %v3209
    %v3211 = vlaneseq
    %v3212 = vshrl.u32 %v3211, 7
    %v3213 = vsub.s32 1, %v3212
    %v3214 = vrot.slane %v3148, %v3213
    %v3215 = vlaneseq
    %v3216 = vshrl.u32 %v3215, 7
    %v3217 = vsub.s32 2, %v3216
    %v3218 = vrot.slane %v3148, %v3217
    %v3219 = vlaneseq
    %v3220 = vshrl.u32 %v3219, 7
    %v3221 = vsub.s32 3, %v3220
    %v3222 = vrot.slane %v3148, %v3221
    %v3223 = vlaneseq
    %v3224 = vshrl.u32 %v3223, 7
    %v3225 = vsub.s32 4, %v3224
    %v3226 = vrot.slane %v3148, %v3225
    %v3227 = vlaneseq
    %v3228 = vshrl.u32 %v3227, 7
    %v3229 = vsub.s32 5, %v3228
    %v3230 = vrot.slane %v3148, %v3229
    %v3231 = vlaneseq
    %v3232 = vshrl.u32 %v3231, 7
    %v3233 = vsub.s32 6, %v3232
    %v3234 = vrot.slane %v3148, %v3233
    %v3235 = vlaneseq
    %v3236 = vshrl.u32 %v3235, 7
    %v3237 = vsub.s32 7, %v3236
    %v3238 = vrot.slane %v3148, %v3237
    %v3247 = vadd.f32 %v3190, %v3210
    %v3248 = vadd.f32 %v3191, %v3214
    %v3249 = vadd.f32 %v3192, %v3218
    %v3250 = vadd.f32 %v3193, %v3222
    %v3251 = vadd.f32 %v3194, %v3226
    %v3252 = vadd.f32 %v3195, %v3230
    %v3253 = vadd.f32 %v3196, %v3234
    %v3254 = vadd.f32 %v3197, %v3238
    %v3255 = vadd.f32 %v3198, %v3210
    %v3256 = vadd.f32 %v3199, %v3214
    %v3257 = vadd.f32 %v3200, %v3218
    %v3258 = vadd.f32 %v3201, %v3222
    %v3259 = vadd.f32 %v3202, %v3226
    %v3260 = vadd.f32 %v3203, %v3230
    %v3261 = vadd.f32 %v3204, %v3234
    %v3262 = vadd.f32 %v3205, %v3238
    %v3263 = vtanh.pop %v3247
    %v3264 = vtanh.pop %v3248
    %v3265 = vtanh.pop %v3249
    %v3266 = vtanh.pop %v3250
    %v3267 = vtanh.pop %v3251
    %v3268 = vtanh.pop %v3252
    %v3269 = vtanh.pop %v3253
    %v3270 = vtanh.pop %v3254
    %v3271 = vtanh.pop %v3255
    %v3272 = vtanh.pop %v3256
    %v3273 = vtanh.pop %v3257
    %v3274 = vtanh.pop %v3258
    %v3275 = vtanh.pop %v3259
    %v3276 = vtanh.pop %v3260
    %v3277 = vtanh.pop %v3261
    %v3278 = vtanh.pop %v3262
    %v3279 = vpack.c.bf16 %v3271, %v3263
    %v3280 = vpack.c.bf16 %v3272, %v3264
    %v3281 = vpack.c.bf16 %v3273, %v3265
    %v3282 = vpack.c.bf16 %v3274, %v3266
    %v3283 = vpack.c.bf16 %v3275, %v3267
    %v3284 = vpack.c.bf16 %v3276, %v3268
    %v3285 = vpack.c.bf16 %v3277, %v3269
    %v3286 = vpack.c.bf16 %v3278, %v3270
    %v3287 = vld [vmem:[#allocation11] sm:$0xff]
    %v3288 = vld [vmem:[#allocation11 + $0x8] sm:$0xff]
    %v3289 = vld [vmem:[#allocation11 + $0x10] sm:$0xff]
    %v3290 = vld [vmem:[#allocation11 + $0x18] sm:$0xff]
    %v3291 = vld [vmem:[#allocation11 + $0x20] sm:$0xff]
    %v3292 = vld [vmem:[#allocation11 + $0x28] sm:$0xff]
    %v3293 = vld [vmem:[#allocation11 + $0x30] sm:$0xff]
    %v3294 = vld [vmem:[#allocation11 + $0x38] sm:$0xff]
    %v3295 = vld [vmem:[#allocation11 + $0x40] sm:$0xff]
    %v3296 = vld [vmem:[#allocation11 + $0x48] sm:$0xff]
    %v3297 = vld [vmem:[#allocation11 + $0x50] sm:$0xff]
    %v3298 = vld [vmem:[#allocation11 + $0x58] sm:$0xff]
    %v3299 = vld [vmem:[#allocation11 + $0x60] sm:$0xff]
    %v3300 = vld [vmem:[#allocation11 + $0x68] sm:$0xff]
    %v3301 = vld [vmem:[#allocation11 + $0x70] sm:$0xff]
    %v3302 = vld [vmem:[#allocation11 + $0x78] sm:$0xff]
    %v3303 = vld [vmem:[#allocation11 + $0x80] sm:$0xff]
    %v3304 = vld [vmem:[#allocation11 + $0x88] sm:$0xff]
    %v3305 = vld [vmem:[#allocation11 + $0x90] sm:$0xff]
    %v3306 = vld [vmem:[#allocation11 + $0x98] sm:$0xff]
    %v3307 = vld [vmem:[#allocation11 + $0xa0] sm:$0xff]
    %v3308 = vld [vmem:[#allocation11 + $0xa8] sm:$0xff]
    %v3309 = vld [vmem:[#allocation11 + $0xb0] sm:$0xff]
    %v3310 = vld [vmem:[#allocation11 + $0xb8] sm:$0xff]
    %v3311 = vld [vmem:[#allocation11 + $0xc0] sm:$0xff]
    %v3312 = vld [vmem:[#allocation11 + $0xc8] sm:$0xff]
    %v3313 = vld [vmem:[#allocation11 + $0xd0] sm:$0xff]
    %v3314 = vld [vmem:[#allocation11 + $0xd8] sm:$0xff]
    %v3315 = vld [vmem:[#allocation11 + $0xe0] sm:$0xff]
    %v3316 = vld [vmem:[#allocation11 + $0xe8] sm:$0xff]
    %v3317 = vld [vmem:[#allocation11 + $0xf0] sm:$0xff]
    %v3318 = vld [vmem:[#allocation11 + $0xf8] sm:$0xff]
    %v3319 = vld [vmem:[#allocation11 + $0x100] sm:$0xff]
    %v3320 = vld [vmem:[#allocation11 + $0x108] sm:$0xff]
    %v3321 = vld [vmem:[#allocation11 + $0x110] sm:$0xff]
    %v3322 = vld [vmem:[#allocation11 + $0x118] sm:$0xff]
    %v3323 = vld [vmem:[#allocation11 + $0x120] sm:$0xff]
    %v3324 = vld [vmem:[#allocation11 + $0x128] sm:$0xff]
    %v3325 = vld [vmem:[#allocation11 + $0x130] sm:$0xff]
    %v3326 = vld [vmem:[#allocation11 + $0x138] sm:$0xff]
    %v3327 = vld [vmem:[#allocation11 + $0x140] sm:$0xff]
    %v3328 = vld [vmem:[#allocation11 + $0x148] sm:$0xff]
    %v3329 = vld [vmem:[#allocation11 + $0x150] sm:$0xff]
    %v3330 = vld [vmem:[#allocation11 + $0x158] sm:$0xff]
    %v3331 = vld [vmem:[#allocation11 + $0x160] sm:$0xff]
    %v3332 = vld [vmem:[#allocation11 + $0x168] sm:$0xff]
    %v3333 = vld [vmem:[#allocation11 + $0x170] sm:$0xff]
    %v3334 = vld [vmem:[#allocation11 + $0x178] sm:$0xff]
    %v3335 = vld [vmem:[#allocation11 + $0x180] sm:$0xff]
    %v3336 = vld [vmem:[#allocation11 + $0x188] sm:$0xff]
    %v3337 = vld [vmem:[#allocation11 + $0x190] sm:$0xff]
    %v3338 = vld [vmem:[#allocation11 + $0x198] sm:$0xff]
    %v3339 = vld [vmem:[#allocation11 + $0x1a0] sm:$0xff]
    %v3340 = vld [vmem:[#allocation11 + $0x1a8] sm:$0xff]
    %v3341 = vld [vmem:[#allocation11 + $0x1b0] sm:$0xff]
    %v3342 = vld [vmem:[#allocation11 + $0x1b8] sm:$0xff]
    %v3343 = vld [vmem:[#allocation11 + $0x1c0] sm:$0xff]
    %v3344 = vld [vmem:[#allocation11 + $0x1c8] sm:$0xff]
    %v3345 = vld [vmem:[#allocation11 + $0x1d0] sm:$0xff]
    %v3346 = vld [vmem:[#allocation11 + $0x1d8] sm:$0xff]
    %v3347 = vld [vmem:[#allocation11 + $0x1e0] sm:$0xff]
    %v3348 = vld [vmem:[#allocation11 + $0x1e8] sm:$0xff]
    %v3349 = vld [vmem:[#allocation11 + $0x1f0] sm:$0xff]
    %v3350 = vld [vmem:[#allocation11 + $0x1f8] sm:$0xff]
    %v3351 = vld [vmem:[#allocation11 + $0x200] sm:$0xff]
    %v3352 = vld [vmem:[#allocation11 + $0x208] sm:$0xff]
    %v3353 = vld [vmem:[#allocation11 + $0x210] sm:$0xff]
    %v3354 = vld [vmem:[#allocation11 + $0x218] sm:$0xff]
    %v3355 = vld [vmem:[#allocation11 + $0x220] sm:$0xff]
    %v3356 = vld [vmem:[#allocation11 + $0x228] sm:$0xff]
    %v3357 = vld [vmem:[#allocation11 + $0x230] sm:$0xff]
    %v3358 = vld [vmem:[#allocation11 + $0x238] sm:$0xff]
    %v3359 = vld [vmem:[#allocation11 + $0x240] sm:$0xff]
    %v3360 = vld [vmem:[#allocation11 + $0x248] sm:$0xff]
    %v3361 = vld [vmem:[#allocation11 + $0x250] sm:$0xff]
    %v3362 = vld [vmem:[#allocation11 + $0x258] sm:$0xff]
    %v3363 = vld [vmem:[#allocation11 + $0x260] sm:$0xff]
    %v3364 = vld [vmem:[#allocation11 + $0x268] sm:$0xff]
    %v3365 = vld [vmem:[#allocation11 + $0x270] sm:$0xff]
    %v3366 = vld [vmem:[#allocation11 + $0x278] sm:$0xff]
    %v3367 = vld [vmem:[#allocation11 + $0x280] sm:$0xff]
    %v3368 = vld [vmem:[#allocation11 + $0x288] sm:$0xff]
    %v3369 = vld [vmem:[#allocation11 + $0x290] sm:$0xff]
    %v3370 = vld [vmem:[#allocation11 + $0x298] sm:$0xff]
    %v3371 = vld [vmem:[#allocation11 + $0x2a0] sm:$0xff]
    %v3372 = vld [vmem:[#allocation11 + $0x2a8] sm:$0xff]
    %v3373 = vld [vmem:[#allocation11 + $0x2b0] sm:$0xff]
    %v3374 = vld [vmem:[#allocation11 + $0x2b8] sm:$0xff]
    %v3375 = vld [vmem:[#allocation11 + $0x2c0] sm:$0xff]
    %v3376 = vld [vmem:[#allocation11 + $0x2c8] sm:$0xff]
    %v3377 = vld [vmem:[#allocation11 + $0x2d0] sm:$0xff]
    %v3378 = vld [vmem:[#allocation11 + $0x2d8] sm:$0xff]
    %v3379 = vld [vmem:[#allocation11 + $0x2e0] sm:$0xff]
    %v3380 = vld [vmem:[#allocation11 + $0x2e8] sm:$0xff]
    %v3381 = vld [vmem:[#allocation11 + $0x2f0] sm:$0xff]
    %v3382 = vld [vmem:[#allocation11 + $0x2f8] sm:$0xff]
    %v3383 = vld [vmem:[#allocation11 + $0x300] sm:$0xff]
    %v3384 = vld [vmem:[#allocation11 + $0x308] sm:$0xff]
    %v3385 = vld [vmem:[#allocation11 + $0x310] sm:$0xff]
    %v3386 = vld [vmem:[#allocation11 + $0x318] sm:$0xff]
    %v3387 = vld [vmem:[#allocation11 + $0x320] sm:$0xff]
    %v3388 = vld [vmem:[#allocation11 + $0x328] sm:$0xff]
    %v3389 = vld [vmem:[#allocation11 + $0x330] sm:$0xff]
    %v3390 = vld [vmem:[#allocation11 + $0x338] sm:$0xff]
    %v3391 = vld [vmem:[#allocation11 + $0x340] sm:$0xff]
    %v3392 = vld [vmem:[#allocation11 + $0x348] sm:$0xff]
    %v3393 = vld [vmem:[#allocation11 + $0x350] sm:$0xff]
    %v3394 = vld [vmem:[#allocation11 + $0x358] sm:$0xff]
    %v3395 = vld [vmem:[#allocation11 + $0x360] sm:$0xff]
    %v3396 = vld [vmem:[#allocation11 + $0x368] sm:$0xff]
    %v3397 = vld [vmem:[#allocation11 + $0x370] sm:$0xff]
    %v3398 = vld [vmem:[#allocation11 + $0x378] sm:$0xff]
    %v3399 = vld [vmem:[#allocation11 + $0x380] sm:$0xff]
    %v3400 = vld [vmem:[#allocation11 + $0x388] sm:$0xff]
    %v3401 = vld [vmem:[#allocation11 + $0x390] sm:$0xff]
    %v3402 = vld [vmem:[#allocation11 + $0x398] sm:$0xff]
    %v3403 = vld [vmem:[#allocation11 + $0x3a0] sm:$0xff]
    %v3404 = vld [vmem:[#allocation11 + $0x3a8] sm:$0xff]
    %v3405 = vld [vmem:[#allocation11 + $0x3b0] sm:$0xff]
    %v3406 = vld [vmem:[#allocation11 + $0x3b8] sm:$0xff]
    %v3407 = vld [vmem:[#allocation11 + $0x3c0] sm:$0xff]
    %v3408 = vld [vmem:[#allocation11 + $0x3c8] sm:$0xff]
    %v3409 = vld [vmem:[#allocation11 + $0x3d0] sm:$0xff]
    %v3410 = vld [vmem:[#allocation11 + $0x3d8] sm:$0xff]
    %v3411 = vld [vmem:[#allocation11 + $0x3e0] sm:$0xff]
    %v3412 = vld [vmem:[#allocation11 + $0x3e8] sm:$0xff]
    %v3413 = vld [vmem:[#allocation11 + $0x3f0] sm:$0xff]
    %v3414 = vld [vmem:[#allocation11 + $0x3f8] sm:$0xff]
    %v3415 = vld [vmem:[#allocation11 + $0x400] sm:$0xff]
    %v3416 = vld [vmem:[#allocation11 + $0x408] sm:$0xff]
    %v3417 = vld [vmem:[#allocation11 + $0x410] sm:$0xff]
    %v3418 = vld [vmem:[#allocation11 + $0x418] sm:$0xff]
    %v3419 = vld [vmem:[#allocation11 + $0x420] sm:$0xff]
    %v3420 = vld [vmem:[#allocation11 + $0x428] sm:$0xff]
    %v3421 = vld [vmem:[#allocation11 + $0x430] sm:$0xff]
    %v3422 = vld [vmem:[#allocation11 + $0x438] sm:$0xff]
    %v3423 = vld [vmem:[#allocation11 + $0x440] sm:$0xff]
    %v3424 = vld [vmem:[#allocation11 + $0x448] sm:$0xff]
    %v3425 = vld [vmem:[#allocation11 + $0x450] sm:$0xff]
    %v3426 = vld [vmem:[#allocation11 + $0x458] sm:$0xff]
    %v3427 = vld [vmem:[#allocation11 + $0x460] sm:$0xff]
    %v3428 = vld [vmem:[#allocation11 + $0x468] sm:$0xff]
    %v3429 = vld [vmem:[#allocation11 + $0x470] sm:$0xff]
    %v3430 = vld [vmem:[#allocation11 + $0x478] sm:$0xff]
    %v3431 = vld [vmem:[#allocation11 + $0x480] sm:$0xff]
    %v3432 = vld [vmem:[#allocation11 + $0x488] sm:$0xff]
    %v3433 = vld [vmem:[#allocation11 + $0x490] sm:$0xff]
    %v3434 = vld [vmem:[#allocation11 + $0x498] sm:$0xff]
    %v3435 = vld [vmem:[#allocation11 + $0x4a0] sm:$0xff]
    %v3436 = vld [vmem:[#allocation11 + $0x4a8] sm:$0xff]
    %v3437 = vld [vmem:[#allocation11 + $0x4b0] sm:$0xff]
    %v3438 = vld [vmem:[#allocation11 + $0x4b8] sm:$0xff]
    %v3439 = vld [vmem:[#allocation11 + $0x4c0] sm:$0xff]
    %v3440 = vld [vmem:[#allocation11 + $0x4c8] sm:$0xff]
    %v3441 = vld [vmem:[#allocation11 + $0x4d0] sm:$0xff]
    %v3442 = vld [vmem:[#allocation11 + $0x4d8] sm:$0xff]
    %v3443 = vld [vmem:[#allocation11 + $0x4e0] sm:$0xff]
    %v3444 = vld [vmem:[#allocation11 + $0x4e8] sm:$0xff]
    %v3445 = vld [vmem:[#allocation11 + $0x4f0] sm:$0xff]
    %v3446 = vld [vmem:[#allocation11 + $0x4f8] sm:$0xff]
    %v3447 = vld [vmem:[#allocation11 + $0x500] sm:$0xff]
    %v3448 = vld [vmem:[#allocation11 + $0x508] sm:$0xff]
    %v3449 = vld [vmem:[#allocation11 + $0x510] sm:$0xff]
    %v3450 = vld [vmem:[#allocation11 + $0x518] sm:$0xff]
    %v3451 = vld [vmem:[#allocation11 + $0x520] sm:$0xff]
    %v3452 = vld [vmem:[#allocation11 + $0x528] sm:$0xff]
    %v3453 = vld [vmem:[#allocation11 + $0x530] sm:$0xff]
    %v3454 = vld [vmem:[#allocation11 + $0x538] sm:$0xff]
    %v3455 = vld [vmem:[#allocation11 + $0x540] sm:$0xff]
    %v3456 = vld [vmem:[#allocation11 + $0x548] sm:$0xff]
    %v3457 = vld [vmem:[#allocation11 + $0x550] sm:$0xff]
    %v3458 = vld [vmem:[#allocation11 + $0x558] sm:$0xff]
    %v3459 = vld [vmem:[#allocation11 + $0x560] sm:$0xff]
    %v3460 = vld [vmem:[#allocation11 + $0x568] sm:$0xff]
    %v3461 = vld [vmem:[#allocation11 + $0x570] sm:$0xff]
    %v3462 = vld [vmem:[#allocation11 + $0x578] sm:$0xff]
    %v3463 = vld [vmem:[#allocation11 + $0x580] sm:$0xff]
    %v3464 = vld [vmem:[#allocation11 + $0x588] sm:$0xff]
    %v3465 = vld [vmem:[#allocation11 + $0x590] sm:$0xff]
    %v3466 = vld [vmem:[#allocation11 + $0x598] sm:$0xff]
    %v3467 = vld [vmem:[#allocation11 + $0x5a0] sm:$0xff]
    %v3468 = vld [vmem:[#allocation11 + $0x5a8] sm:$0xff]
    %v3469 = vld [vmem:[#allocation11 + $0x5b0] sm:$0xff]
    %v3470 = vld [vmem:[#allocation11 + $0x5b8] sm:$0xff]
    %v3471 = vld [vmem:[#allocation11 + $0x5c0] sm:$0xff]
    %v3472 = vld [vmem:[#allocation11 + $0x5c8] sm:$0xff]
    %v3473 = vld [vmem:[#allocation11 + $0x5d0] sm:$0xff]
    %v3474 = vld [vmem:[#allocation11 + $0x5d8] sm:$0xff]
    %v3475 = vld [vmem:[#allocation11 + $0x5e0] sm:$0xff]
    %v3476 = vld [vmem:[#allocation11 + $0x5e8] sm:$0xff]
    %v3477 = vld [vmem:[#allocation11 + $0x5f0] sm:$0xff]
    %v3478 = vld [vmem:[#allocation11 + $0x5f8] sm:$0xff]
    %v3479 = vunpack.c.l.s8.bf16 %v3287
    %v3480 = vunpack.c.l.s8.bf16 %v3288
    %v3481 = vunpack.c.l.s8.bf16 %v3289
    %v3482 = vunpack.c.l.s8.bf16 %v3290
    %v3483 = vunpack.c.l.s8.bf16 %v3291
    %v3484 = vunpack.c.l.s8.bf16 %v3292
    %v3485 = vunpack.c.h.s8.bf16 %v3287
    %v3486 = vunpack.c.h.s8.bf16 %v3288
    %v3487 = vunpack.c.h.s8.bf16 %v3289
    %v3488 = vunpack.c.h.s8.bf16 %v3290
    %v3489 = vunpack.c.h.s8.bf16 %v3291
    %v3490 = vunpack.c.h.s8.bf16 %v3292
    %v3491 = vunpack.c.l.s8.bf16 %v3293
    %v3492 = vunpack.c.l.s8.bf16 %v3294
    %v3493 = vunpack.c.l.s8.bf16 %v3295
    %v3494 = vunpack.c.l.s8.bf16 %v3296
    %v3495 = vunpack.c.l.s8.bf16 %v3297
    %v3496 = vunpack.c.l.s8.bf16 %v3298
    %v3497 = vunpack.c.h.s8.bf16 %v3293
    %v3498 = vunpack.c.h.s8.bf16 %v3294
    %v3499 = vunpack.c.h.s8.bf16 %v3295
    %v3500 = vunpack.c.h.s8.bf16 %v3296
    %v3501 = vunpack.c.h.s8.bf16 %v3297
    %v3502 = vunpack.c.h.s8.bf16 %v3298
    %v3503 = vunpack.c.l.s8.bf16 %v3299
    %v3504 = vunpack.c.l.s8.bf16 %v3300
    %v3505 = vunpack.c.l.s8.bf16 %v3301
    %v3506 = vunpack.c.l.s8.bf16 %v3302
    %v3507 = vunpack.c.l.s8.bf16 %v3303
    %v3508 = vunpack.c.l.s8.bf16 %v3304
    %v3509 = vunpack.c.h.s8.bf16 %v3299
    %v3510 = vunpack.c.h.s8.bf16 %v3300
    %v3511 = vunpack.c.h.s8.bf16 %v3301
    %v3512 = vunpack.c.h.s8.bf16 %v3302
    %v3513 = vunpack.c.h.s8.bf16 %v3303
    %v3514 = vunpack.c.h.s8.bf16 %v3304
    %v3515 = vunpack.c.l.s8.bf16 %v3305
    %v3516 = vunpack.c.l.s8.bf16 %v3306
    %v3517 = vunpack.c.l.s8.bf16 %v3307
    %v3518 = vunpack.c.l.s8.bf16 %v3308
    %v3519 = vunpack.c.l.s8.bf16 %v3309
    %v3520 = vunpack.c.l.s8.bf16 %v3310
    %v3521 = vunpack.c.h.s8.bf16 %v3305
    %v3522 = vunpack.c.h.s8.bf16 %v3306
    %v3523 = vunpack.c.h.s8.bf16 %v3307
    %v3524 = vunpack.c.h.s8.bf16 %v3308
    %v3525 = vunpack.c.h.s8.bf16 %v3309
    %v3526 = vunpack.c.h.s8.bf16 %v3310
    %v3527 = vunpack.c.l.s8.bf16 %v3311
    %v3528 = vunpack.c.l.s8.bf16 %v3312
    %v3529 = vunpack.c.l.s8.bf16 %v3313
    %v3530 = vunpack.c.l.s8.bf16 %v3314
    %v3531 = vunpack.c.l.s8.bf16 %v3315
    %v3532 = vunpack.c.l.s8.bf16 %v3316
    %v3533 = vunpack.c.h.s8.bf16 %v3311
    %v3534 = vunpack.c.h.s8.bf16 %v3312
    %v3535 = vunpack.c.h.s8.bf16 %v3313
    %v3536 = vunpack.c.h.s8.bf16 %v3314
    %v3537 = vunpack.c.h.s8.bf16 %v3315
    %v3538 = vunpack.c.h.s8.bf16 %v3316
    %v3539 = vunpack.c.l.s8.bf16 %v3317
    %v3540 = vunpack.c.l.s8.bf16 %v3318
    %v3541 = vunpack.c.l.s8.bf16 %v3319
    %v3542 = vunpack.c.l.s8.bf16 %v3320
    %v3543 = vunpack.c.l.s8.bf16 %v3321
    %v3544 = vunpack.c.l.s8.bf16 %v3322
    %v3545 = vunpack.c.h.s8.bf16 %v3317
    %v3546 = vunpack.c.h.s8.bf16 %v3318
    %v3547 = vunpack.c.h.s8.bf16 %v3319
    %v3548 = vunpack.c.h.s8.bf16 %v3320
    %v3549 = vunpack.c.h.s8.bf16 %v3321
    %v3550 = vunpack.c.h.s8.bf16 %v3322
    %v3551 = vunpack.c.l.s8.bf16 %v3323
    %v3552 = vunpack.c.l.s8.bf16 %v3324
    %v3553 = vunpack.c.l.s8.bf16 %v3325
    %v3554 = vunpack.c.l.s8.bf16 %v3326
    %v3555 = vunpack.c.l.s8.bf16 %v3327
    %v3556 = vunpack.c.l.s8.bf16 %v3328
    %v3557 = vunpack.c.h.s8.bf16 %v3323
    %v3558 = vunpack.c.h.s8.bf16 %v3324
    %v3559 = vunpack.c.h.s8.bf16 %v3325
    %v3560 = vunpack.c.h.s8.bf16 %v3326
    %v3561 = vunpack.c.h.s8.bf16 %v3327
    %v3562 = vunpack.c.h.s8.bf16 %v3328
    %v3563 = vunpack.c.l.s8.bf16 %v3329
    %v3564 = vunpack.c.l.s8.bf16 %v3330
    %v3565 = vunpack.c.l.s8.bf16 %v3331
    %v3566 = vunpack.c.l.s8.bf16 %v3332
    %v3567 = vunpack.c.l.s8.bf16 %v3333
    %v3568 = vunpack.c.l.s8.bf16 %v3334
    %v3569 = vunpack.c.h.s8.bf16 %v3329
    %v3570 = vunpack.c.h.s8.bf16 %v3330
    %v3571 = vunpack.c.h.s8.bf16 %v3331
    %v3572 = vunpack.c.h.s8.bf16 %v3332
    %v3573 = vunpack.c.h.s8.bf16 %v3333
    %v3574 = vunpack.c.h.s8.bf16 %v3334
    %v3575 = vunpack.c.l.s8.bf16 %v3335
    %v3576 = vunpack.c.l.s8.bf16 %v3336
    %v3577 = vunpack.c.l.s8.bf16 %v3337
    %v3578 = vunpack.c.l.s8.bf16 %v3338
    %v3579 = vunpack.c.l.s8.bf16 %v3339
    %v3580 = vunpack.c.l.s8.bf16 %v3340
    %v3581 = vunpack.c.h.s8.bf16 %v3335
    %v3582 = vunpack.c.h.s8.bf16 %v3336
    %v3583 = vunpack.c.h.s8.bf16 %v3337
    %v3584 = vunpack.c.h.s8.bf16 %v3338
    %v3585 = vunpack.c.h.s8.bf16 %v3339
    %v3586 = vunpack.c.h.s8.bf16 %v3340
    %v3587 = vunpack.c.l.s8.bf16 %v3341
    %v3588 = vunpack.c.l.s8.bf16 %v3342
    %v3589 = vunpack.c.l.s8.bf16 %v3343
    %v3590 = vunpack.c.l.s8.bf16 %v3344
    %v3591 = vunpack.c.l.s8.bf16 %v3345
    %v3592 = vunpack.c.l.s8.bf16 %v3346
    %v3593 = vunpack.c.h.s8.bf16 %v3341
    %v3594 = vunpack.c.h.s8.bf16 %v3342
    %v3595 = vunpack.c.h.s8.bf16 %v3343
    %v3596 = vunpack.c.h.s8.bf16 %v3344
    %v3597 = vunpack.c.h.s8.bf16 %v3345
    %v3598 = vunpack.c.h.s8.bf16 %v3346
    %v3599 = vunpack.c.l.s8.bf16 %v3347
    %v3600 = vunpack.c.l.s8.bf16 %v3348
    %v3601 = vunpack.c.l.s8.bf16 %v3349
    %v3602 = vunpack.c.l.s8.bf16 %v3350
    %v3603 = vunpack.c.l.s8.bf16 %v3351
    %v3604 = vunpack.c.l.s8.bf16 %v3352
    %v3605 = vunpack.c.h.s8.bf16 %v3347
    %v3606 = vunpack.c.h.s8.bf16 %v3348
    %v3607 = vunpack.c.h.s8.bf16 %v3349
    %v3608 = vunpack.c.h.s8.bf16 %v3350
    %v3609 = vunpack.c.h.s8.bf16 %v3351
    %v3610 = vunpack.c.h.s8.bf16 %v3352
    %v3611 = vunpack.c.l.s8.bf16 %v3353
    %v3612 = vunpack.c.l.s8.bf16 %v3354
    %v3613 = vunpack.c.l.s8.bf16 %v3355
    %v3614 = vunpack.c.l.s8.bf16 %v3356
    %v3615 = vunpack.c.l.s8.bf16 %v3357
    %v3616 = vunpack.c.l.s8.bf16 %v3358
    %v3617 = vunpack.c.h.s8.bf16 %v3353
    %v3618 = vunpack.c.h.s8.bf16 %v3354
    %v3619 = vunpack.c.h.s8.bf16 %v3355
    %v3620 = vunpack.c.h.s8.bf16 %v3356
    %v3621 = vunpack.c.h.s8.bf16 %v3357
    %v3622 = vunpack.c.h.s8.bf16 %v3358
    %v3623 = vunpack.c.l.s8.bf16 %v3359
    %v3624 = vunpack.c.l.s8.bf16 %v3360
    %v3625 = vunpack.c.l.s8.bf16 %v3361
    %v3626 = vunpack.c.l.s8.bf16 %v3362
    %v3627 = vunpack.c.l.s8.bf16 %v3363
    %v3628 = vunpack.c.l.s8.bf16 %v3364
    %v3629 = vunpack.c.h.s8.bf16 %v3359
    %v3630 = vunpack.c.h.s8.bf16 %v3360
    %v3631 = vunpack.c.h.s8.bf16 %v3361
    %v3632 = vunpack.c.h.s8.bf16 %v3362
    %v3633 = vunpack.c.h.s8.bf16 %v3363
    %v3634 = vunpack.c.h.s8.bf16 %v3364
    %v3635 = vunpack.c.l.s8.bf16 %v3365
    %v3636 = vunpack.c.l.s8.bf16 %v3366
    %v3637 = vunpack.c.l.s8.bf16 %v3367
    %v3638 = vunpack.c.l.s8.bf16 %v3368
    %v3639 = vunpack.c.l.s8.bf16 %v3369
    %v3640 = vunpack.c.l.s8.bf16 %v3370
    %v3641 = vunpack.c.h.s8.bf16 %v3365
    %v3642 = vunpack.c.h.s8.bf16 %v3366
    %v3643 = vunpack.c.h.s8.bf16 %v3367
    %v3644 = vunpack.c.h.s8.bf16 %v3368
    %v3645 = vunpack.c.h.s8.bf16 %v3369
    %v3646 = vunpack.c.h.s8.bf16 %v3370
    %v3647 = vunpack.c.l.s8.bf16 %v3371
    %v3648 = vunpack.c.l.s8.bf16 %v3372
    %v3649 = vunpack.c.l.s8.bf16 %v3373
    %v3650 = vunpack.c.l.s8.bf16 %v3374
    %v3651 = vunpack.c.l.s8.bf16 %v3375
    %v3652 = vunpack.c.l.s8.bf16 %v3376
    %v3653 = vunpack.c.h.s8.bf16 %v3371
    %v3654 = vunpack.c.h.s8.bf16 %v3372
    %v3655 = vunpack.c.h.s8.bf16 %v3373
    %v3656 = vunpack.c.h.s8.bf16 %v3374
    %v3657 = vunpack.c.h.s8.bf16 %v3375
    %v3658 = vunpack.c.h.s8.bf16 %v3376
    %v3659 = vunpack.c.l.s8.bf16 %v3377
    %v3660 = vunpack.c.l.s8.bf16 %v3378
    %v3661 = vunpack.c.l.s8.bf16 %v3379
    %v3662 = vunpack.c.l.s8.bf16 %v3380
    %v3663 = vunpack.c.l.s8.bf16 %v3381
    %v3664 = vunpack.c.l.s8.bf16 %v3382
    %v3665 = vunpack.c.h.s8.bf16 %v3377
    %v3666 = vunpack.c.h.s8.bf16 %v3378
    %v3667 = vunpack.c.h.s8.bf16 %v3379
    %v3668 = vunpack.c.h.s8.bf16 %v3380
    %v3669 = vunpack.c.h.s8.bf16 %v3381
    %v3670 = vunpack.c.h.s8.bf16 %v3382
    %v3671 = vunpack.c.l.s8.bf16 %v3383
    %v3672 = vunpack.c.l.s8.bf16 %v3384
    %v3673 = vunpack.c.l.s8.bf16 %v3385
    %v3674 = vunpack.c.l.s8.bf16 %v3386
    %v3675 = vunpack.c.l.s8.bf16 %v3387
    %v3676 = vunpack.c.l.s8.bf16 %v3388
    %v3677 = vunpack.c.h.s8.bf16 %v3383
    %v3678 = vunpack.c.h.s8.bf16 %v3384
    %v3679 = vunpack.c.h.s8.bf16 %v3385
    %v3680 = vunpack.c.h.s8.bf16 %v3386
    %v3681 = vunpack.c.h.s8.bf16 %v3387
    %v3682 = vunpack.c.h.s8.bf16 %v3388
    %v3683 = vunpack.c.l.s8.bf16 %v3389
    %v3684 = vunpack.c.l.s8.bf16 %v3390
    %v3685 = vunpack.c.l.s8.bf16 %v3391
    %v3686 = vunpack.c.l.s8.bf16 %v3392
    %v3687 = vunpack.c.l.s8.bf16 %v3393
    %v3688 = vunpack.c.l.s8.bf16 %v3394
    %v3689 = vunpack.c.h.s8.bf16 %v3389
    %v3690 = vunpack.c.h.s8.bf16 %v3390
    %v3691 = vunpack.c.h.s8.bf16 %v3391
    %v3692 = vunpack.c.h.s8.bf16 %v3392
    %v3693 = vunpack.c.h.s8.bf16 %v3393
    %v3694 = vunpack.c.h.s8.bf16 %v3394
    %v3695 = vunpack.c.l.s8.bf16 %v3395
    %v3696 = vunpack.c.l.s8.bf16 %v3396
    %v3697 = vunpack.c.l.s8.bf16 %v3397
    %v3698 = vunpack.c.l.s8.bf16 %v3398
    %v3699 = vunpack.c.l.s8.bf16 %v3399
    %v3700 = vunpack.c.l.s8.bf16 %v3400
    %v3701 = vunpack.c.h.s8.bf16 %v3395
    %v3702 = vunpack.c.h.s8.bf16 %v3396
    %v3703 = vunpack.c.h.s8.bf16 %v3397
    %v3704 = vunpack.c.h.s8.bf16 %v3398
    %v3705 = vunpack.c.h.s8.bf16 %v3399
    %v3706 = vunpack.c.h.s8.bf16 %v3400
    %v3707 = vunpack.c.l.s8.bf16 %v3401
    %v3708 = vunpack.c.l.s8.bf16 %v3402
    %v3709 = vunpack.c.l.s8.bf16 %v3403
    %v3710 = vunpack.c.l.s8.bf16 %v3404
    %v3711 = vunpack.c.l.s8.bf16 %v3405
    %v3712 = vunpack.c.l.s8.bf16 %v3406
    %v3713 = vunpack.c.h.s8.bf16 %v3401
    %v3714 = vunpack.c.h.s8.bf16 %v3402
    %v3715 = vunpack.c.h.s8.bf16 %v3403
    %v3716 = vunpack.c.h.s8.bf16 %v3404
    %v3717 = vunpack.c.h.s8.bf16 %v3405
    %v3718 = vunpack.c.h.s8.bf16 %v3406
    %v3719 = vunpack.c.l.s8.bf16 %v3407
    %v3720 = vunpack.c.l.s8.bf16 %v3408
    %v3721 = vunpack.c.l.s8.bf16 %v3409
    %v3722 = vunpack.c.l.s8.bf16 %v3410
    %v3723 = vunpack.c.l.s8.bf16 %v3411
    %v3724 = vunpack.c.l.s8.bf16 %v3412
    %v3725 = vunpack.c.h.s8.bf16 %v3407
    %v3726 = vunpack.c.h.s8.bf16 %v3408
    %v3727 = vunpack.c.h.s8.bf16 %v3409
    %v3728 = vunpack.c.h.s8.bf16 %v3410
    %v3729 = vunpack.c.h.s8.bf16 %v3411
    %v3730 = vunpack.c.h.s8.bf16 %v3412
    %v3731 = vunpack.c.l.s8.bf16 %v3413
    %v3732 = vunpack.c.l.s8.bf16 %v3414
    %v3733 = vunpack.c.l.s8.bf16 %v3415
    %v3734 = vunpack.c.l.s8.bf16 %v3416
    %v3735 = vunpack.c.l.s8.bf16 %v3417
    %v3736 = vunpack.c.l.s8.bf16 %v3418
    %v3737 = vunpack.c.h.s8.bf16 %v3413
    %v3738 = vunpack.c.h.s8.bf16 %v3414
    %v3739 = vunpack.c.h.s8.bf16 %v3415
    %v3740 = vunpack.c.h.s8.bf16 %v3416
    %v3741 = vunpack.c.h.s8.bf16 %v3417
    %v3742 = vunpack.c.h.s8.bf16 %v3418
    %v3743 = vunpack.c.l.s8.bf16 %v3419
    %v3744 = vunpack.c.l.s8.bf16 %v3420
    %v3745 = vunpack.c.l.s8.bf16 %v3421
    %v3746 = vunpack.c.l.s8.bf16 %v3422
    %v3747 = vunpack.c.l.s8.bf16 %v3423
    %v3748 = vunpack.c.l.s8.bf16 %v3424
    %v3749 = vunpack.c.h.s8.bf16 %v3419
    %v3750 = vunpack.c.h.s8.bf16 %v3420
    %v3751 = vunpack.c.h.s8.bf16 %v3421
    %v3752 = vunpack.c.h.s8.bf16 %v3422
    %v3753 = vunpack.c.h.s8.bf16 %v3423
    %v3754 = vunpack.c.h.s8.bf16 %v3424
    %v3755 = vunpack.c.l.s8.bf16 %v3425
    %v3756 = vunpack.c.l.s8.bf16 %v3426
    %v3757 = vunpack.c.l.s8.bf16 %v3427
    %v3758 = vunpack.c.l.s8.bf16 %v3428
    %v3759 = vunpack.c.l.s8.bf16 %v3429
    %v3760 = vunpack.c.l.s8.bf16 %v3430
    %v3761 = vunpack.c.h.s8.bf16 %v3425
    %v3762 = vunpack.c.h.s8.bf16 %v3426
    %v3763 = vunpack.c.h.s8.bf16 %v3427
    %v3764 = vunpack.c.h.s8.bf16 %v3428
    %v3765 = vunpack.c.h.s8.bf16 %v3429
    %v3766 = vunpack.c.h.s8.bf16 %v3430
    %v3767 = vunpack.c.l.s8.bf16 %v3431
    %v3768 = vunpack.c.l.s8.bf16 %v3432
    %v3769 = vunpack.c.l.s8.bf16 %v3433
    %v3770 = vunpack.c.l.s8.bf16 %v3434
    %v3771 = vunpack.c.l.s8.bf16 %v3435
    %v3772 = vunpack.c.l.s8.bf16 %v3436
    %v3773 = vunpack.c.h.s8.bf16 %v3431
    %v3774 = vunpack.c.h.s8.bf16 %v3432
    %v3775 = vunpack.c.h.s8.bf16 %v3433
    %v3776 = vunpack.c.h.s8.bf16 %v3434
    %v3777 = vunpack.c.h.s8.bf16 %v3435
    %v3778 = vunpack.c.h.s8.bf16 %v3436
    %v3779 = vunpack.c.l.s8.bf16 %v3437
    %v3780 = vunpack.c.l.s8.bf16 %v3438
    %v3781 = vunpack.c.l.s8.bf16 %v3439
    %v3782 = vunpack.c.l.s8.bf16 %v3440
    %v3783 = vunpack.c.l.s8.bf16 %v3441
    %v3784 = vunpack.c.l.s8.bf16 %v3442
    %v3785 = vunpack.c.h.s8.bf16 %v3437
    %v3786 = vunpack.c.h.s8.bf16 %v3438
    %v3787 = vunpack.c.h.s8.bf16 %v3439
    %v3788 = vunpack.c.h.s8.bf16 %v3440
    %v3789 = vunpack.c.h.s8.bf16 %v3441
    %v3790 = vunpack.c.h.s8.bf16 %v3442
    %v3791 = vunpack.c.l.s8.bf16 %v3443
    %v3792 = vunpack.c.l.s8.bf16 %v3444
    %v3793 = vunpack.c.l.s8.bf16 %v3445
    %v3794 = vunpack.c.l.s8.bf16 %v3446
    %v3795 = vunpack.c.l.s8.bf16 %v3447
    %v3796 = vunpack.c.l.s8.bf16 %v3448
    %v3797 = vunpack.c.h.s8.bf16 %v3443
    %v3798 = vunpack.c.h.s8.bf16 %v3444
    %v3799 = vunpack.c.h.s8.bf16 %v3445
    %v3800 = vunpack.c.h.s8.bf16 %v3446
    %v3801 = vunpack.c.h.s8.bf16 %v3447
    %v3802 = vunpack.c.h.s8.bf16 %v3448
    %v3803 = vunpack.c.l.s8.bf16 %v3449
    %v3804 = vunpack.c.l.s8.bf16 %v3450
    %v3805 = vunpack.c.l.s8.bf16 %v3451
    %v3806 = vunpack.c.l.s8.bf16 %v3452
    %v3807 = vunpack.c.l.s8.bf16 %v3453
    %v3808 = vunpack.c.l.s8.bf16 %v3454
    %v3809 = vunpack.c.h.s8.bf16 %v3449
    %v3810 = vunpack.c.h.s8.bf16 %v3450
    %v3811 = vunpack.c.h.s8.bf16 %v3451
    %v3812 = vunpack.c.h.s8.bf16 %v3452
    %v3813 = vunpack.c.h.s8.bf16 %v3453
    %v3814 = vunpack.c.h.s8.bf16 %v3454
    %v3815 = vunpack.c.l.s8.bf16 %v3455
    %v3816 = vunpack.c.l.s8.bf16 %v3456
    %v3817 = vunpack.c.l.s8.bf16 %v3457
    %v3818 = vunpack.c.l.s8.bf16 %v3458
    %v3819 = vunpack.c.l.s8.bf16 %v3459
    %v3820 = vunpack.c.l.s8.bf16 %v3460
    %v3821 = vunpack.c.h.s8.bf16 %v3455
    %v3822 = vunpack.c.h.s8.bf16 %v3456
    %v3823 = vunpack.c.h.s8.bf16 %v3457
    %v3824 = vunpack.c.h.s8.bf16 %v3458
    %v3825 = vunpack.c.h.s8.bf16 %v3459
    %v3826 = vunpack.c.h.s8.bf16 %v3460
    %v3827 = vunpack.c.l.s8.bf16 %v3461
    %v3828 = vunpack.c.l.s8.bf16 %v3462
    %v3829 = vunpack.c.l.s8.bf16 %v3463
    %v3830 = vunpack.c.l.s8.bf16 %v3464
    %v3831 = vunpack.c.l.s8.bf16 %v3465
    %v3832 = vunpack.c.l.s8.bf16 %v3466
    %v3833 = vunpack.c.h.s8.bf16 %v3461
    %v3834 = vunpack.c.h.s8.bf16 %v3462
    %v3835 = vunpack.c.h.s8.bf16 %v3463
    %v3836 = vunpack.c.h.s8.bf16 %v3464
    %v3837 = vunpack.c.h.s8.bf16 %v3465
    %v3838 = vunpack.c.h.s8.bf16 %v3466
    %v3839 = vunpack.c.l.s8.bf16 %v3467
    %v3840 = vunpack.c.l.s8.bf16 %v3468
    %v3841 = vunpack.c.l.s8.bf16 %v3469
    %v3842 = vunpack.c.l.s8.bf16 %v3470
    %v3843 = vunpack.c.l.s8.bf16 %v3471
    %v3844 = vunpack.c.l.s8.bf16 %v3472
    %v3845 = vunpack.c.h.s8.bf16 %v3467
    %v3846 = vunpack.c.h.s8.bf16 %v3468
    %v3847 = vunpack.c.h.s8.bf16 %v3469
    %v3848 = vunpack.c.h.s8.bf16 %v3470
    %v3849 = vunpack.c.h.s8.bf16 %v3471
    %v3850 = vunpack.c.h.s8.bf16 %v3472
    %v3851 = vunpack.c.l.s8.bf16 %v3473
    %v3852 = vunpack.c.l.s8.bf16 %v3474
    %v3853 = vunpack.c.l.s8.bf16 %v3475
    %v3854 = vunpack.c.l.s8.bf16 %v3476
    %v3855 = vunpack.c.l.s8.bf16 %v3477
    %v3856 = vunpack.c.l.s8.bf16 %v3478
    %v3857 = vunpack.c.h.s8.bf16 %v3473
    %v3858 = vunpack.c.h.s8.bf16 %v3474
    %v3859 = vunpack.c.h.s8.bf16 %v3475
    %v3860 = vunpack.c.h.s8.bf16 %v3476
    %v3861 = vunpack.c.h.s8.bf16 %v3477
    %v3862 = vunpack.c.h.s8.bf16 %v3478
    %3863 = vmatprep.subr.bf16.mxu0 %v3522
    %3864 = vmatpush1.bf16.msra.mxu0 %v3521
    %3865 = vmatprep.subr.bf16.mxu0 %v3516
    %3866 = vmatpush1.bf16.msra.mxu0 %v3515
    %3867 = vmatprep.subr.bf16.mxu0 %v3510
    %3868 = vmatpush1.bf16.msra.mxu0 %v3509
    %3869 = vmatprep.subr.bf16.mxu0 %v3504
    %3870 = vmatpush1.bf16.msra.mxu0 %v3503
    %3871 = vmatprep.subr.bf16.mxu0 %v3498
    %3872 = vmatpush1.bf16.msra.mxu0 %v3497
    %3873 = vmatprep.subr.bf16.mxu0 %v3492
    %3874 = vmatpush1.bf16.msra.mxu0 %v3491
    %3875 = vmatprep.subr.bf16.mxu0 %v3486
    %3876 = vmatpush1.bf16.msra.mxu0 %v3485
    %3877 = vmatprep.subr.bf16.mxu0 %v3480
    %3878 = vmatpush1.bf16.msra.mxu0 %v3479
    %3879 = vmatprep.subr.bf16.mxu0 %v3570
    %3880 = vmatpush2.bf16.msra.mxu0 %v3569
    %3881 = vmatprep.subr.bf16.mxu0 %v3564
    %3882 = vmatpush2.bf16.msra.mxu0 %v3563
    %3883 = vmatprep.subr.bf16.mxu0 %v3558
    %3884 = vmatpush2.bf16.msra.mxu0 %v3557
    %3885 = vmatprep.subr.bf16.mxu0 %v3552
    %3886 = vmatpush2.bf16.msra.mxu0 %v3551
    %3887 = vmatprep.subr.bf16.mxu0 %v3546
    %3888 = vmatpush2.bf16.msra.mxu0 %v3545
    %3889 = vmatprep.subr.bf16.mxu0 %v3540
    %3890 = vmatpush2.bf16.msra.mxu0 %v3539
    %3891 = vmatprep.subr.bf16.mxu0 %v3534
    %3892 = vmatpush2.bf16.msra.mxu0 %v3533
    %3893 = vmatprep.subr.bf16.mxu0 %v3528
    %3894 = vmatpush2.bf16.msra.mxu0 %v3527
    %3895 = vmatprep.mubr.bf16.mxu0 %v3280
    %3896 = vmatmul.mubr.bf16.gmra.mxu0 %v3279
    %v3897 = vpop.f32.mrf.mxu0
    %v3898 = vadd.f32 0.0, %v3897
    %v3899 = vpop.f32.mrf.mxu0
    %v3900 = vadd.f32 0.0, %v3899
    %v3901 = vpop.f32.mrf.mxu0
    %v3902 = vadd.f32 0.0, %v3901
    %v3903 = vpop.f32.mrf.mxu0
    %v3904 = vadd.f32 0.0, %v3903
    %3905 = vdwg.mxu0
    %3906 = vmatprep.subr.bf16.mxu0 %v3618
    %3907 = vmatpush1.bf16.msra.mxu0 %v3617
    %3908 = vmatprep.subr.bf16.mxu0 %v3612
    %3909 = vmatpush1.bf16.msra.mxu0 %v3611
    %3910 = vmatprep.subr.bf16.mxu0 %v3606
    %3911 = vmatpush1.bf16.msra.mxu0 %v3605
    %3912 = vmatprep.subr.bf16.mxu0 %v3600
    %3913 = vmatpush1.bf16.msra.mxu0 %v3599
    %3914 = vmatprep.subr.bf16.mxu0 %v3594
    %3915 = vmatpush1.bf16.msra.mxu0 %v3593
    %3916 = vmatprep.subr.bf16.mxu0 %v3588
    %3917 = vmatpush1.bf16.msra.mxu0 %v3587
    %3918 = vmatprep.subr.bf16.mxu0 %v3582
    %3919 = vmatpush1.bf16.msra.mxu0 %v3581
    %3920 = vmatprep.subr.bf16.mxu0 %v3576
    %3921 = vmatpush1.bf16.msra.mxu0 %v3575
    %3922 = vmatprep.subr.bf16.mxu0 %v3666
    %3923 = vmatpush2.bf16.msra.mxu0 %v3665
    %3924 = vmatprep.subr.bf16.mxu0 %v3660
    %3925 = vmatpush2.bf16.msra.mxu0 %v3659
    %3926 = vmatprep.subr.bf16.mxu0 %v3654
    %3927 = vmatpush2.bf16.msra.mxu0 %v3653
    %3928 = vmatprep.subr.bf16.mxu0 %v3648
    %3929 = vmatpush2.bf16.msra.mxu0 %v3647
    %3930 = vmatprep.subr.bf16.mxu0 %v3642
    %3931 = vmatpush2.bf16.msra.mxu0 %v3641
    %3932 = vmatprep.subr.bf16.mxu0 %v3636
    %3933 = vmatpush2.bf16.msra.mxu0 %v3635
    %3934 = vmatprep.subr.bf16.mxu0 %v3630
    %3935 = vmatpush2.bf16.msra.mxu0 %v3629
    %3936 = vmatprep.subr.bf16.mxu0 %v3624
    %3937 = vmatpush2.bf16.msra.mxu0 %v3623
    %3938 = vmatprep.mubr.bf16.mxu0 %v3282
    %3939 = vmatmul.mubr.bf16.gmra.mxu0 %v3281
    %v3940 = vpop.f32.mrf.mxu0
    %v3941 = vadd.f32 %v3898, %v3940
    %v3942 = vpop.f32.mrf.mxu0
    %v3943 = vadd.f32 %v3900, %v3942
    %v3944 = vpop.f32.mrf.mxu0
    %v3945 = vadd.f32 %v3902, %v3944
    %v3946 = vpop.f32.mrf.mxu0
    %v3947 = vadd.f32 %v3904, %v3946
    %3948 = vdwg.mxu0
    %3949 = vmatprep.subr.bf16.mxu0 %v3714
    %3950 = vmatpush1.bf16.msra.mxu0 %v3713
    %3951 = vmatprep.subr.bf16.mxu0 %v3708
    %3952 = vmatpush1.bf16.msra.mxu0 %v3707
    %3953 = vmatprep.subr.bf16.mxu0 %v3702
    %3954 = vmatpush1.bf16.msra.mxu0 %v3701
    %3955 = vmatprep.subr.bf16.mxu0 %v3696
    %3956 = vmatpush1.bf16.msra.mxu0 %v3695
    %3957 = vmatprep.subr.bf16.mxu0 %v3690
    %3958 = vmatpush1.bf16.msra.mxu0 %v3689
    %3959 = vmatprep.subr.bf16.mxu0 %v3684
    %3960 = vmatpush1.bf16.msra.mxu0 %v3683
    %3961 = vmatprep.subr.bf16.mxu0 %v3678
    %3962 = vmatpush1.bf16.msra.mxu0 %v3677
    %3963 = vmatprep.subr.bf16.mxu0 %v3672
    %3964 = vmatpush1.bf16.msra.mxu0 %v3671
    %3965 = vmatprep.subr.bf16.mxu0 %v3762
    %3966 = vmatpush2.bf16.msra.mxu0 %v3761
    %3967 = vmatprep.subr.bf16.mxu0 %v3756
    %3968 = vmatpush2.bf16.msra.mxu0 %v3755
    %3969 = vmatprep.subr.bf16.mxu0 %v3750
    %3970 = vmatpush2.bf16.msra.mxu0 %v3749
    %3971 = vmatprep.subr.bf16.mxu0 %v3744
    %3972 = vmatpush2.bf16.msra.mxu0 %v3743
    %3973 = vmatprep.subr.bf16.mxu0 %v3738
    %3974 = vmatpush2.bf16.msra.mxu0 %v3737
    %3975 = vmatprep.subr.bf16.mxu0 %v3732
    %3976 = vmatpush2.bf16.msra.mxu0 %v3731
    %3977 = vmatprep.subr.bf16.mxu0 %v3726
    %3978 = vmatpush2.bf16.msra.mxu0 %v3725
    %3979 = vmatprep.subr.bf16.mxu0 %v3720
    %3980 = vmatpush2.bf16.msra.mxu0 %v3719
    %3981 = vmatprep.mubr.bf16.mxu0 %v3284
    %3982 = vmatmul.mubr.bf16.gmra.mxu0 %v3283
    %v3983 = vpop.f32.mrf.mxu0
    %v3984 = vadd.f32 %v3941, %v3983
    %v3985 = vpop.f32.mrf.mxu0
    %v3986 = vadd.f32 %v3943, %v3985
    %v3987 = vpop.f32.mrf.mxu0
    %v3988 = vadd.f32 %v3945, %v3987
    %v3989 = vpop.f32.mrf.mxu0
    %v3990 = vadd.f32 %v3947, %v3989
    %3991 = vdwg.mxu0
    %3992 = vmatprep.subr.bf16.mxu0 %v3810
    %3993 = vmatpush1.bf16.msra.mxu0 %v3809
    %3994 = vmatprep.subr.bf16.mxu0 %v3804
    %3995 = vmatpush1.bf16.msra.mxu0 %v3803
    %3996 = vmatprep.subr.bf16.mxu0 %v3798
    %3997 = vmatpush1.bf16.msra.mxu0 %v3797
    %3998 = vmatprep.subr.bf16.mxu0 %v3792
    %3999 = vmatpush1.bf16.msra.mxu0 %v3791
    %4000 = vmatprep.subr.bf16.mxu0 %v3786
    %4001 = vmatpush1.bf16.msra.mxu0 %v3785
    %4002 = vmatprep.subr.bf16.mxu0 %v3780
    %4003 = vmatpush1.bf16.msra.mxu0 %v3779
    %4004 = vmatprep.subr.bf16.mxu0 %v3774
    %4005 = vmatpush1.bf16.msra.mxu0 %v3773
    %4006 = vmatprep.subr.bf16.mxu0 %v3768
    %4007 = vmatpush1.bf16.msra.mxu0 %v3767
    %4008 = vmatprep.subr.bf16.mxu0 %v3858
    %4009 = vmatpush2.bf16.msra.mxu0 %v3857
    %4010 = vmatprep.subr.bf16.mxu0 %v3852
    %4011 = vmatpush2.bf16.msra.mxu0 %v3851
    %4012 = vmatprep.subr.bf16.mxu0 %v3846
    %4013 = vmatpush2.bf16.msra.mxu0 %v3845
    %4014 = vmatprep.subr.bf16.mxu0 %v3840
    %4015 = vmatpush2.bf16.msra.mxu0 %v3839
    %4016 = vmatprep.subr.bf16.mxu0 %v3834
    %4017 = vmatpush2.bf16.msra.mxu0 %v3833
    %4018 = vmatprep.subr.bf16.mxu0 %v3828
    %4019 = vmatpush2.bf16.msra.mxu0 %v3827
    %4020 = vmatprep.subr.bf16.mxu0 %v3822
    %4021 = vmatpush2.bf16.msra.mxu0 %v3821
    %4022 = vmatprep.subr.bf16.mxu0 %v3816
    %4023 = vmatpush2.bf16.msra.mxu0 %v3815
    %4024 = vmatprep.mubr.bf16.mxu0 %v3286
    %4025 = vmatmul.mubr.bf16.gmra.mxu0 %v3285
    %v4026 = vpop.f32.mrf.mxu0
    %v4027 = vadd.f32 %v3984, %v4026
    %v4028 = vpop.f32.mrf.mxu0
    %v4029 = vadd.f32 %v3986, %v4028
    %v4030 = vpop.f32.mrf.mxu0
    %v4031 = vadd.f32 %v3988, %v4030
    %v4032 = vpop.f32.mrf.mxu0
    %v4033 = vadd.f32 %v3990, %v4032
    %4034 = vdwg.mxu0
    %4035 = vmatprep.subr.bf16.mxu0 %v3524
    %4036 = vmatpush1.bf16.msra.mxu0 %v3523
    %4037 = vmatprep.subr.bf16.mxu0 %v3518
    %4038 = vmatpush1.bf16.msra.mxu0 %v3517
    %4039 = vmatprep.subr.bf16.mxu0 %v3512
    %4040 = vmatpush1.bf16.msra.mxu0 %v3511
    %4041 = vmatprep.subr.bf16.mxu0 %v3506
    %4042 = vmatpush1.bf16.msra.mxu0 %v3505
    %4043 = vmatprep.subr.bf16.mxu0 %v3500
    %4044 = vmatpush1.bf16.msra.mxu0 %v3499
    %4045 = vmatprep.subr.bf16.mxu0 %v3494
    %4046 = vmatpush1.bf16.msra.mxu0 %v3493
    %4047 = vmatprep.subr.bf16.mxu0 %v3488
    %4048 = vmatpush1.bf16.msra.mxu0 %v3487
    %4049 = vmatprep.subr.bf16.mxu0 %v3482
    %4050 = vmatpush1.bf16.msra.mxu0 %v3481
    %4051 = vmatprep.subr.bf16.mxu0 %v3572
    %4052 = vmatpush2.bf16.msra.mxu0 %v3571
    %4053 = vmatprep.subr.bf16.mxu0 %v3566
    %4054 = vmatpush2.bf16.msra.mxu0 %v3565
    %4055 = vmatprep.subr.bf16.mxu0 %v3560
    %4056 = vmatpush2.bf16.msra.mxu0 %v3559
    %4057 = vmatprep.subr.bf16.mxu0 %v3554
    %4058 = vmatpush2.bf16.msra.mxu0 %v3553
    %4059 = vmatprep.subr.bf16.mxu0 %v3548
    %4060 = vmatpush2.bf16.msra.mxu0 %v3547
    %4061 = vmatprep.subr.bf16.mxu0 %v3542
    %4062 = vmatpush2.bf16.msra.mxu0 %v3541
    %4063 = vmatprep.subr.bf16.mxu0 %v3536
    %4064 = vmatpush2.bf16.msra.mxu0 %v3535
    %4065 = vmatprep.subr.bf16.mxu0 %v3530
    %4066 = vmatpush2.bf16.msra.mxu0 %v3529
    %4067 = vmatprep.mubr.bf16.mxu0 %v3280
    %4068 = vmatmul.mubr.bf16.gmra.mxu0 %v3279
    %v4069 = vpop.f32.mrf.mxu0
    %v4070 = vadd.f32 0.0, %v4069
    %v4071 = vpop.f32.mrf.mxu0
    %v4072 = vadd.f32 0.0, %v4071
    %v4073 = vpop.f32.mrf.mxu0
    %v4074 = vadd.f32 0.0, %v4073
    %v4075 = vpop.f32.mrf.mxu0
    %v4076 = vadd.f32 0.0, %v4075
    %4077 = vdwg.mxu0
    %4078 = vmatprep.subr.bf16.mxu0 %v3620
    %4079 = vmatpush1.bf16.msra.mxu0 %v3619
    %4080 = vmatprep.subr.bf16.mxu0 %v3614
    %4081 = vmatpush1.bf16.msra.mxu0 %v3613
    %4082 = vmatprep.subr.bf16.mxu0 %v3608
    %4083 = vmatpush1.bf16.msra.mxu0 %v3607
    %4084 = vmatprep.subr.bf16.mxu0 %v3602
    %4085 = vmatpush1.bf16.msra.mxu0 %v3601
    %4086 = vmatprep.subr.bf16.mxu0 %v3596
    %4087 = vmatpush1.bf16.msra.mxu0 %v3595
    %4088 = vmatprep.subr.bf16.mxu0 %v3590
    %4089 = vmatpush1.bf16.msra.mxu0 %v3589
    %4090 = vmatprep.subr.bf16.mxu0 %v3584
    %4091 = vmatpush1.bf16.msra.mxu0 %v3583
    %4092 = vmatprep.subr.bf16.mxu0 %v3578
    %4093 = vmatpush1.bf16.msra.mxu0 %v3577
    %4094 = vmatprep.subr.bf16.mxu0 %v3668
    %4095 = vmatpush2.bf16.msra.mxu0 %v3667
    %4096 = vmatprep.subr.bf16.mxu0 %v3662
    %4097 = vmatpush2.bf16.msra.mxu0 %v3661
    %4098 = vmatprep.subr.bf16.mxu0 %v3656
    %4099 = vmatpush2.bf16.msra.mxu0 %v3655
    %4100 = vmatprep.subr.bf16.mxu0 %v3650
    %4101 = vmatpush2.bf16.msra.mxu0 %v3649
    %4102 = vmatprep.subr.bf16.mxu0 %v3644
    %4103 = vmatpush2.bf16.msra.mxu0 %v3643
    %4104 = vmatprep.subr.bf16.mxu0 %v3638
    %4105 = vmatpush2.bf16.msra.mxu0 %v3637
    %4106 = vmatprep.subr.bf16.mxu0 %v3632
    %4107 = vmatpush2.bf16.msra.mxu0 %v3631
    %4108 = vmatprep.subr.bf16.mxu0 %v3626
    %4109 = vmatpush2.bf16.msra.mxu0 %v3625
    %4110 = vmatprep.mubr.bf16.mxu0 %v3282
    %4111 = vmatmul.mubr.bf16.gmra.mxu0 %v3281
    %v4112 = vpop.f32.mrf.mxu0
    %v4113 = vadd.f32 %v4070, %v4112
    %v4114 = vpop.f32.mrf.mxu0
    %v4115 = vadd.f32 %v4072, %v4114
    %v4116 = vpop.f32.mrf.mxu0
    %v4117 = vadd.f32 %v4074, %v4116
    %v4118 = vpop.f32.mrf.mxu0
    %v4119 = vadd.f32 %v4076, %v4118
    %4120 = vdwg.mxu0
    %4121 = vmatprep.subr.bf16.mxu0 %v3716
    %4122 = vmatpush1.bf16.msra.mxu0 %v3715
    %4123 = vmatprep.subr.bf16.mxu0 %v3710
    %4124 = vmatpush1.bf16.msra.mxu0 %v3709
    %4125 = vmatprep.subr.bf16.mxu0 %v3704
    %4126 = vmatpush1.bf16.msra.mxu0 %v3703
    %4127 = vmatprep.subr.bf16.mxu0 %v3698
    %4128 = vmatpush1.bf16.msra.mxu0 %v3697
    %4129 = vmatprep.subr.bf16.mxu0 %v3692
    %4130 = vmatpush1.bf16.msra.mxu0 %v3691
    %4131 = vmatprep.subr.bf16.mxu0 %v3686
    %4132 = vmatpush1.bf16.msra.mxu0 %v3685
    %4133 = vmatprep.subr.bf16.mxu0 %v3680
    %4134 = vmatpush1.bf16.msra.mxu0 %v3679
    %4135 = vmatprep.subr.bf16.mxu0 %v3674
    %4136 = vmatpush1.bf16.msra.mxu0 %v3673
    %4137 = vmatprep.subr.bf16.mxu0 %v3764
    %4138 = vmatpush2.bf16.msra.mxu0 %v3763
    %4139 = vmatprep.subr.bf16.mxu0 %v3758
    %4140 = vmatpush2.bf16.msra.mxu0 %v3757
    %4141 = vmatprep.subr.bf16.mxu0 %v3752
    %4142 = vmatpush2.bf16.msra.mxu0 %v3751
    %4143 = vmatprep.subr.bf16.mxu0 %v3746
    %4144 = vmatpush2.bf16.msra.mxu0 %v3745
    %4145 = vmatprep.subr.bf16.mxu0 %v3740
    %4146 = vmatpush2.bf16.msra.mxu0 %v3739
    %4147 = vmatprep.subr.bf16.mxu0 %v3734
    %4148 = vmatpush2.bf16.msra.mxu0 %v3733
    %4149 = vmatprep.subr.bf16.mxu0 %v3728
    %4150 = vmatpush2.bf16.msra.mxu0 %v3727
    %4151 = vmatprep.subr.bf16.mxu0 %v3722
    %4152 = vmatpush2.bf16.msra.mxu0 %v3721
    %4153 = vmatprep.mubr.bf16.mxu0 %v3284
    %4154 = vmatmul.mubr.bf16.gmra.mxu0 %v3283
    %v4155 = vpop.f32.mrf.mxu0
    %v4156 = vadd.f32 %v4113, %v4155
    %v4157 = vpop.f32.mrf.mxu0
    %v4158 = vadd.f32 %v4115, %v4157
    %v4159 = vpop.f32.mrf.mxu0
    %v4160 = vadd.f32 %v4117, %v4159
    %v4161 = vpop.f32.mrf.mxu0
    %v4162 = vadd.f32 %v4119, %v4161
    %4163 = vdwg.mxu0
    %4164 = vmatprep.subr.bf16.mxu0 %v3812
    %4165 = vmatpush1.bf16.msra.mxu0 %v3811
    %4166 = vmatprep.subr.bf16.mxu0 %v3806
    %4167 = vmatpush1.bf16.msra.mxu0 %v3805
    %4168 = vmatprep.subr.bf16.mxu0 %v3800
    %4169 = vmatpush1.bf16.msra.mxu0 %v3799
    %4170 = vmatprep.subr.bf16.mxu0 %v3794
    %4171 = vmatpush1.bf16.msra.mxu0 %v3793
    %4172 = vmatprep.subr.bf16.mxu0 %v3788
    %4173 = vmatpush1.bf16.msra.mxu0 %v3787
    %4174 = vmatprep.subr.bf16.mxu0 %v3782
    %4175 = vmatpush1.bf16.msra.mxu0 %v3781
    %4176 = vmatprep.subr.bf16.mxu0 %v3776
    %4177 = vmatpush1.bf16.msra.mxu0 %v3775
    %4178 = vmatprep.subr.bf16.mxu0 %v3770
    %4179 = vmatpush1.bf16.msra.mxu0 %v3769
    %4180 = vmatprep.subr.bf16.mxu0 %v3860
    %4181 = vmatpush2.bf16.msra.mxu0 %v3859
    %4182 = vmatprep.subr.bf16.mxu0 %v3854
    %4183 = vmatpush2.bf16.msra.mxu0 %v3853
    %4184 = vmatprep.subr.bf16.mxu0 %v3848
    %4185 = vmatpush2.bf16.msra.mxu0 %v3847
    %4186 = vmatprep.subr.bf16.mxu0 %v3842
    %4187 = vmatpush2.bf16.msra.mxu0 %v3841
    %4188 = vmatprep.subr.bf16.mxu0 %v3836
    %4189 = vmatpush2.bf16.msra.mxu0 %v3835
    %4190 = vmatprep.subr.bf16.mxu0 %v3830
    %4191 = vmatpush2.bf16.msra.mxu0 %v3829
    %4192 = vmatprep.subr.bf16.mxu0 %v3824
    %4193 = vmatpush2.bf16.msra.mxu0 %v3823
    %4194 = vmatprep.subr.bf16.mxu0 %v3818
    %4195 = vmatpush2.bf16.msra.mxu0 %v3817
    %4196 = vmatprep.mubr.bf16.mxu0 %v3286
    %4197 = vmatmul.mubr.bf16.gmra.mxu0 %v3285
    %v4198 = vpop.f32.mrf.mxu0
    %v4199 = vadd.f32 %v4156, %v4198
    %v4200 = vpop.f32.mrf.mxu0
    %v4201 = vadd.f32 %v4158, %v4200
    %v4202 = vpop.f32.mrf.mxu0
    %v4203 = vadd.f32 %v4160, %v4202
    %v4204 = vpop.f32.mrf.mxu0
    %v4205 = vadd.f32 %v4162, %v4204
    %4206 = vdwg.mxu0
    %4207 = vmatprep.subr.bf16.mxu0 %v3526
    %4208 = vmatpush1.bf16.msra.mxu0 %v3525
    %4209 = vmatprep.subr.bf16.mxu0 %v3520
    %4210 = vmatpush1.bf16.msra.mxu0 %v3519
    %4211 = vmatprep.subr.bf16.mxu0 %v3514
    %4212 = vmatpush1.bf16.msra.mxu0 %v3513
    %4213 = vmatprep.subr.bf16.mxu0 %v3508
    %4214 = vmatpush1.bf16.msra.mxu0 %v3507
    %4215 = vmatprep.subr.bf16.mxu0 %v3502
    %4216 = vmatpush1.bf16.msra.mxu0 %v3501
    %4217 = vmatprep.subr.bf16.mxu0 %v3496
    %4218 = vmatpush1.bf16.msra.mxu0 %v3495
    %4219 = vmatprep.subr.bf16.mxu0 %v3490
    %4220 = vmatpush1.bf16.msra.mxu0 %v3489
    %4221 = vmatprep.subr.bf16.mxu0 %v3484
    %4222 = vmatpush1.bf16.msra.mxu0 %v3483
    %4223 = vmatprep.subr.bf16.mxu0 %v3574
    %4224 = vmatpush2.bf16.msra.mxu0 %v3573
    %4225 = vmatprep.subr.bf16.mxu0 %v3568
    %4226 = vmatpush2.bf16.msra.mxu0 %v3567
    %4227 = vmatprep.subr.bf16.mxu0 %v3562
    %4228 = vmatpush2.bf16.msra.mxu0 %v3561
    %4229 = vmatprep.subr.bf16.mxu0 %v3556
    %4230 = vmatpush2.bf16.msra.mxu0 %v3555
    %4231 = vmatprep.subr.bf16.mxu0 %v3550
    %4232 = vmatpush2.bf16.msra.mxu0 %v3549
    %4233 = vmatprep.subr.bf16.mxu0 %v3544
    %4234 = vmatpush2.bf16.msra.mxu0 %v3543
    %4235 = vmatprep.subr.bf16.mxu0 %v3538
    %4236 = vmatpush2.bf16.msra.mxu0 %v3537
    %4237 = vmatprep.subr.bf16.mxu0 %v3532
    %4238 = vmatpush2.bf16.msra.mxu0 %v3531
    %4239 = vmatprep.mubr.bf16.mxu0 %v3280
    %4240 = vmatmul.mubr.bf16.gmra.mxu0 %v3279
    %v4241 = vpop.f32.mrf.mxu0
    %v4242 = vadd.f32 0.0, %v4241
    %v4243 = vpop.f32.mrf.mxu0
    %v4244 = vadd.f32 0.0, %v4243
    %v4245 = vpop.f32.mrf.mxu0
    %v4246 = vadd.f32 0.0, %v4245
    %v4247 = vpop.f32.mrf.mxu0
    %v4248 = vadd.f32 0.0, %v4247
    %4249 = vdwg.mxu0
    %4250 = vmatprep.subr.bf16.mxu0 %v3622
    %4251 = vmatpush1.bf16.msra.mxu0 %v3621
    %4252 = vmatprep.subr.bf16.mxu0 %v3616
    %4253 = vmatpush1.bf16.msra.mxu0 %v3615
    %4254 = vmatprep.subr.bf16.mxu0 %v3610
    %4255 = vmatpush1.bf16.msra.mxu0 %v3609
    %4256 = vmatprep.subr.bf16.mxu0 %v3604
    %4257 = vmatpush1.bf16.msra.mxu0 %v3603
    %4258 = vmatprep.subr.bf16.mxu0 %v3598
    %4259 = vmatpush1.bf16.msra.mxu0 %v3597
    %4260 = vmatprep.subr.bf16.mxu0 %v3592
    %4261 = vmatpush1.bf16.msra.mxu0 %v3591
    %4262 = vmatprep.subr.bf16.mxu0 %v3586
    %4263 = vmatpush1.bf16.msra.mxu0 %v3585
    %4264 = vmatprep.subr.bf16.mxu0 %v3580
    %4265 = vmatpush1.bf16.msra.mxu0 %v3579
    %4266 = vmatprep.subr.bf16.mxu0 %v3670
    %4267 = vmatpush2.bf16.msra.mxu0 %v3669
    %4268 = vmatprep.subr.bf16.mxu0 %v3664
    %4269 = vmatpush2.bf16.msra.mxu0 %v3663
    %4270 = vmatprep.subr.bf16.mxu0 %v3658
    %4271 = vmatpush2.bf16.msra.mxu0 %v3657
    %4272 = vmatprep.subr.bf16.mxu0 %v3652
    %4273 = vmatpush2.bf16.msra.mxu0 %v3651
    %4274 = vmatprep.subr.bf16.mxu0 %v3646
    %4275 = vmatpush2.bf16.msra.mxu0 %v3645
    %4276 = vmatprep.subr.bf16.mxu0 %v3640
    %4277 = vmatpush2.bf16.msra.mxu0 %v3639
    %4278 = vmatprep.subr.bf16.mxu0 %v3634
    %4279 = vmatpush2.bf16.msra.mxu0 %v3633
    %4280 = vmatprep.subr.bf16.mxu0 %v3628
    %4281 = vmatpush2.bf16.msra.mxu0 %v3627
    %4282 = vmatprep.mubr.bf16.mxu0 %v3282
    %4283 = vmatmul.mubr.bf16.gmra.mxu0 %v3281
    %v4284 = vpop.f32.mrf.mxu0
    %v4285 = vadd.f32 %v4242, %v4284
    %v4286 = vpop.f32.mrf.mxu0
    %v4287 = vadd.f32 %v4244, %v4286
    %v4288 = vpop.f32.mrf.mxu0
    %v4289 = vadd.f32 %v4246, %v4288
    %v4290 = vpop.f32.mrf.mxu0
    %v4291 = vadd.f32 %v4248, %v4290
    %4292 = vdwg.mxu0
    %4293 = vmatprep.subr.bf16.mxu0 %v3718
    %4294 = vmatpush1.bf16.msra.mxu0 %v3717
    %4295 = vmatprep.subr.bf16.mxu0 %v3712
    %4296 = vmatpush1.bf16.msra.mxu0 %v3711
    %4297 = vmatprep.subr.bf16.mxu0 %v3706
    %4298 = vmatpush1.bf16.msra.mxu0 %v3705
    %4299 = vmatprep.subr.bf16.mxu0 %v3700
    %4300 = vmatpush1.bf16.msra.mxu0 %v3699
    %4301 = vmatprep.subr.bf16.mxu0 %v3694
    %4302 = vmatpush1.bf16.msra.mxu0 %v3693
    %4303 = vmatprep.subr.bf16.mxu0 %v3688
    %4304 = vmatpush1.bf16.msra.mxu0 %v3687
    %4305 = vmatprep.subr.bf16.mxu0 %v3682
    %4306 = vmatpush1.bf16.msra.mxu0 %v3681
    %4307 = vmatprep.subr.bf16.mxu0 %v3676
    %4308 = vmatpush1.bf16.msra.mxu0 %v3675
    %4309 = vmatprep.subr.bf16.mxu0 %v3766
    %4310 = vmatpush2.bf16.msra.mxu0 %v3765
    %4311 = vmatprep.subr.bf16.mxu0 %v3760
    %4312 = vmatpush2.bf16.msra.mxu0 %v3759
    %4313 = vmatprep.subr.bf16.mxu0 %v3754
    %4314 = vmatpush2.bf16.msra.mxu0 %v3753
    %4315 = vmatprep.subr.bf16.mxu0 %v3748
    %4316 = vmatpush2.bf16.msra.mxu0 %v3747
    %4317 = vmatprep.subr.bf16.mxu0 %v3742
    %4318 = vmatpush2.bf16.msra.mxu0 %v3741
    %4319 = vmatprep.subr.bf16.mxu0 %v3736
    %4320 = vmatpush2.bf16.msra.mxu0 %v3735
    %4321 = vmatprep.subr.bf16.mxu0 %v3730
    %4322 = vmatpush2.bf16.msra.mxu0 %v3729
    %4323 = vmatprep.subr.bf16.mxu0 %v3724
    %4324 = vmatpush2.bf16.msra.mxu0 %v3723
    %4325 = vmatprep.mubr.bf16.mxu0 %v3284
    %4326 = vmatmul.mubr.bf16.gmra.mxu0 %v3283
    %v4327 = vpop.f32.mrf.mxu0
    %v4328 = vadd.f32 %v4285, %v4327
    %v4329 = vpop.f32.mrf.mxu0
    %v4330 = vadd.f32 %v4287, %v4329
    %v4331 = vpop.f32.mrf.mxu0
    %v4332 = vadd.f32 %v4289, %v4331
    %v4333 = vpop.f32.mrf.mxu0
    %v4334 = vadd.f32 %v4291, %v4333
    %4335 = vdwg.mxu0
    %4336 = vmatprep.subr.bf16.mxu0 %v3814
    %4337 = vmatpush1.bf16.msra.mxu0 %v3813
    %4338 = vmatprep.subr.bf16.mxu0 %v3808
    %4339 = vmatpush1.bf16.msra.mxu0 %v3807
    %4340 = vmatprep.subr.bf16.mxu0 %v3802
    %4341 = vmatpush1.bf16.msra.mxu0 %v3801
    %4342 = vmatprep.subr.bf16.mxu0 %v3796
    %4343 = vmatpush1.bf16.msra.mxu0 %v3795
    %4344 = vmatprep.subr.bf16.mxu0 %v3790
    %4345 = vmatpush1.bf16.msra.mxu0 %v3789
    %4346 = vmatprep.subr.bf16.mxu0 %v3784
    %4347 = vmatpush1.bf16.msra.mxu0 %v3783
    %4348 = vmatprep.subr.bf16.mxu0 %v3778
    %4349 = vmatpush1.bf16.msra.mxu0 %v3777
    %4350 = vmatprep.subr.bf16.mxu0 %v3772
    %4351 = vmatpush1.bf16.msra.mxu0 %v3771
    %4352 = vmatprep.subr.bf16.mxu0 %v3862
    %4353 = vmatpush2.bf16.msra.mxu0 %v3861
    %4354 = vmatprep.subr.bf16.mxu0 %v3856
    %4355 = vmatpush2.bf16.msra.mxu0 %v3855
    %4356 = vmatprep.subr.bf16.mxu0 %v3850
    %4357 = vmatpush2.bf16.msra.mxu0 %v3849
    %4358 = vmatprep.subr.bf16.mxu0 %v3844
    %4359 = vmatpush2.bf16.msra.mxu0 %v3843
    %4360 = vmatprep.subr.bf16.mxu0 %v3838
    %4361 = vmatpush2.bf16.msra.mxu0 %v3837
    %4362 = vmatprep.subr.bf16.mxu0 %v3832
    %4363 = vmatpush2.bf16.msra.mxu0 %v3831
    %4364 = vmatprep.subr.bf16.mxu0 %v3826
    %4365 = vmatpush2.bf16.msra.mxu0 %v3825
    %4366 = vmatprep.subr.bf16.mxu0 %v3820
    %4367 = vmatpush2.bf16.msra.mxu0 %v3819
    %4368 = vmatprep.mubr.bf16.mxu0 %v3286
    %4369 = vmatmul.mubr.bf16.gmra.mxu0 %v3285
    %v4370 = vpop.f32.mrf.mxu0
    %v4371 = vadd.f32 %v4328, %v4370
    %v4372 = vpop.f32.mrf.mxu0
    %v4373 = vadd.f32 %v4330, %v4372
    %v4374 = vpop.f32.mrf.mxu0
    %v4375 = vadd.f32 %v4332, %v4374
    %v4376 = vpop.f32.mrf.mxu0
    %v4377 = vadd.f32 %v4334, %v4376
    %4378 = vdwg.mxu0
    %s4379 = scalar_lea.vmem [#allocation5], 2
    %v4380 = vld [vmem:[%s4379] ss:$8 sm:$0xf]
    %v4381 = vld [vmem:[%s4379] ss:$8 sm:$0x30]
    %v4382 = vor.u32 %v4380, %v4381
    %s4383 = scalar_lea.vmem [#allocation7], 2
    %v4384 = vld [vmem:[%s4383] ss:$8 sm:$0xf]
    %v4385 = vld [vmem:[%s4383] ss:$8 sm:$0x30]
    %v4386 = vor.u32 %v4384, %v4385
    %v4388 = vlaneseq
    %v4389 = vshrl.u32 %v4388, 7
    %v4390 = vsub.s32 0, %v4389
    %v4391 = vrot.slane %v4382, %v4390
    %v4392 = vlaneseq
    %v4393 = vshrl.u32 %v4392, 7
    %v4394 = vsub.s32 1, %v4393
    %v4395 = vrot.slane %v4382, %v4394
    %v4396 = vlaneseq
    %v4397 = vshrl.u32 %v4396, 7
    %v4398 = vsub.s32 2, %v4397
    %v4399 = vrot.slane %v4382, %v4398
    %v4400 = vlaneseq
    %v4401 = vshrl.u32 %v4400, 7
    %v4402 = vsub.s32 3, %v4401
    %v4403 = vrot.slane %v4382, %v4402
    %v4404 = vlaneseq
    %v4405 = vshrl.u32 %v4404, 7
    %v4406 = vsub.s32 4, %v4405
    %v4407 = vrot.slane %v4382, %v4406
    %v4408 = vlaneseq
    %v4409 = vshrl.u32 %v4408, 7
    %v4410 = vsub.s32 5, %v4409
    %v4411 = vrot.slane %v4382, %v4410
    %v4418 = vmul.f32 %v4027, %v4391
    %v4419 = vmul.f32 %v4029, %v4395
    %v4420 = vmul.f32 %v4199, %v4399
    %v4421 = vmul.f32 %v4201, %v4403
    %v4422 = vmul.f32 %v4371, %v4407
    %v4423 = vmul.f32 %v4373, %v4411
    %v4424 = vmul.f32 %v4031, %v4391
    %v4425 = vmul.f32 %v4033, %v4395
    %v4426 = vmul.f32 %v4203, %v4399
    %v4427 = vmul.f32 %v4205, %v4403
    %v4428 = vmul.f32 %v4375, %v4407
    %v4429 = vmul.f32 %v4377, %v4411
    %v4431 = vlaneseq
    %v4432 = vshrl.u32 %v4431, 7
    %v4433 = vsub.s32 0, %v4432
    %v4434 = vrot.slane %v4386, %v4433
    %v4435 = vlaneseq
    %v4436 = vshrl.u32 %v4435, 7
    %v4437 = vsub.s32 1, %v4436
    %v4438 = vrot.slane %v4386, %v4437
    %v4439 = vlaneseq
    %v4440 = vshrl.u32 %v4439, 7
    %v4441 = vsub.s32 2, %v4440
    %v4442 = vrot.slane %v4386, %v4441
    %v4443 = vlaneseq
    %v4444 = vshrl.u32 %v4443, 7
    %v4445 = vsub.s32 3, %v4444
    %v4446 = vrot.slane %v4386, %v4445
    %v4447 = vlaneseq
    %v4448 = vshrl.u32 %v4447, 7
    %v4449 = vsub.s32 4, %v4448
    %v4450 = vrot.slane %v4386, %v4449
    %v4451 = vlaneseq
    %v4452 = vshrl.u32 %v4451, 7
    %v4453 = vsub.s32 5, %v4452
    %v4454 = vrot.slane %v4386, %v4453
    %v4461 = vadd.f32 %v4418, %v4434
    %v4462 = vadd.f32 %v4419, %v4438
    %v4463 = vadd.f32 %v4420, %v4442
    %v4464 = vadd.f32 %v4421, %v4446
    %v4465 = vadd.f32 %v4422, %v4450
    %v4466 = vadd.f32 %v4423, %v4454
    %v4467 = vadd.f32 %v4424, %v4434
    %v4468 = vadd.f32 %v4425, %v4438
    %v4469 = vadd.f32 %v4426, %v4442
    %v4470 = vadd.f32 %v4427, %v4446
    %v4471 = vadd.f32 %v4428, %v4450
    %v4472 = vadd.f32 %v4429, %v4454
    %v4473 = vtanh.pop %v4461
    %v4474 = vtanh.pop %v4462
    %v4475 = vtanh.pop %v4463
    %v4476 = vtanh.pop %v4464
    %v4477 = vtanh.pop %v4465
    %v4478 = vtanh.pop %v4466
    %v4479 = vtanh.pop %v4467
    %v4480 = vtanh.pop %v4468
    %v4481 = vtanh.pop %v4469
    %v4482 = vtanh.pop %v4470
    %v4483 = vtanh.pop %v4471
    %v4484 = vtanh.pop %v4472
    %v4485 = vpack.c.bf16 %v4479, %v4473
    %v4486 = vpack.c.bf16 %v4480, %v4474
    %v4487 = vpack.c.bf16 %v4481, %v4475
    %v4488 = vpack.c.bf16 %v4482, %v4476
    %v4489 = vpack.c.bf16 %v4483, %v4477
    %v4490 = vpack.c.bf16 %v4484, %v4478
    %v4491 = vld [vmem:[#allocation13] sm:$0xff]
    %v4492 = vld [vmem:[#allocation13 + $0x8] sm:$0xff]
    %v4493 = vld [vmem:[#allocation13 + $0x10] sm:$0xff]
    %v4494 = vld [vmem:[#allocation13 + $0x18] sm:$0xff]
    %v4495 = vld [vmem:[#allocation13 + $0x20] sm:$0xff]
    %v4496 = vld [vmem:[#allocation13 + $0x28] sm:$0xff]
    %v4497 = vld [vmem:[#allocation13 + $0x30] sm:$0xff]
    %v4498 = vld [vmem:[#allocation13 + $0x38] sm:$0xff]
    %v4499 = vld [vmem:[#allocation13 + $0x40] sm:$0xff]
    %v4500 = vld [vmem:[#allocation13 + $0x48] sm:$0xff]
    %v4501 = vld [vmem:[#allocation13 + $0x50] sm:$0xff]
    %v4502 = vld [vmem:[#allocation13 + $0x58] sm:$0xff]
    %v4503 = vld [vmem:[#allocation13 + $0x60] sm:$0xff]
    %v4504 = vld [vmem:[#allocation13 + $0x68] sm:$0xff]
    %v4505 = vld [vmem:[#allocation13 + $0x70] sm:$0xff]
    %v4506 = vld [vmem:[#allocation13 + $0x78] sm:$0xff]
    %v4507 = vld [vmem:[#allocation13 + $0x80] sm:$0xff]
    %v4508 = vld [vmem:[#allocation13 + $0x88] sm:$0xff]
    %v4509 = vld [vmem:[#allocation13 + $0x90] sm:$0xff]
    %v4510 = vld [vmem:[#allocation13 + $0x98] sm:$0xff]
    %v4511 = vld [vmem:[#allocation13 + $0xa0] sm:$0xff]
    %v4512 = vld [vmem:[#allocation13 + $0xa8] sm:$0xff]
    %v4513 = vld [vmem:[#allocation13 + $0xb0] sm:$0xff]
    %v4514 = vld [vmem:[#allocation13 + $0xb8] sm:$0xff]
    %v4515 = vld [vmem:[#allocation13 + $0xc0] sm:$0xff]
    %v4516 = vld [vmem:[#allocation13 + $0xc8] sm:$0xff]
    %v4517 = vld [vmem:[#allocation13 + $0xd0] sm:$0xff]
    %v4518 = vld [vmem:[#allocation13 + $0xd8] sm:$0xff]
    %v4519 = vld [vmem:[#allocation13 + $0xe0] sm:$0xff]
    %v4520 = vld [vmem:[#allocation13 + $0xe8] sm:$0xff]
    %v4521 = vld [vmem:[#allocation13 + $0xf0] sm:$0xff]
    %v4522 = vld [vmem:[#allocation13 + $0xf8] sm:$0xff]
    %v4523 = vld [vmem:[#allocation13 + $0x100] sm:$0xff]
    %v4524 = vld [vmem:[#allocation13 + $0x108] sm:$0xff]
    %v4525 = vld [vmem:[#allocation13 + $0x110] sm:$0xff]
    %v4526 = vld [vmem:[#allocation13 + $0x118] sm:$0xff]
    %v4527 = vld [vmem:[#allocation13 + $0x120] sm:$0xff]
    %v4528 = vld [vmem:[#allocation13 + $0x128] sm:$0xff]
    %v4529 = vld [vmem:[#allocation13 + $0x130] sm:$0xff]
    %v4530 = vld [vmem:[#allocation13 + $0x138] sm:$0xff]
    %v4531 = vld [vmem:[#allocation13 + $0x140] sm:$0xff]
    %v4532 = vld [vmem:[#allocation13 + $0x148] sm:$0xff]
    %v4533 = vld [vmem:[#allocation13 + $0x150] sm:$0xff]
    %v4534 = vld [vmem:[#allocation13 + $0x158] sm:$0xff]
    %v4535 = vld [vmem:[#allocation13 + $0x160] sm:$0xff]
    %v4536 = vld [vmem:[#allocation13 + $0x168] sm:$0xff]
    %v4537 = vld [vmem:[#allocation13 + $0x170] sm:$0xff]
    %v4538 = vld [vmem:[#allocation13 + $0x178] sm:$0xff]
    %v4539 = vld [vmem:[#allocation13 + $0x180] sm:$0xff]
    %v4540 = vld [vmem:[#allocation13 + $0x188] sm:$0xff]
    %v4541 = vld [vmem:[#allocation13 + $0x190] sm:$0xff]
    %v4542 = vld [vmem:[#allocation13 + $0x198] sm:$0xff]
    %v4543 = vld [vmem:[#allocation13 + $0x1a0] sm:$0xff]
    %v4544 = vld [vmem:[#allocation13 + $0x1a8] sm:$0xff]
    %v4545 = vld [vmem:[#allocation13 + $0x1b0] sm:$0xff]
    %v4546 = vld [vmem:[#allocation13 + $0x1b8] sm:$0xff]
    %v4547 = vld [vmem:[#allocation13 + $0x1c0] sm:$0xff]
    %v4548 = vld [vmem:[#allocation13 + $0x1c8] sm:$0xff]
    %v4549 = vld [vmem:[#allocation13 + $0x1d0] sm:$0xff]
    %v4550 = vld [vmem:[#allocation13 + $0x1d8] sm:$0xff]
    %v4551 = vld [vmem:[#allocation13 + $0x1e0] sm:$0xff]
    %v4552 = vld [vmem:[#allocation13 + $0x1e8] sm:$0xff]
    %v4553 = vld [vmem:[#allocation13 + $0x1f0] sm:$0xff]
    %v4554 = vld [vmem:[#allocation13 + $0x1f8] sm:$0xff]
    %v4555 = vld [vmem:[#allocation13 + $0x200] sm:$0xff]
    %v4556 = vld [vmem:[#allocation13 + $0x208] sm:$0xff]
    %v4557 = vld [vmem:[#allocation13 + $0x210] sm:$0xff]
    %v4558 = vld [vmem:[#allocation13 + $0x218] sm:$0xff]
    %v4559 = vld [vmem:[#allocation13 + $0x220] sm:$0xff]
    %v4560 = vld [vmem:[#allocation13 + $0x228] sm:$0xff]
    %v4561 = vld [vmem:[#allocation13 + $0x230] sm:$0xff]
    %v4562 = vld [vmem:[#allocation13 + $0x238] sm:$0xff]
    %v4563 = vld [vmem:[#allocation13 + $0x240] sm:$0xff]
    %v4564 = vld [vmem:[#allocation13 + $0x248] sm:$0xff]
    %v4565 = vld [vmem:[#allocation13 + $0x250] sm:$0xff]
    %v4566 = vld [vmem:[#allocation13 + $0x258] sm:$0xff]
    %v4567 = vld [vmem:[#allocation13 + $0x260] sm:$0xff]
    %v4568 = vld [vmem:[#allocation13 + $0x268] sm:$0xff]
    %v4569 = vld [vmem:[#allocation13 + $0x270] sm:$0xff]
    %v4570 = vld [vmem:[#allocation13 + $0x278] sm:$0xff]
    %v4571 = vld [vmem:[#allocation13 + $0x280] sm:$0xff]
    %v4572 = vld [vmem:[#allocation13 + $0x288] sm:$0xff]
    %v4573 = vld [vmem:[#allocation13 + $0x290] sm:$0xff]
    %v4574 = vld [vmem:[#allocation13 + $0x298] sm:$0xff]
    %v4575 = vld [vmem:[#allocation13 + $0x2a0] sm:$0xff]
    %v4576 = vld [vmem:[#allocation13 + $0x2a8] sm:$0xff]
    %v4577 = vld [vmem:[#allocation13 + $0x2b0] sm:$0xff]
    %v4578 = vld [vmem:[#allocation13 + $0x2b8] sm:$0xff]
    %v4579 = vld [vmem:[#allocation13 + $0x2c0] sm:$0xff]
    %v4580 = vld [vmem:[#allocation13 + $0x2c8] sm:$0xff]
    %v4581 = vld [vmem:[#allocation13 + $0x2d0] sm:$0xff]
    %v4582 = vld [vmem:[#allocation13 + $0x2d8] sm:$0xff]
    %v4583 = vld [vmem:[#allocation13 + $0x2e0] sm:$0xff]
    %v4584 = vld [vmem:[#allocation13 + $0x2e8] sm:$0xff]
    %v4585 = vld [vmem:[#allocation13 + $0x2f0] sm:$0xff]
    %v4586 = vld [vmem:[#allocation13 + $0x2f8] sm:$0xff]
    %v4587 = vunpack.c.l.s8.bf16 %v4491
    %v4588 = vunpack.c.l.s8.bf16 %v4492
    %v4589 = vunpack.c.l.s8.bf16 %v4493
    %v4590 = vunpack.c.l.s8.bf16 %v4494
    %v4591 = vunpack.c.h.s8.bf16 %v4491
    %v4592 = vunpack.c.h.s8.bf16 %v4492
    %v4593 = vunpack.c.h.s8.bf16 %v4493
    %v4594 = vunpack.c.h.s8.bf16 %v4494
    %v4595 = vunpack.c.l.s8.bf16 %v4495
    %v4596 = vunpack.c.l.s8.bf16 %v4496
    %v4597 = vunpack.c.l.s8.bf16 %v4497
    %v4598 = vunpack.c.l.s8.bf16 %v4498
    %v4599 = vunpack.c.h.s8.bf16 %v4495
    %v4600 = vunpack.c.h.s8.bf16 %v4496
    %v4601 = vunpack.c.h.s8.bf16 %v4497
    %v4602 = vunpack.c.h.s8.bf16 %v4498
    %v4603 = vunpack.c.l.s8.bf16 %v4499
    %v4604 = vunpack.c.l.s8.bf16 %v4500
    %v4605 = vunpack.c.l.s8.bf16 %v4501
    %v4606 = vunpack.c.l.s8.bf16 %v4502
    %v4607 = vunpack.c.h.s8.bf16 %v4499
    %v4608 = vunpack.c.h.s8.bf16 %v4500
    %v4609 = vunpack.c.h.s8.bf16 %v4501
    %v4610 = vunpack.c.h.s8.bf16 %v4502
    %v4611 = vunpack.c.l.s8.bf16 %v4503
    %v4612 = vunpack.c.l.s8.bf16 %v4504
    %v4613 = vunpack.c.l.s8.bf16 %v4505
    %v4614 = vunpack.c.l.s8.bf16 %v4506
    %v4615 = vunpack.c.h.s8.bf16 %v4503
    %v4616 = vunpack.c.h.s8.bf16 %v4504
    %v4617 = vunpack.c.h.s8.bf16 %v4505
    %v4618 = vunpack.c.h.s8.bf16 %v4506
    %v4619 = vunpack.c.l.s8.bf16 %v4507
    %v4620 = vunpack.c.l.s8.bf16 %v4508
    %v4621 = vunpack.c.l.s8.bf16 %v4509
    %v4622 = vunpack.c.l.s8.bf16 %v4510
    %v4623 = vunpack.c.h.s8.bf16 %v4507
    %v4624 = vunpack.c.h.s8.bf16 %v4508
    %v4625 = vunpack.c.h.s8.bf16 %v4509
    %v4626 = vunpack.c.h.s8.bf16 %v4510
    %v4627 = vunpack.c.l.s8.bf16 %v4511
    %v4628 = vunpack.c.l.s8.bf16 %v4512
    %v4629 = vunpack.c.l.s8.bf16 %v4513
    %v4630 = vunpack.c.l.s8.bf16 %v4514
    %v4631 = vunpack.c.h.s8.bf16 %v4511
    %v4632 = vunpack.c.h.s8.bf16 %v4512
    %v4633 = vunpack.c.h.s8.bf16 %v4513
    %v4634 = vunpack.c.h.s8.bf16 %v4514
    %v4635 = vunpack.c.l.s8.bf16 %v4515
    %v4636 = vunpack.c.l.s8.bf16 %v4516
    %v4637 = vunpack.c.l.s8.bf16 %v4517
    %v4638 = vunpack.c.l.s8.bf16 %v4518
    %v4639 = vunpack.c.h.s8.bf16 %v4515
    %v4640 = vunpack.c.h.s8.bf16 %v4516
    %v4641 = vunpack.c.h.s8.bf16 %v4517
    %v4642 = vunpack.c.h.s8.bf16 %v4518
    %v4643 = vunpack.c.l.s8.bf16 %v4519
    %v4644 = vunpack.c.l.s8.bf16 %v4520
    %v4645 = vunpack.c.l.s8.bf16 %v4521
    %v4646 = vunpack.c.l.s8.bf16 %v4522
    %v4647 = vunpack.c.h.s8.bf16 %v4519
    %v4648 = vunpack.c.h.s8.bf16 %v4520
    %v4649 = vunpack.c.h.s8.bf16 %v4521
    %v4650 = vunpack.c.h.s8.bf16 %v4522
    %v4651 = vunpack.c.l.s8.bf16 %v4523
    %v4652 = vunpack.c.l.s8.bf16 %v4524
    %v4653 = vunpack.c.l.s8.bf16 %v4525
    %v4654 = vunpack.c.l.s8.bf16 %v4526
    %v4655 = vunpack.c.h.s8.bf16 %v4523
    %v4656 = vunpack.c.h.s8.bf16 %v4524
    %v4657 = vunpack.c.h.s8.bf16 %v4525
    %v4658 = vunpack.c.h.s8.bf16 %v4526
    %v4659 = vunpack.c.l.s8.bf16 %v4527
    %v4660 = vunpack.c.l.s8.bf16 %v4528
    %v4661 = vunpack.c.l.s8.bf16 %v4529
    %v4662 = vunpack.c.l.s8.bf16 %v4530
    %v4663 = vunpack.c.h.s8.bf16 %v4527
    %v4664 = vunpack.c.h.s8.bf16 %v4528
    %v4665 = vunpack.c.h.s8.bf16 %v4529
    %v4666 = vunpack.c.h.s8.bf16 %v4530
    %v4667 = vunpack.c.l.s8.bf16 %v4531
    %v4668 = vunpack.c.l.s8.bf16 %v4532
    %v4669 = vunpack.c.l.s8.bf16 %v4533
    %v4670 = vunpack.c.l.s8.bf16 %v4534
    %v4671 = vunpack.c.h.s8.bf16 %v4531
    %v4672 = vunpack.c.h.s8.bf16 %v4532
    %v4673 = vunpack.c.h.s8.bf16 %v4533
    %v4674 = vunpack.c.h.s8.bf16 %v4534
    %v4675 = vunpack.c.l.s8.bf16 %v4535
    %v4676 = vunpack.c.l.s8.bf16 %v4536
    %v4677 = vunpack.c.l.s8.bf16 %v4537
    %v4678 = vunpack.c.l.s8.bf16 %v4538
    %v4679 = vunpack.c.h.s8.bf16 %v4535
    %v4680 = vunpack.c.h.s8.bf16 %v4536
    %v4681 = vunpack.c.h.s8.bf16 %v4537
    %v4682 = vunpack.c.h.s8.bf16 %v4538
    %v4683 = vunpack.c.l.s8.bf16 %v4539
    %v4684 = vunpack.c.l.s8.bf16 %v4540
    %v4685 = vunpack.c.l.s8.bf16 %v4541
    %v4686 = vunpack.c.l.s8.bf16 %v4542
    %v4687 = vunpack.c.h.s8.bf16 %v4539
    %v4688 = vunpack.c.h.s8.bf16 %v4540
    %v4689 = vunpack.c.h.s8.bf16 %v4541
    %v4690 = vunpack.c.h.s8.bf16 %v4542
    %v4691 = vunpack.c.l.s8.bf16 %v4543
    %v4692 = vunpack.c.l.s8.bf16 %v4544
    %v4693 = vunpack.c.l.s8.bf16 %v4545
    %v4694 = vunpack.c.l.s8.bf16 %v4546
    %v4695 = vunpack.c.h.s8.bf16 %v4543
    %v4696 = vunpack.c.h.s8.bf16 %v4544
    %v4697 = vunpack.c.h.s8.bf16 %v4545
    %v4698 = vunpack.c.h.s8.bf16 %v4546
    %v4699 = vunpack.c.l.s8.bf16 %v4547
    %v4700 = vunpack.c.l.s8.bf16 %v4548
    %v4701 = vunpack.c.l.s8.bf16 %v4549
    %v4702 = vunpack.c.l.s8.bf16 %v4550
    %v4703 = vunpack.c.h.s8.bf16 %v4547
    %v4704 = vunpack.c.h.s8.bf16 %v4548
    %v4705 = vunpack.c.h.s8.bf16 %v4549
    %v4706 = vunpack.c.h.s8.bf16 %v4550
    %v4707 = vunpack.c.l.s8.bf16 %v4551
    %v4708 = vunpack.c.l.s8.bf16 %v4552
    %v4709 = vunpack.c.l.s8.bf16 %v4553
    %v4710 = vunpack.c.l.s8.bf16 %v4554
    %v4711 = vunpack.c.h.s8.bf16 %v4551
    %v4712 = vunpack.c.h.s8.bf16 %v4552
    %v4713 = vunpack.c.h.s8.bf16 %v4553
    %v4714 = vunpack.c.h.s8.bf16 %v4554
    %v4715 = vunpack.c.l.s8.bf16 %v4555
    %v4716 = vunpack.c.l.s8.bf16 %v4556
    %v4717 = vunpack.c.l.s8.bf16 %v4557
    %v4718 = vunpack.c.l.s8.bf16 %v4558
    %v4719 = vunpack.c.h.s8.bf16 %v4555
    %v4720 = vunpack.c.h.s8.bf16 %v4556
    %v4721 = vunpack.c.h.s8.bf16 %v4557
    %v4722 = vunpack.c.h.s8.bf16 %v4558
    %v4723 = vunpack.c.l.s8.bf16 %v4559
    %v4724 = vunpack.c.l.s8.bf16 %v4560
    %v4725 = vunpack.c.l.s8.bf16 %v4561
    %v4726 = vunpack.c.l.s8.bf16 %v4562
    %v4727 = vunpack.c.h.s8.bf16 %v4559
    %v4728 = vunpack.c.h.s8.bf16 %v4560
    %v4729 = vunpack.c.h.s8.bf16 %v4561
    %v4730 = vunpack.c.h.s8.bf16 %v4562
    %v4731 = vunpack.c.l.s8.bf16 %v4563
    %v4732 = vunpack.c.l.s8.bf16 %v4564
    %v4733 = vunpack.c.l.s8.bf16 %v4565
    %v4734 = vunpack.c.l.s8.bf16 %v4566
    %v4735 = vunpack.c.h.s8.bf16 %v4563
    %v4736 = vunpack.c.h.s8.bf16 %v4564
    %v4737 = vunpack.c.h.s8.bf16 %v4565
    %v4738 = vunpack.c.h.s8.bf16 %v4566
    %v4739 = vunpack.c.l.s8.bf16 %v4567
    %v4740 = vunpack.c.l.s8.bf16 %v4568
    %v4741 = vunpack.c.l.s8.bf16 %v4569
    %v4742 = vunpack.c.l.s8.bf16 %v4570
    %v4743 = vunpack.c.h.s8.bf16 %v4567
    %v4744 = vunpack.c.h.s8.bf16 %v4568
    %v4745 = vunpack.c.h.s8.bf16 %v4569
    %v4746 = vunpack.c.h.s8.bf16 %v4570
    %v4747 = vunpack.c.l.s8.bf16 %v4571
    %v4748 = vunpack.c.l.s8.bf16 %v4572
    %v4749 = vunpack.c.l.s8.bf16 %v4573
    %v4750 = vunpack.c.l.s8.bf16 %v4574
    %v4751 = vunpack.c.h.s8.bf16 %v4571
    %v4752 = vunpack.c.h.s8.bf16 %v4572
    %v4753 = vunpack.c.h.s8.bf16 %v4573
    %v4754 = vunpack.c.h.s8.bf16 %v4574
    %v4755 = vunpack.c.l.s8.bf16 %v4575
    %v4756 = vunpack.c.l.s8.bf16 %v4576
    %v4757 = vunpack.c.l.s8.bf16 %v4577
    %v4758 = vunpack.c.l.s8.bf16 %v4578
    %v4759 = vunpack.c.h.s8.bf16 %v4575
    %v4760 = vunpack.c.h.s8.bf16 %v4576
    %v4761 = vunpack.c.h.s8.bf16 %v4577
    %v4762 = vunpack.c.h.s8.bf16 %v4578
    %v4763 = vunpack.c.l.s8.bf16 %v4579
    %v4764 = vunpack.c.l.s8.bf16 %v4580
    %v4765 = vunpack.c.l.s8.bf16 %v4581
    %v4766 = vunpack.c.l.s8.bf16 %v4582
    %v4767 = vunpack.c.h.s8.bf16 %v4579
    %v4768 = vunpack.c.h.s8.bf16 %v4580
    %v4769 = vunpack.c.h.s8.bf16 %v4581
    %v4770 = vunpack.c.h.s8.bf16 %v4582
    %v4771 = vunpack.c.l.s8.bf16 %v4583
    %v4772 = vunpack.c.l.s8.bf16 %v4584
    %v4773 = vunpack.c.l.s8.bf16 %v4585
    %v4774 = vunpack.c.l.s8.bf16 %v4586
    %v4775 = vunpack.c.h.s8.bf16 %v4583
    %v4776 = vunpack.c.h.s8.bf16 %v4584
    %v4777 = vunpack.c.h.s8.bf16 %v4585
    %v4778 = vunpack.c.h.s8.bf16 %v4586
    %4779 = vmatprep.subr.bf16.mxu0 %v4616
    %4780 = vmatpush1.bf16.msra.mxu0 %v4615
    %4781 = vmatprep.subr.bf16.mxu0 %v4612
    %4782 = vmatpush1.bf16.msra.mxu0 %v4611
    %4783 = vmatprep.subr.bf16.mxu0 %v4608
    %4784 = vmatpush1.bf16.msra.mxu0 %v4607
    %4785 = vmatprep.subr.bf16.mxu0 %v4604
    %4786 = vmatpush1.bf16.msra.mxu0 %v4603
    %4787 = vmatprep.subr.bf16.mxu0 %v4600
    %4788 = vmatpush1.bf16.msra.mxu0 %v4599
    %4789 = vmatprep.subr.bf16.mxu0 %v4596
    %4790 = vmatpush1.bf16.msra.mxu0 %v4595
    %4791 = vmatprep.subr.bf16.mxu0 %v4592
    %4792 = vmatpush1.bf16.msra.mxu0 %v4591
    %4793 = vmatprep.subr.bf16.mxu0 %v4588
    %4794 = vmatpush1.bf16.msra.mxu0 %v4587
    %4795 = vmatprep.subr.bf16.mxu0 %v4648
    %4796 = vmatpush2.bf16.msra.mxu0 %v4647
    %4797 = vmatprep.subr.bf16.mxu0 %v4644
    %4798 = vmatpush2.bf16.msra.mxu0 %v4643
    %4799 = vmatprep.subr.bf16.mxu0 %v4640
    %4800 = vmatpush2.bf16.msra.mxu0 %v4639
    %4801 = vmatprep.subr.bf16.mxu0 %v4636
    %4802 = vmatpush2.bf16.msra.mxu0 %v4635
    %4803 = vmatprep.subr.bf16.mxu0 %v4632
    %4804 = vmatpush2.bf16.msra.mxu0 %v4631
    %4805 = vmatprep.subr.bf16.mxu0 %v4628
    %4806 = vmatpush2.bf16.msra.mxu0 %v4627
    %4807 = vmatprep.subr.bf16.mxu0 %v4624
    %4808 = vmatpush2.bf16.msra.mxu0 %v4623
    %4809 = vmatprep.subr.bf16.mxu0 %v4620
    %4810 = vmatpush2.bf16.msra.mxu0 %v4619
    %4811 = vmatprep.mubr.bf16.mxu0 %v4486
    %4812 = vmatmul.mubr.bf16.gmra.mxu0 %v4485
    %v4813 = vpop.f32.mrf.mxu0
    %v4814 = vadd.f32 0.0, %v4813
    %v4815 = vpop.f32.mrf.mxu0
    %v4816 = vadd.f32 0.0, %v4815
    %v4817 = vpop.f32.mrf.mxu0
    %v4818 = vadd.f32 0.0, %v4817
    %v4819 = vpop.f32.mrf.mxu0
    %v4820 = vadd.f32 0.0, %v4819
    %4821 = vdwg.mxu0
    %4822 = vmatprep.subr.bf16.mxu0 %v4680
    %4823 = vmatpush1.bf16.msra.mxu0 %v4679
    %4824 = vmatprep.subr.bf16.mxu0 %v4676
    %4825 = vmatpush1.bf16.msra.mxu0 %v4675
    %4826 = vmatprep.subr.bf16.mxu0 %v4672
    %4827 = vmatpush1.bf16.msra.mxu0 %v4671
    %4828 = vmatprep.subr.bf16.mxu0 %v4668
    %4829 = vmatpush1.bf16.msra.mxu0 %v4667
    %4830 = vmatprep.subr.bf16.mxu0 %v4664
    %4831 = vmatpush1.bf16.msra.mxu0 %v4663
    %4832 = vmatprep.subr.bf16.mxu0 %v4660
    %4833 = vmatpush1.bf16.msra.mxu0 %v4659
    %4834 = vmatprep.subr.bf16.mxu0 %v4656
    %4835 = vmatpush1.bf16.msra.mxu0 %v4655
    %4836 = vmatprep.subr.bf16.mxu0 %v4652
    %4837 = vmatpush1.bf16.msra.mxu0 %v4651
    %4838 = vmatprep.subr.bf16.mxu0 %v4712
    %4839 = vmatpush2.bf16.msra.mxu0 %v4711
    %4840 = vmatprep.subr.bf16.mxu0 %v4708
    %4841 = vmatpush2.bf16.msra.mxu0 %v4707
    %4842 = vmatprep.subr.bf16.mxu0 %v4704
    %4843 = vmatpush2.bf16.msra.mxu0 %v4703
    %4844 = vmatprep.subr.bf16.mxu0 %v4700
    %4845 = vmatpush2.bf16.msra.mxu0 %v4699
    %4846 = vmatprep.subr.bf16.mxu0 %v4696
    %4847 = vmatpush2.bf16.msra.mxu0 %v4695
    %4848 = vmatprep.subr.bf16.mxu0 %v4692
    %4849 = vmatpush2.bf16.msra.mxu0 %v4691
    %4850 = vmatprep.subr.bf16.mxu0 %v4688
    %4851 = vmatpush2.bf16.msra.mxu0 %v4687
    %4852 = vmatprep.subr.bf16.mxu0 %v4684
    %4853 = vmatpush2.bf16.msra.mxu0 %v4683
    %4854 = vmatprep.mubr.bf16.mxu0 %v4488
    %4855 = vmatmul.mubr.bf16.gmra.mxu0 %v4487
    %v4856 = vpop.f32.mrf.mxu0
    %v4857 = vadd.f32 %v4814, %v4856
    %v4858 = vpop.f32.mrf.mxu0
    %v4859 = vadd.f32 %v4816, %v4858
    %v4860 = vpop.f32.mrf.mxu0
    %v4861 = vadd.f32 %v4818, %v4860
    %v4862 = vpop.f32.mrf.mxu0
    %v4863 = vadd.f32 %v4820, %v4862
    %4864 = vdwg.mxu0
    %4865 = vmatprep.subr.bf16.mxu0 %v4744
    %4866 = vmatpush1.bf16.msra.mxu0 %v4743
    %4867 = vmatprep.subr.bf16.mxu0 %v4740
    %4868 = vmatpush1.bf16.msra.mxu0 %v4739
    %4869 = vmatprep.subr.bf16.mxu0 %v4736
    %4870 = vmatpush1.bf16.msra.mxu0 %v4735
    %4871 = vmatprep.subr.bf16.mxu0 %v4732
    %4872 = vmatpush1.bf16.msra.mxu0 %v4731
    %4873 = vmatprep.subr.bf16.mxu0 %v4728
    %4874 = vmatpush1.bf16.msra.mxu0 %v4727
    %4875 = vmatprep.subr.bf16.mxu0 %v4724
    %4876 = vmatpush1.bf16.msra.mxu0 %v4723
    %4877 = vmatprep.subr.bf16.mxu0 %v4720
    %4878 = vmatpush1.bf16.msra.mxu0 %v4719
    %4879 = vmatprep.subr.bf16.mxu0 %v4716
    %4880 = vmatpush1.bf16.msra.mxu0 %v4715
    %4881 = vmatprep.subr.bf16.mxu0 %v4776
    %4882 = vmatpush2.bf16.msra.mxu0 %v4775
    %4883 = vmatprep.subr.bf16.mxu0 %v4772
    %4884 = vmatpush2.bf16.msra.mxu0 %v4771
    %4885 = vmatprep.subr.bf16.mxu0 %v4768
    %4886 = vmatpush2.bf16.msra.mxu0 %v4767
    %4887 = vmatprep.subr.bf16.mxu0 %v4764
    %4888 = vmatpush2.bf16.msra.mxu0 %v4763
    %4889 = vmatprep.subr.bf16.mxu0 %v4760
    %4890 = vmatpush2.bf16.msra.mxu0 %v4759
    %4891 = vmatprep.subr.bf16.mxu0 %v4756
    %4892 = vmatpush2.bf16.msra.mxu0 %v4755
    %4893 = vmatprep.subr.bf16.mxu0 %v4752
    %4894 = vmatpush2.bf16.msra.mxu0 %v4751
    %4895 = vmatprep.subr.bf16.mxu0 %v4748
    %4896 = vmatpush2.bf16.msra.mxu0 %v4747
    %4897 = vmatprep.mubr.bf16.mxu0 %v4490
    %4898 = vmatmul.mubr.bf16.gmra.mxu0 %v4489
    %v4899 = vpop.f32.mrf.mxu0
    %v4900 = vadd.f32 %v4857, %v4899
    %v4901 = vpop.f32.mrf.mxu0
    %v4902 = vadd.f32 %v4859, %v4901
    %v4903 = vpop.f32.mrf.mxu0
    %v4904 = vadd.f32 %v4861, %v4903
    %v4905 = vpop.f32.mrf.mxu0
    %v4906 = vadd.f32 %v4863, %v4905
    %4907 = vdwg.mxu0
    %4908 = vmatprep.subr.bf16.mxu0 %v4618
    %4909 = vmatpush1.bf16.msra.mxu0 %v4617
    %4910 = vmatprep.subr.bf16.mxu0 %v4614
    %4911 = vmatpush1.bf16.msra.mxu0 %v4613
    %4912 = vmatprep.subr.bf16.mxu0 %v4610
    %4913 = vmatpush1.bf16.msra.mxu0 %v4609
    %4914 = vmatprep.subr.bf16.mxu0 %v4606
    %4915 = vmatpush1.bf16.msra.mxu0 %v4605
    %4916 = vmatprep.subr.bf16.mxu0 %v4602
    %4917 = vmatpush1.bf16.msra.mxu0 %v4601
    %4918 = vmatprep.subr.bf16.mxu0 %v4598
    %4919 = vmatpush1.bf16.msra.mxu0 %v4597
    %4920 = vmatprep.subr.bf16.mxu0 %v4594
    %4921 = vmatpush1.bf16.msra.mxu0 %v4593
    %4922 = vmatprep.subr.bf16.mxu0 %v4590
    %4923 = vmatpush1.bf16.msra.mxu0 %v4589
    %4924 = vmatprep.subr.bf16.mxu0 %v4650
    %4925 = vmatpush2.bf16.msra.mxu0 %v4649
    %4926 = vmatprep.subr.bf16.mxu0 %v4646
    %4927 = vmatpush2.bf16.msra.mxu0 %v4645
    %4928 = vmatprep.subr.bf16.mxu0 %v4642
    %4929 = vmatpush2.bf16.msra.mxu0 %v4641
    %4930 = vmatprep.subr.bf16.mxu0 %v4638
    %4931 = vmatpush2.bf16.msra.mxu0 %v4637
    %4932 = vmatprep.subr.bf16.mxu0 %v4634
    %4933 = vmatpush2.bf16.msra.mxu0 %v4633
    %4934 = vmatprep.subr.bf16.mxu0 %v4630
    %4935 = vmatpush2.bf16.msra.mxu0 %v4629
    %4936 = vmatprep.subr.bf16.mxu0 %v4626
    %4937 = vmatpush2.bf16.msra.mxu0 %v4625
    %4938 = vmatprep.subr.bf16.mxu0 %v4622
    %4939 = vmatpush2.bf16.msra.mxu0 %v4621
    %4940 = vmatprep.mubr.bf16.mxu0 %v4486
    %4941 = vmatmul.mubr.bf16.gmra.mxu0 %v4485
    %v4942 = vpop.f32.mrf.mxu0
    %v4943 = vadd.f32 0.0, %v4942
    %v4944 = vpop.f32.mrf.mxu0
    %v4945 = vadd.f32 0.0, %v4944
    %v4946 = vpop.f32.mrf.mxu0
    %v4947 = vadd.f32 0.0, %v4946
    %v4948 = vpop.f32.mrf.mxu0
    %v4949 = vadd.f32 0.0, %v4948
    %4950 = vdwg.mxu0
    %4951 = vmatprep.subr.bf16.mxu0 %v4682
    %4952 = vmatpush1.bf16.msra.mxu0 %v4681
    %4953 = vmatprep.subr.bf16.mxu0 %v4678
    %4954 = vmatpush1.bf16.msra.mxu0 %v4677
    %4955 = vmatprep.subr.bf16.mxu0 %v4674
    %4956 = vmatpush1.bf16.msra.mxu0 %v4673
    %4957 = vmatprep.subr.bf16.mxu0 %v4670
    %4958 = vmatpush1.bf16.msra.mxu0 %v4669
    %4959 = vmatprep.subr.bf16.mxu0 %v4666
    %4960 = vmatpush1.bf16.msra.mxu0 %v4665
    %4961 = vmatprep.subr.bf16.mxu0 %v4662
    %4962 = vmatpush1.bf16.msra.mxu0 %v4661
    %4963 = vmatprep.subr.bf16.mxu0 %v4658
    %4964 = vmatpush1.bf16.msra.mxu0 %v4657
    %4965 = vmatprep.subr.bf16.mxu0 %v4654
    %4966 = vmatpush1.bf16.msra.mxu0 %v4653
    %4967 = vmatprep.subr.bf16.mxu0 %v4714
    %4968 = vmatpush2.bf16.msra.mxu0 %v4713
    %4969 = vmatprep.subr.bf16.mxu0 %v4710
    %4970 = vmatpush2.bf16.msra.mxu0 %v4709
    %4971 = vmatprep.subr.bf16.mxu0 %v4706
    %4972 = vmatpush2.bf16.msra.mxu0 %v4705
    %4973 = vmatprep.subr.bf16.mxu0 %v4702
    %4974 = vmatpush2.bf16.msra.mxu0 %v4701
    %4975 = vmatprep.subr.bf16.mxu0 %v4698
    %4976 = vmatpush2.bf16.msra.mxu0 %v4697
    %4977 = vmatprep.subr.bf16.mxu0 %v4694
    %4978 = vmatpush2.bf16.msra.mxu0 %v4693
    %4979 = vmatprep.subr.bf16.mxu0 %v4690
    %4980 = vmatpush2.bf16.msra.mxu0 %v4689
    %4981 = vmatprep.subr.bf16.mxu0 %v4686
    %4982 = vmatpush2.bf16.msra.mxu0 %v4685
    %4983 = vmatprep.mubr.bf16.mxu0 %v4488
    %4984 = vmatmul.mubr.bf16.gmra.mxu0 %v4487
    %v4985 = vpop.f32.mrf.mxu0
    %v4986 = vadd.f32 %v4943, %v4985
    %v4987 = vpop.f32.mrf.mxu0
    %v4988 = vadd.f32 %v4945, %v4987
    %v4989 = vpop.f32.mrf.mxu0
    %v4990 = vadd.f32 %v4947, %v4989
    %v4991 = vpop.f32.mrf.mxu0
    %v4992 = vadd.f32 %v4949, %v4991
    %4993 = vdwg.mxu0
    %4994 = vmatprep.subr.bf16.mxu0 %v4746
    %4995 = vmatpush1.bf16.msra.mxu0 %v4745
    %4996 = vmatprep.subr.bf16.mxu0 %v4742
    %4997 = vmatpush1.bf16.msra.mxu0 %v4741
    %4998 = vmatprep.subr.bf16.mxu0 %v4738
    %4999 = vmatpush1.bf16.msra.mxu0 %v4737
    %5000 = vmatprep.subr.bf16.mxu0 %v4734
    %5001 = vmatpush1.bf16.msra.mxu0 %v4733
    %5002 = vmatprep.subr.bf16.mxu0 %v4730
    %5003 = vmatpush1.bf16.msra.mxu0 %v4729
    %5004 = vmatprep.subr.bf16.mxu0 %v4726
    %5005 = vmatpush1.bf16.msra.mxu0 %v4725
    %5006 = vmatprep.subr.bf16.mxu0 %v4722
    %5007 = vmatpush1.bf16.msra.mxu0 %v4721
    %5008 = vmatprep.subr.bf16.mxu0 %v4718
    %5009 = vmatpush1.bf16.msra.mxu0 %v4717
    %5010 = vmatprep.subr.bf16.mxu0 %v4778
    %5011 = vmatpush2.bf16.msra.mxu0 %v4777
    %5012 = vmatprep.subr.bf16.mxu0 %v4774
    %5013 = vmatpush2.bf16.msra.mxu0 %v4773
    %5014 = vmatprep.subr.bf16.mxu0 %v4770
    %5015 = vmatpush2.bf16.msra.mxu0 %v4769
    %5016 = vmatprep.subr.bf16.mxu0 %v4766
    %5017 = vmatpush2.bf16.msra.mxu0 %v4765
    %5018 = vmatprep.subr.bf16.mxu0 %v4762
    %5019 = vmatpush2.bf16.msra.mxu0 %v4761
    %5020 = vmatprep.subr.bf16.mxu0 %v4758
    %5021 = vmatpush2.bf16.msra.mxu0 %v4757
    %5022 = vmatprep.subr.bf16.mxu0 %v4754
    %5023 = vmatpush2.bf16.msra.mxu0 %v4753
    %5024 = vmatprep.subr.bf16.mxu0 %v4750
    %5025 = vmatpush2.bf16.msra.mxu0 %v4749
    %5026 = vmatprep.mubr.bf16.mxu0 %v4490
    %5027 = vmatmul.mubr.bf16.gmra.mxu0 %v4489
    %v5028 = vpop.f32.mrf.mxu0
    %v5029 = vadd.f32 %v4986, %v5028
    %v5030 = vpop.f32.mrf.mxu0
    %v5031 = vadd.f32 %v4988, %v5030
    %v5032 = vpop.f32.mrf.mxu0
    %v5033 = vadd.f32 %v4990, %v5032
    %v5034 = vpop.f32.mrf.mxu0
    %v5035 = vadd.f32 %v4992, %v5034
    %5036 = vdwg.mxu0
    %s5037 = scalar_lea.vmem [#allocation5], 3
    %v5038 = vld [vmem:[%s5037] ss:$8 sm:$0xf]
    %s5039 = scalar_lea.vmem [#allocation7], 3
    %v5040 = vld [vmem:[%s5039] ss:$8 sm:$0xf]
    %v5042 = vlaneseq
    %v5043 = vshrl.u32 %v5042, 7
    %v5044 = vsub.s32 0, %v5043
    %v5045 = vrot.slane %v5038, %v5044
    %v5046 = vlaneseq
    %v5047 = vshrl.u32 %v5046, 7
    %v5048 = vsub.s32 1, %v5047
    %v5049 = vrot.slane %v5038, %v5048
    %v5050 = vlaneseq
    %v5051 = vshrl.u32 %v5050, 7
    %v5052 = vsub.s32 2, %v5051
    %v5053 = vrot.slane %v5038, %v5052
    %v5054 = vlaneseq
    %v5055 = vshrl.u32 %v5054, 7
    %v5056 = vsub.s32 3, %v5055
    %v5057 = vrot.slane %v5038, %v5056
    %v5062 = vmul.f32 %v4900, %v5045
    %v5063 = vmul.f32 %v4902, %v5049
    %v5064 = vmul.f32 %v5029, %v5053
    %v5065 = vmul.f32 %v5031, %v5057
    %v5066 = vmul.f32 %v4904, %v5045
    %v5067 = vmul.f32 %v4906, %v5049
    %v5068 = vmul.f32 %v5033, %v5053
    %v5069 = vmul.f32 %v5035, %v5057
    %v5071 = vlaneseq
    %v5072 = vshrl.u32 %v5071, 7
    %v5073 = vsub.s32 0, %v5072
    %v5074 = vrot.slane %v5040, %v5073
    %v5075 = vlaneseq
    %v5076 = vshrl.u32 %v5075, 7
    %v5077 = vsub.s32 1, %v5076
    %v5078 = vrot.slane %v5040, %v5077
    %v5079 = vlaneseq
    %v5080 = vshrl.u32 %v5079, 7
    %v5081 = vsub.s32 2, %v5080
    %v5082 = vrot.slane %v5040, %v5081
    %v5083 = vlaneseq
    %v5084 = vshrl.u32 %v5083, 7
    %v5085 = vsub.s32 3, %v5084
    %v5086 = vrot.slane %v5040, %v5085
    %v5091 = vadd.f32 %v5062, %v5074
    %v5092 = vadd.f32 %v5063, %v5078
    %v5093 = vadd.f32 %v5064, %v5082
    %v5094 = vadd.f32 %v5065, %v5086
    %v5095 = vadd.f32 %v5066, %v5074
    %v5096 = vadd.f32 %v5067, %v5078
    %v5097 = vadd.f32 %v5068, %v5082
    %v5098 = vadd.f32 %v5069, %v5086
    %v5099 = vtanh.pop %v5091
    %v5100 = vtanh.pop %v5092
    %v5101 = vtanh.pop %v5093
    %v5102 = vtanh.pop %v5094
    %v5103 = vtanh.pop %v5095
    %v5104 = vtanh.pop %v5096
    %v5105 = vtanh.pop %v5097
    %v5106 = vtanh.pop %v5098
    %5107 = vst [vmem:[#allocation21] sm:$0xff] %v5099
    %5108 = vst [vmem:[#allocation21 + $0x8] sm:$0xff] %v5100
    %5109 = vst [vmem:[#allocation21 + $0x10] sm:$0xff] %v5101
    %5110 = vst [vmem:[#allocation21 + $0x18] sm:$0xff] %v5102
    %5111 = vst [vmem:[#allocation21 + $0x20] sm:$0xff] %v5103
    %5112 = vst [vmem:[#allocation21 + $0x28] sm:$0xff] %v5104
    %5113 = vst [vmem:[#allocation21 + $0x30] sm:$0xff] %v5105
    %5114 = vst [vmem:[#allocation21 + $0x38] sm:$0xff] %v5106
    %v5115 = vpack.c.bf16 %v5103, %v5099
    %v5116 = vpack.c.bf16 %v5104, %v5100
    %v5117 = vpack.c.bf16 %v5105, %v5101
    %v5118 = vpack.c.bf16 %v5106, %v5102
    %v5119 = vld [vmem:[#allocation14] sm:$0xff]
    %v5120 = vld [vmem:[#allocation14 + $0x8] sm:$0xff]
    %v5121 = vld [vmem:[#allocation14 + $0x10] sm:$0xff]
    %v5122 = vld [vmem:[#allocation14 + $0x18] sm:$0xff]
    %v5123 = vld [vmem:[#allocation14 + $0x20] sm:$0xff]
    %v5124 = vld [vmem:[#allocation14 + $0x28] sm:$0xff]
    %v5125 = vld [vmem:[#allocation14 + $0x30] sm:$0xff]
    %v5126 = vld [vmem:[#allocation14 + $0x38] sm:$0xff]
    %v5127 = vld [vmem:[#allocation14 + $0x40] sm:$0xff]
    %v5128 = vld [vmem:[#allocation14 + $0x48] sm:$0xff]
    %v5129 = vld [vmem:[#allocation14 + $0x50] sm:$0xff]
    %v5130 = vld [vmem:[#allocation14 + $0x58] sm:$0xff]
    %v5131 = vld [vmem:[#allocation14 + $0x60] sm:$0xff]
    %v5132 = vld [vmem:[#allocation14 + $0x68] sm:$0xff]
    %v5133 = vld [vmem:[#allocation14 + $0x70] sm:$0xff]
    %v5134 = vld [vmem:[#allocation14 + $0x78] sm:$0xff]
    %v5135 = vld [vmem:[#allocation14 + $0x80] sm:$0xff]
    %v5136 = vld [vmem:[#allocation14 + $0x88] sm:$0xff]
    %v5137 = vld [vmem:[#allocation14 + $0x90] sm:$0xff]
    %v5138 = vld [vmem:[#allocation14 + $0x98] sm:$0xff]
    %v5139 = vld [vmem:[#allocation14 + $0xa0] sm:$0xff]
    %v5140 = vld [vmem:[#allocation14 + $0xa8] sm:$0xff]
    %v5141 = vld [vmem:[#allocation14 + $0xb0] sm:$0xff]
    %v5142 = vld [vmem:[#allocation14 + $0xb8] sm:$0xff]
    %v5143 = vld [vmem:[#allocation14 + $0xc0] sm:$0xff]
    %v5144 = vld [vmem:[#allocation14 + $0xc8] sm:$0xff]
    %v5145 = vld [vmem:[#allocation14 + $0xd0] sm:$0xff]
    %v5146 = vld [vmem:[#allocation14 + $0xd8] sm:$0xff]
    %v5147 = vld [vmem:[#allocation14 + $0xe0] sm:$0xff]
    %v5148 = vld [vmem:[#allocation14 + $0xe8] sm:$0xff]
    %v5149 = vld [vmem:[#allocation14 + $0xf0] sm:$0xff]
    %v5150 = vld [vmem:[#allocation14 + $0xf8] sm:$0xff]
    %v5151 = vld [vmem:[#allocation14 + $0x100] sm:$0xff]
    %v5152 = vld [vmem:[#allocation14 + $0x108] sm:$0xff]
    %v5153 = vld [vmem:[#allocation14 + $0x110] sm:$0xff]
    %v5154 = vld [vmem:[#allocation14 + $0x118] sm:$0xff]
    %v5155 = vld [vmem:[#allocation14 + $0x120] sm:$0xff]
    %v5156 = vld [vmem:[#allocation14 + $0x128] sm:$0xff]
    %v5157 = vld [vmem:[#allocation14 + $0x130] sm:$0xff]
    %v5158 = vld [vmem:[#allocation14 + $0x138] sm:$0xff]
    %v5159 = vld [vmem:[#allocation14 + $0x140] sm:$0xff]
    %v5160 = vld [vmem:[#allocation14 + $0x148] sm:$0xff]
    %v5161 = vld [vmem:[#allocation14 + $0x150] sm:$0xff]
    %v5162 = vld [vmem:[#allocation14 + $0x158] sm:$0xff]
    %v5163 = vld [vmem:[#allocation14 + $0x160] sm:$0xff]
    %v5164 = vld [vmem:[#allocation14 + $0x168] sm:$0xff]
    %v5165 = vld [vmem:[#allocation14 + $0x170] sm:$0xff]
    %v5166 = vld [vmem:[#allocation14 + $0x178] sm:$0xff]
    %v5167 = vld [vmem:[#allocation14 + $0x180] sm:$0xff]
    %v5168 = vld [vmem:[#allocation14 + $0x188] sm:$0xff]
    %v5169 = vld [vmem:[#allocation14 + $0x190] sm:$0xff]
    %v5170 = vld [vmem:[#allocation14 + $0x198] sm:$0xff]
    %v5171 = vld [vmem:[#allocation14 + $0x1a0] sm:$0xff]
    %v5172 = vld [vmem:[#allocation14 + $0x1a8] sm:$0xff]
    %v5173 = vld [vmem:[#allocation14 + $0x1b0] sm:$0xff]
    %v5174 = vld [vmem:[#allocation14 + $0x1b8] sm:$0xff]
    %v5175 = vld [vmem:[#allocation14 + $0x1c0] sm:$0xff]
    %v5176 = vld [vmem:[#allocation14 + $0x1c8] sm:$0xff]
    %v5177 = vld [vmem:[#allocation14 + $0x1d0] sm:$0xff]
    %v5178 = vld [vmem:[#allocation14 + $0x1d8] sm:$0xff]
    %v5179 = vld [vmem:[#allocation14 + $0x1e0] sm:$0xff]
    %v5180 = vld [vmem:[#allocation14 + $0x1e8] sm:$0xff]
    %v5181 = vld [vmem:[#allocation14 + $0x1f0] sm:$0xff]
    %v5182 = vld [vmem:[#allocation14 + $0x1f8] sm:$0xff]
    %v5183 = vld [vmem:[#allocation14 + $0x200] sm:$0xff]
    %v5184 = vld [vmem:[#allocation14 + $0x208] sm:$0xff]
    %v5185 = vld [vmem:[#allocation14 + $0x210] sm:$0xff]
    %v5186 = vld [vmem:[#allocation14 + $0x218] sm:$0xff]
    %v5187 = vld [vmem:[#allocation14 + $0x220] sm:$0xff]
    %v5188 = vld [vmem:[#allocation14 + $0x228] sm:$0xff]
    %v5189 = vld [vmem:[#allocation14 + $0x230] sm:$0xff]
    %v5190 = vld [vmem:[#allocation14 + $0x238] sm:$0xff]
    %v5191 = vld [vmem:[#allocation14 + $0x240] sm:$0xff]
    %v5192 = vld [vmem:[#allocation14 + $0x248] sm:$0xff]
    %v5193 = vld [vmem:[#allocation14 + $0x250] sm:$0xff]
    %v5194 = vld [vmem:[#allocation14 + $0x258] sm:$0xff]
    %v5195 = vld [vmem:[#allocation14 + $0x260] sm:$0xff]
    %v5196 = vld [vmem:[#allocation14 + $0x268] sm:$0xff]
    %v5197 = vld [vmem:[#allocation14 + $0x270] sm:$0xff]
    %v5198 = vld [vmem:[#allocation14 + $0x278] sm:$0xff]
    %v5199 = vld [vmem:[#allocation14 + $0x280] sm:$0xff]
    %v5200 = vld [vmem:[#allocation14 + $0x288] sm:$0xff]
    %v5201 = vld [vmem:[#allocation14 + $0x290] sm:$0xff]
    %v5202 = vld [vmem:[#allocation14 + $0x298] sm:$0xff]
    %v5203 = vld [vmem:[#allocation14 + $0x2a0] sm:$0xff]
    %v5204 = vld [vmem:[#allocation14 + $0x2a8] sm:$0xff]
    %v5205 = vld [vmem:[#allocation14 + $0x2b0] sm:$0xff]
    %v5206 = vld [vmem:[#allocation14 + $0x2b8] sm:$0xff]
    %v5207 = vld [vmem:[#allocation14 + $0x2c0] sm:$0xff]
    %v5208 = vld [vmem:[#allocation14 + $0x2c8] sm:$0xff]
    %v5209 = vld [vmem:[#allocation14 + $0x2d0] sm:$0xff]
    %v5210 = vld [vmem:[#allocation14 + $0x2d8] sm:$0xff]
    %v5211 = vld [vmem:[#allocation14 + $0x2e0] sm:$0xff]
    %v5212 = vld [vmem:[#allocation14 + $0x2e8] sm:$0xff]
    %v5213 = vld [vmem:[#allocation14 + $0x2f0] sm:$0xff]
    %v5214 = vld [vmem:[#allocation14 + $0x2f8] sm:$0xff]
    %v5215 = vunpack.c.l.s8.bf16 %v5119
    %v5216 = vunpack.c.l.s8.bf16 %v5120
    %v5217 = vunpack.c.l.s8.bf16 %v5121
    %v5218 = vunpack.c.l.s8.bf16 %v5122
    %v5219 = vunpack.c.l.s8.bf16 %v5123
    %v5220 = vunpack.c.l.s8.bf16 %v5124
    %v5221 = vunpack.c.h.s8.bf16 %v5119
    %v5222 = vunpack.c.h.s8.bf16 %v5120
    %v5223 = vunpack.c.h.s8.bf16 %v5121
    %v5224 = vunpack.c.h.s8.bf16 %v5122
    %v5225 = vunpack.c.h.s8.bf16 %v5123
    %v5226 = vunpack.c.h.s8.bf16 %v5124
    %v5227 = vunpack.c.l.s8.bf16 %v5125
    %v5228 = vunpack.c.l.s8.bf16 %v5126
    %v5229 = vunpack.c.l.s8.bf16 %v5127
    %v5230 = vunpack.c.l.s8.bf16 %v5128
    %v5231 = vunpack.c.l.s8.bf16 %v5129
    %v5232 = vunpack.c.l.s8.bf16 %v5130
    %v5233 = vunpack.c.h.s8.bf16 %v5125
    %v5234 = vunpack.c.h.s8.bf16 %v5126
    %v5235 = vunpack.c.h.s8.bf16 %v5127
    %v5236 = vunpack.c.h.s8.bf16 %v5128
    %v5237 = vunpack.c.h.s8.bf16 %v5129
    %v5238 = vunpack.c.h.s8.bf16 %v5130
    %v5239 = vunpack.c.l.s8.bf16 %v5131
    %v5240 = vunpack.c.l.s8.bf16 %v5132
    %v5241 = vunpack.c.l.s8.bf16 %v5133
    %v5242 = vunpack.c.l.s8.bf16 %v5134
    %v5243 = vunpack.c.l.s8.bf16 %v5135
    %v5244 = vunpack.c.l.s8.bf16 %v5136
    %v5245 = vunpack.c.h.s8.bf16 %v5131
    %v5246 = vunpack.c.h.s8.bf16 %v5132
    %v5247 = vunpack.c.h.s8.bf16 %v5133
    %v5248 = vunpack.c.h.s8.bf16 %v5134
    %v5249 = vunpack.c.h.s8.bf16 %v5135
    %v5250 = vunpack.c.h.s8.bf16 %v5136
    %v5251 = vunpack.c.l.s8.bf16 %v5137
    %v5252 = vunpack.c.l.s8.bf16 %v5138
    %v5253 = vunpack.c.l.s8.bf16 %v5139
    %v5254 = vunpack.c.l.s8.bf16 %v5140
    %v5255 = vunpack.c.l.s8.bf16 %v5141
    %v5256 = vunpack.c.l.s8.bf16 %v5142
    %v5257 = vunpack.c.h.s8.bf16 %v5137
    %v5258 = vunpack.c.h.s8.bf16 %v5138
    %v5259 = vunpack.c.h.s8.bf16 %v5139
    %v5260 = vunpack.c.h.s8.bf16 %v5140
    %v5261 = vunpack.c.h.s8.bf16 %v5141
    %v5262 = vunpack.c.h.s8.bf16 %v5142
    %v5263 = vunpack.c.l.s8.bf16 %v5143
    %v5264 = vunpack.c.l.s8.bf16 %v5144
    %v5265 = vunpack.c.l.s8.bf16 %v5145
    %v5266 = vunpack.c.l.s8.bf16 %v5146
    %v5267 = vunpack.c.l.s8.bf16 %v5147
    %v5268 = vunpack.c.l.s8.bf16 %v5148
    %v5269 = vunpack.c.h.s8.bf16 %v5143
    %v5270 = vunpack.c.h.s8.bf16 %v5144
    %v5271 = vunpack.c.h.s8.bf16 %v5145
    %v5272 = vunpack.c.h.s8.bf16 %v5146
    %v5273 = vunpack.c.h.s8.bf16 %v5147
    %v5274 = vunpack.c.h.s8.bf16 %v5148
    %v5275 = vunpack.c.l.s8.bf16 %v5149
    %v5276 = vunpack.c.l.s8.bf16 %v5150
    %v5277 = vunpack.c.l.s8.bf16 %v5151
    %v5278 = vunpack.c.l.s8.bf16 %v5152
    %v5279 = vunpack.c.l.s8.bf16 %v5153
    %v5280 = vunpack.c.l.s8.bf16 %v5154
    %v5281 = vunpack.c.h.s8.bf16 %v5149
    %v5282 = vunpack.c.h.s8.bf16 %v5150
    %v5283 = vunpack.c.h.s8.bf16 %v5151
    %v5284 = vunpack.c.h.s8.bf16 %v5152
    %v5285 = vunpack.c.h.s8.bf16 %v5153
    %v5286 = vunpack.c.h.s8.bf16 %v5154
    %v5287 = vunpack.c.l.s8.bf16 %v5155
    %v5288 = vunpack.c.l.s8.bf16 %v5156
    %v5289 = vunpack.c.l.s8.bf16 %v5157
    %v5290 = vunpack.c.l.s8.bf16 %v5158
    %v5291 = vunpack.c.l.s8.bf16 %v5159
    %v5292 = vunpack.c.l.s8.bf16 %v5160
    %v5293 = vunpack.c.h.s8.bf16 %v5155
    %v5294 = vunpack.c.h.s8.bf16 %v5156
    %v5295 = vunpack.c.h.s8.bf16 %v5157
    %v5296 = vunpack.c.h.s8.bf16 %v5158
    %v5297 = vunpack.c.h.s8.bf16 %v5159
    %v5298 = vunpack.c.h.s8.bf16 %v5160
    %v5299 = vunpack.c.l.s8.bf16 %v5161
    %v5300 = vunpack.c.l.s8.bf16 %v5162
    %v5301 = vunpack.c.l.s8.bf16 %v5163
    %v5302 = vunpack.c.l.s8.bf16 %v5164
    %v5303 = vunpack.c.l.s8.bf16 %v5165
    %v5304 = vunpack.c.l.s8.bf16 %v5166
    %v5305 = vunpack.c.h.s8.bf16 %v5161
    %v5306 = vunpack.c.h.s8.bf16 %v5162
    %v5307 = vunpack.c.h.s8.bf16 %v5163
    %v5308 = vunpack.c.h.s8.bf16 %v5164
    %v5309 = vunpack.c.h.s8.bf16 %v5165
    %v5310 = vunpack.c.h.s8.bf16 %v5166
    %v5311 = vunpack.c.l.s8.bf16 %v5167
    %v5312 = vunpack.c.l.s8.bf16 %v5168
    %v5313 = vunpack.c.l.s8.bf16 %v5169
    %v5314 = vunpack.c.l.s8.bf16 %v5170
    %v5315 = vunpack.c.l.s8.bf16 %v5171
    %v5316 = vunpack.c.l.s8.bf16 %v5172
    %v5317 = vunpack.c.h.s8.bf16 %v5167
    %v5318 = vunpack.c.h.s8.bf16 %v5168
    %v5319 = vunpack.c.h.s8.bf16 %v5169
    %v5320 = vunpack.c.h.s8.bf16 %v5170
    %v5321 = vunpack.c.h.s8.bf16 %v5171
    %v5322 = vunpack.c.h.s8.bf16 %v5172
    %v5323 = vunpack.c.l.s8.bf16 %v5173
    %v5324 = vunpack.c.l.s8.bf16 %v5174
    %v5325 = vunpack.c.l.s8.bf16 %v5175
    %v5326 = vunpack.c.l.s8.bf16 %v5176
    %v5327 = vunpack.c.l.s8.bf16 %v5177
    %v5328 = vunpack.c.l.s8.bf16 %v5178
    %v5329 = vunpack.c.h.s8.bf16 %v5173
    %v5330 = vunpack.c.h.s8.bf16 %v5174
    %v5331 = vunpack.c.h.s8.bf16 %v5175
    %v5332 = vunpack.c.h.s8.bf16 %v5176
    %v5333 = vunpack.c.h.s8.bf16 %v5177
    %v5334 = vunpack.c.h.s8.bf16 %v5178
    %v5335 = vunpack.c.l.s8.bf16 %v5179
    %v5336 = vunpack.c.l.s8.bf16 %v5180
    %v5337 = vunpack.c.l.s8.bf16 %v5181
    %v5338 = vunpack.c.l.s8.bf16 %v5182
    %v5339 = vunpack.c.l.s8.bf16 %v5183
    %v5340 = vunpack.c.l.s8.bf16 %v5184
    %v5341 = vunpack.c.h.s8.bf16 %v5179
    %v5342 = vunpack.c.h.s8.bf16 %v5180
    %v5343 = vunpack.c.h.s8.bf16 %v5181
    %v5344 = vunpack.c.h.s8.bf16 %v5182
    %v5345 = vunpack.c.h.s8.bf16 %v5183
    %v5346 = vunpack.c.h.s8.bf16 %v5184
    %v5347 = vunpack.c.l.s8.bf16 %v5185
    %v5348 = vunpack.c.l.s8.bf16 %v5186
    %v5349 = vunpack.c.l.s8.bf16 %v5187
    %v5350 = vunpack.c.l.s8.bf16 %v5188
    %v5351 = vunpack.c.l.s8.bf16 %v5189
    %v5352 = vunpack.c.l.s8.bf16 %v5190
    %v5353 = vunpack.c.h.s8.bf16 %v5185
    %v5354 = vunpack.c.h.s8.bf16 %v5186
    %v5355 = vunpack.c.h.s8.bf16 %v5187
    %v5356 = vunpack.c.h.s8.bf16 %v5188
    %v5357 = vunpack.c.h.s8.bf16 %v5189
    %v5358 = vunpack.c.h.s8.bf16 %v5190
    %v5359 = vunpack.c.l.s8.bf16 %v5191
    %v5360 = vunpack.c.l.s8.bf16 %v5192
    %v5361 = vunpack.c.l.s8.bf16 %v5193
    %v5362 = vunpack.c.l.s8.bf16 %v5194
    %v5363 = vunpack.c.l.s8.bf16 %v5195
    %v5364 = vunpack.c.l.s8.bf16 %v5196
    %v5365 = vunpack.c.h.s8.bf16 %v5191
    %v5366 = vunpack.c.h.s8.bf16 %v5192
    %v5367 = vunpack.c.h.s8.bf16 %v5193
    %v5368 = vunpack.c.h.s8.bf16 %v5194
    %v5369 = vunpack.c.h.s8.bf16 %v5195
    %v5370 = vunpack.c.h.s8.bf16 %v5196
    %v5371 = vunpack.c.l.s8.bf16 %v5197
    %v5372 = vunpack.c.l.s8.bf16 %v5198
    %v5373 = vunpack.c.l.s8.bf16 %v5199
    %v5374 = vunpack.c.l.s8.bf16 %v5200
    %v5375 = vunpack.c.l.s8.bf16 %v5201
    %v5376 = vunpack.c.l.s8.bf16 %v5202
    %v5377 = vunpack.c.h.s8.bf16 %v5197
    %v5378 = vunpack.c.h.s8.bf16 %v5198
    %v5379 = vunpack.c.h.s8.bf16 %v5199
    %v5380 = vunpack.c.h.s8.bf16 %v5200
    %v5381 = vunpack.c.h.s8.bf16 %v5201
    %v5382 = vunpack.c.h.s8.bf16 %v5202
    %v5383 = vunpack.c.l.s8.bf16 %v5203
    %v5384 = vunpack.c.l.s8.bf16 %v5204
    %v5385 = vunpack.c.l.s8.bf16 %v5205
    %v5386 = vunpack.c.l.s8.bf16 %v5206
    %v5387 = vunpack.c.l.s8.bf16 %v5207
    %v5388 = vunpack.c.l.s8.bf16 %v5208
    %v5389 = vunpack.c.h.s8.bf16 %v5203
    %v5390 = vunpack.c.h.s8.bf16 %v5204
    %v5391 = vunpack.c.h.s8.bf16 %v5205
    %v5392 = vunpack.c.h.s8.bf16 %v5206
    %v5393 = vunpack.c.h.s8.bf16 %v5207
    %v5394 = vunpack.c.h.s8.bf16 %v5208
    %v5395 = vunpack.c.l.s8.bf16 %v5209
    %v5396 = vunpack.c.l.s8.bf16 %v5210
    %v5397 = vunpack.c.l.s8.bf16 %v5211
    %v5398 = vunpack.c.l.s8.bf16 %v5212
    %v5399 = vunpack.c.l.s8.bf16 %v5213
    %v5400 = vunpack.c.l.s8.bf16 %v5214
    %v5401 = vunpack.c.h.s8.bf16 %v5209
    %v5402 = vunpack.c.h.s8.bf16 %v5210
    %v5403 = vunpack.c.h.s8.bf16 %v5211
    %v5404 = vunpack.c.h.s8.bf16 %v5212
    %v5405 = vunpack.c.h.s8.bf16 %v5213
    %v5406 = vunpack.c.h.s8.bf16 %v5214
    %5407 = vmatprep.subr.bf16.mxu0 %v5258
    %5408 = vmatpush1.bf16.msra.mxu0 %v5257
    %5409 = vmatprep.subr.bf16.mxu0 %v5252
    %5410 = vmatpush1.bf16.msra.mxu0 %v5251
    %5411 = vmatprep.subr.bf16.mxu0 %v5246
    %5412 = vmatpush1.bf16.msra.mxu0 %v5245
    %5413 = vmatprep.subr.bf16.mxu0 %v5240
    %5414 = vmatpush1.bf16.msra.mxu0 %v5239
    %5415 = vmatprep.subr.bf16.mxu0 %v5234
    %5416 = vmatpush1.bf16.msra.mxu0 %v5233
    %5417 = vmatprep.subr.bf16.mxu0 %v5228
    %5418 = vmatpush1.bf16.msra.mxu0 %v5227
    %5419 = vmatprep.subr.bf16.mxu0 %v5222
    %5420 = vmatpush1.bf16.msra.mxu0 %v5221
    %5421 = vmatprep.subr.bf16.mxu0 %v5216
    %5422 = vmatpush1.bf16.msra.mxu0 %v5215
    %5423 = vmatprep.subr.bf16.mxu0 %v5306
    %5424 = vmatpush2.bf16.msra.mxu0 %v5305
    %5425 = vmatprep.subr.bf16.mxu0 %v5300
    %5426 = vmatpush2.bf16.msra.mxu0 %v5299
    %5427 = vmatprep.subr.bf16.mxu0 %v5294
    %5428 = vmatpush2.bf16.msra.mxu0 %v5293
    %5429 = vmatprep.subr.bf16.mxu0 %v5288
    %5430 = vmatpush2.bf16.msra.mxu0 %v5287
    %5431 = vmatprep.subr.bf16.mxu0 %v5282
    %5432 = vmatpush2.bf16.msra.mxu0 %v5281
    %5433 = vmatprep.subr.bf16.mxu0 %v5276
    %5434 = vmatpush2.bf16.msra.mxu0 %v5275
    %5435 = vmatprep.subr.bf16.mxu0 %v5270
    %5436 = vmatpush2.bf16.msra.mxu0 %v5269
    %5437 = vmatprep.subr.bf16.mxu0 %v5264
    %5438 = vmatpush2.bf16.msra.mxu0 %v5263
    %5439 = vmatprep.mubr.bf16.mxu0 %v5116
    %5440 = vmatmul.mubr.bf16.gmra.mxu0 %v5115
    %v5441 = vpop.f32.mrf.mxu0
    %v5442 = vadd.f32 0.0, %v5441
    %v5443 = vpop.f32.mrf.mxu0
    %v5444 = vadd.f32 0.0, %v5443
    %v5445 = vpop.f32.mrf.mxu0
    %v5446 = vadd.f32 0.0, %v5445
    %v5447 = vpop.f32.mrf.mxu0
    %v5448 = vadd.f32 0.0, %v5447
    %5449 = vdwg.mxu0
    %5450 = vmatprep.subr.bf16.mxu0 %v5354
    %5451 = vmatpush1.bf16.msra.mxu0 %v5353
    %5452 = vmatprep.subr.bf16.mxu0 %v5348
    %5453 = vmatpush1.bf16.msra.mxu0 %v5347
    %5454 = vmatprep.subr.bf16.mxu0 %v5342
    %5455 = vmatpush1.bf16.msra.mxu0 %v5341
    %5456 = vmatprep.subr.bf16.mxu0 %v5336
    %5457 = vmatpush1.bf16.msra.mxu0 %v5335
    %5458 = vmatprep.subr.bf16.mxu0 %v5330
    %5459 = vmatpush1.bf16.msra.mxu0 %v5329
    %5460 = vmatprep.subr.bf16.mxu0 %v5324
    %5461 = vmatpush1.bf16.msra.mxu0 %v5323
    %5462 = vmatprep.subr.bf16.mxu0 %v5318
    %5463 = vmatpush1.bf16.msra.mxu0 %v5317
    %5464 = vmatprep.subr.bf16.mxu0 %v5312
    %5465 = vmatpush1.bf16.msra.mxu0 %v5311
    %5466 = vmatprep.subr.bf16.mxu0 %v5402
    %5467 = vmatpush2.bf16.msra.mxu0 %v5401
    %5468 = vmatprep.subr.bf16.mxu0 %v5396
    %5469 = vmatpush2.bf16.msra.mxu0 %v5395
    %5470 = vmatprep.subr.bf16.mxu0 %v5390
    %5471 = vmatpush2.bf16.msra.mxu0 %v5389
    %5472 = vmatprep.subr.bf16.mxu0 %v5384
    %5473 = vmatpush2.bf16.msra.mxu0 %v5383
    %5474 = vmatprep.subr.bf16.mxu0 %v5378
    %5475 = vmatpush2.bf16.msra.mxu0 %v5377
    %5476 = vmatprep.subr.bf16.mxu0 %v5372
    %5477 = vmatpush2.bf16.msra.mxu0 %v5371
    %5478 = vmatprep.subr.bf16.mxu0 %v5366
    %5479 = vmatpush2.bf16.msra.mxu0 %v5365
    %5480 = vmatprep.subr.bf16.mxu0 %v5360
    %5481 = vmatpush2.bf16.msra.mxu0 %v5359
    %5482 = vmatprep.mubr.bf16.mxu0 %v5118
    %5483 = vmatmul.mubr.bf16.gmra.mxu0 %v5117
    %v5484 = vpop.f32.mrf.mxu0
    %v5485 = vadd.f32 %v5442, %v5484
    %v5486 = vpop.f32.mrf.mxu0
    %v5487 = vadd.f32 %v5444, %v5486
    %v5488 = vpop.f32.mrf.mxu0
    %v5489 = vadd.f32 %v5446, %v5488
    %v5490 = vpop.f32.mrf.mxu0
    %v5491 = vadd.f32 %v5448, %v5490
    %5492 = vdwg.mxu0
    %5493 = vmatprep.subr.bf16.mxu0 %v5260
    %5494 = vmatpush1.bf16.msra.mxu0 %v5259
    %5495 = vmatprep.subr.bf16.mxu0 %v5254
    %5496 = vmatpush1.bf16.msra.mxu0 %v5253
    %5497 = vmatprep.subr.bf16.mxu0 %v5248
    %5498 = vmatpush1.bf16.msra.mxu0 %v5247
    %5499 = vmatprep.subr.bf16.mxu0 %v5242
    %5500 = vmatpush1.bf16.msra.mxu0 %v5241
    %5501 = vmatprep.subr.bf16.mxu0 %v5236
    %5502 = vmatpush1.bf16.msra.mxu0 %v5235
    %5503 = vmatprep.subr.bf16.mxu0 %v5230
    %5504 = vmatpush1.bf16.msra.mxu0 %v5229
    %5505 = vmatprep.subr.bf16.mxu0 %v5224
    %5506 = vmatpush1.bf16.msra.mxu0 %v5223
    %5507 = vmatprep.subr.bf16.mxu0 %v5218
    %5508 = vmatpush1.bf16.msra.mxu0 %v5217
    %5509 = vmatprep.subr.bf16.mxu0 %v5308
    %5510 = vmatpush2.bf16.msra.mxu0 %v5307
    %5511 = vmatprep.subr.bf16.mxu0 %v5302
    %5512 = vmatpush2.bf16.msra.mxu0 %v5301
    %5513 = vmatprep.subr.bf16.mxu0 %v5296
    %5514 = vmatpush2.bf16.msra.mxu0 %v5295
    %5515 = vmatprep.subr.bf16.mxu0 %v5290
    %5516 = vmatpush2.bf16.msra.mxu0 %v5289
    %5517 = vmatprep.subr.bf16.mxu0 %v5284
    %5518 = vmatpush2.bf16.msra.mxu0 %v5283
    %5519 = vmatprep.subr.bf16.mxu0 %v5278
    %5520 = vmatpush2.bf16.msra.mxu0 %v5277
    %5521 = vmatprep.subr.bf16.mxu0 %v5272
    %5522 = vmatpush2.bf16.msra.mxu0 %v5271
    %5523 = vmatprep.subr.bf16.mxu0 %v5266
    %5524 = vmatpush2.bf16.msra.mxu0 %v5265
    %5525 = vmatprep.mubr.bf16.mxu0 %v5116
    %5526 = vmatmul.mubr.bf16.gmra.mxu0 %v5115
    %v5527 = vpop.f32.mrf.mxu0
    %v5528 = vadd.f32 0.0, %v5527
    %v5529 = vpop.f32.mrf.mxu0
    %v5530 = vadd.f32 0.0, %v5529
    %v5531 = vpop.f32.mrf.mxu0
    %v5532 = vadd.f32 0.0, %v5531
    %v5533 = vpop.f32.mrf.mxu0
    %v5534 = vadd.f32 0.0, %v5533
    %5535 = vdwg.mxu0
    %5536 = vmatprep.subr.bf16.mxu0 %v5356
    %5537 = vmatpush1.bf16.msra.mxu0 %v5355
    %5538 = vmatprep.subr.bf16.mxu0 %v5350
    %5539 = vmatpush1.bf16.msra.mxu0 %v5349
    %5540 = vmatprep.subr.bf16.mxu0 %v5344
    %5541 = vmatpush1.bf16.msra.mxu0 %v5343
    %5542 = vmatprep.subr.bf16.mxu0 %v5338
    %5543 = vmatpush1.bf16.msra.mxu0 %v5337
    %5544 = vmatprep.subr.bf16.mxu0 %v5332
    %5545 = vmatpush1.bf16.msra.mxu0 %v5331
    %5546 = vmatprep.subr.bf16.mxu0 %v5326
    %5547 = vmatpush1.bf16.msra.mxu0 %v5325
    %5548 = vmatprep.subr.bf16.mxu0 %v5320
    %5549 = vmatpush1.bf16.msra.mxu0 %v5319
    %5550 = vmatprep.subr.bf16.mxu0 %v5314
    %5551 = vmatpush1.bf16.msra.mxu0 %v5313
    %5552 = vmatprep.subr.bf16.mxu0 %v5404
    %5553 = vmatpush2.bf16.msra.mxu0 %v5403
    %5554 = vmatprep.subr.bf16.mxu0 %v5398
    %5555 = vmatpush2.bf16.msra.mxu0 %v5397
    %5556 = vmatprep.subr.bf16.mxu0 %v5392
    %5557 = vmatpush2.bf16.msra.mxu0 %v5391
    %5558 = vmatprep.subr.bf16.mxu0 %v5386
    %5559 = vmatpush2.bf16.msra.mxu0 %v5385
    %5560 = vmatprep.subr.bf16.mxu0 %v5380
    %5561 = vmatpush2.bf16.msra.mxu0 %v5379
    %5562 = vmatprep.subr.bf16.mxu0 %v5374
    %5563 = vmatpush2.bf16.msra.mxu0 %v5373
    %5564 = vmatprep.subr.bf16.mxu0 %v5368
    %5565 = vmatpush2.bf16.msra.mxu0 %v5367
    %5566 = vmatprep.subr.bf16.mxu0 %v5362
    %5567 = vmatpush2.bf16.msra.mxu0 %v5361
    %5568 = vmatprep.mubr.bf16.mxu0 %v5118
    %5569 = vmatmul.mubr.bf16.gmra.mxu0 %v5117
    %v5570 = vpop.f32.mrf.mxu0
    %v5571 = vadd.f32 %v5528, %v5570
    %v5572 = vpop.f32.mrf.mxu0
    %v5573 = vadd.f32 %v5530, %v5572
    %v5574 = vpop.f32.mrf.mxu0
    %v5575 = vadd.f32 %v5532, %v5574
    %v5576 = vpop.f32.mrf.mxu0
    %v5577 = vadd.f32 %v5534, %v5576
    %5578 = vdwg.mxu0
    %5579 = vmatprep.subr.bf16.mxu0 %v5262
    %5580 = vmatpush1.bf16.msra.mxu0 %v5261
    %5581 = vmatprep.subr.bf16.mxu0 %v5256
    %5582 = vmatpush1.bf16.msra.mxu0 %v5255
    %5583 = vmatprep.subr.bf16.mxu0 %v5250
    %5584 = vmatpush1.bf16.msra.mxu0 %v5249
    %5585 = vmatprep.subr.bf16.mxu0 %v5244
    %5586 = vmatpush1.bf16.msra.mxu0 %v5243
    %5587 = vmatprep.subr.bf16.mxu0 %v5238
    %5588 = vmatpush1.bf16.msra.mxu0 %v5237
    %5589 = vmatprep.subr.bf16.mxu0 %v5232
    %5590 = vmatpush1.bf16.msra.mxu0 %v5231
    %5591 = vmatprep.subr.bf16.mxu0 %v5226
    %5592 = vmatpush1.bf16.msra.mxu0 %v5225
    %5593 = vmatprep.subr.bf16.mxu0 %v5220
    %5594 = vmatpush1.bf16.msra.mxu0 %v5219
    %5595 = vmatprep.subr.bf16.mxu0 %v5310
    %5596 = vmatpush2.bf16.msra.mxu0 %v5309
    %5597 = vmatprep.subr.bf16.mxu0 %v5304
    %5598 = vmatpush2.bf16.msra.mxu0 %v5303
    %5599 = vmatprep.subr.bf16.mxu0 %v5298
    %5600 = vmatpush2.bf16.msra.mxu0 %v5297
    %5601 = vmatprep.subr.bf16.mxu0 %v5292
    %5602 = vmatpush2.bf16.msra.mxu0 %v5291
    %5603 = vmatprep.subr.bf16.mxu0 %v5286
    %5604 = vmatpush2.bf16.msra.mxu0 %v5285
    %5605 = vmatprep.subr.bf16.mxu0 %v5280
    %5606 = vmatpush2.bf16.msra.mxu0 %v5279
    %5607 = vmatprep.subr.bf16.mxu0 %v5274
    %5608 = vmatpush2.bf16.msra.mxu0 %v5273
    %5609 = vmatprep.subr.bf16.mxu0 %v5268
    %5610 = vmatpush2.bf16.msra.mxu0 %v5267
    %5611 = vmatprep.mubr.bf16.mxu0 %v5116
    %5612 = vmatmul.mubr.bf16.gmra.mxu0 %v5115
    %v5613 = vpop.f32.mrf.mxu0
    %v5614 = vadd.f32 0.0, %v5613
    %v5615 = vpop.f32.mrf.mxu0
    %v5616 = vadd.f32 0.0, %v5615
    %v5617 = vpop.f32.mrf.mxu0
    %v5618 = vadd.f32 0.0, %v5617
    %v5619 = vpop.f32.mrf.mxu0
    %v5620 = vadd.f32 0.0, %v5619
    %5621 = vdwg.mxu0
    %5622 = vmatprep.subr.bf16.mxu0 %v5358
    %5623 = vmatpush1.bf16.msra.mxu0 %v5357
    %5624 = vmatprep.subr.bf16.mxu0 %v5352
    %5625 = vmatpush1.bf16.msra.mxu0 %v5351
    %5626 = vmatprep.subr.bf16.mxu0 %v5346
    %5627 = vmatpush1.bf16.msra.mxu0 %v5345
    %5628 = vmatprep.subr.bf16.mxu0 %v5340
    %5629 = vmatpush1.bf16.msra.mxu0 %v5339
    %5630 = vmatprep.subr.bf16.mxu0 %v5334
    %5631 = vmatpush1.bf16.msra.mxu0 %v5333
    %5632 = vmatprep.subr.bf16.mxu0 %v5328
    %5633 = vmatpush1.bf16.msra.mxu0 %v5327
    %5634 = vmatprep.subr.bf16.mxu0 %v5322
    %5635 = vmatpush1.bf16.msra.mxu0 %v5321
    %5636 = vmatprep.subr.bf16.mxu0 %v5316
    %5637 = vmatpush1.bf16.msra.mxu0 %v5315
    %5638 = vmatprep.subr.bf16.mxu0 %v5406
    %5639 = vmatpush2.bf16.msra.mxu0 %v5405
    %5640 = vmatprep.subr.bf16.mxu0 %v5400
    %5641 = vmatpush2.bf16.msra.mxu0 %v5399
    %5642 = vmatprep.subr.bf16.mxu0 %v5394
    %5643 = vmatpush2.bf16.msra.mxu0 %v5393
    %5644 = vmatprep.subr.bf16.mxu0 %v5388
    %5645 = vmatpush2.bf16.msra.mxu0 %v5387
    %5646 = vmatprep.subr.bf16.mxu0 %v5382
    %5647 = vmatpush2.bf16.msra.mxu0 %v5381
    %5648 = vmatprep.subr.bf16.mxu0 %v5376
    %5649 = vmatpush2.bf16.msra.mxu0 %v5375
    %5650 = vmatprep.subr.bf16.mxu0 %v5370
    %5651 = vmatpush2.bf16.msra.mxu0 %v5369
    %5652 = vmatprep.subr.bf16.mxu0 %v5364
    %5653 = vmatpush2.bf16.msra.mxu0 %v5363
    %5654 = vmatprep.mubr.bf16.mxu0 %v5118
    %5655 = vmatmul.mubr.bf16.gmra.mxu0 %v5117
    %v5656 = vpop.f32.mrf.mxu0
    %v5657 = vadd.f32 %v5614, %v5656
    %v5658 = vpop.f32.mrf.mxu0
    %v5659 = vadd.f32 %v5616, %v5658
    %v5660 = vpop.f32.mrf.mxu0
    %v5661 = vadd.f32 %v5618, %v5660
    %v5662 = vpop.f32.mrf.mxu0
    %v5663 = vadd.f32 %v5620, %v5662
    %5664 = vdwg.mxu0
    %s5665 = scalar_lea.vmem [#allocation5], 4
    %v5666 = vld [vmem:[%s5665] ss:$8 sm:$0xf]
    %v5667 = vld [vmem:[%s5665] ss:$8 sm:$0x30]
    %v5668 = vor.u32 %v5666, %v5667
    %s5669 = scalar_lea.vmem [#allocation7], 4
    %v5670 = vld [vmem:[%s5669] ss:$8 sm:$0xf]
    %v5671 = vld [vmem:[%s5669] ss:$8 sm:$0x30]
    %v5672 = vor.u32 %v5670, %v5671
    %v5674 = vlaneseq
    %v5675 = vshrl.u32 %v5674, 7
    %v5676 = vsub.s32 0, %v5675
    %v5677 = vrot.slane %v5668, %v5676
    %v5678 = vlaneseq
    %v5679 = vshrl.u32 %v5678, 7
    %v5680 = vsub.s32 1, %v5679
    %v5681 = vrot.slane %v5668, %v5680
    %v5682 = vlaneseq
    %v5683 = vshrl.u32 %v5682, 7
    %v5684 = vsub.s32 2, %v5683
    %v5685 = vrot.slane %v5668, %v5684
    %v5686 = vlaneseq
    %v5687 = vshrl.u32 %v5686, 7
    %v5688 = vsub.s32 3, %v5687
    %v5689 = vrot.slane %v5668, %v5688
    %v5690 = vlaneseq
    %v5691 = vshrl.u32 %v5690, 7
    %v5692 = vsub.s32 4, %v5691
    %v5693 = vrot.slane %v5668, %v5692
    %v5694 = vlaneseq
    %v5695 = vshrl.u32 %v5694, 7
    %v5696 = vsub.s32 5, %v5695
    %v5697 = vrot.slane %v5668, %v5696
    %v5704 = vmul.f32 %v5485, %v5677
    %v5705 = vmul.f32 %v5487, %v5681
    %v5706 = vmul.f32 %v5571, %v5685
    %v5707 = vmul.f32 %v5573, %v5689
    %v5708 = vmul.f32 %v5657, %v5693
    %v5709 = vmul.f32 %v5659, %v5697
    %v5710 = vmul.f32 %v5489, %v5677
    %v5711 = vmul.f32 %v5491, %v5681
    %v5712 = vmul.f32 %v5575, %v5685
    %v5713 = vmul.f32 %v5577, %v5689
    %v5714 = vmul.f32 %v5661, %v5693
    %v5715 = vmul.f32 %v5663, %v5697
    %v5717 = vlaneseq
    %v5718 = vshrl.u32 %v5717, 7
    %v5719 = vsub.s32 0, %v5718
    %v5720 = vrot.slane %v5672, %v5719
    %v5721 = vlaneseq
    %v5722 = vshrl.u32 %v5721, 7
    %v5723 = vsub.s32 1, %v5722
    %v5724 = vrot.slane %v5672, %v5723
    %v5725 = vlaneseq
    %v5726 = vshrl.u32 %v5725, 7
    %v5727 = vsub.s32 2, %v5726
    %v5728 = vrot.slane %v5672, %v5727
    %v5729 = vlaneseq
    %v5730 = vshrl.u32 %v5729, 7
    %v5731 = vsub.s32 3, %v5730
    %v5732 = vrot.slane %v5672, %v5731
    %v5733 = vlaneseq
    %v5734 = vshrl.u32 %v5733, 7
    %v5735 = vsub.s32 4, %v5734
    %v5736 = vrot.slane %v5672, %v5735
    %v5737 = vlaneseq
    %v5738 = vshrl.u32 %v5737, 7
    %v5739 = vsub.s32 5, %v5738
    %v5740 = vrot.slane %v5672, %v5739
    %v5747 = vadd.f32 %v5704, %v5720
    %v5748 = vadd.f32 %v5705, %v5724
    %v5749 = vadd.f32 %v5706, %v5728
    %v5750 = vadd.f32 %v5707, %v5732
    %v5751 = vadd.f32 %v5708, %v5736
    %v5752 = vadd.f32 %v5709, %v5740
    %v5753 = vadd.f32 %v5710, %v5720
    %v5754 = vadd.f32 %v5711, %v5724
    %v5755 = vadd.f32 %v5712, %v5728
    %v5756 = vadd.f32 %v5713, %v5732
    %v5757 = vadd.f32 %v5714, %v5736
    %v5758 = vadd.f32 %v5715, %v5740
    %v5759 = vtanh.pop %v5747
    %v5760 = vtanh.pop %v5748
    %v5761 = vtanh.pop %v5749
    %v5762 = vtanh.pop %v5750
    %v5763 = vtanh.pop %v5751
    %v5764 = vtanh.pop %v5752
    %v5765 = vtanh.pop %v5753
    %v5766 = vtanh.pop %v5754
    %v5767 = vtanh.pop %v5755
    %v5768 = vtanh.pop %v5756
    %v5769 = vtanh.pop %v5757
    %v5770 = vtanh.pop %v5758
    %v5771 = vpack.c.bf16 %v5765, %v5759
    %v5772 = vpack.c.bf16 %v5766, %v5760
    %v5773 = vpack.c.bf16 %v5767, %v5761
    %v5774 = vpack.c.bf16 %v5768, %v5762
    %v5775 = vpack.c.bf16 %v5769, %v5763
    %v5776 = vpack.c.bf16 %v5770, %v5764
    %v5777 = vld [vmem:[#allocation16] sm:$0xff]
    %v5778 = vld [vmem:[#allocation16 + $0x8] sm:$0xff]
    %v5779 = vld [vmem:[#allocation16 + $0x10] sm:$0xff]
    %v5780 = vld [vmem:[#allocation16 + $0x18] sm:$0xff]
    %v5781 = vld [vmem:[#allocation16 + $0x20] sm:$0xff]
    %v5782 = vld [vmem:[#allocation16 + $0x28] sm:$0xff]
    %v5783 = vld [vmem:[#allocation16 + $0x30] sm:$0xff]
    %v5784 = vld [vmem:[#allocation16 + $0x38] sm:$0xff]
    %v5785 = vld [vmem:[#allocation16 + $0x40] sm:$0xff]
    %v5786 = vld [vmem:[#allocation16 + $0x48] sm:$0xff]
    %v5787 = vld [vmem:[#allocation16 + $0x50] sm:$0xff]
    %v5788 = vld [vmem:[#allocation16 + $0x58] sm:$0xff]
    %v5789 = vld [vmem:[#allocation16 + $0x60] sm:$0xff]
    %v5790 = vld [vmem:[#allocation16 + $0x68] sm:$0xff]
    %v5791 = vld [vmem:[#allocation16 + $0x70] sm:$0xff]
    %v5792 = vld [vmem:[#allocation16 + $0x78] sm:$0xff]
    %v5793 = vld [vmem:[#allocation16 + $0x80] sm:$0xff]
    %v5794 = vld [vmem:[#allocation16 + $0x88] sm:$0xff]
    %v5795 = vld [vmem:[#allocation16 + $0x90] sm:$0xff]
    %v5796 = vld [vmem:[#allocation16 + $0x98] sm:$0xff]
    %v5797 = vld [vmem:[#allocation16 + $0xa0] sm:$0xff]
    %v5798 = vld [vmem:[#allocation16 + $0xa8] sm:$0xff]
    %v5799 = vld [vmem:[#allocation16 + $0xb0] sm:$0xff]
    %v5800 = vld [vmem:[#allocation16 + $0xb8] sm:$0xff]
    %v5801 = vld [vmem:[#allocation16 + $0xc0] sm:$0xff]
    %v5802 = vld [vmem:[#allocation16 + $0xc8] sm:$0xff]
    %v5803 = vld [vmem:[#allocation16 + $0xd0] sm:$0xff]
    %v5804 = vld [vmem:[#allocation16 + $0xd8] sm:$0xff]
    %v5805 = vld [vmem:[#allocation16 + $0xe0] sm:$0xff]
    %v5806 = vld [vmem:[#allocation16 + $0xe8] sm:$0xff]
    %v5807 = vld [vmem:[#allocation16 + $0xf0] sm:$0xff]
    %v5808 = vld [vmem:[#allocation16 + $0xf8] sm:$0xff]
    %v5809 = vld [vmem:[#allocation16 + $0x100] sm:$0xff]
    %v5810 = vld [vmem:[#allocation16 + $0x108] sm:$0xff]
    %v5811 = vld [vmem:[#allocation16 + $0x110] sm:$0xff]
    %v5812 = vld [vmem:[#allocation16 + $0x118] sm:$0xff]
    %v5813 = vld [vmem:[#allocation16 + $0x120] sm:$0xff]
    %v5814 = vld [vmem:[#allocation16 + $0x128] sm:$0xff]
    %v5815 = vld [vmem:[#allocation16 + $0x130] sm:$0xff]
    %v5816 = vld [vmem:[#allocation16 + $0x138] sm:$0xff]
    %v5817 = vld [vmem:[#allocation16 + $0x140] sm:$0xff]
    %v5818 = vld [vmem:[#allocation16 + $0x148] sm:$0xff]
    %v5819 = vld [vmem:[#allocation16 + $0x150] sm:$0xff]
    %v5820 = vld [vmem:[#allocation16 + $0x158] sm:$0xff]
    %v5821 = vld [vmem:[#allocation16 + $0x160] sm:$0xff]
    %v5822 = vld [vmem:[#allocation16 + $0x168] sm:$0xff]
    %v5823 = vld [vmem:[#allocation16 + $0x170] sm:$0xff]
    %v5824 = vld [vmem:[#allocation16 + $0x178] sm:$0xff]
    %v5825 = vld [vmem:[#allocation16 + $0x180] sm:$0xff]
    %v5826 = vld [vmem:[#allocation16 + $0x188] sm:$0xff]
    %v5827 = vld [vmem:[#allocation16 + $0x190] sm:$0xff]
    %v5828 = vld [vmem:[#allocation16 + $0x198] sm:$0xff]
    %v5829 = vld [vmem:[#allocation16 + $0x1a0] sm:$0xff]
    %v5830 = vld [vmem:[#allocation16 + $0x1a8] sm:$0xff]
    %v5831 = vld [vmem:[#allocation16 + $0x1b0] sm:$0xff]
    %v5832 = vld [vmem:[#allocation16 + $0x1b8] sm:$0xff]
    %v5833 = vld [vmem:[#allocation16 + $0x1c0] sm:$0xff]
    %v5834 = vld [vmem:[#allocation16 + $0x1c8] sm:$0xff]
    %v5835 = vld [vmem:[#allocation16 + $0x1d0] sm:$0xff]
    %v5836 = vld [vmem:[#allocation16 + $0x1d8] sm:$0xff]
    %v5837 = vld [vmem:[#allocation16 + $0x1e0] sm:$0xff]
    %v5838 = vld [vmem:[#allocation16 + $0x1e8] sm:$0xff]
    %v5839 = vld [vmem:[#allocation16 + $0x1f0] sm:$0xff]
    %v5840 = vld [vmem:[#allocation16 + $0x1f8] sm:$0xff]
    %v5841 = vld [vmem:[#allocation16 + $0x200] sm:$0xff]
    %v5842 = vld [vmem:[#allocation16 + $0x208] sm:$0xff]
    %v5843 = vld [vmem:[#allocation16 + $0x210] sm:$0xff]
    %v5844 = vld [vmem:[#allocation16 + $0x218] sm:$0xff]
    %v5845 = vld [vmem:[#allocation16 + $0x220] sm:$0xff]
    %v5846 = vld [vmem:[#allocation16 + $0x228] sm:$0xff]
    %v5847 = vld [vmem:[#allocation16 + $0x230] sm:$0xff]
    %v5848 = vld [vmem:[#allocation16 + $0x238] sm:$0xff]
    %v5849 = vld [vmem:[#allocation16 + $0x240] sm:$0xff]
    %v5850 = vld [vmem:[#allocation16 + $0x248] sm:$0xff]
    %v5851 = vld [vmem:[#allocation16 + $0x250] sm:$0xff]
    %v5852 = vld [vmem:[#allocation16 + $0x258] sm:$0xff]
    %v5853 = vld [vmem:[#allocation16 + $0x260] sm:$0xff]
    %v5854 = vld [vmem:[#allocation16 + $0x268] sm:$0xff]
    %v5855 = vld [vmem:[#allocation16 + $0x270] sm:$0xff]
    %v5856 = vld [vmem:[#allocation16 + $0x278] sm:$0xff]
    %v5857 = vld [vmem:[#allocation16 + $0x280] sm:$0xff]
    %v5858 = vld [vmem:[#allocation16 + $0x288] sm:$0xff]
    %v5859 = vld [vmem:[#allocation16 + $0x290] sm:$0xff]
    %v5860 = vld [vmem:[#allocation16 + $0x298] sm:$0xff]
    %v5861 = vld [vmem:[#allocation16 + $0x2a0] sm:$0xff]
    %v5862 = vld [vmem:[#allocation16 + $0x2a8] sm:$0xff]
    %v5863 = vld [vmem:[#allocation16 + $0x2b0] sm:$0xff]
    %v5864 = vld [vmem:[#allocation16 + $0x2b8] sm:$0xff]
    %v5865 = vld [vmem:[#allocation16 + $0x2c0] sm:$0xff]
    %v5866 = vld [vmem:[#allocation16 + $0x2c8] sm:$0xff]
    %v5867 = vld [vmem:[#allocation16 + $0x2d0] sm:$0xff]
    %v5868 = vld [vmem:[#allocation16 + $0x2d8] sm:$0xff]
    %v5869 = vld [vmem:[#allocation16 + $0x2e0] sm:$0xff]
    %v5870 = vld [vmem:[#allocation16 + $0x2e8] sm:$0xff]
    %v5871 = vld [vmem:[#allocation16 + $0x2f0] sm:$0xff]
    %v5872 = vld [vmem:[#allocation16 + $0x2f8] sm:$0xff]
    %v5873 = vld [vmem:[#allocation16 + $0x300] sm:$0xff]
    %v5874 = vld [vmem:[#allocation16 + $0x308] sm:$0xff]
    %v5875 = vld [vmem:[#allocation16 + $0x310] sm:$0xff]
    %v5876 = vld [vmem:[#allocation16 + $0x318] sm:$0xff]
    %v5877 = vld [vmem:[#allocation16 + $0x320] sm:$0xff]
    %v5878 = vld [vmem:[#allocation16 + $0x328] sm:$0xff]
    %v5879 = vld [vmem:[#allocation16 + $0x330] sm:$0xff]
    %v5880 = vld [vmem:[#allocation16 + $0x338] sm:$0xff]
    %v5881 = vld [vmem:[#allocation16 + $0x340] sm:$0xff]
    %v5882 = vld [vmem:[#allocation16 + $0x348] sm:$0xff]
    %v5883 = vld [vmem:[#allocation16 + $0x350] sm:$0xff]
    %v5884 = vld [vmem:[#allocation16 + $0x358] sm:$0xff]
    %v5885 = vld [vmem:[#allocation16 + $0x360] sm:$0xff]
    %v5886 = vld [vmem:[#allocation16 + $0x368] sm:$0xff]
    %v5887 = vld [vmem:[#allocation16 + $0x370] sm:$0xff]
    %v5888 = vld [vmem:[#allocation16 + $0x378] sm:$0xff]
    %v5889 = vld [vmem:[#allocation16 + $0x380] sm:$0xff]
    %v5890 = vld [vmem:[#allocation16 + $0x388] sm:$0xff]
    %v5891 = vld [vmem:[#allocation16 + $0x390] sm:$0xff]
    %v5892 = vld [vmem:[#allocation16 + $0x398] sm:$0xff]
    %v5893 = vld [vmem:[#allocation16 + $0x3a0] sm:$0xff]
    %v5894 = vld [vmem:[#allocation16 + $0x3a8] sm:$0xff]
    %v5895 = vld [vmem:[#allocation16 + $0x3b0] sm:$0xff]
    %v5896 = vld [vmem:[#allocation16 + $0x3b8] sm:$0xff]
    %v5897 = vld [vmem:[#allocation16 + $0x3c0] sm:$0xff]
    %v5898 = vld [vmem:[#allocation16 + $0x3c8] sm:$0xff]
    %v5899 = vld [vmem:[#allocation16 + $0x3d0] sm:$0xff]
    %v5900 = vld [vmem:[#allocation16 + $0x3d8] sm:$0xff]
    %v5901 = vld [vmem:[#allocation16 + $0x3e0] sm:$0xff]
    %v5902 = vld [vmem:[#allocation16 + $0x3e8] sm:$0xff]
    %v5903 = vld [vmem:[#allocation16 + $0x3f0] sm:$0xff]
    %v5904 = vld [vmem:[#allocation16 + $0x3f8] sm:$0xff]
    %v5905 = vld [vmem:[#allocation16 + $0x400] sm:$0xff]
    %v5906 = vld [vmem:[#allocation16 + $0x408] sm:$0xff]
    %v5907 = vld [vmem:[#allocation16 + $0x410] sm:$0xff]
    %v5908 = vld [vmem:[#allocation16 + $0x418] sm:$0xff]
    %v5909 = vld [vmem:[#allocation16 + $0x420] sm:$0xff]
    %v5910 = vld [vmem:[#allocation16 + $0x428] sm:$0xff]
    %v5911 = vld [vmem:[#allocation16 + $0x430] sm:$0xff]
    %v5912 = vld [vmem:[#allocation16 + $0x438] sm:$0xff]
    %v5913 = vld [vmem:[#allocation16 + $0x440] sm:$0xff]
    %v5914 = vld [vmem:[#allocation16 + $0x448] sm:$0xff]
    %v5915 = vld [vmem:[#allocation16 + $0x450] sm:$0xff]
    %v5916 = vld [vmem:[#allocation16 + $0x458] sm:$0xff]
    %v5917 = vld [vmem:[#allocation16 + $0x460] sm:$0xff]
    %v5918 = vld [vmem:[#allocation16 + $0x468] sm:$0xff]
    %v5919 = vld [vmem:[#allocation16 + $0x470] sm:$0xff]
    %v5920 = vld [vmem:[#allocation16 + $0x478] sm:$0xff]
    %v5921 = vld [vmem:[#allocation16 + $0x480] sm:$0xff]
    %v5922 = vld [vmem:[#allocation16 + $0x488] sm:$0xff]
    %v5923 = vld [vmem:[#allocation16 + $0x490] sm:$0xff]
    %v5924 = vld [vmem:[#allocation16 + $0x498] sm:$0xff]
    %v5925 = vld [vmem:[#allocation16 + $0x4a0] sm:$0xff]
    %v5926 = vld [vmem:[#allocation16 + $0x4a8] sm:$0xff]
    %v5927 = vld [vmem:[#allocation16 + $0x4b0] sm:$0xff]
    %v5928 = vld [vmem:[#allocation16 + $0x4b8] sm:$0xff]
    %v5929 = vld [vmem:[#allocation16 + $0x4c0] sm:$0xff]
    %v5930 = vld [vmem:[#allocation16 + $0x4c8] sm:$0xff]
    %v5931 = vld [vmem:[#allocation16 + $0x4d0] sm:$0xff]
    %v5932 = vld [vmem:[#allocation16 + $0x4d8] sm:$0xff]
    %v5933 = vld [vmem:[#allocation16 + $0x4e0] sm:$0xff]
    %v5934 = vld [vmem:[#allocation16 + $0x4e8] sm:$0xff]
    %v5935 = vld [vmem:[#allocation16 + $0x4f0] sm:$0xff]
    %v5936 = vld [vmem:[#allocation16 + $0x4f8] sm:$0xff]
    %v5937 = vld [vmem:[#allocation16 + $0x500] sm:$0xff]
    %v5938 = vld [vmem:[#allocation16 + $0x508] sm:$0xff]
    %v5939 = vld [vmem:[#allocation16 + $0x510] sm:$0xff]
    %v5940 = vld [vmem:[#allocation16 + $0x518] sm:$0xff]
    %v5941 = vld [vmem:[#allocation16 + $0x520] sm:$0xff]
    %v5942 = vld [vmem:[#allocation16 + $0x528] sm:$0xff]
    %v5943 = vld [vmem:[#allocation16 + $0x530] sm:$0xff]
    %v5944 = vld [vmem:[#allocation16 + $0x538] sm:$0xff]
    %v5945 = vld [vmem:[#allocation16 + $0x540] sm:$0xff]
    %v5946 = vld [vmem:[#allocation16 + $0x548] sm:$0xff]
    %v5947 = vld [vmem:[#allocation16 + $0x550] sm:$0xff]
    %v5948 = vld [vmem:[#allocation16 + $0x558] sm:$0xff]
    %v5949 = vld [vmem:[#allocation16 + $0x560] sm:$0xff]
    %v5950 = vld [vmem:[#allocation16 + $0x568] sm:$0xff]
    %v5951 = vld [vmem:[#allocation16 + $0x570] sm:$0xff]
    %v5952 = vld [vmem:[#allocation16 + $0x578] sm:$0xff]
    %v5953 = vld [vmem:[#allocation16 + $0x580] sm:$0xff]
    %v5954 = vld [vmem:[#allocation16 + $0x588] sm:$0xff]
    %v5955 = vld [vmem:[#allocation16 + $0x590] sm:$0xff]
    %v5956 = vld [vmem:[#allocation16 + $0x598] sm:$0xff]
    %v5957 = vld [vmem:[#allocation16 + $0x5a0] sm:$0xff]
    %v5958 = vld [vmem:[#allocation16 + $0x5a8] sm:$0xff]
    %v5959 = vld [vmem:[#allocation16 + $0x5b0] sm:$0xff]
    %v5960 = vld [vmem:[#allocation16 + $0x5b8] sm:$0xff]
    %v5961 = vld [vmem:[#allocation16 + $0x5c0] sm:$0xff]
    %v5962 = vld [vmem:[#allocation16 + $0x5c8] sm:$0xff]
    %v5963 = vld [vmem:[#allocation16 + $0x5d0] sm:$0xff]
    %v5964 = vld [vmem:[#allocation16 + $0x5d8] sm:$0xff]
    %v5965 = vld [vmem:[#allocation16 + $0x5e0] sm:$0xff]
    %v5966 = vld [vmem:[#allocation16 + $0x5e8] sm:$0xff]
    %v5967 = vld [vmem:[#allocation16 + $0x5f0] sm:$0xff]
    %v5968 = vld [vmem:[#allocation16 + $0x5f8] sm:$0xff]
    %v5969 = vunpack.c.l.s8.bf16 %v5777
    %v5970 = vunpack.c.l.s8.bf16 %v5778
    %v5971 = vunpack.c.l.s8.bf16 %v5779
    %v5972 = vunpack.c.l.s8.bf16 %v5780
    %v5973 = vunpack.c.l.s8.bf16 %v5781
    %v5974 = vunpack.c.l.s8.bf16 %v5782
    %v5975 = vunpack.c.l.s8.bf16 %v5783
    %v5976 = vunpack.c.l.s8.bf16 %v5784
    %v5977 = vunpack.c.h.s8.bf16 %v5777
    %v5978 = vunpack.c.h.s8.bf16 %v5778
    %v5979 = vunpack.c.h.s8.bf16 %v5779
    %v5980 = vunpack.c.h.s8.bf16 %v5780
    %v5981 = vunpack.c.h.s8.bf16 %v5781
    %v5982 = vunpack.c.h.s8.bf16 %v5782
    %v5983 = vunpack.c.h.s8.bf16 %v5783
    %v5984 = vunpack.c.h.s8.bf16 %v5784
    %v5985 = vunpack.c.l.s8.bf16 %v5785
    %v5986 = vunpack.c.l.s8.bf16 %v5786
    %v5987 = vunpack.c.l.s8.bf16 %v5787
    %v5988 = vunpack.c.l.s8.bf16 %v5788
    %v5989 = vunpack.c.l.s8.bf16 %v5789
    %v5990 = vunpack.c.l.s8.bf16 %v5790
    %v5991 = vunpack.c.l.s8.bf16 %v5791
    %v5992 = vunpack.c.l.s8.bf16 %v5792
    %v5993 = vunpack.c.h.s8.bf16 %v5785
    %v5994 = vunpack.c.h.s8.bf16 %v5786
    %v5995 = vunpack.c.h.s8.bf16 %v5787
    %v5996 = vunpack.c.h.s8.bf16 %v5788
    %v5997 = vunpack.c.h.s8.bf16 %v5789
    %v5998 = vunpack.c.h.s8.bf16 %v5790
    %v5999 = vunpack.c.h.s8.bf16 %v5791
    %v6000 = vunpack.c.h.s8.bf16 %v5792
    %v6001 = vunpack.c.l.s8.bf16 %v5793
    %v6002 = vunpack.c.l.s8.bf16 %v5794
    %v6003 = vunpack.c.l.s8.bf16 %v5795
    %v6004 = vunpack.c.l.s8.bf16 %v5796
    %v6005 = vunpack.c.l.s8.bf16 %v5797
    %v6006 = vunpack.c.l.s8.bf16 %v5798
    %v6007 = vunpack.c.l.s8.bf16 %v5799
    %v6008 = vunpack.c.l.s8.bf16 %v5800
    %v6009 = vunpack.c.h.s8.bf16 %v5793
    %v6010 = vunpack.c.h.s8.bf16 %v5794
    %v6011 = vunpack.c.h.s8.bf16 %v5795
    %v6012 = vunpack.c.h.s8.bf16 %v5796
    %v6013 = vunpack.c.h.s8.bf16 %v5797
    %v6014 = vunpack.c.h.s8.bf16 %v5798
    %v6015 = vunpack.c.h.s8.bf16 %v5799
    %v6016 = vunpack.c.h.s8.bf16 %v5800
    %v6017 = vunpack.c.l.s8.bf16 %v5801
    %v6018 = vunpack.c.l.s8.bf16 %v5802
    %v6019 = vunpack.c.l.s8.bf16 %v5803
    %v6020 = vunpack.c.l.s8.bf16 %v5804
    %v6021 = vunpack.c.l.s8.bf16 %v5805
    %v6022 = vunpack.c.l.s8.bf16 %v5806
    %v6023 = vunpack.c.l.s8.bf16 %v5807
    %v6024 = vunpack.c.l.s8.bf16 %v5808
    %v6025 = vunpack.c.h.s8.bf16 %v5801
    %v6026 = vunpack.c.h.s8.bf16 %v5802
    %v6027 = vunpack.c.h.s8.bf16 %v5803
    %v6028 = vunpack.c.h.s8.bf16 %v5804
    %v6029 = vunpack.c.h.s8.bf16 %v5805
    %v6030 = vunpack.c.h.s8.bf16 %v5806
    %v6031 = vunpack.c.h.s8.bf16 %v5807
    %v6032 = vunpack.c.h.s8.bf16 %v5808
    %v6033 = vunpack.c.l.s8.bf16 %v5809
    %v6034 = vunpack.c.l.s8.bf16 %v5810
    %v6035 = vunpack.c.l.s8.bf16 %v5811
    %v6036 = vunpack.c.l.s8.bf16 %v5812
    %v6037 = vunpack.c.l.s8.bf16 %v5813
    %v6038 = vunpack.c.l.s8.bf16 %v5814
    %v6039 = vunpack.c.l.s8.bf16 %v5815
    %v6040 = vunpack.c.l.s8.bf16 %v5816
    %v6041 = vunpack.c.h.s8.bf16 %v5809
    %v6042 = vunpack.c.h.s8.bf16 %v5810
    %v6043 = vunpack.c.h.s8.bf16 %v5811
    %v6044 = vunpack.c.h.s8.bf16 %v5812
    %v6045 = vunpack.c.h.s8.bf16 %v5813
    %v6046 = vunpack.c.h.s8.bf16 %v5814
    %v6047 = vunpack.c.h.s8.bf16 %v5815
    %v6048 = vunpack.c.h.s8.bf16 %v5816
    %v6049 = vunpack.c.l.s8.bf16 %v5817
    %v6050 = vunpack.c.l.s8.bf16 %v5818
    %v6051 = vunpack.c.l.s8.bf16 %v5819
    %v6052 = vunpack.c.l.s8.bf16 %v5820
    %v6053 = vunpack.c.l.s8.bf16 %v5821
    %v6054 = vunpack.c.l.s8.bf16 %v5822
    %v6055 = vunpack.c.l.s8.bf16 %v5823
    %v6056 = vunpack.c.l.s8.bf16 %v5824
    %v6057 = vunpack.c.h.s8.bf16 %v5817
    %v6058 = vunpack.c.h.s8.bf16 %v5818
    %v6059 = vunpack.c.h.s8.bf16 %v5819
    %v6060 = vunpack.c.h.s8.bf16 %v5820
    %v6061 = vunpack.c.h.s8.bf16 %v5821
    %v6062 = vunpack.c.h.s8.bf16 %v5822
    %v6063 = vunpack.c.h.s8.bf16 %v5823
    %v6064 = vunpack.c.h.s8.bf16 %v5824
    %v6065 = vunpack.c.l.s8.bf16 %v5825
    %v6066 = vunpack.c.l.s8.bf16 %v5826
    %v6067 = vunpack.c.l.s8.bf16 %v5827
    %v6068 = vunpack.c.l.s8.bf16 %v5828
    %v6069 = vunpack.c.l.s8.bf16 %v5829
    %v6070 = vunpack.c.l.s8.bf16 %v5830
    %v6071 = vunpack.c.l.s8.bf16 %v5831
    %v6072 = vunpack.c.l.s8.bf16 %v5832
    %v6073 = vunpack.c.h.s8.bf16 %v5825
    %v6074 = vunpack.c.h.s8.bf16 %v5826
    %v6075 = vunpack.c.h.s8.bf16 %v5827
    %v6076 = vunpack.c.h.s8.bf16 %v5828
    %v6077 = vunpack.c.h.s8.bf16 %v5829
    %v6078 = vunpack.c.h.s8.bf16 %v5830
    %v6079 = vunpack.c.h.s8.bf16 %v5831
    %v6080 = vunpack.c.h.s8.bf16 %v5832
    %v6081 = vunpack.c.l.s8.bf16 %v5833
    %v6082 = vunpack.c.l.s8.bf16 %v5834
    %v6083 = vunpack.c.l.s8.bf16 %v5835
    %v6084 = vunpack.c.l.s8.bf16 %v5836
    %v6085 = vunpack.c.l.s8.bf16 %v5837
    %v6086 = vunpack.c.l.s8.bf16 %v5838
    %v6087 = vunpack.c.l.s8.bf16 %v5839
    %v6088 = vunpack.c.l.s8.bf16 %v5840
    %v6089 = vunpack.c.h.s8.bf16 %v5833
    %v6090 = vunpack.c.h.s8.bf16 %v5834
    %v6091 = vunpack.c.h.s8.bf16 %v5835
    %v6092 = vunpack.c.h.s8.bf16 %v5836
    %v6093 = vunpack.c.h.s8.bf16 %v5837
    %v6094 = vunpack.c.h.s8.bf16 %v5838
    %v6095 = vunpack.c.h.s8.bf16 %v5839
    %v6096 = vunpack.c.h.s8.bf16 %v5840
    %v6097 = vunpack.c.l.s8.bf16 %v5841
    %v6098 = vunpack.c.l.s8.bf16 %v5842
    %v6099 = vunpack.c.l.s8.bf16 %v5843
    %v6100 = vunpack.c.l.s8.bf16 %v5844
    %v6101 = vunpack.c.l.s8.bf16 %v5845
    %v6102 = vunpack.c.l.s8.bf16 %v5846
    %v6103 = vunpack.c.l.s8.bf16 %v5847
    %v6104 = vunpack.c.l.s8.bf16 %v5848
    %v6105 = vunpack.c.h.s8.bf16 %v5841
    %v6106 = vunpack.c.h.s8.bf16 %v5842
    %v6107 = vunpack.c.h.s8.bf16 %v5843
    %v6108 = vunpack.c.h.s8.bf16 %v5844
    %v6109 = vunpack.c.h.s8.bf16 %v5845
    %v6110 = vunpack.c.h.s8.bf16 %v5846
    %v6111 = vunpack.c.h.s8.bf16 %v5847
    %v6112 = vunpack.c.h.s8.bf16 %v5848
    %v6113 = vunpack.c.l.s8.bf16 %v5849
    %v6114 = vunpack.c.l.s8.bf16 %v5850
    %v6115 = vunpack.c.l.s8.bf16 %v5851
    %v6116 = vunpack.c.l.s8.bf16 %v5852
    %v6117 = vunpack.c.l.s8.bf16 %v5853
    %v6118 = vunpack.c.l.s8.bf16 %v5854
    %v6119 = vunpack.c.l.s8.bf16 %v5855
    %v6120 = vunpack.c.l.s8.bf16 %v5856
    %v6121 = vunpack.c.h.s8.bf16 %v5849
    %v6122 = vunpack.c.h.s8.bf16 %v5850
    %v6123 = vunpack.c.h.s8.bf16 %v5851
    %v6124 = vunpack.c.h.s8.bf16 %v5852
    %v6125 = vunpack.c.h.s8.bf16 %v5853
    %v6126 = vunpack.c.h.s8.bf16 %v5854
    %v6127 = vunpack.c.h.s8.bf16 %v5855
    %v6128 = vunpack.c.h.s8.bf16 %v5856
    %v6129 = vunpack.c.l.s8.bf16 %v5857
    %v6130 = vunpack.c.l.s8.bf16 %v5858
    %v6131 = vunpack.c.l.s8.bf16 %v5859
    %v6132 = vunpack.c.l.s8.bf16 %v5860
    %v6133 = vunpack.c.l.s8.bf16 %v5861
    %v6134 = vunpack.c.l.s8.bf16 %v5862
    %v6135 = vunpack.c.l.s8.bf16 %v5863
    %v6136 = vunpack.c.l.s8.bf16 %v5864
    %v6137 = vunpack.c.h.s8.bf16 %v5857
    %v6138 = vunpack.c.h.s8.bf16 %v5858
    %v6139 = vunpack.c.h.s8.bf16 %v5859
    %v6140 = vunpack.c.h.s8.bf16 %v5860
    %v6141 = vunpack.c.h.s8.bf16 %v5861
    %v6142 = vunpack.c.h.s8.bf16 %v5862
    %v6143 = vunpack.c.h.s8.bf16 %v5863
    %v6144 = vunpack.c.h.s8.bf16 %v5864
    %v6145 = vunpack.c.l.s8.bf16 %v5865
    %v6146 = vunpack.c.l.s8.bf16 %v5866
    %v6147 = vunpack.c.l.s8.bf16 %v5867
    %v6148 = vunpack.c.l.s8.bf16 %v5868
    %v6149 = vunpack.c.l.s8.bf16 %v5869
    %v6150 = vunpack.c.l.s8.bf16 %v5870
    %v6151 = vunpack.c.l.s8.bf16 %v5871
    %v6152 = vunpack.c.l.s8.bf16 %v5872
    %v6153 = vunpack.c.h.s8.bf16 %v5865
    %v6154 = vunpack.c.h.s8.bf16 %v5866
    %v6155 = vunpack.c.h.s8.bf16 %v5867
    %v6156 = vunpack.c.h.s8.bf16 %v5868
    %v6157 = vunpack.c.h.s8.bf16 %v5869
    %v6158 = vunpack.c.h.s8.bf16 %v5870
    %v6159 = vunpack.c.h.s8.bf16 %v5871
    %v6160 = vunpack.c.h.s8.bf16 %v5872
    %v6161 = vunpack.c.l.s8.bf16 %v5873
    %v6162 = vunpack.c.l.s8.bf16 %v5874
    %v6163 = vunpack.c.l.s8.bf16 %v5875
    %v6164 = vunpack.c.l.s8.bf16 %v5876
    %v6165 = vunpack.c.l.s8.bf16 %v5877
    %v6166 = vunpack.c.l.s8.bf16 %v5878
    %v6167 = vunpack.c.l.s8.bf16 %v5879
    %v6168 = vunpack.c.l.s8.bf16 %v5880
    %v6169 = vunpack.c.h.s8.bf16 %v5873
    %v6170 = vunpack.c.h.s8.bf16 %v5874
    %v6171 = vunpack.c.h.s8.bf16 %v5875
    %v6172 = vunpack.c.h.s8.bf16 %v5876
    %v6173 = vunpack.c.h.s8.bf16 %v5877
    %v6174 = vunpack.c.h.s8.bf16 %v5878
    %v6175 = vunpack.c.h.s8.bf16 %v5879
    %v6176 = vunpack.c.h.s8.bf16 %v5880
    %v6177 = vunpack.c.l.s8.bf16 %v5881
    %v6178 = vunpack.c.l.s8.bf16 %v5882
    %v6179 = vunpack.c.l.s8.bf16 %v5883
    %v6180 = vunpack.c.l.s8.bf16 %v5884
    %v6181 = vunpack.c.l.s8.bf16 %v5885
    %v6182 = vunpack.c.l.s8.bf16 %v5886
    %v6183 = vunpack.c.l.s8.bf16 %v5887
    %v6184 = vunpack.c.l.s8.bf16 %v5888
    %v6185 = vunpack.c.h.s8.bf16 %v5881
    %v6186 = vunpack.c.h.s8.bf16 %v5882
    %v6187 = vunpack.c.h.s8.bf16 %v5883
    %v6188 = vunpack.c.h.s8.bf16 %v5884
    %v6189 = vunpack.c.h.s8.bf16 %v5885
    %v6190 = vunpack.c.h.s8.bf16 %v5886
    %v6191 = vunpack.c.h.s8.bf16 %v5887
    %v6192 = vunpack.c.h.s8.bf16 %v5888
    %v6193 = vunpack.c.l.s8.bf16 %v5889
    %v6194 = vunpack.c.l.s8.bf16 %v5890
    %v6195 = vunpack.c.l.s8.bf16 %v5891
    %v6196 = vunpack.c.l.s8.bf16 %v5892
    %v6197 = vunpack.c.l.s8.bf16 %v5893
    %v6198 = vunpack.c.l.s8.bf16 %v5894
    %v6199 = vunpack.c.l.s8.bf16 %v5895
    %v6200 = vunpack.c.l.s8.bf16 %v5896
    %v6201 = vunpack.c.h.s8.bf16 %v5889
    %v6202 = vunpack.c.h.s8.bf16 %v5890
    %v6203 = vunpack.c.h.s8.bf16 %v5891
    %v6204 = vunpack.c.h.s8.bf16 %v5892
    %v6205 = vunpack.c.h.s8.bf16 %v5893
    %v6206 = vunpack.c.h.s8.bf16 %v5894
    %v6207 = vunpack.c.h.s8.bf16 %v5895
    %v6208 = vunpack.c.h.s8.bf16 %v5896
    %v6209 = vunpack.c.l.s8.bf16 %v5897
    %v6210 = vunpack.c.l.s8.bf16 %v5898
    %v6211 = vunpack.c.l.s8.bf16 %v5899
    %v6212 = vunpack.c.l.s8.bf16 %v5900
    %v6213 = vunpack.c.l.s8.bf16 %v5901
    %v6214 = vunpack.c.l.s8.bf16 %v5902
    %v6215 = vunpack.c.l.s8.bf16 %v5903
    %v6216 = vunpack.c.l.s8.bf16 %v5904
    %v6217 = vunpack.c.h.s8.bf16 %v5897
    %v6218 = vunpack.c.h.s8.bf16 %v5898
    %v6219 = vunpack.c.h.s8.bf16 %v5899
    %v6220 = vunpack.c.h.s8.bf16 %v5900
    %v6221 = vunpack.c.h.s8.bf16 %v5901
    %v6222 = vunpack.c.h.s8.bf16 %v5902
    %v6223 = vunpack.c.h.s8.bf16 %v5903
    %v6224 = vunpack.c.h.s8.bf16 %v5904
    %v6225 = vunpack.c.l.s8.bf16 %v5905
    %v6226 = vunpack.c.l.s8.bf16 %v5906
    %v6227 = vunpack.c.l.s8.bf16 %v5907
    %v6228 = vunpack.c.l.s8.bf16 %v5908
    %v6229 = vunpack.c.l.s8.bf16 %v5909
    %v6230 = vunpack.c.l.s8.bf16 %v5910
    %v6231 = vunpack.c.l.s8.bf16 %v5911
    %v6232 = vunpack.c.l.s8.bf16 %v5912
    %v6233 = vunpack.c.h.s8.bf16 %v5905
    %v6234 = vunpack.c.h.s8.bf16 %v5906
    %v6235 = vunpack.c.h.s8.bf16 %v5907
    %v6236 = vunpack.c.h.s8.bf16 %v5908
    %v6237 = vunpack.c.h.s8.bf16 %v5909
    %v6238 = vunpack.c.h.s8.bf16 %v5910
    %v6239 = vunpack.c.h.s8.bf16 %v5911
    %v6240 = vunpack.c.h.s8.bf16 %v5912
    %v6241 = vunpack.c.l.s8.bf16 %v5913
    %v6242 = vunpack.c.l.s8.bf16 %v5914
    %v6243 = vunpack.c.l.s8.bf16 %v5915
    %v6244 = vunpack.c.l.s8.bf16 %v5916
    %v6245 = vunpack.c.l.s8.bf16 %v5917
    %v6246 = vunpack.c.l.s8.bf16 %v5918
    %v6247 = vunpack.c.l.s8.bf16 %v5919
    %v6248 = vunpack.c.l.s8.bf16 %v5920
    %v6249 = vunpack.c.h.s8.bf16 %v5913
    %v6250 = vunpack.c.h.s8.bf16 %v5914
    %v6251 = vunpack.c.h.s8.bf16 %v5915
    %v6252 = vunpack.c.h.s8.bf16 %v5916
    %v6253 = vunpack.c.h.s8.bf16 %v5917
    %v6254 = vunpack.c.h.s8.bf16 %v5918
    %v6255 = vunpack.c.h.s8.bf16 %v5919
    %v6256 = vunpack.c.h.s8.bf16 %v5920
    %v6257 = vunpack.c.l.s8.bf16 %v5921
    %v6258 = vunpack.c.l.s8.bf16 %v5922
    %v6259 = vunpack.c.l.s8.bf16 %v5923
    %v6260 = vunpack.c.l.s8.bf16 %v5924
    %v6261 = vunpack.c.l.s8.bf16 %v5925
    %v6262 = vunpack.c.l.s8.bf16 %v5926
    %v6263 = vunpack.c.l.s8.bf16 %v5927
    %v6264 = vunpack.c.l.s8.bf16 %v5928
    %v6265 = vunpack.c.h.s8.bf16 %v5921
    %v6266 = vunpack.c.h.s8.bf16 %v5922
    %v6267 = vunpack.c.h.s8.bf16 %v5923
    %v6268 = vunpack.c.h.s8.bf16 %v5924
    %v6269 = vunpack.c.h.s8.bf16 %v5925
    %v6270 = vunpack.c.h.s8.bf16 %v5926
    %v6271 = vunpack.c.h.s8.bf16 %v5927
    %v6272 = vunpack.c.h.s8.bf16 %v5928
    %v6273 = vunpack.c.l.s8.bf16 %v5929
    %v6274 = vunpack.c.l.s8.bf16 %v5930
    %v6275 = vunpack.c.l.s8.bf16 %v5931
    %v6276 = vunpack.c.l.s8.bf16 %v5932
    %v6277 = vunpack.c.l.s8.bf16 %v5933
    %v6278 = vunpack.c.l.s8.bf16 %v5934
    %v6279 = vunpack.c.l.s8.bf16 %v5935
    %v6280 = vunpack.c.l.s8.bf16 %v5936
    %v6281 = vunpack.c.h.s8.bf16 %v5929
    %v6282 = vunpack.c.h.s8.bf16 %v5930
    %v6283 = vunpack.c.h.s8.bf16 %v5931
    %v6284 = vunpack.c.h.s8.bf16 %v5932
    %v6285 = vunpack.c.h.s8.bf16 %v5933
    %v6286 = vunpack.c.h.s8.bf16 %v5934
    %v6287 = vunpack.c.h.s8.bf16 %v5935
    %v6288 = vunpack.c.h.s8.bf16 %v5936
    %v6289 = vunpack.c.l.s8.bf16 %v5937
    %v6290 = vunpack.c.l.s8.bf16 %v5938
    %v6291 = vunpack.c.l.s8.bf16 %v5939
    %v6292 = vunpack.c.l.s8.bf16 %v5940
    %v6293 = vunpack.c.l.s8.bf16 %v5941
    %v6294 = vunpack.c.l.s8.bf16 %v5942
    %v6295 = vunpack.c.l.s8.bf16 %v5943
    %v6296 = vunpack.c.l.s8.bf16 %v5944
    %v6297 = vunpack.c.h.s8.bf16 %v5937
    %v6298 = vunpack.c.h.s8.bf16 %v5938
    %v6299 = vunpack.c.h.s8.bf16 %v5939
    %v6300 = vunpack.c.h.s8.bf16 %v5940
    %v6301 = vunpack.c.h.s8.bf16 %v5941
    %v6302 = vunpack.c.h.s8.bf16 %v5942
    %v6303 = vunpack.c.h.s8.bf16 %v5943
    %v6304 = vunpack.c.h.s8.bf16 %v5944
    %v6305 = vunpack.c.l.s8.bf16 %v5945
    %v6306 = vunpack.c.l.s8.bf16 %v5946
    %v6307 = vunpack.c.l.s8.bf16 %v5947
    %v6308 = vunpack.c.l.s8.bf16 %v5948
    %v6309 = vunpack.c.l.s8.bf16 %v5949
    %v6310 = vunpack.c.l.s8.bf16 %v5950
    %v6311 = vunpack.c.l.s8.bf16 %v5951
    %v6312 = vunpack.c.l.s8.bf16 %v5952
    %v6313 = vunpack.c.h.s8.bf16 %v5945
    %v6314 = vunpack.c.h.s8.bf16 %v5946
    %v6315 = vunpack.c.h.s8.bf16 %v5947
    %v6316 = vunpack.c.h.s8.bf16 %v5948
    %v6317 = vunpack.c.h.s8.bf16 %v5949
    %v6318 = vunpack.c.h.s8.bf16 %v5950
    %v6319 = vunpack.c.h.s8.bf16 %v5951
    %v6320 = vunpack.c.h.s8.bf16 %v5952
    %v6321 = vunpack.c.l.s8.bf16 %v5953
    %v6322 = vunpack.c.l.s8.bf16 %v5954
    %v6323 = vunpack.c.l.s8.bf16 %v5955
    %v6324 = vunpack.c.l.s8.bf16 %v5956
    %v6325 = vunpack.c.l.s8.bf16 %v5957
    %v6326 = vunpack.c.l.s8.bf16 %v5958
    %v6327 = vunpack.c.l.s8.bf16 %v5959
    %v6328 = vunpack.c.l.s8.bf16 %v5960
    %v6329 = vunpack.c.h.s8.bf16 %v5953
    %v6330 = vunpack.c.h.s8.bf16 %v5954
    %v6331 = vunpack.c.h.s8.bf16 %v5955
    %v6332 = vunpack.c.h.s8.bf16 %v5956
    %v6333 = vunpack.c.h.s8.bf16 %v5957
    %v6334 = vunpack.c.h.s8.bf16 %v5958
    %v6335 = vunpack.c.h.s8.bf16 %v5959
    %v6336 = vunpack.c.h.s8.bf16 %v5960
    %v6337 = vunpack.c.l.s8.bf16 %v5961
    %v6338 = vunpack.c.l.s8.bf16 %v5962
    %v6339 = vunpack.c.l.s8.bf16 %v5963
    %v6340 = vunpack.c.l.s8.bf16 %v5964
    %v6341 = vunpack.c.l.s8.bf16 %v5965
    %v6342 = vunpack.c.l.s8.bf16 %v5966
    %v6343 = vunpack.c.l.s8.bf16 %v5967
    %v6344 = vunpack.c.l.s8.bf16 %v5968
    %v6345 = vunpack.c.h.s8.bf16 %v5961
    %v6346 = vunpack.c.h.s8.bf16 %v5962
    %v6347 = vunpack.c.h.s8.bf16 %v5963
    %v6348 = vunpack.c.h.s8.bf16 %v5964
    %v6349 = vunpack.c.h.s8.bf16 %v5965
    %v6350 = vunpack.c.h.s8.bf16 %v5966
    %v6351 = vunpack.c.h.s8.bf16 %v5967
    %v6352 = vunpack.c.h.s8.bf16 %v5968
    %6353 = vmatprep.subr.bf16.mxu0 %v6026
    %6354 = vmatpush1.bf16.msra.mxu0 %v6025
    %6355 = vmatprep.subr.bf16.mxu0 %v6018
    %6356 = vmatpush1.bf16.msra.mxu0 %v6017
    %6357 = vmatprep.subr.bf16.mxu0 %v6010
    %6358 = vmatpush1.bf16.msra.mxu0 %v6009
    %6359 = vmatprep.subr.bf16.mxu0 %v6002
    %6360 = vmatpush1.bf16.msra.mxu0 %v6001
    %6361 = vmatprep.subr.bf16.mxu0 %v5994
    %6362 = vmatpush1.bf16.msra.mxu0 %v5993
    %6363 = vmatprep.subr.bf16.mxu0 %v5986
    %6364 = vmatpush1.bf16.msra.mxu0 %v5985
    %6365 = vmatprep.subr.bf16.mxu0 %v5978
    %6366 = vmatpush1.bf16.msra.mxu0 %v5977
    %6367 = vmatprep.subr.bf16.mxu0 %v5970
    %6368 = vmatpush1.bf16.msra.mxu0 %v5969
    %6369 = vmatprep.subr.bf16.mxu0 %v6090
    %6370 = vmatpush2.bf16.msra.mxu0 %v6089
    %6371 = vmatprep.subr.bf16.mxu0 %v6082
    %6372 = vmatpush2.bf16.msra.mxu0 %v6081
    %6373 = vmatprep.subr.bf16.mxu0 %v6074
    %6374 = vmatpush2.bf16.msra.mxu0 %v6073
    %6375 = vmatprep.subr.bf16.mxu0 %v6066
    %6376 = vmatpush2.bf16.msra.mxu0 %v6065
    %6377 = vmatprep.subr.bf16.mxu0 %v6058
    %6378 = vmatpush2.bf16.msra.mxu0 %v6057
    %6379 = vmatprep.subr.bf16.mxu0 %v6050
    %6380 = vmatpush2.bf16.msra.mxu0 %v6049
    %6381 = vmatprep.subr.bf16.mxu0 %v6042
    %6382 = vmatpush2.bf16.msra.mxu0 %v6041
    %6383 = vmatprep.subr.bf16.mxu0 %v6034
    %6384 = vmatpush2.bf16.msra.mxu0 %v6033
    %6385 = vmatprep.mubr.bf16.mxu0 %v5772
    %6386 = vmatmul.mubr.bf16.gmra.mxu0 %v5771
    %v6387 = vpop.f32.mrf.mxu0
    %v6388 = vadd.f32 0.0, %v6387
    %v6389 = vpop.f32.mrf.mxu0
    %v6390 = vadd.f32 0.0, %v6389
    %v6391 = vpop.f32.mrf.mxu0
    %v6392 = vadd.f32 0.0, %v6391
    %v6393 = vpop.f32.mrf.mxu0
    %v6394 = vadd.f32 0.0, %v6393
    %6395 = vdwg.mxu0
    %6396 = vmatprep.subr.bf16.mxu0 %v6154
    %6397 = vmatpush1.bf16.msra.mxu0 %v6153
    %6398 = vmatprep.subr.bf16.mxu0 %v6146
    %6399 = vmatpush1.bf16.msra.mxu0 %v6145
    %6400 = vmatprep.subr.bf16.mxu0 %v6138
    %6401 = vmatpush1.bf16.msra.mxu0 %v6137
    %6402 = vmatprep.subr.bf16.mxu0 %v6130
    %6403 = vmatpush1.bf16.msra.mxu0 %v6129
    %6404 = vmatprep.subr.bf16.mxu0 %v6122
    %6405 = vmatpush1.bf16.msra.mxu0 %v6121
    %6406 = vmatprep.subr.bf16.mxu0 %v6114
    %6407 = vmatpush1.bf16.msra.mxu0 %v6113
    %6408 = vmatprep.subr.bf16.mxu0 %v6106
    %6409 = vmatpush1.bf16.msra.mxu0 %v6105
    %6410 = vmatprep.subr.bf16.mxu0 %v6098
    %6411 = vmatpush1.bf16.msra.mxu0 %v6097
    %6412 = vmatprep.subr.bf16.mxu0 %v6218
    %6413 = vmatpush2.bf16.msra.mxu0 %v6217
    %6414 = vmatprep.subr.bf16.mxu0 %v6210
    %6415 = vmatpush2.bf16.msra.mxu0 %v6209
    %6416 = vmatprep.subr.bf16.mxu0 %v6202
    %6417 = vmatpush2.bf16.msra.mxu0 %v6201
    %6418 = vmatprep.subr.bf16.mxu0 %v6194
    %6419 = vmatpush2.bf16.msra.mxu0 %v6193
    %6420 = vmatprep.subr.bf16.mxu0 %v6186
    %6421 = vmatpush2.bf16.msra.mxu0 %v6185
    %6422 = vmatprep.subr.bf16.mxu0 %v6178
    %6423 = vmatpush2.bf16.msra.mxu0 %v6177
    %6424 = vmatprep.subr.bf16.mxu0 %v6170
    %6425 = vmatpush2.bf16.msra.mxu0 %v6169
    %6426 = vmatprep.subr.bf16.mxu0 %v6162
    %6427 = vmatpush2.bf16.msra.mxu0 %v6161
    %6428 = vmatprep.mubr.bf16.mxu0 %v5774
    %6429 = vmatmul.mubr.bf16.gmra.mxu0 %v5773
    %v6430 = vpop.f32.mrf.mxu0
    %v6431 = vadd.f32 %v6388, %v6430
    %v6432 = vpop.f32.mrf.mxu0
    %v6433 = vadd.f32 %v6390, %v6432
    %v6434 = vpop.f32.mrf.mxu0
    %v6435 = vadd.f32 %v6392, %v6434
    %v6436 = vpop.f32.mrf.mxu0
    %v6437 = vadd.f32 %v6394, %v6436
    %6438 = vdwg.mxu0
    %6439 = vmatprep.subr.bf16.mxu0 %v6282
    %6440 = vmatpush1.bf16.msra.mxu0 %v6281
    %6441 = vmatprep.subr.bf16.mxu0 %v6274
    %6442 = vmatpush1.bf16.msra.mxu0 %v6273
    %6443 = vmatprep.subr.bf16.mxu0 %v6266
    %6444 = vmatpush1.bf16.msra.mxu0 %v6265
    %6445 = vmatprep.subr.bf16.mxu0 %v6258
    %6446 = vmatpush1.bf16.msra.mxu0 %v6257
    %6447 = vmatprep.subr.bf16.mxu0 %v6250
    %6448 = vmatpush1.bf16.msra.mxu0 %v6249
    %6449 = vmatprep.subr.bf16.mxu0 %v6242
    %6450 = vmatpush1.bf16.msra.mxu0 %v6241
    %6451 = vmatprep.subr.bf16.mxu0 %v6234
    %6452 = vmatpush1.bf16.msra.mxu0 %v6233
    %6453 = vmatprep.subr.bf16.mxu0 %v6226
    %6454 = vmatpush1.bf16.msra.mxu0 %v6225
    %6455 = vmatprep.subr.bf16.mxu0 %v6346
    %6456 = vmatpush2.bf16.msra.mxu0 %v6345
    %6457 = vmatprep.subr.bf16.mxu0 %v6338
    %6458 = vmatpush2.bf16.msra.mxu0 %v6337
    %6459 = vmatprep.subr.bf16.mxu0 %v6330
    %6460 = vmatpush2.bf16.msra.mxu0 %v6329
    %6461 = vmatprep.subr.bf16.mxu0 %v6322
    %6462 = vmatpush2.bf16.msra.mxu0 %v6321
    %6463 = vmatprep.subr.bf16.mxu0 %v6314
    %6464 = vmatpush2.bf16.msra.mxu0 %v6313
    %6465 = vmatprep.subr.bf16.mxu0 %v6306
    %6466 = vmatpush2.bf16.msra.mxu0 %v6305
    %6467 = vmatprep.subr.bf16.mxu0 %v6298
    %6468 = vmatpush2.bf16.msra.mxu0 %v6297
    %6469 = vmatprep.subr.bf16.mxu0 %v6290
    %6470 = vmatpush2.bf16.msra.mxu0 %v6289
    %6471 = vmatprep.mubr.bf16.mxu0 %v5776
    %6472 = vmatmul.mubr.bf16.gmra.mxu0 %v5775
    %v6473 = vpop.f32.mrf.mxu0
    %v6474 = vadd.f32 %v6431, %v6473
    %v6475 = vpop.f32.mrf.mxu0
    %v6476 = vadd.f32 %v6433, %v6475
    %v6477 = vpop.f32.mrf.mxu0
    %v6478 = vadd.f32 %v6435, %v6477
    %v6479 = vpop.f32.mrf.mxu0
    %v6480 = vadd.f32 %v6437, %v6479
    %6481 = vdwg.mxu0
    %6482 = vmatprep.subr.bf16.mxu0 %v6028
    %6483 = vmatpush1.bf16.msra.mxu0 %v6027
    %6484 = vmatprep.subr.bf16.mxu0 %v6020
    %6485 = vmatpush1.bf16.msra.mxu0 %v6019
    %6486 = vmatprep.subr.bf16.mxu0 %v6012
    %6487 = vmatpush1.bf16.msra.mxu0 %v6011
    %6488 = vmatprep.subr.bf16.mxu0 %v6004
    %6489 = vmatpush1.bf16.msra.mxu0 %v6003
    %6490 = vmatprep.subr.bf16.mxu0 %v5996
    %6491 = vmatpush1.bf16.msra.mxu0 %v5995
    %6492 = vmatprep.subr.bf16.mxu0 %v5988
    %6493 = vmatpush1.bf16.msra.mxu0 %v5987
    %6494 = vmatprep.subr.bf16.mxu0 %v5980
    %6495 = vmatpush1.bf16.msra.mxu0 %v5979
    %6496 = vmatprep.subr.bf16.mxu0 %v5972
    %6497 = vmatpush1.bf16.msra.mxu0 %v5971
    %6498 = vmatprep.subr.bf16.mxu0 %v6092
    %6499 = vmatpush2.bf16.msra.mxu0 %v6091
    %6500 = vmatprep.subr.bf16.mxu0 %v6084
    %6501 = vmatpush2.bf16.msra.mxu0 %v6083
    %6502 = vmatprep.subr.bf16.mxu0 %v6076
    %6503 = vmatpush2.bf16.msra.mxu0 %v6075
    %6504 = vmatprep.subr.bf16.mxu0 %v6068
    %6505 = vmatpush2.bf16.msra.mxu0 %v6067
    %6506 = vmatprep.subr.bf16.mxu0 %v6060
    %6507 = vmatpush2.bf16.msra.mxu0 %v6059
    %6508 = vmatprep.subr.bf16.mxu0 %v6052
    %6509 = vmatpush2.bf16.msra.mxu0 %v6051
    %6510 = vmatprep.subr.bf16.mxu0 %v6044
    %6511 = vmatpush2.bf16.msra.mxu0 %v6043
    %6512 = vmatprep.subr.bf16.mxu0 %v6036
    %6513 = vmatpush2.bf16.msra.mxu0 %v6035
    %6514 = vmatprep.mubr.bf16.mxu0 %v5772
    %6515 = vmatmul.mubr.bf16.gmra.mxu0 %v5771
    %v6516 = vpop.f32.mrf.mxu0
    %v6517 = vadd.f32 0.0, %v6516
    %v6518 = vpop.f32.mrf.mxu0
    %v6519 = vadd.f32 0.0, %v6518
    %v6520 = vpop.f32.mrf.mxu0
    %v6521 = vadd.f32 0.0, %v6520
    %v6522 = vpop.f32.mrf.mxu0
    %v6523 = vadd.f32 0.0, %v6522
    %6524 = vdwg.mxu0
    %6525 = vmatprep.subr.bf16.mxu0 %v6156
    %6526 = vmatpush1.bf16.msra.mxu0 %v6155
    %6527 = vmatprep.subr.bf16.mxu0 %v6148
    %6528 = vmatpush1.bf16.msra.mxu0 %v6147
    %6529 = vmatprep.subr.bf16.mxu0 %v6140
    %6530 = vmatpush1.bf16.msra.mxu0 %v6139
    %6531 = vmatprep.subr.bf16.mxu0 %v6132
    %6532 = vmatpush1.bf16.msra.mxu0 %v6131
    %6533 = vmatprep.subr.bf16.mxu0 %v6124
    %6534 = vmatpush1.bf16.msra.mxu0 %v6123
    %6535 = vmatprep.subr.bf16.mxu0 %v6116
    %6536 = vmatpush1.bf16.msra.mxu0 %v6115
    %6537 = vmatprep.subr.bf16.mxu0 %v6108
    %6538 = vmatpush1.bf16.msra.mxu0 %v6107
    %6539 = vmatprep.subr.bf16.mxu0 %v6100
    %6540 = vmatpush1.bf16.msra.mxu0 %v6099
    %6541 = vmatprep.subr.bf16.mxu0 %v6220
    %6542 = vmatpush2.bf16.msra.mxu0 %v6219
    %6543 = vmatprep.subr.bf16.mxu0 %v6212
    %6544 = vmatpush2.bf16.msra.mxu0 %v6211
    %6545 = vmatprep.subr.bf16.mxu0 %v6204
    %6546 = vmatpush2.bf16.msra.mxu0 %v6203
    %6547 = vmatprep.subr.bf16.mxu0 %v6196
    %6548 = vmatpush2.bf16.msra.mxu0 %v6195
    %6549 = vmatprep.subr.bf16.mxu0 %v6188
    %6550 = vmatpush2.bf16.msra.mxu0 %v6187
    %6551 = vmatprep.subr.bf16.mxu0 %v6180
    %6552 = vmatpush2.bf16.msra.mxu0 %v6179
    %6553 = vmatprep.subr.bf16.mxu0 %v6172
    %6554 = vmatpush2.bf16.msra.mxu0 %v6171
    %6555 = vmatprep.subr.bf16.mxu0 %v6164
    %6556 = vmatpush2.bf16.msra.mxu0 %v6163
    %6557 = vmatprep.mubr.bf16.mxu0 %v5774
    %6558 = vmatmul.mubr.bf16.gmra.mxu0 %v5773
    %v6559 = vpop.f32.mrf.mxu0
    %v6560 = vadd.f32 %v6517, %v6559
    %v6561 = vpop.f32.mrf.mxu0
    %v6562 = vadd.f32 %v6519, %v6561
    %v6563 = vpop.f32.mrf.mxu0
    %v6564 = vadd.f32 %v6521, %v6563
    %v6565 = vpop.f32.mrf.mxu0
    %v6566 = vadd.f32 %v6523, %v6565
    %6567 = vdwg.mxu0
    %6568 = vmatprep.subr.bf16.mxu0 %v6284
    %6569 = vmatpush1.bf16.msra.mxu0 %v6283
    %6570 = vmatprep.subr.bf16.mxu0 %v6276
    %6571 = vmatpush1.bf16.msra.mxu0 %v6275
    %6572 = vmatprep.subr.bf16.mxu0 %v6268
    %6573 = vmatpush1.bf16.msra.mxu0 %v6267
    %6574 = vmatprep.subr.bf16.mxu0 %v6260
    %6575 = vmatpush1.bf16.msra.mxu0 %v6259
    %6576 = vmatprep.subr.bf16.mxu0 %v6252
    %6577 = vmatpush1.bf16.msra.mxu0 %v6251
    %6578 = vmatprep.subr.bf16.mxu0 %v6244
    %6579 = vmatpush1.bf16.msra.mxu0 %v6243
    %6580 = vmatprep.subr.bf16.mxu0 %v6236
    %6581 = vmatpush1.bf16.msra.mxu0 %v6235
    %6582 = vmatprep.subr.bf16.mxu0 %v6228
    %6583 = vmatpush1.bf16.msra.mxu0 %v6227
    %6584 = vmatprep.subr.bf16.mxu0 %v6348
    %6585 = vmatpush2.bf16.msra.mxu0 %v6347
    %6586 = vmatprep.subr.bf16.mxu0 %v6340
    %6587 = vmatpush2.bf16.msra.mxu0 %v6339
    %6588 = vmatprep.subr.bf16.mxu0 %v6332
    %6589 = vmatpush2.bf16.msra.mxu0 %v6331
    %6590 = vmatprep.subr.bf16.mxu0 %v6324
    %6591 = vmatpush2.bf16.msra.mxu0 %v6323
    %6592 = vmatprep.subr.bf16.mxu0 %v6316
    %6593 = vmatpush2.bf16.msra.mxu0 %v6315
    %6594 = vmatprep.subr.bf16.mxu0 %v6308
    %6595 = vmatpush2.bf16.msra.mxu0 %v6307
    %6596 = vmatprep.subr.bf16.mxu0 %v6300
    %6597 = vmatpush2.bf16.msra.mxu0 %v6299
    %6598 = vmatprep.subr.bf16.mxu0 %v6292
    %6599 = vmatpush2.bf16.msra.mxu0 %v6291
    %6600 = vmatprep.mubr.bf16.mxu0 %v5776
    %6601 = vmatmul.mubr.bf16.gmra.mxu0 %v5775
    %v6602 = vpop.f32.mrf.mxu0
    %v6603 = vadd.f32 %v6560, %v6602
    %v6604 = vpop.f32.mrf.mxu0
    %v6605 = vadd.f32 %v6562, %v6604
    %v6606 = vpop.f32.mrf.mxu0
    %v6607 = vadd.f32 %v6564, %v6606
    %v6608 = vpop.f32.mrf.mxu0
    %v6609 = vadd.f32 %v6566, %v6608
    %6610 = vdwg.mxu0
    %6611 = vmatprep.subr.bf16.mxu0 %v6030
    %6612 = vmatpush1.bf16.msra.mxu0 %v6029
    %6613 = vmatprep.subr.bf16.mxu0 %v6022
    %6614 = vmatpush1.bf16.msra.mxu0 %v6021
    %6615 = vmatprep.subr.bf16.mxu0 %v6014
    %6616 = vmatpush1.bf16.msra.mxu0 %v6013
    %6617 = vmatprep.subr.bf16.mxu0 %v6006
    %6618 = vmatpush1.bf16.msra.mxu0 %v6005
    %6619 = vmatprep.subr.bf16.mxu0 %v5998
    %6620 = vmatpush1.bf16.msra.mxu0 %v5997
    %6621 = vmatprep.subr.bf16.mxu0 %v5990
    %6622 = vmatpush1.bf16.msra.mxu0 %v5989
    %6623 = vmatprep.subr.bf16.mxu0 %v5982
    %6624 = vmatpush1.bf16.msra.mxu0 %v5981
    %6625 = vmatprep.subr.bf16.mxu0 %v5974
    %6626 = vmatpush1.bf16.msra.mxu0 %v5973
    %6627 = vmatprep.subr.bf16.mxu0 %v6094
    %6628 = vmatpush2.bf16.msra.mxu0 %v6093
    %6629 = vmatprep.subr.bf16.mxu0 %v6086
    %6630 = vmatpush2.bf16.msra.mxu0 %v6085
    %6631 = vmatprep.subr.bf16.mxu0 %v6078
    %6632 = vmatpush2.bf16.msra.mxu0 %v6077
    %6633 = vmatprep.subr.bf16.mxu0 %v6070
    %6634 = vmatpush2.bf16.msra.mxu0 %v6069
    %6635 = vmatprep.subr.bf16.mxu0 %v6062
    %6636 = vmatpush2.bf16.msra.mxu0 %v6061
    %6637 = vmatprep.subr.bf16.mxu0 %v6054
    %6638 = vmatpush2.bf16.msra.mxu0 %v6053
    %6639 = vmatprep.subr.bf16.mxu0 %v6046
    %6640 = vmatpush2.bf16.msra.mxu0 %v6045
    %6641 = vmatprep.subr.bf16.mxu0 %v6038
    %6642 = vmatpush2.bf16.msra.mxu0 %v6037
    %6643 = vmatprep.mubr.bf16.mxu0 %v5772
    %6644 = vmatmul.mubr.bf16.gmra.mxu0 %v5771
    %v6645 = vpop.f32.mrf.mxu0
    %v6646 = vadd.f32 0.0, %v6645
    %v6647 = vpop.f32.mrf.mxu0
    %v6648 = vadd.f32 0.0, %v6647
    %v6649 = vpop.f32.mrf.mxu0
    %v6650 = vadd.f32 0.0, %v6649
    %v6651 = vpop.f32.mrf.mxu0
    %v6652 = vadd.f32 0.0, %v6651
    %6653 = vdwg.mxu0
    %6654 = vmatprep.subr.bf16.mxu0 %v6158
    %6655 = vmatpush1.bf16.msra.mxu0 %v6157
    %6656 = vmatprep.subr.bf16.mxu0 %v6150
    %6657 = vmatpush1.bf16.msra.mxu0 %v6149
    %6658 = vmatprep.subr.bf16.mxu0 %v6142
    %6659 = vmatpush1.bf16.msra.mxu0 %v6141
    %6660 = vmatprep.subr.bf16.mxu0 %v6134
    %6661 = vmatpush1.bf16.msra.mxu0 %v6133
    %6662 = vmatprep.subr.bf16.mxu0 %v6126
    %6663 = vmatpush1.bf16.msra.mxu0 %v6125
    %6664 = vmatprep.subr.bf16.mxu0 %v6118
    %6665 = vmatpush1.bf16.msra.mxu0 %v6117
    %6666 = vmatprep.subr.bf16.mxu0 %v6110
    %6667 = vmatpush1.bf16.msra.mxu0 %v6109
    %6668 = vmatprep.subr.bf16.mxu0 %v6102
    %6669 = vmatpush1.bf16.msra.mxu0 %v6101
    %6670 = vmatprep.subr.bf16.mxu0 %v6222
    %6671 = vmatpush2.bf16.msra.mxu0 %v6221
    %6672 = vmatprep.subr.bf16.mxu0 %v6214
    %6673 = vmatpush2.bf16.msra.mxu0 %v6213
    %6674 = vmatprep.subr.bf16.mxu0 %v6206
    %6675 = vmatpush2.bf16.msra.mxu0 %v6205
    %6676 = vmatprep.subr.bf16.mxu0 %v6198
    %6677 = vmatpush2.bf16.msra.mxu0 %v6197
    %6678 = vmatprep.subr.bf16.mxu0 %v6190
    %6679 = vmatpush2.bf16.msra.mxu0 %v6189
    %6680 = vmatprep.subr.bf16.mxu0 %v6182
    %6681 = vmatpush2.bf16.msra.mxu0 %v6181
    %6682 = vmatprep.subr.bf16.mxu0 %v6174
    %6683 = vmatpush2.bf16.msra.mxu0 %v6173
    %6684 = vmatprep.subr.bf16.mxu0 %v6166
    %6685 = vmatpush2.bf16.msra.mxu0 %v6165
    %6686 = vmatprep.mubr.bf16.mxu0 %v5774
    %6687 = vmatmul.mubr.bf16.gmra.mxu0 %v5773
    %v6688 = vpop.f32.mrf.mxu0
    %v6689 = vadd.f32 %v6646, %v6688
    %v6690 = vpop.f32.mrf.mxu0
    %v6691 = vadd.f32 %v6648, %v6690
    %v6692 = vpop.f32.mrf.mxu0
    %v6693 = vadd.f32 %v6650, %v6692
    %v6694 = vpop.f32.mrf.mxu0
    %v6695 = vadd.f32 %v6652, %v6694
    %6696 = vdwg.mxu0
    %6697 = vmatprep.subr.bf16.mxu0 %v6286
    %6698 = vmatpush1.bf16.msra.mxu0 %v6285
    %6699 = vmatprep.subr.bf16.mxu0 %v6278
    %6700 = vmatpush1.bf16.msra.mxu0 %v6277
    %6701 = vmatprep.subr.bf16.mxu0 %v6270
    %6702 = vmatpush1.bf16.msra.mxu0 %v6269
    %6703 = vmatprep.subr.bf16.mxu0 %v6262
    %6704 = vmatpush1.bf16.msra.mxu0 %v6261
    %6705 = vmatprep.subr.bf16.mxu0 %v6254
    %6706 = vmatpush1.bf16.msra.mxu0 %v6253
    %6707 = vmatprep.subr.bf16.mxu0 %v6246
    %6708 = vmatpush1.bf16.msra.mxu0 %v6245
    %6709 = vmatprep.subr.bf16.mxu0 %v6238
    %6710 = vmatpush1.bf16.msra.mxu0 %v6237
    %6711 = vmatprep.subr.bf16.mxu0 %v6230
    %6712 = vmatpush1.bf16.msra.mxu0 %v6229
    %6713 = vmatprep.subr.bf16.mxu0 %v6350
    %6714 = vmatpush2.bf16.msra.mxu0 %v6349
    %6715 = vmatprep.subr.bf16.mxu0 %v6342
    %6716 = vmatpush2.bf16.msra.mxu0 %v6341
    %6717 = vmatprep.subr.bf16.mxu0 %v6334
    %6718 = vmatpush2.bf16.msra.mxu0 %v6333
    %6719 = vmatprep.subr.bf16.mxu0 %v6326
    %6720 = vmatpush2.bf16.msra.mxu0 %v6325
    %6721 = vmatprep.subr.bf16.mxu0 %v6318
    %6722 = vmatpush2.bf16.msra.mxu0 %v6317
    %6723 = vmatprep.subr.bf16.mxu0 %v6310
    %6724 = vmatpush2.bf16.msra.mxu0 %v6309
    %6725 = vmatprep.subr.bf16.mxu0 %v6302
    %6726 = vmatpush2.bf16.msra.mxu0 %v6301
    %6727 = vmatprep.subr.bf16.mxu0 %v6294
    %6728 = vmatpush2.bf16.msra.mxu0 %v6293
    %6729 = vmatprep.mubr.bf16.mxu0 %v5776
    %6730 = vmatmul.mubr.bf16.gmra.mxu0 %v5775
    %v6731 = vpop.f32.mrf.mxu0
    %v6732 = vadd.f32 %v6689, %v6731
    %v6733 = vpop.f32.mrf.mxu0
    %v6734 = vadd.f32 %v6691, %v6733
    %v6735 = vpop.f32.mrf.mxu0
    %v6736 = vadd.f32 %v6693, %v6735
    %v6737 = vpop.f32.mrf.mxu0
    %v6738 = vadd.f32 %v6695, %v6737
    %6739 = vdwg.mxu0
    %6740 = vmatprep.subr.bf16.mxu0 %v6032
    %6741 = vmatpush1.bf16.msra.mxu0 %v6031
    %6742 = vmatprep.subr.bf16.mxu0 %v6024
    %6743 = vmatpush1.bf16.msra.mxu0 %v6023
    %6744 = vmatprep.subr.bf16.mxu0 %v6016
    %6745 = vmatpush1.bf16.msra.mxu0 %v6015
    %6746 = vmatprep.subr.bf16.mxu0 %v6008
    %6747 = vmatpush1.bf16.msra.mxu0 %v6007
    %6748 = vmatprep.subr.bf16.mxu0 %v6000
    %6749 = vmatpush1.bf16.msra.mxu0 %v5999
    %6750 = vmatprep.subr.bf16.mxu0 %v5992
    %6751 = vmatpush1.bf16.msra.mxu0 %v5991
    %6752 = vmatprep.subr.bf16.mxu0 %v5984
    %6753 = vmatpush1.bf16.msra.mxu0 %v5983
    %6754 = vmatprep.subr.bf16.mxu0 %v5976
    %6755 = vmatpush1.bf16.msra.mxu0 %v5975
    %6756 = vmatprep.subr.bf16.mxu0 %v6096
    %6757 = vmatpush2.bf16.msra.mxu0 %v6095
    %6758 = vmatprep.subr.bf16.mxu0 %v6088
    %6759 = vmatpush2.bf16.msra.mxu0 %v6087
    %6760 = vmatprep.subr.bf16.mxu0 %v6080
    %6761 = vmatpush2.bf16.msra.mxu0 %v6079
    %6762 = vmatprep.subr.bf16.mxu0 %v6072
    %6763 = vmatpush2.bf16.msra.mxu0 %v6071
    %6764 = vmatprep.subr.bf16.mxu0 %v6064
    %6765 = vmatpush2.bf16.msra.mxu0 %v6063
    %6766 = vmatprep.subr.bf16.mxu0 %v6056
    %6767 = vmatpush2.bf16.msra.mxu0 %v6055
    %6768 = vmatprep.subr.bf16.mxu0 %v6048
    %6769 = vmatpush2.bf16.msra.mxu0 %v6047
    %6770 = vmatprep.subr.bf16.mxu0 %v6040
    %6771 = vmatpush2.bf16.msra.mxu0 %v6039
    %6772 = vmatprep.mubr.bf16.mxu0 %v5772
    %6773 = vmatmul.mubr.bf16.gmra.mxu0 %v5771
    %v6774 = vpop.f32.mrf.mxu0
    %v6775 = vadd.f32 0.0, %v6774
    %v6776 = vpop.f32.mrf.mxu0
    %v6777 = vadd.f32 0.0, %v6776
    %v6778 = vpop.f32.mrf.mxu0
    %v6779 = vadd.f32 0.0, %v6778
    %v6780 = vpop.f32.mrf.mxu0
    %v6781 = vadd.f32 0.0, %v6780
    %6782 = vdwg.mxu0
    %6783 = vmatprep.subr.bf16.mxu0 %v6160
    %6784 = vmatpush1.bf16.msra.mxu0 %v6159
    %6785 = vmatprep.subr.bf16.mxu0 %v6152
    %6786 = vmatpush1.bf16.msra.mxu0 %v6151
    %6787 = vmatprep.subr.bf16.mxu0 %v6144
    %6788 = vmatpush1.bf16.msra.mxu0 %v6143
    %6789 = vmatprep.subr.bf16.mxu0 %v6136
    %6790 = vmatpush1.bf16.msra.mxu0 %v6135
    %6791 = vmatprep.subr.bf16.mxu0 %v6128
    %6792 = vmatpush1.bf16.msra.mxu0 %v6127
    %6793 = vmatprep.subr.bf16.mxu0 %v6120
    %6794 = vmatpush1.bf16.msra.mxu0 %v6119
    %6795 = vmatprep.subr.bf16.mxu0 %v6112
    %6796 = vmatpush1.bf16.msra.mxu0 %v6111
    %6797 = vmatprep.subr.bf16.mxu0 %v6104
    %6798 = vmatpush1.bf16.msra.mxu0 %v6103
    %6799 = vmatprep.subr.bf16.mxu0 %v6224
    %6800 = vmatpush2.bf16.msra.mxu0 %v6223
    %6801 = vmatprep.subr.bf16.mxu0 %v6216
    %6802 = vmatpush2.bf16.msra.mxu0 %v6215
    %6803 = vmatprep.subr.bf16.mxu0 %v6208
    %6804 = vmatpush2.bf16.msra.mxu0 %v6207
    %6805 = vmatprep.subr.bf16.mxu0 %v6200
    %6806 = vmatpush2.bf16.msra.mxu0 %v6199
    %6807 = vmatprep.subr.bf16.mxu0 %v6192
    %6808 = vmatpush2.bf16.msra.mxu0 %v6191
    %6809 = vmatprep.subr.bf16.mxu0 %v6184
    %6810 = vmatpush2.bf16.msra.mxu0 %v6183
    %6811 = vmatprep.subr.bf16.mxu0 %v6176
    %6812 = vmatpush2.bf16.msra.mxu0 %v6175
    %6813 = vmatprep.subr.bf16.mxu0 %v6168
    %6814 = vmatpush2.bf16.msra.mxu0 %v6167
    %6815 = vmatprep.mubr.bf16.mxu0 %v5774
    %6816 = vmatmul.mubr.bf16.gmra.mxu0 %v5773
    %v6817 = vpop.f32.mrf.mxu0
    %v6818 = vadd.f32 %v6775, %v6817
    %v6819 = vpop.f32.mrf.mxu0
    %v6820 = vadd.f32 %v6777, %v6819
    %v6821 = vpop.f32.mrf.mxu0
    %v6822 = vadd.f32 %v6779, %v6821
    %v6823 = vpop.f32.mrf.mxu0
    %v6824 = vadd.f32 %v6781, %v6823
    %6825 = vdwg.mxu0
    %6826 = vmatprep.subr.bf16.mxu0 %v6288
    %6827 = vmatpush1.bf16.msra.mxu0 %v6287
    %6828 = vmatprep.subr.bf16.mxu0 %v6280
    %6829 = vmatpush1.bf16.msra.mxu0 %v6279
    %6830 = vmatprep.subr.bf16.mxu0 %v6272
    %6831 = vmatpush1.bf16.msra.mxu0 %v6271
    %6832 = vmatprep.subr.bf16.mxu0 %v6264
    %6833 = vmatpush1.bf16.msra.mxu0 %v6263
    %6834 = vmatprep.subr.bf16.mxu0 %v6256
    %6835 = vmatpush1.bf16.msra.mxu0 %v6255
    %6836 = vmatprep.subr.bf16.mxu0 %v6248
    %6837 = vmatpush1.bf16.msra.mxu0 %v6247
    %6838 = vmatprep.subr.bf16.mxu0 %v6240
    %6839 = vmatpush1.bf16.msra.mxu0 %v6239
    %6840 = vmatprep.subr.bf16.mxu0 %v6232
    %6841 = vmatpush1.bf16.msra.mxu0 %v6231
    %6842 = vmatprep.subr.bf16.mxu0 %v6352
    %6843 = vmatpush2.bf16.msra.mxu0 %v6351
    %6844 = vmatprep.subr.bf16.mxu0 %v6344
    %6845 = vmatpush2.bf16.msra.mxu0 %v6343
    %6846 = vmatprep.subr.bf16.mxu0 %v6336
    %6847 = vmatpush2.bf16.msra.mxu0 %v6335
    %6848 = vmatprep.subr.bf16.mxu0 %v6328
    %6849 = vmatpush2.bf16.msra.mxu0 %v6327
    %6850 = vmatprep.subr.bf16.mxu0 %v6320
    %6851 = vmatpush2.bf16.msra.mxu0 %v6319
    %6852 = vmatprep.subr.bf16.mxu0 %v6312
    %6853 = vmatpush2.bf16.msra.mxu0 %v6311
    %6854 = vmatprep.subr.bf16.mxu0 %v6304
    %6855 = vmatpush2.bf16.msra.mxu0 %v6303
    %6856 = vmatprep.subr.bf16.mxu0 %v6296
    %6857 = vmatpush2.bf16.msra.mxu0 %v6295
    %6858 = vmatprep.mubr.bf16.mxu0 %v5776
    %6859 = vmatmul.mubr.bf16.gmra.mxu0 %v5775
    %v6860 = vpop.f32.mrf.mxu0
    %v6861 = vadd.f32 %v6818, %v6860
    %v6862 = vpop.f32.mrf.mxu0
    %v6863 = vadd.f32 %v6820, %v6862
    %v6864 = vpop.f32.mrf.mxu0
    %v6865 = vadd.f32 %v6822, %v6864
    %v6866 = vpop.f32.mrf.mxu0
    %v6867 = vadd.f32 %v6824, %v6866
    %6868 = vdwg.mxu0
    %s6869 = scalar_lea.vmem [#allocation5], 5
    %v6870 = vld [vmem:[%s6869] ss:$8 sm:$0xf]
    %v6871 = vld [vmem:[%s6869] ss:$8 sm:$0xf0]
    %v6872 = vor.u32 %v6870, %v6871
    %s6873 = scalar_lea.vmem [#allocation7], 5
    %v6874 = vld [vmem:[%s6873] ss:$8 sm:$0xf]
    %v6875 = vld [vmem:[%s6873] ss:$8 sm:$0xf0]
    %v6876 = vor.u32 %v6874, %v6875
    %v6878 = vlaneseq
    %v6879 = vshrl.u32 %v6878, 7
    %v6880 = vsub.s32 0, %v6879
    %v6881 = vrot.slane %v6872, %v6880
    %v6882 = vlaneseq
    %v6883 = vshrl.u32 %v6882, 7
    %v6884 = vsub.s32 1, %v6883
    %v6885 = vrot.slane %v6872, %v6884
    %v6886 = vlaneseq
    %v6887 = vshrl.u32 %v6886, 7
    %v6888 = vsub.s32 2, %v6887
    %v6889 = vrot.slane %v6872, %v6888
    %v6890 = vlaneseq
    %v6891 = vshrl.u32 %v6890, 7
    %v6892 = vsub.s32 3, %v6891
    %v6893 = vrot.slane %v6872, %v6892
    %v6894 = vlaneseq
    %v6895 = vshrl.u32 %v6894, 7
    %v6896 = vsub.s32 4, %v6895
    %v6897 = vrot.slane %v6872, %v6896
    %v6898 = vlaneseq
    %v6899 = vshrl.u32 %v6898, 7
    %v6900 = vsub.s32 5, %v6899
    %v6901 = vrot.slane %v6872, %v6900
    %v6902 = vlaneseq
    %v6903 = vshrl.u32 %v6902, 7
    %v6904 = vsub.s32 6, %v6903
    %v6905 = vrot.slane %v6872, %v6904
    %v6906 = vlaneseq
    %v6907 = vshrl.u32 %v6906, 7
    %v6908 = vsub.s32 7, %v6907
    %v6909 = vrot.slane %v6872, %v6908
    %v6918 = vmul.f32 %v6474, %v6881
    %v6919 = vmul.f32 %v6476, %v6885
    %v6920 = vmul.f32 %v6603, %v6889
    %v6921 = vmul.f32 %v6605, %v6893
    %v6922 = vmul.f32 %v6732, %v6897
    %v6923 = vmul.f32 %v6734, %v6901
    %v6924 = vmul.f32 %v6861, %v6905
    %v6925 = vmul.f32 %v6863, %v6909
    %v6926 = vmul.f32 %v6478, %v6881
    %v6927 = vmul.f32 %v6480, %v6885
    %v6928 = vmul.f32 %v6607, %v6889
    %v6929 = vmul.f32 %v6609, %v6893
    %v6930 = vmul.f32 %v6736, %v6897
    %v6931 = vmul.f32 %v6738, %v6901
    %v6932 = vmul.f32 %v6865, %v6905
    %v6933 = vmul.f32 %v6867, %v6909
    %v6935 = vlaneseq
    %v6936 = vshrl.u32 %v6935, 7
    %v6937 = vsub.s32 0, %v6936
    %v6938 = vrot.slane %v6876, %v6937
    %v6939 = vlaneseq
    %v6940 = vshrl.u32 %v6939, 7
    %v6941 = vsub.s32 1, %v6940
    %v6942 = vrot.slane %v6876, %v6941
    %v6943 = vlaneseq
    %v6944 = vshrl.u32 %v6943, 7
    %v6945 = vsub.s32 2, %v6944
    %v6946 = vrot.slane %v6876, %v6945
    %v6947 = vlaneseq
    %v6948 = vshrl.u32 %v6947, 7
    %v6949 = vsub.s32 3, %v6948
    %v6950 = vrot.slane %v6876, %v6949
    %v6951 = vlaneseq
    %v6952 = vshrl.u32 %v6951, 7
    %v6953 = vsub.s32 4, %v6952
    %v6954 = vrot.slane %v6876, %v6953
    %v6955 = vlaneseq
    %v6956 = vshrl.u32 %v6955, 7
    %v6957 = vsub.s32 5, %v6956
    %v6958 = vrot.slane %v6876, %v6957
    %v6959 = vlaneseq
    %v6960 = vshrl.u32 %v6959, 7
    %v6961 = vsub.s32 6, %v6960
    %v6962 = vrot.slane %v6876, %v6961
    %v6963 = vlaneseq
    %v6964 = vshrl.u32 %v6963, 7
    %v6965 = vsub.s32 7, %v6964
    %v6966 = vrot.slane %v6876, %v6965
    %v6975 = vadd.f32 %v6918, %v6938
    %v6976 = vadd.f32 %v6919, %v6942
    %v6977 = vadd.f32 %v6920, %v6946
    %v6978 = vadd.f32 %v6921, %v6950
    %v6979 = vadd.f32 %v6922, %v6954
    %v6980 = vadd.f32 %v6923, %v6958
    %v6981 = vadd.f32 %v6924, %v6962
    %v6982 = vadd.f32 %v6925, %v6966
    %v6983 = vadd.f32 %v6926, %v6938
    %v6984 = vadd.f32 %v6927, %v6942
    %v6985 = vadd.f32 %v6928, %v6946
    %v6986 = vadd.f32 %v6929, %v6950
    %v6987 = vadd.f32 %v6930, %v6954
    %v6988 = vadd.f32 %v6931, %v6958
    %v6989 = vadd.f32 %v6932, %v6962
    %v6990 = vadd.f32 %v6933, %v6966
    %v6991 = vtanh.pop %v6975
    %v6992 = vtanh.pop %v6976
    %v6993 = vtanh.pop %v6977
    %v6994 = vtanh.pop %v6978
    %v6995 = vtanh.pop %v6979
    %v6996 = vtanh.pop %v6980
    %v6997 = vtanh.pop %v6981
    %v6998 = vtanh.pop %v6982
    %v6999 = vtanh.pop %v6983
    %v7000 = vtanh.pop %v6984
    %v7001 = vtanh.pop %v6985
    %v7002 = vtanh.pop %v6986
    %v7003 = vtanh.pop %v6987
    %v7004 = vtanh.pop %v6988
    %v7005 = vtanh.pop %v6989
    %v7006 = vtanh.pop %v6990
    %v7007 = vpack.c.bf16 %v6999, %v6991
    %v7008 = vpack.c.bf16 %v7000, %v6992
    %v7009 = vpack.c.bf16 %v7001, %v6993
    %v7010 = vpack.c.bf16 %v7002, %v6994
    %v7011 = vpack.c.bf16 %v7003, %v6995
    %v7012 = vpack.c.bf16 %v7004, %v6996
    %v7013 = vpack.c.bf16 %v7005, %v6997
    %v7014 = vpack.c.bf16 %v7006, %v6998
    %v7015 = vld [vmem:[#allocation17] sm:$0xff]
    %v7016 = vld [vmem:[#allocation17 + $0x8] sm:$0xff]
    %v7017 = vld [vmem:[#allocation17 + $0x10] sm:$0xff]
    %v7018 = vld [vmem:[#allocation17 + $0x18] sm:$0xff]
    %v7019 = vld [vmem:[#allocation17 + $0x20] sm:$0xff]
    %v7020 = vld [vmem:[#allocation17 + $0x28] sm:$0xff]
    %v7021 = vld [vmem:[#allocation17 + $0x30] sm:$0xff]
    %v7022 = vld [vmem:[#allocation17 + $0x38] sm:$0xff]
    %v7023 = vld [vmem:[#allocation17 + $0x40] sm:$0xff]
    %v7024 = vld [vmem:[#allocation17 + $0x48] sm:$0xff]
    %v7025 = vld [vmem:[#allocation17 + $0x50] sm:$0xff]
    %v7026 = vld [vmem:[#allocation17 + $0x58] sm:$0xff]
    %v7027 = vld [vmem:[#allocation17 + $0x60] sm:$0xff]
    %v7028 = vld [vmem:[#allocation17 + $0x68] sm:$0xff]
    %v7029 = vld [vmem:[#allocation17 + $0x70] sm:$0xff]
    %v7030 = vld [vmem:[#allocation17 + $0x78] sm:$0xff]
    %v7031 = vld [vmem:[#allocation17 + $0x80] sm:$0xff]
    %v7032 = vld [vmem:[#allocation17 + $0x88] sm:$0xff]
    %v7033 = vld [vmem:[#allocation17 + $0x90] sm:$0xff]
    %v7034 = vld [vmem:[#allocation17 + $0x98] sm:$0xff]
    %v7035 = vld [vmem:[#allocation17 + $0xa0] sm:$0xff]
    %v7036 = vld [vmem:[#allocation17 + $0xa8] sm:$0xff]
    %v7037 = vld [vmem:[#allocation17 + $0xb0] sm:$0xff]
    %v7038 = vld [vmem:[#allocation17 + $0xb8] sm:$0xff]
    %v7039 = vld [vmem:[#allocation17 + $0xc0] sm:$0xff]
    %v7040 = vld [vmem:[#allocation17 + $0xc8] sm:$0xff]
    %v7041 = vld [vmem:[#allocation17 + $0xd0] sm:$0xff]
    %v7042 = vld [vmem:[#allocation17 + $0xd8] sm:$0xff]
    %v7043 = vld [vmem:[#allocation17 + $0xe0] sm:$0xff]
    %v7044 = vld [vmem:[#allocation17 + $0xe8] sm:$0xff]
    %v7045 = vld [vmem:[#allocation17 + $0xf0] sm:$0xff]
    %v7046 = vld [vmem:[#allocation17 + $0xf8] sm:$0xff]
    %v7047 = vld [vmem:[#allocation17 + $0x100] sm:$0xff]
    %v7048 = vld [vmem:[#allocation17 + $0x108] sm:$0xff]
    %v7049 = vld [vmem:[#allocation17 + $0x110] sm:$0xff]
    %v7050 = vld [vmem:[#allocation17 + $0x118] sm:$0xff]
    %v7051 = vld [vmem:[#allocation17 + $0x120] sm:$0xff]
    %v7052 = vld [vmem:[#allocation17 + $0x128] sm:$0xff]
    %v7053 = vld [vmem:[#allocation17 + $0x130] sm:$0xff]
    %v7054 = vld [vmem:[#allocation17 + $0x138] sm:$0xff]
    %v7055 = vld [vmem:[#allocation17 + $0x140] sm:$0xff]
    %v7056 = vld [vmem:[#allocation17 + $0x148] sm:$0xff]
    %v7057 = vld [vmem:[#allocation17 + $0x150] sm:$0xff]
    %v7058 = vld [vmem:[#allocation17 + $0x158] sm:$0xff]
    %v7059 = vld [vmem:[#allocation17 + $0x160] sm:$0xff]
    %v7060 = vld [vmem:[#allocation17 + $0x168] sm:$0xff]
    %v7061 = vld [vmem:[#allocation17 + $0x170] sm:$0xff]
    %v7062 = vld [vmem:[#allocation17 + $0x178] sm:$0xff]
    %v7063 = vld [vmem:[#allocation17 + $0x180] sm:$0xff]
    %v7064 = vld [vmem:[#allocation17 + $0x188] sm:$0xff]
    %v7065 = vld [vmem:[#allocation17 + $0x190] sm:$0xff]
    %v7066 = vld [vmem:[#allocation17 + $0x198] sm:$0xff]
    %v7067 = vld [vmem:[#allocation17 + $0x1a0] sm:$0xff]
    %v7068 = vld [vmem:[#allocation17 + $0x1a8] sm:$0xff]
    %v7069 = vld [vmem:[#allocation17 + $0x1b0] sm:$0xff]
    %v7070 = vld [vmem:[#allocation17 + $0x1b8] sm:$0xff]
    %v7071 = vld [vmem:[#allocation17 + $0x1c0] sm:$0xff]
    %v7072 = vld [vmem:[#allocation17 + $0x1c8] sm:$0xff]
    %v7073 = vld [vmem:[#allocation17 + $0x1d0] sm:$0xff]
    %v7074 = vld [vmem:[#allocation17 + $0x1d8] sm:$0xff]
    %v7075 = vld [vmem:[#allocation17 + $0x1e0] sm:$0xff]
    %v7076 = vld [vmem:[#allocation17 + $0x1e8] sm:$0xff]
    %v7077 = vld [vmem:[#allocation17 + $0x1f0] sm:$0xff]
    %v7078 = vld [vmem:[#allocation17 + $0x1f8] sm:$0xff]
    %v7079 = vld [vmem:[#allocation17 + $0x200] sm:$0xff]
    %v7080 = vld [vmem:[#allocation17 + $0x208] sm:$0xff]
    %v7081 = vld [vmem:[#allocation17 + $0x210] sm:$0xff]
    %v7082 = vld [vmem:[#allocation17 + $0x218] sm:$0xff]
    %v7083 = vld [vmem:[#allocation17 + $0x220] sm:$0xff]
    %v7084 = vld [vmem:[#allocation17 + $0x228] sm:$0xff]
    %v7085 = vld [vmem:[#allocation17 + $0x230] sm:$0xff]
    %v7086 = vld [vmem:[#allocation17 + $0x238] sm:$0xff]
    %v7087 = vld [vmem:[#allocation17 + $0x240] sm:$0xff]
    %v7088 = vld [vmem:[#allocation17 + $0x248] sm:$0xff]
    %v7089 = vld [vmem:[#allocation17 + $0x250] sm:$0xff]
    %v7090 = vld [vmem:[#allocation17 + $0x258] sm:$0xff]
    %v7091 = vld [vmem:[#allocation17 + $0x260] sm:$0xff]
    %v7092 = vld [vmem:[#allocation17 + $0x268] sm:$0xff]
    %v7093 = vld [vmem:[#allocation17 + $0x270] sm:$0xff]
    %v7094 = vld [vmem:[#allocation17 + $0x278] sm:$0xff]
    %v7095 = vld [vmem:[#allocation17 + $0x280] sm:$0xff]
    %v7096 = vld [vmem:[#allocation17 + $0x288] sm:$0xff]
    %v7097 = vld [vmem:[#allocation17 + $0x290] sm:$0xff]
    %v7098 = vld [vmem:[#allocation17 + $0x298] sm:$0xff]
    %v7099 = vld [vmem:[#allocation17 + $0x2a0] sm:$0xff]
    %v7100 = vld [vmem:[#allocation17 + $0x2a8] sm:$0xff]
    %v7101 = vld [vmem:[#allocation17 + $0x2b0] sm:$0xff]
    %v7102 = vld [vmem:[#allocation17 + $0x2b8] sm:$0xff]
    %v7103 = vld [vmem:[#allocation17 + $0x2c0] sm:$0xff]
    %v7104 = vld [vmem:[#allocation17 + $0x2c8] sm:$0xff]
    %v7105 = vld [vmem:[#allocation17 + $0x2d0] sm:$0xff]
    %v7106 = vld [vmem:[#allocation17 + $0x2d8] sm:$0xff]
    %v7107 = vld [vmem:[#allocation17 + $0x2e0] sm:$0xff]
    %v7108 = vld [vmem:[#allocation17 + $0x2e8] sm:$0xff]
    %v7109 = vld [vmem:[#allocation17 + $0x2f0] sm:$0xff]
    %v7110 = vld [vmem:[#allocation17 + $0x2f8] sm:$0xff]
    %v7111 = vld [vmem:[#allocation17 + $0x300] sm:$0xff]
    %v7112 = vld [vmem:[#allocation17 + $0x308] sm:$0xff]
    %v7113 = vld [vmem:[#allocation17 + $0x310] sm:$0xff]
    %v7114 = vld [vmem:[#allocation17 + $0x318] sm:$0xff]
    %v7115 = vld [vmem:[#allocation17 + $0x320] sm:$0xff]
    %v7116 = vld [vmem:[#allocation17 + $0x328] sm:$0xff]
    %v7117 = vld [vmem:[#allocation17 + $0x330] sm:$0xff]
    %v7118 = vld [vmem:[#allocation17 + $0x338] sm:$0xff]
    %v7119 = vld [vmem:[#allocation17 + $0x340] sm:$0xff]
    %v7120 = vld [vmem:[#allocation17 + $0x348] sm:$0xff]
    %v7121 = vld [vmem:[#allocation17 + $0x350] sm:$0xff]
    %v7122 = vld [vmem:[#allocation17 + $0x358] sm:$0xff]
    %v7123 = vld [vmem:[#allocation17 + $0x360] sm:$0xff]
    %v7124 = vld [vmem:[#allocation17 + $0x368] sm:$0xff]
    %v7125 = vld [vmem:[#allocation17 + $0x370] sm:$0xff]
    %v7126 = vld [vmem:[#allocation17 + $0x378] sm:$0xff]
    %v7127 = vld [vmem:[#allocation17 + $0x380] sm:$0xff]
    %v7128 = vld [vmem:[#allocation17 + $0x388] sm:$0xff]
    %v7129 = vld [vmem:[#allocation17 + $0x390] sm:$0xff]
    %v7130 = vld [vmem:[#allocation17 + $0x398] sm:$0xff]
    %v7131 = vld [vmem:[#allocation17 + $0x3a0] sm:$0xff]
    %v7132 = vld [vmem:[#allocation17 + $0x3a8] sm:$0xff]
    %v7133 = vld [vmem:[#allocation17 + $0x3b0] sm:$0xff]
    %v7134 = vld [vmem:[#allocation17 + $0x3b8] sm:$0xff]
    %v7135 = vld [vmem:[#allocation17 + $0x3c0] sm:$0xff]
    %v7136 = vld [vmem:[#allocation17 + $0x3c8] sm:$0xff]
    %v7137 = vld [vmem:[#allocation17 + $0x3d0] sm:$0xff]
    %v7138 = vld [vmem:[#allocation17 + $0x3d8] sm:$0xff]
    %v7139 = vld [vmem:[#allocation17 + $0x3e0] sm:$0xff]
    %v7140 = vld [vmem:[#allocation17 + $0x3e8] sm:$0xff]
    %v7141 = vld [vmem:[#allocation17 + $0x3f0] sm:$0xff]
    %v7142 = vld [vmem:[#allocation17 + $0x3f8] sm:$0xff]
    %v7143 = vld [vmem:[#allocation17 + $0x400] sm:$0xff]
    %v7144 = vld [vmem:[#allocation17 + $0x408] sm:$0xff]
    %v7145 = vld [vmem:[#allocation17 + $0x410] sm:$0xff]
    %v7146 = vld [vmem:[#allocation17 + $0x418] sm:$0xff]
    %v7147 = vld [vmem:[#allocation17 + $0x420] sm:$0xff]
    %v7148 = vld [vmem:[#allocation17 + $0x428] sm:$0xff]
    %v7149 = vld [vmem:[#allocation17 + $0x430] sm:$0xff]
    %v7150 = vld [vmem:[#allocation17 + $0x438] sm:$0xff]
    %v7151 = vld [vmem:[#allocation17 + $0x440] sm:$0xff]
    %v7152 = vld [vmem:[#allocation17 + $0x448] sm:$0xff]
    %v7153 = vld [vmem:[#allocation17 + $0x450] sm:$0xff]
    %v7154 = vld [vmem:[#allocation17 + $0x458] sm:$0xff]
    %v7155 = vld [vmem:[#allocation17 + $0x460] sm:$0xff]
    %v7156 = vld [vmem:[#allocation17 + $0x468] sm:$0xff]
    %v7157 = vld [vmem:[#allocation17 + $0x470] sm:$0xff]
    %v7158 = vld [vmem:[#allocation17 + $0x478] sm:$0xff]
    %v7159 = vld [vmem:[#allocation17 + $0x480] sm:$0xff]
    %v7160 = vld [vmem:[#allocation17 + $0x488] sm:$0xff]
    %v7161 = vld [vmem:[#allocation17 + $0x490] sm:$0xff]
    %v7162 = vld [vmem:[#allocation17 + $0x498] sm:$0xff]
    %v7163 = vld [vmem:[#allocation17 + $0x4a0] sm:$0xff]
    %v7164 = vld [vmem:[#allocation17 + $0x4a8] sm:$0xff]
    %v7165 = vld [vmem:[#allocation17 + $0x4b0] sm:$0xff]
    %v7166 = vld [vmem:[#allocation17 + $0x4b8] sm:$0xff]
    %v7167 = vld [vmem:[#allocation17 + $0x4c0] sm:$0xff]
    %v7168 = vld [vmem:[#allocation17 + $0x4c8] sm:$0xff]
    %v7169 = vld [vmem:[#allocation17 + $0x4d0] sm:$0xff]
    %v7170 = vld [vmem:[#allocation17 + $0x4d8] sm:$0xff]
    %v7171 = vld [vmem:[#allocation17 + $0x4e0] sm:$0xff]
    %v7172 = vld [vmem:[#allocation17 + $0x4e8] sm:$0xff]
    %v7173 = vld [vmem:[#allocation17 + $0x4f0] sm:$0xff]
    %v7174 = vld [vmem:[#allocation17 + $0x4f8] sm:$0xff]
    %v7175 = vld [vmem:[#allocation17 + $0x500] sm:$0xff]
    %v7176 = vld [vmem:[#allocation17 + $0x508] sm:$0xff]
    %v7177 = vld [vmem:[#allocation17 + $0x510] sm:$0xff]
    %v7178 = vld [vmem:[#allocation17 + $0x518] sm:$0xff]
    %v7179 = vld [vmem:[#allocation17 + $0x520] sm:$0xff]
    %v7180 = vld [vmem:[#allocation17 + $0x528] sm:$0xff]
    %v7181 = vld [vmem:[#allocation17 + $0x530] sm:$0xff]
    %v7182 = vld [vmem:[#allocation17 + $0x538] sm:$0xff]
    %v7183 = vld [vmem:[#allocation17 + $0x540] sm:$0xff]
    %v7184 = vld [vmem:[#allocation17 + $0x548] sm:$0xff]
    %v7185 = vld [vmem:[#allocation17 + $0x550] sm:$0xff]
    %v7186 = vld [vmem:[#allocation17 + $0x558] sm:$0xff]
    %v7187 = vld [vmem:[#allocation17 + $0x560] sm:$0xff]
    %v7188 = vld [vmem:[#allocation17 + $0x568] sm:$0xff]
    %v7189 = vld [vmem:[#allocation17 + $0x570] sm:$0xff]
    %v7190 = vld [vmem:[#allocation17 + $0x578] sm:$0xff]
    %v7191 = vld [vmem:[#allocation17 + $0x580] sm:$0xff]
    %v7192 = vld [vmem:[#allocation17 + $0x588] sm:$0xff]
    %v7193 = vld [vmem:[#allocation17 + $0x590] sm:$0xff]
    %v7194 = vld [vmem:[#allocation17 + $0x598] sm:$0xff]
    %v7195 = vld [vmem:[#allocation17 + $0x5a0] sm:$0xff]
    %v7196 = vld [vmem:[#allocation17 + $0x5a8] sm:$0xff]
    %v7197 = vld [vmem:[#allocation17 + $0x5b0] sm:$0xff]
    %v7198 = vld [vmem:[#allocation17 + $0x5b8] sm:$0xff]
    %v7199 = vld [vmem:[#allocation17 + $0x5c0] sm:$0xff]
    %v7200 = vld [vmem:[#allocation17 + $0x5c8] sm:$0xff]
    %v7201 = vld [vmem:[#allocation17 + $0x5d0] sm:$0xff]
    %v7202 = vld [vmem:[#allocation17 + $0x5d8] sm:$0xff]
    %v7203 = vld [vmem:[#allocation17 + $0x5e0] sm:$0xff]
    %v7204 = vld [vmem:[#allocation17 + $0x5e8] sm:$0xff]
    %v7205 = vld [vmem:[#allocation17 + $0x5f0] sm:$0xff]
    %v7206 = vld [vmem:[#allocation17 + $0x5f8] sm:$0xff]
    %v7207 = vld [vmem:[#allocation17 + $0x600] sm:$0xff]
    %v7208 = vld [vmem:[#allocation17 + $0x608] sm:$0xff]
    %v7209 = vld [vmem:[#allocation17 + $0x610] sm:$0xff]
    %v7210 = vld [vmem:[#allocation17 + $0x618] sm:$0xff]
    %v7211 = vld [vmem:[#allocation17 + $0x620] sm:$0xff]
    %v7212 = vld [vmem:[#allocation17 + $0x628] sm:$0xff]
    %v7213 = vld [vmem:[#allocation17 + $0x630] sm:$0xff]
    %v7214 = vld [vmem:[#allocation17 + $0x638] sm:$0xff]
    %v7215 = vld [vmem:[#allocation17 + $0x640] sm:$0xff]
    %v7216 = vld [vmem:[#allocation17 + $0x648] sm:$0xff]
    %v7217 = vld [vmem:[#allocation17 + $0x650] sm:$0xff]
    %v7218 = vld [vmem:[#allocation17 + $0x658] sm:$0xff]
    %v7219 = vld [vmem:[#allocation17 + $0x660] sm:$0xff]
    %v7220 = vld [vmem:[#allocation17 + $0x668] sm:$0xff]
    %v7221 = vld [vmem:[#allocation17 + $0x670] sm:$0xff]
    %v7222 = vld [vmem:[#allocation17 + $0x678] sm:$0xff]
    %v7223 = vld [vmem:[#allocation17 + $0x680] sm:$0xff]
    %v7224 = vld [vmem:[#allocation17 + $0x688] sm:$0xff]
    %v7225 = vld [vmem:[#allocation17 + $0x690] sm:$0xff]
    %v7226 = vld [vmem:[#allocation17 + $0x698] sm:$0xff]
    %v7227 = vld [vmem:[#allocation17 + $0x6a0] sm:$0xff]
    %v7228 = vld [vmem:[#allocation17 + $0x6a8] sm:$0xff]
    %v7229 = vld [vmem:[#allocation17 + $0x6b0] sm:$0xff]
    %v7230 = vld [vmem:[#allocation17 + $0x6b8] sm:$0xff]
    %v7231 = vld [vmem:[#allocation17 + $0x6c0] sm:$0xff]
    %v7232 = vld [vmem:[#allocation17 + $0x6c8] sm:$0xff]
    %v7233 = vld [vmem:[#allocation17 + $0x6d0] sm:$0xff]
    %v7234 = vld [vmem:[#allocation17 + $0x6d8] sm:$0xff]
    %v7235 = vld [vmem:[#allocation17 + $0x6e0] sm:$0xff]
    %v7236 = vld [vmem:[#allocation17 + $0x6e8] sm:$0xff]
    %v7237 = vld [vmem:[#allocation17 + $0x6f0] sm:$0xff]
    %v7238 = vld [vmem:[#allocation17 + $0x6f8] sm:$0xff]
    %v7239 = vld [vmem:[#allocation17 + $0x700] sm:$0xff]
    %v7240 = vld [vmem:[#allocation17 + $0x708] sm:$0xff]
    %v7241 = vld [vmem:[#allocation17 + $0x710] sm:$0xff]
    %v7242 = vld [vmem:[#allocation17 + $0x718] sm:$0xff]
    %v7243 = vld [vmem:[#allocation17 + $0x720] sm:$0xff]
    %v7244 = vld [vmem:[#allocation17 + $0x728] sm:$0xff]
    %v7245 = vld [vmem:[#allocation17 + $0x730] sm:$0xff]
    %v7246 = vld [vmem:[#allocation17 + $0x738] sm:$0xff]
    %v7247 = vld [vmem:[#allocation17 + $0x740] sm:$0xff]
    %v7248 = vld [vmem:[#allocation17 + $0x748] sm:$0xff]
    %v7249 = vld [vmem:[#allocation17 + $0x750] sm:$0xff]
    %v7250 = vld [vmem:[#allocation17 + $0x758] sm:$0xff]
    %v7251 = vld [vmem:[#allocation17 + $0x760] sm:$0xff]
    %v7252 = vld [vmem:[#allocation17 + $0x768] sm:$0xff]
    %v7253 = vld [vmem:[#allocation17 + $0x770] sm:$0xff]
    %v7254 = vld [vmem:[#allocation17 + $0x778] sm:$0xff]
    %v7255 = vld [vmem:[#allocation17 + $0x780] sm:$0xff]
    %v7256 = vld [vmem:[#allocation17 + $0x788] sm:$0xff]
    %v7257 = vld [vmem:[#allocation17 + $0x790] sm:$0xff]
    %v7258 = vld [vmem:[#allocation17 + $0x798] sm:$0xff]
    %v7259 = vld [vmem:[#allocation17 + $0x7a0] sm:$0xff]
    %v7260 = vld [vmem:[#allocation17 + $0x7a8] sm:$0xff]
    %v7261 = vld [vmem:[#allocation17 + $0x7b0] sm:$0xff]
    %v7262 = vld [vmem:[#allocation17 + $0x7b8] sm:$0xff]
    %v7263 = vld [vmem:[#allocation17 + $0x7c0] sm:$0xff]
    %v7264 = vld [vmem:[#allocation17 + $0x7c8] sm:$0xff]
    %v7265 = vld [vmem:[#allocation17 + $0x7d0] sm:$0xff]
    %v7266 = vld [vmem:[#allocation17 + $0x7d8] sm:$0xff]
    %v7267 = vld [vmem:[#allocation17 + $0x7e0] sm:$0xff]
    %v7268 = vld [vmem:[#allocation17 + $0x7e8] sm:$0xff]
    %v7269 = vld [vmem:[#allocation17 + $0x7f0] sm:$0xff]
    %v7270 = vld [vmem:[#allocation17 + $0x7f8] sm:$0xff]
    %v7271 = vld [vmem:[#allocation17 + $0x800] sm:$0xff]
    %v7272 = vld [vmem:[#allocation17 + $0x808] sm:$0xff]
    %v7273 = vld [vmem:[#allocation17 + $0x810] sm:$0xff]
    %v7274 = vld [vmem:[#allocation17 + $0x818] sm:$0xff]
    %v7275 = vld [vmem:[#allocation17 + $0x820] sm:$0xff]
    %v7276 = vld [vmem:[#allocation17 + $0x828] sm:$0xff]
    %v7277 = vld [vmem:[#allocation17 + $0x830] sm:$0xff]
    %v7278 = vld [vmem:[#allocation17 + $0x838] sm:$0xff]
    %v7279 = vld [vmem:[#allocation17 + $0x840] sm:$0xff]
    %v7280 = vld [vmem:[#allocation17 + $0x848] sm:$0xff]
    %v7281 = vld [vmem:[#allocation17 + $0x850] sm:$0xff]
    %v7282 = vld [vmem:[#allocation17 + $0x858] sm:$0xff]
    %v7283 = vld [vmem:[#allocation17 + $0x860] sm:$0xff]
    %v7284 = vld [vmem:[#allocation17 + $0x868] sm:$0xff]
    %v7285 = vld [vmem:[#allocation17 + $0x870] sm:$0xff]
    %v7286 = vld [vmem:[#allocation17 + $0x878] sm:$0xff]
    %v7287 = vld [vmem:[#allocation17 + $0x880] sm:$0xff]
    %v7288 = vld [vmem:[#allocation17 + $0x888] sm:$0xff]
    %v7289 = vld [vmem:[#allocation17 + $0x890] sm:$0xff]
    %v7290 = vld [vmem:[#allocation17 + $0x898] sm:$0xff]
    %v7291 = vld [vmem:[#allocation17 + $0x8a0] sm:$0xff]
    %v7292 = vld [vmem:[#allocation17 + $0x8a8] sm:$0xff]
    %v7293 = vld [vmem:[#allocation17 + $0x8b0] sm:$0xff]
    %v7294 = vld [vmem:[#allocation17 + $0x8b8] sm:$0xff]
    %v7295 = vld [vmem:[#allocation17 + $0x8c0] sm:$0xff]
    %v7296 = vld [vmem:[#allocation17 + $0x8c8] sm:$0xff]
    %v7297 = vld [vmem:[#allocation17 + $0x8d0] sm:$0xff]
    %v7298 = vld [vmem:[#allocation17 + $0x8d8] sm:$0xff]
    %v7299 = vld [vmem:[#allocation17 + $0x8e0] sm:$0xff]
    %v7300 = vld [vmem:[#allocation17 + $0x8e8] sm:$0xff]
    %v7301 = vld [vmem:[#allocation17 + $0x8f0] sm:$0xff]
    %v7302 = vld [vmem:[#allocation17 + $0x8f8] sm:$0xff]
    %v7303 = vld [vmem:[#allocation17 + $0x900] sm:$0xff]
    %v7304 = vld [vmem:[#allocation17 + $0x908] sm:$0xff]
    %v7305 = vld [vmem:[#allocation17 + $0x910] sm:$0xff]
    %v7306 = vld [vmem:[#allocation17 + $0x918] sm:$0xff]
    %v7307 = vld [vmem:[#allocation17 + $0x920] sm:$0xff]
    %v7308 = vld [vmem:[#allocation17 + $0x928] sm:$0xff]
    %v7309 = vld [vmem:[#allocation17 + $0x930] sm:$0xff]
    %v7310 = vld [vmem:[#allocation17 + $0x938] sm:$0xff]
    %v7311 = vld [vmem:[#allocation17 + $0x940] sm:$0xff]
    %v7312 = vld [vmem:[#allocation17 + $0x948] sm:$0xff]
    %v7313 = vld [vmem:[#allocation17 + $0x950] sm:$0xff]
    %v7314 = vld [vmem:[#allocation17 + $0x958] sm:$0xff]
    %v7315 = vld [vmem:[#allocation17 + $0x960] sm:$0xff]
    %v7316 = vld [vmem:[#allocation17 + $0x968] sm:$0xff]
    %v7317 = vld [vmem:[#allocation17 + $0x970] sm:$0xff]
    %v7318 = vld [vmem:[#allocation17 + $0x978] sm:$0xff]
    %v7319 = vld [vmem:[#allocation17 + $0x980] sm:$0xff]
    %v7320 = vld [vmem:[#allocation17 + $0x988] sm:$0xff]
    %v7321 = vld [vmem:[#allocation17 + $0x990] sm:$0xff]
    %v7322 = vld [vmem:[#allocation17 + $0x998] sm:$0xff]
    %v7323 = vld [vmem:[#allocation17 + $0x9a0] sm:$0xff]
    %v7324 = vld [vmem:[#allocation17 + $0x9a8] sm:$0xff]
    %v7325 = vld [vmem:[#allocation17 + $0x9b0] sm:$0xff]
    %v7326 = vld [vmem:[#allocation17 + $0x9b8] sm:$0xff]
    %v7327 = vld [vmem:[#allocation17 + $0x9c0] sm:$0xff]
    %v7328 = vld [vmem:[#allocation17 + $0x9c8] sm:$0xff]
    %v7329 = vld [vmem:[#allocation17 + $0x9d0] sm:$0xff]
    %v7330 = vld [vmem:[#allocation17 + $0x9d8] sm:$0xff]
    %v7331 = vld [vmem:[#allocation17 + $0x9e0] sm:$0xff]
    %v7332 = vld [vmem:[#allocation17 + $0x9e8] sm:$0xff]
    %v7333 = vld [vmem:[#allocation17 + $0x9f0] sm:$0xff]
    %v7334 = vld [vmem:[#allocation17 + $0x9f8] sm:$0xff]
    %v7335 = vld [vmem:[#allocation17 + $0xa00] sm:$0xff]
    %v7336 = vld [vmem:[#allocation17 + $0xa08] sm:$0xff]
    %v7337 = vld [vmem:[#allocation17 + $0xa10] sm:$0xff]
    %v7338 = vld [vmem:[#allocation17 + $0xa18] sm:$0xff]
    %v7339 = vld [vmem:[#allocation17 + $0xa20] sm:$0xff]
    %v7340 = vld [vmem:[#allocation17 + $0xa28] sm:$0xff]
    %v7341 = vld [vmem:[#allocation17 + $0xa30] sm:$0xff]
    %v7342 = vld [vmem:[#allocation17 + $0xa38] sm:$0xff]
    %v7343 = vld [vmem:[#allocation17 + $0xa40] sm:$0xff]
    %v7344 = vld [vmem:[#allocation17 + $0xa48] sm:$0xff]
    %v7345 = vld [vmem:[#allocation17 + $0xa50] sm:$0xff]
    %v7346 = vld [vmem:[#allocation17 + $0xa58] sm:$0xff]
    %v7347 = vld [vmem:[#allocation17 + $0xa60] sm:$0xff]
    %v7348 = vld [vmem:[#allocation17 + $0xa68] sm:$0xff]
    %v7349 = vld [vmem:[#allocation17 + $0xa70] sm:$0xff]
    %v7350 = vld [vmem:[#allocation17 + $0xa78] sm:$0xff]
    %v7351 = vld [vmem:[#allocation17 + $0xa80] sm:$0xff]
    %v7352 = vld [vmem:[#allocation17 + $0xa88] sm:$0xff]
    %v7353 = vld [vmem:[#allocation17 + $0xa90] sm:$0xff]
    %v7354 = vld [vmem:[#allocation17 + $0xa98] sm:$0xff]
    %v7355 = vld [vmem:[#allocation17 + $0xaa0] sm:$0xff]
    %v7356 = vld [vmem:[#allocation17 + $0xaa8] sm:$0xff]
    %v7357 = vld [vmem:[#allocation17 + $0xab0] sm:$0xff]
    %v7358 = vld [vmem:[#allocation17 + $0xab8] sm:$0xff]
    %v7359 = vld [vmem:[#allocation17 + $0xac0] sm:$0xff]
    %v7360 = vld [vmem:[#allocation17 + $0xac8] sm:$0xff]
    %v7361 = vld [vmem:[#allocation17 + $0xad0] sm:$0xff]
    %v7362 = vld [vmem:[#allocation17 + $0xad8] sm:$0xff]
    %v7363 = vld [vmem:[#allocation17 + $0xae0] sm:$0xff]
    %v7364 = vld [vmem:[#allocation17 + $0xae8] sm:$0xff]
    %v7365 = vld [vmem:[#allocation17 + $0xaf0] sm:$0xff]
    %v7366 = vld [vmem:[#allocation17 + $0xaf8] sm:$0xff]
    %v7367 = vld [vmem:[#allocation17 + $0xb00] sm:$0xff]
    %v7368 = vld [vmem:[#allocation17 + $0xb08] sm:$0xff]
    %v7369 = vld [vmem:[#allocation17 + $0xb10] sm:$0xff]
    %v7370 = vld [vmem:[#allocation17 + $0xb18] sm:$0xff]
    %v7371 = vld [vmem:[#allocation17 + $0xb20] sm:$0xff]
    %v7372 = vld [vmem:[#allocation17 + $0xb28] sm:$0xff]
    %v7373 = vld [vmem:[#allocation17 + $0xb30] sm:$0xff]
    %v7374 = vld [vmem:[#allocation17 + $0xb38] sm:$0xff]
    %v7375 = vld [vmem:[#allocation17 + $0xb40] sm:$0xff]
    %v7376 = vld [vmem:[#allocation17 + $0xb48] sm:$0xff]
    %v7377 = vld [vmem:[#allocation17 + $0xb50] sm:$0xff]
    %v7378 = vld [vmem:[#allocation17 + $0xb58] sm:$0xff]
    %v7379 = vld [vmem:[#allocation17 + $0xb60] sm:$0xff]
    %v7380 = vld [vmem:[#allocation17 + $0xb68] sm:$0xff]
    %v7381 = vld [vmem:[#allocation17 + $0xb70] sm:$0xff]
    %v7382 = vld [vmem:[#allocation17 + $0xb78] sm:$0xff]
    %v7383 = vld [vmem:[#allocation17 + $0xb80] sm:$0xff]
    %v7384 = vld [vmem:[#allocation17 + $0xb88] sm:$0xff]
    %v7385 = vld [vmem:[#allocation17 + $0xb90] sm:$0xff]
    %v7386 = vld [vmem:[#allocation17 + $0xb98] sm:$0xff]
    %v7387 = vld [vmem:[#allocation17 + $0xba0] sm:$0xff]
    %v7388 = vld [vmem:[#allocation17 + $0xba8] sm:$0xff]
    %v7389 = vld [vmem:[#allocation17 + $0xbb0] sm:$0xff]
    %v7390 = vld [vmem:[#allocation17 + $0xbb8] sm:$0xff]
    %v7391 = vld [vmem:[#allocation17 + $0xbc0] sm:$0xff]
    %v7392 = vld [vmem:[#allocation17 + $0xbc8] sm:$0xff]
    %v7393 = vld [vmem:[#allocation17 + $0xbd0] sm:$0xff]
    %v7394 = vld [vmem:[#allocation17 + $0xbd8] sm:$0xff]
    %v7395 = vld [vmem:[#allocation17 + $0xbe0] sm:$0xff]
    %v7396 = vld [vmem:[#allocation17 + $0xbe8] sm:$0xff]
    %v7397 = vld [vmem:[#allocation17 + $0xbf0] sm:$0xff]
    %v7398 = vld [vmem:[#allocation17 + $0xbf8] sm:$0xff]
    %v7399 = vunpack.c.l.s8.bf16 %v7015
    %v7400 = vunpack.c.l.s8.bf16 %v7016
    %v7401 = vunpack.c.l.s8.bf16 %v7017
    %v7402 = vunpack.c.l.s8.bf16 %v7018
    %v7403 = vunpack.c.l.s8.bf16 %v7019
    %v7404 = vunpack.c.l.s8.bf16 %v7020
    %v7405 = vunpack.c.l.s8.bf16 %v7021
    %v7406 = vunpack.c.l.s8.bf16 %v7022
    %v7407 = vunpack.c.l.s8.bf16 %v7023
    %v7408 = vunpack.c.l.s8.bf16 %v7024
    %v7409 = vunpack.c.l.s8.bf16 %v7025
    %v7410 = vunpack.c.l.s8.bf16 %v7026
    %v7411 = vunpack.c.h.s8.bf16 %v7015
    %v7412 = vunpack.c.h.s8.bf16 %v7016
    %v7413 = vunpack.c.h.s8.bf16 %v7017
    %v7414 = vunpack.c.h.s8.bf16 %v7018
    %v7415 = vunpack.c.h.s8.bf16 %v7019
    %v7416 = vunpack.c.h.s8.bf16 %v7020
    %v7417 = vunpack.c.h.s8.bf16 %v7021
    %v7418 = vunpack.c.h.s8.bf16 %v7022
    %v7419 = vunpack.c.h.s8.bf16 %v7023
    %v7420 = vunpack.c.h.s8.bf16 %v7024
    %v7421 = vunpack.c.h.s8.bf16 %v7025
    %v7422 = vunpack.c.h.s8.bf16 %v7026
    %v7423 = vunpack.c.l.s8.bf16 %v7027
    %v7424 = vunpack.c.l.s8.bf16 %v7028
    %v7425 = vunpack.c.l.s8.bf16 %v7029
    %v7426 = vunpack.c.l.s8.bf16 %v7030
    %v7427 = vunpack.c.l.s8.bf16 %v7031
    %v7428 = vunpack.c.l.s8.bf16 %v7032
    %v7429 = vunpack.c.l.s8.bf16 %v7033
    %v7430 = vunpack.c.l.s8.bf16 %v7034
    %v7431 = vunpack.c.l.s8.bf16 %v7035
    %v7432 = vunpack.c.l.s8.bf16 %v7036
    %v7433 = vunpack.c.l.s8.bf16 %v7037
    %v7434 = vunpack.c.l.s8.bf16 %v7038
    %v7435 = vunpack.c.h.s8.bf16 %v7027
    %v7436 = vunpack.c.h.s8.bf16 %v7028
    %v7437 = vunpack.c.h.s8.bf16 %v7029
    %v7438 = vunpack.c.h.s8.bf16 %v7030
    %v7439 = vunpack.c.h.s8.bf16 %v7031
    %v7440 = vunpack.c.h.s8.bf16 %v7032
    %v7441 = vunpack.c.h.s8.bf16 %v7033
    %v7442 = vunpack.c.h.s8.bf16 %v7034
    %v7443 = vunpack.c.h.s8.bf16 %v7035
    %v7444 = vunpack.c.h.s8.bf16 %v7036
    %v7445 = vunpack.c.h.s8.bf16 %v7037
    %v7446 = vunpack.c.h.s8.bf16 %v7038
    %v7447 = vunpack.c.l.s8.bf16 %v7039
    %v7448 = vunpack.c.l.s8.bf16 %v7040
    %v7449 = vunpack.c.l.s8.bf16 %v7041
    %v7450 = vunpack.c.l.s8.bf16 %v7042
    %v7451 = vunpack.c.l.s8.bf16 %v7043
    %v7452 = vunpack.c.l.s8.bf16 %v7044
    %v7453 = vunpack.c.l.s8.bf16 %v7045
    %v7454 = vunpack.c.l.s8.bf16 %v7046
    %v7455 = vunpack.c.l.s8.bf16 %v7047
    %v7456 = vunpack.c.l.s8.bf16 %v7048
    %v7457 = vunpack.c.l.s8.bf16 %v7049
    %v7458 = vunpack.c.l.s8.bf16 %v7050
    %v7459 = vunpack.c.h.s8.bf16 %v7039
    %v7460 = vunpack.c.h.s8.bf16 %v7040
    %v7461 = vunpack.c.h.s8.bf16 %v7041
    %v7462 = vunpack.c.h.s8.bf16 %v7042
    %v7463 = vunpack.c.h.s8.bf16 %v7043
    %v7464 = vunpack.c.h.s8.bf16 %v7044
    %v7465 = vunpack.c.h.s8.bf16 %v7045
    %v7466 = vunpack.c.h.s8.bf16 %v7046
    %v7467 = vunpack.c.h.s8.bf16 %v7047
    %v7468 = vunpack.c.h.s8.bf16 %v7048
    %v7469 = vunpack.c.h.s8.bf16 %v7049
    %v7470 = vunpack.c.h.s8.bf16 %v7050
    %v7471 = vunpack.c.l.s8.bf16 %v7051
    %v7472 = vunpack.c.l.s8.bf16 %v7052
    %v7473 = vunpack.c.l.s8.bf16 %v7053
    %v7474 = vunpack.c.l.s8.bf16 %v7054
    %v7475 = vunpack.c.l.s8.bf16 %v7055
    %v7476 = vunpack.c.l.s8.bf16 %v7056
    %v7477 = vunpack.c.l.s8.bf16 %v7057
    %v7478 = vunpack.c.l.s8.bf16 %v7058
    %v7479 = vunpack.c.l.s8.bf16 %v7059
    %v7480 = vunpack.c.l.s8.bf16 %v7060
    %v7481 = vunpack.c.l.s8.bf16 %v7061
    %v7482 = vunpack.c.l.s8.bf16 %v7062
    %v7483 = vunpack.c.h.s8.bf16 %v7051
    %v7484 = vunpack.c.h.s8.bf16 %v7052
    %v7485 = vunpack.c.h.s8.bf16 %v7053
    %v7486 = vunpack.c.h.s8.bf16 %v7054
    %v7487 = vunpack.c.h.s8.bf16 %v7055
    %v7488 = vunpack.c.h.s8.bf16 %v7056
    %v7489 = vunpack.c.h.s8.bf16 %v7057
    %v7490 = vunpack.c.h.s8.bf16 %v7058
    %v7491 = vunpack.c.h.s8.bf16 %v7059
    %v7492 = vunpack.c.h.s8.bf16 %v7060
    %v7493 = vunpack.c.h.s8.bf16 %v7061
    %v7494 = vunpack.c.h.s8.bf16 %v7062
    %v7495 = vunpack.c.l.s8.bf16 %v7063
    %v7496 = vunpack.c.l.s8.bf16 %v7064
    %v7497 = vunpack.c.l.s8.bf16 %v7065
    %v7498 = vunpack.c.l.s8.bf16 %v7066
    %v7499 = vunpack.c.l.s8.bf16 %v7067
    %v7500 = vunpack.c.l.s8.bf16 %v7068
    %v7501 = vunpack.c.l.s8.bf16 %v7069
    %v7502 = vunpack.c.l.s8.bf16 %v7070
    %v7503 = vunpack.c.l.s8.bf16 %v7071
    %v7504 = vunpack.c.l.s8.bf16 %v7072
    %v7505 = vunpack.c.l.s8.bf16 %v7073
    %v7506 = vunpack.c.l.s8.bf16 %v7074
    %v7507 = vunpack.c.h.s8.bf16 %v7063
    %v7508 = vunpack.c.h.s8.bf16 %v7064
    %v7509 = vunpack.c.h.s8.bf16 %v7065
    %v7510 = vunpack.c.h.s8.bf16 %v7066
    %v7511 = vunpack.c.h.s8.bf16 %v7067
    %v7512 = vunpack.c.h.s8.bf16 %v7068
    %v7513 = vunpack.c.h.s8.bf16 %v7069
    %v7514 = vunpack.c.h.s8.bf16 %v7070
    %v7515 = vunpack.c.h.s8.bf16 %v7071
    %v7516 = vunpack.c.h.s8.bf16 %v7072
    %v7517 = vunpack.c.h.s8.bf16 %v7073
    %v7518 = vunpack.c.h.s8.bf16 %v7074
    %v7519 = vunpack.c.l.s8.bf16 %v7075
    %v7520 = vunpack.c.l.s8.bf16 %v7076
    %v7521 = vunpack.c.l.s8.bf16 %v7077
    %v7522 = vunpack.c.l.s8.bf16 %v7078
    %v7523 = vunpack.c.l.s8.bf16 %v7079
    %v7524 = vunpack.c.l.s8.bf16 %v7080
    %v7525 = vunpack.c.l.s8.bf16 %v7081
    %v7526 = vunpack.c.l.s8.bf16 %v7082
    %v7527 = vunpack.c.l.s8.bf16 %v7083
    %v7528 = vunpack.c.l.s8.bf16 %v7084
    %v7529 = vunpack.c.l.s8.bf16 %v7085
    %v7530 = vunpack.c.l.s8.bf16 %v7086
    %v7531 = vunpack.c.h.s8.bf16 %v7075
    %v7532 = vunpack.c.h.s8.bf16 %v7076
    %v7533 = vunpack.c.h.s8.bf16 %v7077
    %v7534 = vunpack.c.h.s8.bf16 %v7078
    %v7535 = vunpack.c.h.s8.bf16 %v7079
    %v7536 = vunpack.c.h.s8.bf16 %v7080
    %v7537 = vunpack.c.h.s8.bf16 %v7081
    %v7538 = vunpack.c.h.s8.bf16 %v7082
    %v7539 = vunpack.c.h.s8.bf16 %v7083
    %v7540 = vunpack.c.h.s8.bf16 %v7084
    %v7541 = vunpack.c.h.s8.bf16 %v7085
    %v7542 = vunpack.c.h.s8.bf16 %v7086
    %v7543 = vunpack.c.l.s8.bf16 %v7087
    %v7544 = vunpack.c.l.s8.bf16 %v7088
    %v7545 = vunpack.c.l.s8.bf16 %v7089
    %v7546 = vunpack.c.l.s8.bf16 %v7090
    %v7547 = vunpack.c.l.s8.bf16 %v7091
    %v7548 = vunpack.c.l.s8.bf16 %v7092
    %v7549 = vunpack.c.l.s8.bf16 %v7093
    %v7550 = vunpack.c.l.s8.bf16 %v7094
    %v7551 = vunpack.c.l.s8.bf16 %v7095
    %v7552 = vunpack.c.l.s8.bf16 %v7096
    %v7553 = vunpack.c.l.s8.bf16 %v7097
    %v7554 = vunpack.c.l.s8.bf16 %v7098
    %v7555 = vunpack.c.h.s8.bf16 %v7087
    %v7556 = vunpack.c.h.s8.bf16 %v7088
    %v7557 = vunpack.c.h.s8.bf16 %v7089
    %v7558 = vunpack.c.h.s8.bf16 %v7090
    %v7559 = vunpack.c.h.s8.bf16 %v7091
    %v7560 = vunpack.c.h.s8.bf16 %v7092
    %v7561 = vunpack.c.h.s8.bf16 %v7093
    %v7562 = vunpack.c.h.s8.bf16 %v7094
    %v7563 = vunpack.c.h.s8.bf16 %v7095
    %v7564 = vunpack.c.h.s8.bf16 %v7096
    %v7565 = vunpack.c.h.s8.bf16 %v7097
    %v7566 = vunpack.c.h.s8.bf16 %v7098
    %v7567 = vunpack.c.l.s8.bf16 %v7099
    %v7568 = vunpack.c.l.s8.bf16 %v7100
    %v7569 = vunpack.c.l.s8.bf16 %v7101
    %v7570 = vunpack.c.l.s8.bf16 %v7102
    %v7571 = vunpack.c.l.s8.bf16 %v7103
    %v7572 = vunpack.c.l.s8.bf16 %v7104
    %v7573 = vunpack.c.l.s8.bf16 %v7105
    %v7574 = vunpack.c.l.s8.bf16 %v7106
    %v7575 = vunpack.c.l.s8.bf16 %v7107
    %v7576 = vunpack.c.l.s8.bf16 %v7108
    %v7577 = vunpack.c.l.s8.bf16 %v7109
    %v7578 = vunpack.c.l.s8.bf16 %v7110
    %v7579 = vunpack.c.h.s8.bf16 %v7099
    %v7580 = vunpack.c.h.s8.bf16 %v7100
    %v7581 = vunpack.c.h.s8.bf16 %v7101
    %v7582 = vunpack.c.h.s8.bf16 %v7102
    %v7583 = vunpack.c.h.s8.bf16 %v7103
    %v7584 = vunpack.c.h.s8.bf16 %v7104
    %v7585 = vunpack.c.h.s8.bf16 %v7105
    %v7586 = vunpack.c.h.s8.bf16 %v7106
    %v7587 = vunpack.c.h.s8.bf16 %v7107
    %v7588 = vunpack.c.h.s8.bf16 %v7108
    %v7589 = vunpack.c.h.s8.bf16 %v7109
    %v7590 = vunpack.c.h.s8.bf16 %v7110
    %v7591 = vunpack.c.l.s8.bf16 %v7111
    %v7592 = vunpack.c.l.s8.bf16 %v7112
    %v7593 = vunpack.c.l.s8.bf16 %v7113
    %v7594 = vunpack.c.l.s8.bf16 %v7114
    %v7595 = vunpack.c.l.s8.bf16 %v7115
    %v7596 = vunpack.c.l.s8.bf16 %v7116
    %v7597 = vunpack.c.l.s8.bf16 %v7117
    %v7598 = vunpack.c.l.s8.bf16 %v7118
    %v7599 = vunpack.c.l.s8.bf16 %v7119
    %v7600 = vunpack.c.l.s8.bf16 %v7120
    %v7601 = vunpack.c.l.s8.bf16 %v7121
    %v7602 = vunpack.c.l.s8.bf16 %v7122
    %v7603 = vunpack.c.h.s8.bf16 %v7111
    %v7604 = vunpack.c.h.s8.bf16 %v7112
    %v7605 = vunpack.c.h.s8.bf16 %v7113
    %v7606 = vunpack.c.h.s8.bf16 %v7114
    %v7607 = vunpack.c.h.s8.bf16 %v7115
    %v7608 = vunpack.c.h.s8.bf16 %v7116
    %v7609 = vunpack.c.h.s8.bf16 %v7117
    %v7610 = vunpack.c.h.s8.bf16 %v7118
    %v7611 = vunpack.c.h.s8.bf16 %v7119
    %v7612 = vunpack.c.h.s8.bf16 %v7120
    %v7613 = vunpack.c.h.s8.bf16 %v7121
    %v7614 = vunpack.c.h.s8.bf16 %v7122
    %v7615 = vunpack.c.l.s8.bf16 %v7123
    %v7616 = vunpack.c.l.s8.bf16 %v7124
    %v7617 = vunpack.c.l.s8.bf16 %v7125
    %v7618 = vunpack.c.l.s8.bf16 %v7126
    %v7619 = vunpack.c.l.s8.bf16 %v7127
    %v7620 = vunpack.c.l.s8.bf16 %v7128
    %v7621 = vunpack.c.l.s8.bf16 %v7129
    %v7622 = vunpack.c.l.s8.bf16 %v7130
    %v7623 = vunpack.c.l.s8.bf16 %v7131
    %v7624 = vunpack.c.l.s8.bf16 %v7132
    %v7625 = vunpack.c.l.s8.bf16 %v7133
    %v7626 = vunpack.c.l.s8.bf16 %v7134
    %v7627 = vunpack.c.h.s8.bf16 %v7123
    %v7628 = vunpack.c.h.s8.bf16 %v7124
    %v7629 = vunpack.c.h.s8.bf16 %v7125
    %v7630 = vunpack.c.h.s8.bf16 %v7126
    %v7631 = vunpack.c.h.s8.bf16 %v7127
    %v7632 = vunpack.c.h.s8.bf16 %v7128
    %v7633 = vunpack.c.h.s8.bf16 %v7129
    %v7634 = vunpack.c.h.s8.bf16 %v7130
    %v7635 = vunpack.c.h.s8.bf16 %v7131
    %v7636 = vunpack.c.h.s8.bf16 %v7132
    %v7637 = vunpack.c.h.s8.bf16 %v7133
    %v7638 = vunpack.c.h.s8.bf16 %v7134
    %v7639 = vunpack.c.l.s8.bf16 %v7135
    %v7640 = vunpack.c.l.s8.bf16 %v7136
    %v7641 = vunpack.c.l.s8.bf16 %v7137
    %v7642 = vunpack.c.l.s8.bf16 %v7138
    %v7643 = vunpack.c.l.s8.bf16 %v7139
    %v7644 = vunpack.c.l.s8.bf16 %v7140
    %v7645 = vunpack.c.l.s8.bf16 %v7141
    %v7646 = vunpack.c.l.s8.bf16 %v7142
    %v7647 = vunpack.c.l.s8.bf16 %v7143
    %v7648 = vunpack.c.l.s8.bf16 %v7144
    %v7649 = vunpack.c.l.s8.bf16 %v7145
    %v7650 = vunpack.c.l.s8.bf16 %v7146
    %v7651 = vunpack.c.h.s8.bf16 %v7135
    %v7652 = vunpack.c.h.s8.bf16 %v7136
    %v7653 = vunpack.c.h.s8.bf16 %v7137
    %v7654 = vunpack.c.h.s8.bf16 %v7138
    %v7655 = vunpack.c.h.s8.bf16 %v7139
    %v7656 = vunpack.c.h.s8.bf16 %v7140
    %v7657 = vunpack.c.h.s8.bf16 %v7141
    %v7658 = vunpack.c.h.s8.bf16 %v7142
    %v7659 = vunpack.c.h.s8.bf16 %v7143
    %v7660 = vunpack.c.h.s8.bf16 %v7144
    %v7661 = vunpack.c.h.s8.bf16 %v7145
    %v7662 = vunpack.c.h.s8.bf16 %v7146
    %v7663 = vunpack.c.l.s8.bf16 %v7147
    %v7664 = vunpack.c.l.s8.bf16 %v7148
    %v7665 = vunpack.c.l.s8.bf16 %v7149
    %v7666 = vunpack.c.l.s8.bf16 %v7150
    %v7667 = vunpack.c.l.s8.bf16 %v7151
    %v7668 = vunpack.c.l.s8.bf16 %v7152
    %v7669 = vunpack.c.l.s8.bf16 %v7153
    %v7670 = vunpack.c.l.s8.bf16 %v7154
    %v7671 = vunpack.c.l.s8.bf16 %v7155
    %v7672 = vunpack.c.l.s8.bf16 %v7156
    %v7673 = vunpack.c.l.s8.bf16 %v7157
    %v7674 = vunpack.c.l.s8.bf16 %v7158
    %v7675 = vunpack.c.h.s8.bf16 %v7147
    %v7676 = vunpack.c.h.s8.bf16 %v7148
    %v7677 = vunpack.c.h.s8.bf16 %v7149
    %v7678 = vunpack.c.h.s8.bf16 %v7150
    %v7679 = vunpack.c.h.s8.bf16 %v7151
    %v7680 = vunpack.c.h.s8.bf16 %v7152
    %v7681 = vunpack.c.h.s8.bf16 %v7153
    %v7682 = vunpack.c.h.s8.bf16 %v7154
    %v7683 = vunpack.c.h.s8.bf16 %v7155
    %v7684 = vunpack.c.h.s8.bf16 %v7156
    %v7685 = vunpack.c.h.s8.bf16 %v7157
    %v7686 = vunpack.c.h.s8.bf16 %v7158
    %v7687 = vunpack.c.l.s8.bf16 %v7159
    %v7688 = vunpack.c.l.s8.bf16 %v7160
    %v7689 = vunpack.c.l.s8.bf16 %v7161
    %v7690 = vunpack.c.l.s8.bf16 %v7162
    %v7691 = vunpack.c.l.s8.bf16 %v7163
    %v7692 = vunpack.c.l.s8.bf16 %v7164
    %v7693 = vunpack.c.l.s8.bf16 %v7165
    %v7694 = vunpack.c.l.s8.bf16 %v7166
    %v7695 = vunpack.c.l.s8.bf16 %v7167
    %v7696 = vunpack.c.l.s8.bf16 %v7168
    %v7697 = vunpack.c.l.s8.bf16 %v7169
    %v7698 = vunpack.c.l.s8.bf16 %v7170
    %v7699 = vunpack.c.h.s8.bf16 %v7159
    %v7700 = vunpack.c.h.s8.bf16 %v7160
    %v7701 = vunpack.c.h.s8.bf16 %v7161
    %v7702 = vunpack.c.h.s8.bf16 %v7162
    %v7703 = vunpack.c.h.s8.bf16 %v7163
    %v7704 = vunpack.c.h.s8.bf16 %v7164
    %v7705 = vunpack.c.h.s8.bf16 %v7165
    %v7706 = vunpack.c.h.s8.bf16 %v7166
    %v7707 = vunpack.c.h.s8.bf16 %v7167
    %v7708 = vunpack.c.h.s8.bf16 %v7168
    %v7709 = vunpack.c.h.s8.bf16 %v7169
    %v7710 = vunpack.c.h.s8.bf16 %v7170
    %v7711 = vunpack.c.l.s8.bf16 %v7171
    %v7712 = vunpack.c.l.s8.bf16 %v7172
    %v7713 = vunpack.c.l.s8.bf16 %v7173
    %v7714 = vunpack.c.l.s8.bf16 %v7174
    %v7715 = vunpack.c.l.s8.bf16 %v7175
    %v7716 = vunpack.c.l.s8.bf16 %v7176
    %v7717 = vunpack.c.l.s8.bf16 %v7177
    %v7718 = vunpack.c.l.s8.bf16 %v7178
    %v7719 = vunpack.c.l.s8.bf16 %v7179
    %v7720 = vunpack.c.l.s8.bf16 %v7180
    %v7721 = vunpack.c.l.s8.bf16 %v7181
    %v7722 = vunpack.c.l.s8.bf16 %v7182
    %v7723 = vunpack.c.h.s8.bf16 %v7171
    %v7724 = vunpack.c.h.s8.bf16 %v7172
    %v7725 = vunpack.c.h.s8.bf16 %v7173
    %v7726 = vunpack.c.h.s8.bf16 %v7174
    %v7727 = vunpack.c.h.s8.bf16 %v7175
    %v7728 = vunpack.c.h.s8.bf16 %v7176
    %v7729 = vunpack.c.h.s8.bf16 %v7177
    %v7730 = vunpack.c.h.s8.bf16 %v7178
    %v7731 = vunpack.c.h.s8.bf16 %v7179
    %v7732 = vunpack.c.h.s8.bf16 %v7180
    %v7733 = vunpack.c.h.s8.bf16 %v7181
    %v7734 = vunpack.c.h.s8.bf16 %v7182
    %v7735 = vunpack.c.l.s8.bf16 %v7183
    %v7736 = vunpack.c.l.s8.bf16 %v7184
    %v7737 = vunpack.c.l.s8.bf16 %v7185
    %v7738 = vunpack.c.l.s8.bf16 %v7186
    %v7739 = vunpack.c.l.s8.bf16 %v7187
    %v7740 = vunpack.c.l.s8.bf16 %v7188
    %v7741 = vunpack.c.l.s8.bf16 %v7189
    %v7742 = vunpack.c.l.s8.bf16 %v7190
    %v7743 = vunpack.c.l.s8.bf16 %v7191
    %v7744 = vunpack.c.l.s8.bf16 %v7192
    %v7745 = vunpack.c.l.s8.bf16 %v7193
    %v7746 = vunpack.c.l.s8.bf16 %v7194
    %v7747 = vunpack.c.h.s8.bf16 %v7183
    %v7748 = vunpack.c.h.s8.bf16 %v7184
    %v7749 = vunpack.c.h.s8.bf16 %v7185
    %v7750 = vunpack.c.h.s8.bf16 %v7186
    %v7751 = vunpack.c.h.s8.bf16 %v7187
    %v7752 = vunpack.c.h.s8.bf16 %v7188
    %v7753 = vunpack.c.h.s8.bf16 %v7189
    %v7754 = vunpack.c.h.s8.bf16 %v7190
    %v7755 = vunpack.c.h.s8.bf16 %v7191
    %v7756 = vunpack.c.h.s8.bf16 %v7192
    %v7757 = vunpack.c.h.s8.bf16 %v7193
    %v7758 = vunpack.c.h.s8.bf16 %v7194
    %v7759 = vunpack.c.l.s8.bf16 %v7195
    %v7760 = vunpack.c.l.s8.bf16 %v7196
    %v7761 = vunpack.c.l.s8.bf16 %v7197
    %v7762 = vunpack.c.l.s8.bf16 %v7198
    %v7763 = vunpack.c.l.s8.bf16 %v7199
    %v7764 = vunpack.c.l.s8.bf16 %v7200
    %v7765 = vunpack.c.l.s8.bf16 %v7201
    %v7766 = vunpack.c.l.s8.bf16 %v7202
    %v7767 = vunpack.c.l.s8.bf16 %v7203
    %v7768 = vunpack.c.l.s8.bf16 %v7204
    %v7769 = vunpack.c.l.s8.bf16 %v7205
    %v7770 = vunpack.c.l.s8.bf16 %v7206
    %v7771 = vunpack.c.h.s8.bf16 %v7195
    %v7772 = vunpack.c.h.s8.bf16 %v7196
    %v7773 = vunpack.c.h.s8.bf16 %v7197
    %v7774 = vunpack.c.h.s8.bf16 %v7198
    %v7775 = vunpack.c.h.s8.bf16 %v7199
    %v7776 = vunpack.c.h.s8.bf16 %v7200
    %v7777 = vunpack.c.h.s8.bf16 %v7201
    %v7778 = vunpack.c.h.s8.bf16 %v7202
    %v7779 = vunpack.c.h.s8.bf16 %v7203
    %v7780 = vunpack.c.h.s8.bf16 %v7204
    %v7781 = vunpack.c.h.s8.bf16 %v7205
    %v7782 = vunpack.c.h.s8.bf16 %v7206
    %v7783 = vunpack.c.l.s8.bf16 %v7207
    %v7784 = vunpack.c.l.s8.bf16 %v7208
    %v7785 = vunpack.c.l.s8.bf16 %v7209
    %v7786 = vunpack.c.l.s8.bf16 %v7210
    %v7787 = vunpack.c.l.s8.bf16 %v7211
    %v7788 = vunpack.c.l.s8.bf16 %v7212
    %v7789 = vunpack.c.l.s8.bf16 %v7213
    %v7790 = vunpack.c.l.s8.bf16 %v7214
    %v7791 = vunpack.c.l.s8.bf16 %v7215
    %v7792 = vunpack.c.l.s8.bf16 %v7216
    %v7793 = vunpack.c.l.s8.bf16 %v7217
    %v7794 = vunpack.c.l.s8.bf16 %v7218
    %v7795 = vunpack.c.h.s8.bf16 %v7207
    %v7796 = vunpack.c.h.s8.bf16 %v7208
    %v7797 = vunpack.c.h.s8.bf16 %v7209
    %v7798 = vunpack.c.h.s8.bf16 %v7210
    %v7799 = vunpack.c.h.s8.bf16 %v7211
    %v7800 = vunpack.c.h.s8.bf16 %v7212
    %v7801 = vunpack.c.h.s8.bf16 %v7213
    %v7802 = vunpack.c.h.s8.bf16 %v7214
    %v7803 = vunpack.c.h.s8.bf16 %v7215
    %v7804 = vunpack.c.h.s8.bf16 %v7216
    %v7805 = vunpack.c.h.s8.bf16 %v7217
    %v7806 = vunpack.c.h.s8.bf16 %v7218
    %v7807 = vunpack.c.l.s8.bf16 %v7219
    %v7808 = vunpack.c.l.s8.bf16 %v7220
    %v7809 = vunpack.c.l.s8.bf16 %v7221
    %v7810 = vunpack.c.l.s8.bf16 %v7222
    %v7811 = vunpack.c.l.s8.bf16 %v7223
    %v7812 = vunpack.c.l.s8.bf16 %v7224
    %v7813 = vunpack.c.l.s8.bf16 %v7225
    %v7814 = vunpack.c.l.s8.bf16 %v7226
    %v7815 = vunpack.c.l.s8.bf16 %v7227
    %v7816 = vunpack.c.l.s8.bf16 %v7228
    %v7817 = vunpack.c.l.s8.bf16 %v7229
    %v7818 = vunpack.c.l.s8.bf16 %v7230
    %v7819 = vunpack.c.h.s8.bf16 %v7219
    %v7820 = vunpack.c.h.s8.bf16 %v7220
    %v7821 = vunpack.c.h.s8.bf16 %v7221
    %v7822 = vunpack.c.h.s8.bf16 %v7222
    %v7823 = vunpack.c.h.s8.bf16 %v7223
    %v7824 = vunpack.c.h.s8.bf16 %v7224
    %v7825 = vunpack.c.h.s8.bf16 %v7225
    %v7826 = vunpack.c.h.s8.bf16 %v7226
    %v7827 = vunpack.c.h.s8.bf16 %v7227
    %v7828 = vunpack.c.h.s8.bf16 %v7228
    %v7829 = vunpack.c.h.s8.bf16 %v7229
    %v7830 = vunpack.c.h.s8.bf16 %v7230
    %v7831 = vunpack.c.l.s8.bf16 %v7231
    %v7832 = vunpack.c.l.s8.bf16 %v7232
    %v7833 = vunpack.c.l.s8.bf16 %v7233
    %v7834 = vunpack.c.l.s8.bf16 %v7234
    %v7835 = vunpack.c.l.s8.bf16 %v7235
    %v7836 = vunpack.c.l.s8.bf16 %v7236
    %v7837 = vunpack.c.l.s8.bf16 %v7237
    %v7838 = vunpack.c.l.s8.bf16 %v7238
    %v7839 = vunpack.c.l.s8.bf16 %v7239
    %v7840 = vunpack.c.l.s8.bf16 %v7240
    %v7841 = vunpack.c.l.s8.bf16 %v7241
    %v7842 = vunpack.c.l.s8.bf16 %v7242
    %v7843 = vunpack.c.h.s8.bf16 %v7231
    %v7844 = vunpack.c.h.s8.bf16 %v7232
    %v7845 = vunpack.c.h.s8.bf16 %v7233
    %v7846 = vunpack.c.h.s8.bf16 %v7234
    %v7847 = vunpack.c.h.s8.bf16 %v7235
    %v7848 = vunpack.c.h.s8.bf16 %v7236
    %v7849 = vunpack.c.h.s8.bf16 %v7237
    %v7850 = vunpack.c.h.s8.bf16 %v7238
    %v7851 = vunpack.c.h.s8.bf16 %v7239
    %v7852 = vunpack.c.h.s8.bf16 %v7240
    %v7853 = vunpack.c.h.s8.bf16 %v7241
    %v7854 = vunpack.c.h.s8.bf16 %v7242
    %v7855 = vunpack.c.l.s8.bf16 %v7243
    %v7856 = vunpack.c.l.s8.bf16 %v7244
    %v7857 = vunpack.c.l.s8.bf16 %v7245
    %v7858 = vunpack.c.l.s8.bf16 %v7246
    %v7859 = vunpack.c.l.s8.bf16 %v7247
    %v7860 = vunpack.c.l.s8.bf16 %v7248
    %v7861 = vunpack.c.l.s8.bf16 %v7249
    %v7862 = vunpack.c.l.s8.bf16 %v7250
    %v7863 = vunpack.c.l.s8.bf16 %v7251
    %v7864 = vunpack.c.l.s8.bf16 %v7252
    %v7865 = vunpack.c.l.s8.bf16 %v7253
    %v7866 = vunpack.c.l.s8.bf16 %v7254
    %v7867 = vunpack.c.h.s8.bf16 %v7243
    %v7868 = vunpack.c.h.s8.bf16 %v7244
    %v7869 = vunpack.c.h.s8.bf16 %v7245
    %v7870 = vunpack.c.h.s8.bf16 %v7246
    %v7871 = vunpack.c.h.s8.bf16 %v7247
    %v7872 = vunpack.c.h.s8.bf16 %v7248
    %v7873 = vunpack.c.h.s8.bf16 %v7249
    %v7874 = vunpack.c.h.s8.bf16 %v7250
    %v7875 = vunpack.c.h.s8.bf16 %v7251
    %v7876 = vunpack.c.h.s8.bf16 %v7252
    %v7877 = vunpack.c.h.s8.bf16 %v7253
    %v7878 = vunpack.c.h.s8.bf16 %v7254
    %v7879 = vunpack.c.l.s8.bf16 %v7255
    %v7880 = vunpack.c.l.s8.bf16 %v7256
    %v7881 = vunpack.c.l.s8.bf16 %v7257
    %v7882 = vunpack.c.l.s8.bf16 %v7258
    %v7883 = vunpack.c.l.s8.bf16 %v7259
    %v7884 = vunpack.c.l.s8.bf16 %v7260
    %v7885 = vunpack.c.l.s8.bf16 %v7261
    %v7886 = vunpack.c.l.s8.bf16 %v7262
    %v7887 = vunpack.c.l.s8.bf16 %v7263
    %v7888 = vunpack.c.l.s8.bf16 %v7264
    %v7889 = vunpack.c.l.s8.bf16 %v7265
    %v7890 = vunpack.c.l.s8.bf16 %v7266
    %v7891 = vunpack.c.h.s8.bf16 %v7255
    %v7892 = vunpack.c.h.s8.bf16 %v7256
    %v7893 = vunpack.c.h.s8.bf16 %v7257
    %v7894 = vunpack.c.h.s8.bf16 %v7258
    %v7895 = vunpack.c.h.s8.bf16 %v7259
    %v7896 = vunpack.c.h.s8.bf16 %v7260
    %v7897 = vunpack.c.h.s8.bf16 %v7261
    %v7898 = vunpack.c.h.s8.bf16 %v7262
    %v7899 = vunpack.c.h.s8.bf16 %v7263
    %v7900 = vunpack.c.h.s8.bf16 %v7264
    %v7901 = vunpack.c.h.s8.bf16 %v7265
    %v7902 = vunpack.c.h.s8.bf16 %v7266
    %v7903 = vunpack.c.l.s8.bf16 %v7267
    %v7904 = vunpack.c.l.s8.bf16 %v7268
    %v7905 = vunpack.c.l.s8.bf16 %v7269
    %v7906 = vunpack.c.l.s8.bf16 %v7270
    %v7907 = vunpack.c.l.s8.bf16 %v7271
    %v7908 = vunpack.c.l.s8.bf16 %v7272
    %v7909 = vunpack.c.l.s8.bf16 %v7273
    %v7910 = vunpack.c.l.s8.bf16 %v7274
    %v7911 = vunpack.c.l.s8.bf16 %v7275
    %v7912 = vunpack.c.l.s8.bf16 %v7276
    %v7913 = vunpack.c.l.s8.bf16 %v7277
    %v7914 = vunpack.c.l.s8.bf16 %v7278
    %v7915 = vunpack.c.h.s8.bf16 %v7267
    %v7916 = vunpack.c.h.s8.bf16 %v7268
    %v7917 = vunpack.c.h.s8.bf16 %v7269
    %v7918 = vunpack.c.h.s8.bf16 %v7270
    %v7919 = vunpack.c.h.s8.bf16 %v7271
    %v7920 = vunpack.c.h.s8.bf16 %v7272
    %v7921 = vunpack.c.h.s8.bf16 %v7273
    %v7922 = vunpack.c.h.s8.bf16 %v7274
    %v7923 = vunpack.c.h.s8.bf16 %v7275
    %v7924 = vunpack.c.h.s8.bf16 %v7276
    %v7925 = vunpack.c.h.s8.bf16 %v7277
    %v7926 = vunpack.c.h.s8.bf16 %v7278
    %v7927 = vunpack.c.l.s8.bf16 %v7279
    %v7928 = vunpack.c.l.s8.bf16 %v7280
    %v7929 = vunpack.c.l.s8.bf16 %v7281
    %v7930 = vunpack.c.l.s8.bf16 %v7282
    %v7931 = vunpack.c.l.s8.bf16 %v7283
    %v7932 = vunpack.c.l.s8.bf16 %v7284
    %v7933 = vunpack.c.l.s8.bf16 %v7285
    %v7934 = vunpack.c.l.s8.bf16 %v7286
    %v7935 = vunpack.c.l.s8.bf16 %v7287
    %v7936 = vunpack.c.l.s8.bf16 %v7288
    %v7937 = vunpack.c.l.s8.bf16 %v7289
    %v7938 = vunpack.c.l.s8.bf16 %v7290
    %v7939 = vunpack.c.h.s8.bf16 %v7279
    %v7940 = vunpack.c.h.s8.bf16 %v7280
    %v7941 = vunpack.c.h.s8.bf16 %v7281
    %v7942 = vunpack.c.h.s8.bf16 %v7282
    %v7943 = vunpack.c.h.s8.bf16 %v7283
    %v7944 = vunpack.c.h.s8.bf16 %v7284
    %v7945 = vunpack.c.h.s8.bf16 %v7285
    %v7946 = vunpack.c.h.s8.bf16 %v7286
    %v7947 = vunpack.c.h.s8.bf16 %v7287
    %v7948 = vunpack.c.h.s8.bf16 %v7288
    %v7949 = vunpack.c.h.s8.bf16 %v7289
    %v7950 = vunpack.c.h.s8.bf16 %v7290
    %v7951 = vunpack.c.l.s8.bf16 %v7291
    %v7952 = vunpack.c.l.s8.bf16 %v7292
    %v7953 = vunpack.c.l.s8.bf16 %v7293
    %v7954 = vunpack.c.l.s8.bf16 %v7294
    %v7955 = vunpack.c.l.s8.bf16 %v7295
    %v7956 = vunpack.c.l.s8.bf16 %v7296
    %v7957 = vunpack.c.l.s8.bf16 %v7297
    %v7958 = vunpack.c.l.s8.bf16 %v7298
    %v7959 = vunpack.c.l.s8.bf16 %v7299
    %v7960 = vunpack.c.l.s8.bf16 %v7300
    %v7961 = vunpack.c.l.s8.bf16 %v7301
    %v7962 = vunpack.c.l.s8.bf16 %v7302
    %v7963 = vunpack.c.h.s8.bf16 %v7291
    %v7964 = vunpack.c.h.s8.bf16 %v7292
    %v7965 = vunpack.c.h.s8.bf16 %v7293
    %v7966 = vunpack.c.h.s8.bf16 %v7294
    %v7967 = vunpack.c.h.s8.bf16 %v7295
    %v7968 = vunpack.c.h.s8.bf16 %v7296
    %v7969 = vunpack.c.h.s8.bf16 %v7297
    %v7970 = vunpack.c.h.s8.bf16 %v7298
    %v7971 = vunpack.c.h.s8.bf16 %v7299
    %v7972 = vunpack.c.h.s8.bf16 %v7300
    %v7973 = vunpack.c.h.s8.bf16 %v7301
    %v7974 = vunpack.c.h.s8.bf16 %v7302
    %v7975 = vunpack.c.l.s8.bf16 %v7303
    %v7976 = vunpack.c.l.s8.bf16 %v7304
    %v7977 = vunpack.c.l.s8.bf16 %v7305
    %v7978 = vunpack.c.l.s8.bf16 %v7306
    %v7979 = vunpack.c.l.s8.bf16 %v7307
    %v7980 = vunpack.c.l.s8.bf16 %v7308
    %v7981 = vunpack.c.l.s8.bf16 %v7309
    %v7982 = vunpack.c.l.s8.bf16 %v7310
    %v7983 = vunpack.c.l.s8.bf16 %v7311
    %v7984 = vunpack.c.l.s8.bf16 %v7312
    %v7985 = vunpack.c.l.s8.bf16 %v7313
    %v7986 = vunpack.c.l.s8.bf16 %v7314
    %v7987 = vunpack.c.h.s8.bf16 %v7303
    %v7988 = vunpack.c.h.s8.bf16 %v7304
    %v7989 = vunpack.c.h.s8.bf16 %v7305
    %v7990 = vunpack.c.h.s8.bf16 %v7306
    %v7991 = vunpack.c.h.s8.bf16 %v7307
    %v7992 = vunpack.c.h.s8.bf16 %v7308
    %v7993 = vunpack.c.h.s8.bf16 %v7309
    %v7994 = vunpack.c.h.s8.bf16 %v7310
    %v7995 = vunpack.c.h.s8.bf16 %v7311
    %v7996 = vunpack.c.h.s8.bf16 %v7312
    %v7997 = vunpack.c.h.s8.bf16 %v7313
    %v7998 = vunpack.c.h.s8.bf16 %v7314
    %v7999 = vunpack.c.l.s8.bf16 %v7315
    %v8000 = vunpack.c.l.s8.bf16 %v7316
    %v8001 = vunpack.c.l.s8.bf16 %v7317
    %v8002 = vunpack.c.l.s8.bf16 %v7318
    %v8003 = vunpack.c.l.s8.bf16 %v7319
    %v8004 = vunpack.c.l.s8.bf16 %v7320
    %v8005 = vunpack.c.l.s8.bf16 %v7321
    %v8006 = vunpack.c.l.s8.bf16 %v7322
    %v8007 = vunpack.c.l.s8.bf16 %v7323
    %v8008 = vunpack.c.l.s8.bf16 %v7324
    %v8009 = vunpack.c.l.s8.bf16 %v7325
    %v8010 = vunpack.c.l.s8.bf16 %v7326
    %v8011 = vunpack.c.h.s8.bf16 %v7315
    %v8012 = vunpack.c.h.s8.bf16 %v7316
    %v8013 = vunpack.c.h.s8.bf16 %v7317
    %v8014 = vunpack.c.h.s8.bf16 %v7318
    %v8015 = vunpack.c.h.s8.bf16 %v7319
    %v8016 = vunpack.c.h.s8.bf16 %v7320
    %v8017 = vunpack.c.h.s8.bf16 %v7321
    %v8018 = vunpack.c.h.s8.bf16 %v7322
    %v8019 = vunpack.c.h.s8.bf16 %v7323
    %v8020 = vunpack.c.h.s8.bf16 %v7324
    %v8021 = vunpack.c.h.s8.bf16 %v7325
    %v8022 = vunpack.c.h.s8.bf16 %v7326
    %v8023 = vunpack.c.l.s8.bf16 %v7327
    %v8024 = vunpack.c.l.s8.bf16 %v7328
    %v8025 = vunpack.c.l.s8.bf16 %v7329
    %v8026 = vunpack.c.l.s8.bf16 %v7330
    %v8027 = vunpack.c.l.s8.bf16 %v7331
    %v8028 = vunpack.c.l.s8.bf16 %v7332
    %v8029 = vunpack.c.l.s8.bf16 %v7333
    %v8030 = vunpack.c.l.s8.bf16 %v7334
    %v8031 = vunpack.c.l.s8.bf16 %v7335
    %v8032 = vunpack.c.l.s8.bf16 %v7336
    %v8033 = vunpack.c.l.s8.bf16 %v7337
    %v8034 = vunpack.c.l.s8.bf16 %v7338
    %v8035 = vunpack.c.h.s8.bf16 %v7327
    %v8036 = vunpack.c.h.s8.bf16 %v7328
    %v8037 = vunpack.c.h.s8.bf16 %v7329
    %v8038 = vunpack.c.h.s8.bf16 %v7330
    %v8039 = vunpack.c.h.s8.bf16 %v7331
    %v8040 = vunpack.c.h.s8.bf16 %v7332
    %v8041 = vunpack.c.h.s8.bf16 %v7333
    %v8042 = vunpack.c.h.s8.bf16 %v7334
    %v8043 = vunpack.c.h.s8.bf16 %v7335
    %v8044 = vunpack.c.h.s8.bf16 %v7336
    %v8045 = vunpack.c.h.s8.bf16 %v7337
    %v8046 = vunpack.c.h.s8.bf16 %v7338
    %v8047 = vunpack.c.l.s8.bf16 %v7339
    %v8048 = vunpack.c.l.s8.bf16 %v7340
    %v8049 = vunpack.c.l.s8.bf16 %v7341
    %v8050 = vunpack.c.l.s8.bf16 %v7342
    %v8051 = vunpack.c.l.s8.bf16 %v7343
    %v8052 = vunpack.c.l.s8.bf16 %v7344
    %v8053 = vunpack.c.l.s8.bf16 %v7345
    %v8054 = vunpack.c.l.s8.bf16 %v7346
    %v8055 = vunpack.c.l.s8.bf16 %v7347
    %v8056 = vunpack.c.l.s8.bf16 %v7348
    %v8057 = vunpack.c.l.s8.bf16 %v7349
    %v8058 = vunpack.c.l.s8.bf16 %v7350
    %v8059 = vunpack.c.h.s8.bf16 %v7339
    %v8060 = vunpack.c.h.s8.bf16 %v7340
    %v8061 = vunpack.c.h.s8.bf16 %v7341
    %v8062 = vunpack.c.h.s8.bf16 %v7342
    %v8063 = vunpack.c.h.s8.bf16 %v7343
    %v8064 = vunpack.c.h.s8.bf16 %v7344
    %v8065 = vunpack.c.h.s8.bf16 %v7345
    %v8066 = vunpack.c.h.s8.bf16 %v7346
    %v8067 = vunpack.c.h.s8.bf16 %v7347
    %v8068 = vunpack.c.h.s8.bf16 %v7348
    %v8069 = vunpack.c.h.s8.bf16 %v7349
    %v8070 = vunpack.c.h.s8.bf16 %v7350
    %v8071 = vunpack.c.l.s8.bf16 %v7351
    %v8072 = vunpack.c.l.s8.bf16 %v7352
    %v8073 = vunpack.c.l.s8.bf16 %v7353
    %v8074 = vunpack.c.l.s8.bf16 %v7354
    %v8075 = vunpack.c.l.s8.bf16 %v7355
    %v8076 = vunpack.c.l.s8.bf16 %v7356
    %v8077 = vunpack.c.l.s8.bf16 %v7357
    %v8078 = vunpack.c.l.s8.bf16 %v7358
    %v8079 = vunpack.c.l.s8.bf16 %v7359
    %v8080 = vunpack.c.l.s8.bf16 %v7360
    %v8081 = vunpack.c.l.s8.bf16 %v7361
    %v8082 = vunpack.c.l.s8.bf16 %v7362
    %v8083 = vunpack.c.h.s8.bf16 %v7351
    %v8084 = vunpack.c.h.s8.bf16 %v7352
    %v8085 = vunpack.c.h.s8.bf16 %v7353
    %v8086 = vunpack.c.h.s8.bf16 %v7354
    %v8087 = vunpack.c.h.s8.bf16 %v7355
    %v8088 = vunpack.c.h.s8.bf16 %v7356
    %v8089 = vunpack.c.h.s8.bf16 %v7357
    %v8090 = vunpack.c.h.s8.bf16 %v7358
    %v8091 = vunpack.c.h.s8.bf16 %v7359
    %v8092 = vunpack.c.h.s8.bf16 %v7360
    %v8093 = vunpack.c.h.s8.bf16 %v7361
    %v8094 = vunpack.c.h.s8.bf16 %v7362
    %v8095 = vunpack.c.l.s8.bf16 %v7363
    %v8096 = vunpack.c.l.s8.bf16 %v7364
    %v8097 = vunpack.c.l.s8.bf16 %v7365
    %v8098 = vunpack.c.l.s8.bf16 %v7366
    %v8099 = vunpack.c.l.s8.bf16 %v7367
    %v8100 = vunpack.c.l.s8.bf16 %v7368
    %v8101 = vunpack.c.l.s8.bf16 %v7369
    %v8102 = vunpack.c.l.s8.bf16 %v7370
    %v8103 = vunpack.c.l.s8.bf16 %v7371
    %v8104 = vunpack.c.l.s8.bf16 %v7372
    %v8105 = vunpack.c.l.s8.bf16 %v7373
    %v8106 = vunpack.c.l.s8.bf16 %v7374
    %v8107 = vunpack.c.h.s8.bf16 %v7363
    %v8108 = vunpack.c.h.s8.bf16 %v7364
    %v8109 = vunpack.c.h.s8.bf16 %v7365
    %v8110 = vunpack.c.h.s8.bf16 %v7366
    %v8111 = vunpack.c.h.s8.bf16 %v7367
    %v8112 = vunpack.c.h.s8.bf16 %v7368
    %v8113 = vunpack.c.h.s8.bf16 %v7369
    %v8114 = vunpack.c.h.s8.bf16 %v7370
    %v8115 = vunpack.c.h.s8.bf16 %v7371
    %v8116 = vunpack.c.h.s8.bf16 %v7372
    %v8117 = vunpack.c.h.s8.bf16 %v7373
    %v8118 = vunpack.c.h.s8.bf16 %v7374
    %v8119 = vunpack.c.l.s8.bf16 %v7375
    %v8120 = vunpack.c.l.s8.bf16 %v7376
    %v8121 = vunpack.c.l.s8.bf16 %v7377
    %v8122 = vunpack.c.l.s8.bf16 %v7378
    %v8123 = vunpack.c.l.s8.bf16 %v7379
    %v8124 = vunpack.c.l.s8.bf16 %v7380
    %v8125 = vunpack.c.l.s8.bf16 %v7381
    %v8126 = vunpack.c.l.s8.bf16 %v7382
    %v8127 = vunpack.c.l.s8.bf16 %v7383
    %v8128 = vunpack.c.l.s8.bf16 %v7384
    %v8129 = vunpack.c.l.s8.bf16 %v7385
    %v8130 = vunpack.c.l.s8.bf16 %v7386
    %v8131 = vunpack.c.h.s8.bf16 %v7375
    %v8132 = vunpack.c.h.s8.bf16 %v7376
    %v8133 = vunpack.c.h.s8.bf16 %v7377
    %v8134 = vunpack.c.h.s8.bf16 %v7378
    %v8135 = vunpack.c.h.s8.bf16 %v7379
    %v8136 = vunpack.c.h.s8.bf16 %v7380
    %v8137 = vunpack.c.h.s8.bf16 %v7381
    %v8138 = vunpack.c.h.s8.bf16 %v7382
    %v8139 = vunpack.c.h.s8.bf16 %v7383
    %v8140 = vunpack.c.h.s8.bf16 %v7384
    %v8141 = vunpack.c.h.s8.bf16 %v7385
    %v8142 = vunpack.c.h.s8.bf16 %v7386
    %v8143 = vunpack.c.l.s8.bf16 %v7387
    %v8144 = vunpack.c.l.s8.bf16 %v7388
    %v8145 = vunpack.c.l.s8.bf16 %v7389
    %v8146 = vunpack.c.l.s8.bf16 %v7390
    %v8147 = vunpack.c.l.s8.bf16 %v7391
    %v8148 = vunpack.c.l.s8.bf16 %v7392
    %v8149 = vunpack.c.l.s8.bf16 %v7393
    %v8150 = vunpack.c.l.s8.bf16 %v7394
    %v8151 = vunpack.c.l.s8.bf16 %v7395
    %v8152 = vunpack.c.l.s8.bf16 %v7396
    %v8153 = vunpack.c.l.s8.bf16 %v7397
    %v8154 = vunpack.c.l.s8.bf16 %v7398
    %v8155 = vunpack.c.h.s8.bf16 %v7387
    %v8156 = vunpack.c.h.s8.bf16 %v7388
    %v8157 = vunpack.c.h.s8.bf16 %v7389
    %v8158 = vunpack.c.h.s8.bf16 %v7390
    %v8159 = vunpack.c.h.s8.bf16 %v7391
    %v8160 = vunpack.c.h.s8.bf16 %v7392
    %v8161 = vunpack.c.h.s8.bf16 %v7393
    %v8162 = vunpack.c.h.s8.bf16 %v7394
    %v8163 = vunpack.c.h.s8.bf16 %v7395
    %v8164 = vunpack.c.h.s8.bf16 %v7396
    %v8165 = vunpack.c.h.s8.bf16 %v7397
    %v8166 = vunpack.c.h.s8.bf16 %v7398
    %8167 = vmatprep.subr.bf16.mxu0 %v7484
    %8168 = vmatpush1.bf16.msra.mxu0 %v7483
    %8169 = vmatprep.subr.bf16.mxu0 %v7472
    %8170 = vmatpush1.bf16.msra.mxu0 %v7471
    %8171 = vmatprep.subr.bf16.mxu0 %v7460
    %8172 = vmatpush1.bf16.msra.mxu0 %v7459
    %8173 = vmatprep.subr.bf16.mxu0 %v7448
    %8174 = vmatpush1.bf16.msra.mxu0 %v7447
    %8175 = vmatprep.subr.bf16.mxu0 %v7436
    %8176 = vmatpush1.bf16.msra.mxu0 %v7435
    %8177 = vmatprep.subr.bf16.mxu0 %v7424
    %8178 = vmatpush1.bf16.msra.mxu0 %v7423
    %8179 = vmatprep.subr.bf16.mxu0 %v7412
    %8180 = vmatpush1.bf16.msra.mxu0 %v7411
    %8181 = vmatprep.subr.bf16.mxu0 %v7400
    %8182 = vmatpush1.bf16.msra.mxu0 %v7399
    %8183 = vmatprep.subr.bf16.mxu0 %v7580
    %8184 = vmatpush2.bf16.msra.mxu0 %v7579
    %8185 = vmatprep.subr.bf16.mxu0 %v7568
    %8186 = vmatpush2.bf16.msra.mxu0 %v7567
    %8187 = vmatprep.subr.bf16.mxu0 %v7556
    %8188 = vmatpush2.bf16.msra.mxu0 %v7555
    %8189 = vmatprep.subr.bf16.mxu0 %v7544
    %8190 = vmatpush2.bf16.msra.mxu0 %v7543
    %8191 = vmatprep.subr.bf16.mxu0 %v7532
    %8192 = vmatpush2.bf16.msra.mxu0 %v7531
    %8193 = vmatprep.subr.bf16.mxu0 %v7520
    %8194 = vmatpush2.bf16.msra.mxu0 %v7519
    %8195 = vmatprep.subr.bf16.mxu0 %v7508
    %8196 = vmatpush2.bf16.msra.mxu0 %v7507
    %8197 = vmatprep.subr.bf16.mxu0 %v7496
    %8198 = vmatpush2.bf16.msra.mxu0 %v7495
    %8199 = vmatprep.mubr.bf16.mxu0 %v7008
    %8200 = vmatmul.mubr.bf16.gmra.mxu0 %v7007
    %v8201 = vpop.f32.mrf.mxu0
    %v8202 = vadd.f32 0.0, %v8201
    %v8203 = vpop.f32.mrf.mxu0
    %v8204 = vadd.f32 0.0, %v8203
    %v8205 = vpop.f32.mrf.mxu0
    %v8206 = vadd.f32 0.0, %v8205
    %v8207 = vpop.f32.mrf.mxu0
    %v8208 = vadd.f32 0.0, %v8207
    %8209 = vdwg.mxu0
    %8210 = vmatprep.subr.bf16.mxu0 %v7676
    %8211 = vmatpush1.bf16.msra.mxu0 %v7675
    %8212 = vmatprep.subr.bf16.mxu0 %v7664
    %8213 = vmatpush1.bf16.msra.mxu0 %v7663
    %8214 = vmatprep.subr.bf16.mxu0 %v7652
    %8215 = vmatpush1.bf16.msra.mxu0 %v7651
    %8216 = vmatprep.subr.bf16.mxu0 %v7640
    %8217 = vmatpush1.bf16.msra.mxu0 %v7639
    %8218 = vmatprep.subr.bf16.mxu0 %v7628
    %8219 = vmatpush1.bf16.msra.mxu0 %v7627
    %8220 = vmatprep.subr.bf16.mxu0 %v7616
    %8221 = vmatpush1.bf16.msra.mxu0 %v7615
    %8222 = vmatprep.subr.bf16.mxu0 %v7604
    %8223 = vmatpush1.bf16.msra.mxu0 %v7603
    %8224 = vmatprep.subr.bf16.mxu0 %v7592
    %8225 = vmatpush1.bf16.msra.mxu0 %v7591
    %8226 = vmatprep.subr.bf16.mxu0 %v7772
    %8227 = vmatpush2.bf16.msra.mxu0 %v7771
    %8228 = vmatprep.subr.bf16.mxu0 %v7760
    %8229 = vmatpush2.bf16.msra.mxu0 %v7759
    %8230 = vmatprep.subr.bf16.mxu0 %v7748
    %8231 = vmatpush2.bf16.msra.mxu0 %v7747
    %8232 = vmatprep.subr.bf16.mxu0 %v7736
    %8233 = vmatpush2.bf16.msra.mxu0 %v7735
    %8234 = vmatprep.subr.bf16.mxu0 %v7724
    %8235 = vmatpush2.bf16.msra.mxu0 %v7723
    %8236 = vmatprep.subr.bf16.mxu0 %v7712
    %8237 = vmatpush2.bf16.msra.mxu0 %v7711
    %8238 = vmatprep.subr.bf16.mxu0 %v7700
    %8239 = vmatpush2.bf16.msra.mxu0 %v7699
    %8240 = vmatprep.subr.bf16.mxu0 %v7688
    %8241 = vmatpush2.bf16.msra.mxu0 %v7687
    %8242 = vmatprep.mubr.bf16.mxu0 %v7010
    %8243 = vmatmul.mubr.bf16.gmra.mxu0 %v7009
    %v8244 = vpop.f32.mrf.mxu0
    %v8245 = vadd.f32 %v8202, %v8244
    %v8246 = vpop.f32.mrf.mxu0
    %v8247 = vadd.f32 %v8204, %v8246
    %v8248 = vpop.f32.mrf.mxu0
    %v8249 = vadd.f32 %v8206, %v8248
    %v8250 = vpop.f32.mrf.mxu0
    %v8251 = vadd.f32 %v8208, %v8250
    %8252 = vdwg.mxu0
    %8253 = vmatprep.subr.bf16.mxu0 %v7868
    %8254 = vmatpush1.bf16.msra.mxu0 %v7867
    %8255 = vmatprep.subr.bf16.mxu0 %v7856
    %8256 = vmatpush1.bf16.msra.mxu0 %v7855
    %8257 = vmatprep.subr.bf16.mxu0 %v7844
    %8258 = vmatpush1.bf16.msra.mxu0 %v7843
    %8259 = vmatprep.subr.bf16.mxu0 %v7832
    %8260 = vmatpush1.bf16.msra.mxu0 %v7831
    %8261 = vmatprep.subr.bf16.mxu0 %v7820
    %8262 = vmatpush1.bf16.msra.mxu0 %v7819
    %8263 = vmatprep.subr.bf16.mxu0 %v7808
    %8264 = vmatpush1.bf16.msra.mxu0 %v7807
    %8265 = vmatprep.subr.bf16.mxu0 %v7796
    %8266 = vmatpush1.bf16.msra.mxu0 %v7795
    %8267 = vmatprep.subr.bf16.mxu0 %v7784
    %8268 = vmatpush1.bf16.msra.mxu0 %v7783
    %8269 = vmatprep.subr.bf16.mxu0 %v7964
    %8270 = vmatpush2.bf16.msra.mxu0 %v7963
    %8271 = vmatprep.subr.bf16.mxu0 %v7952
    %8272 = vmatpush2.bf16.msra.mxu0 %v7951
    %8273 = vmatprep.subr.bf16.mxu0 %v7940
    %8274 = vmatpush2.bf16.msra.mxu0 %v7939
    %8275 = vmatprep.subr.bf16.mxu0 %v7928
    %8276 = vmatpush2.bf16.msra.mxu0 %v7927
    %8277 = vmatprep.subr.bf16.mxu0 %v7916
    %8278 = vmatpush2.bf16.msra.mxu0 %v7915
    %8279 = vmatprep.subr.bf16.mxu0 %v7904
    %8280 = vmatpush2.bf16.msra.mxu0 %v7903
    %8281 = vmatprep.subr.bf16.mxu0 %v7892
    %8282 = vmatpush2.bf16.msra.mxu0 %v7891
    %8283 = vmatprep.subr.bf16.mxu0 %v7880
    %8284 = vmatpush2.bf16.msra.mxu0 %v7879
    %8285 = vmatprep.mubr.bf16.mxu0 %v7012
    %8286 = vmatmul.mubr.bf16.gmra.mxu0 %v7011
    %v8287 = vpop.f32.mrf.mxu0
    %v8288 = vadd.f32 %v8245, %v8287
    %v8289 = vpop.f32.mrf.mxu0
    %v8290 = vadd.f32 %v8247, %v8289
    %v8291 = vpop.f32.mrf.mxu0
    %v8292 = vadd.f32 %v8249, %v8291
    %v8293 = vpop.f32.mrf.mxu0
    %v8294 = vadd.f32 %v8251, %v8293
    %8295 = vdwg.mxu0
    %8296 = vmatprep.subr.bf16.mxu0 %v8060
    %8297 = vmatpush1.bf16.msra.mxu0 %v8059
    %8298 = vmatprep.subr.bf16.mxu0 %v8048
    %8299 = vmatpush1.bf16.msra.mxu0 %v8047
    %8300 = vmatprep.subr.bf16.mxu0 %v8036
    %8301 = vmatpush1.bf16.msra.mxu0 %v8035
    %8302 = vmatprep.subr.bf16.mxu0 %v8024
    %8303 = vmatpush1.bf16.msra.mxu0 %v8023
    %8304 = vmatprep.subr.bf16.mxu0 %v8012
    %8305 = vmatpush1.bf16.msra.mxu0 %v8011
    %8306 = vmatprep.subr.bf16.mxu0 %v8000
    %8307 = vmatpush1.bf16.msra.mxu0 %v7999
    %8308 = vmatprep.subr.bf16.mxu0 %v7988
    %8309 = vmatpush1.bf16.msra.mxu0 %v7987
    %8310 = vmatprep.subr.bf16.mxu0 %v7976
    %8311 = vmatpush1.bf16.msra.mxu0 %v7975
    %8312 = vmatprep.subr.bf16.mxu0 %v8156
    %8313 = vmatpush2.bf16.msra.mxu0 %v8155
    %8314 = vmatprep.subr.bf16.mxu0 %v8144
    %8315 = vmatpush2.bf16.msra.mxu0 %v8143
    %8316 = vmatprep.subr.bf16.mxu0 %v8132
    %8317 = vmatpush2.bf16.msra.mxu0 %v8131
    %8318 = vmatprep.subr.bf16.mxu0 %v8120
    %8319 = vmatpush2.bf16.msra.mxu0 %v8119
    %8320 = vmatprep.subr.bf16.mxu0 %v8108
    %8321 = vmatpush2.bf16.msra.mxu0 %v8107
    %8322 = vmatprep.subr.bf16.mxu0 %v8096
    %8323 = vmatpush2.bf16.msra.mxu0 %v8095
    %8324 = vmatprep.subr.bf16.mxu0 %v8084
    %8325 = vmatpush2.bf16.msra.mxu0 %v8083
    %8326 = vmatprep.subr.bf16.mxu0 %v8072
    %8327 = vmatpush2.bf16.msra.mxu0 %v8071
    %8328 = vmatprep.mubr.bf16.mxu0 %v7014
    %8329 = vmatmul.mubr.bf16.gmra.mxu0 %v7013
    %v8330 = vpop.f32.mrf.mxu0
    %v8331 = vadd.f32 %v8288, %v8330
    %v8332 = vpop.f32.mrf.mxu0
    %v8333 = vadd.f32 %v8290, %v8332
    %v8334 = vpop.f32.mrf.mxu0
    %v8335 = vadd.f32 %v8292, %v8334
    %v8336 = vpop.f32.mrf.mxu0
    %v8337 = vadd.f32 %v8294, %v8336
    %8338 = vdwg.mxu0
    %8339 = vmatprep.subr.bf16.mxu0 %v7486
    %8340 = vmatpush1.bf16.msra.mxu0 %v7485
    %8341 = vmatprep.subr.bf16.mxu0 %v7474
    %8342 = vmatpush1.bf16.msra.mxu0 %v7473
    %8343 = vmatprep.subr.bf16.mxu0 %v7462
    %8344 = vmatpush1.bf16.msra.mxu0 %v7461
    %8345 = vmatprep.subr.bf16.mxu0 %v7450
    %8346 = vmatpush1.bf16.msra.mxu0 %v7449
    %8347 = vmatprep.subr.bf16.mxu0 %v7438
    %8348 = vmatpush1.bf16.msra.mxu0 %v7437
    %8349 = vmatprep.subr.bf16.mxu0 %v7426
    %8350 = vmatpush1.bf16.msra.mxu0 %v7425
    %8351 = vmatprep.subr.bf16.mxu0 %v7414
    %8352 = vmatpush1.bf16.msra.mxu0 %v7413
    %8353 = vmatprep.subr.bf16.mxu0 %v7402
    %8354 = vmatpush1.bf16.msra.mxu0 %v7401
    %8355 = vmatprep.subr.bf16.mxu0 %v7582
    %8356 = vmatpush2.bf16.msra.mxu0 %v7581
    %8357 = vmatprep.subr.bf16.mxu0 %v7570
    %8358 = vmatpush2.bf16.msra.mxu0 %v7569
    %8359 = vmatprep.subr.bf16.mxu0 %v7558
    %8360 = vmatpush2.bf16.msra.mxu0 %v7557
    %8361 = vmatprep.subr.bf16.mxu0 %v7546
    %8362 = vmatpush2.bf16.msra.mxu0 %v7545
    %8363 = vmatprep.subr.bf16.mxu0 %v7534
    %8364 = vmatpush2.bf16.msra.mxu0 %v7533
    %8365 = vmatprep.subr.bf16.mxu0 %v7522
    %8366 = vmatpush2.bf16.msra.mxu0 %v7521
    %8367 = vmatprep.subr.bf16.mxu0 %v7510
    %8368 = vmatpush2.bf16.msra.mxu0 %v7509
    %8369 = vmatprep.subr.bf16.mxu0 %v7498
    %8370 = vmatpush2.bf16.msra.mxu0 %v7497
    %8371 = vmatprep.mubr.bf16.mxu0 %v7008
    %8372 = vmatmul.mubr.bf16.gmra.mxu0 %v7007
    %v8373 = vpop.f32.mrf.mxu0
    %v8374 = vadd.f32 0.0, %v8373
    %v8375 = vpop.f32.mrf.mxu0
    %v8376 = vadd.f32 0.0, %v8375
    %v8377 = vpop.f32.mrf.mxu0
    %v8378 = vadd.f32 0.0, %v8377
    %v8379 = vpop.f32.mrf.mxu0
    %v8380 = vadd.f32 0.0, %v8379
    %8381 = vdwg.mxu0
    %8382 = vmatprep.subr.bf16.mxu0 %v7678
    %8383 = vmatpush1.bf16.msra.mxu0 %v7677
    %8384 = vmatprep.subr.bf16.mxu0 %v7666
    %8385 = vmatpush1.bf16.msra.mxu0 %v7665
    %8386 = vmatprep.subr.bf16.mxu0 %v7654
    %8387 = vmatpush1.bf16.msra.mxu0 %v7653
    %8388 = vmatprep.subr.bf16.mxu0 %v7642
    %8389 = vmatpush1.bf16.msra.mxu0 %v7641
    %8390 = vmatprep.subr.bf16.mxu0 %v7630
    %8391 = vmatpush1.bf16.msra.mxu0 %v7629
    %8392 = vmatprep.subr.bf16.mxu0 %v7618
    %8393 = vmatpush1.bf16.msra.mxu0 %v7617
    %8394 = vmatprep.subr.bf16.mxu0 %v7606
    %8395 = vmatpush1.bf16.msra.mxu0 %v7605
    %8396 = vmatprep.subr.bf16.mxu0 %v7594
    %8397 = vmatpush1.bf16.msra.mxu0 %v7593
    %8398 = vmatprep.subr.bf16.mxu0 %v7774
    %8399 = vmatpush2.bf16.msra.mxu0 %v7773
    %8400 = vmatprep.subr.bf16.mxu0 %v7762
    %8401 = vmatpush2.bf16.msra.mxu0 %v7761
    %8402 = vmatprep.subr.bf16.mxu0 %v7750
    %8403 = vmatpush2.bf16.msra.mxu0 %v7749
    %8404 = vmatprep.subr.bf16.mxu0 %v7738
    %8405 = vmatpush2.bf16.msra.mxu0 %v7737
    %8406 = vmatprep.subr.bf16.mxu0 %v7726
    %8407 = vmatpush2.bf16.msra.mxu0 %v7725
    %8408 = vmatprep.subr.bf16.mxu0 %v7714
    %8409 = vmatpush2.bf16.msra.mxu0 %v7713
    %8410 = vmatprep.subr.bf16.mxu0 %v7702
    %8411 = vmatpush2.bf16.msra.mxu0 %v7701
    %8412 = vmatprep.subr.bf16.mxu0 %v7690
    %8413 = vmatpush2.bf16.msra.mxu0 %v7689
    %8414 = vmatprep.mubr.bf16.mxu0 %v7010
    %8415 = vmatmul.mubr.bf16.gmra.mxu0 %v7009
    %v8416 = vpop.f32.mrf.mxu0
    %v8417 = vadd.f32 %v8374, %v8416
    %v8418 = vpop.f32.mrf.mxu0
    %v8419 = vadd.f32 %v8376, %v8418
    %v8420 = vpop.f32.mrf.mxu0
    %v8421 = vadd.f32 %v8378, %v8420
    %v8422 = vpop.f32.mrf.mxu0
    %v8423 = vadd.f32 %v8380, %v8422
    %8424 = vdwg.mxu0
    %8425 = vmatprep.subr.bf16.mxu0 %v7870
    %8426 = vmatpush1.bf16.msra.mxu0 %v7869
    %8427 = vmatprep.subr.bf16.mxu0 %v7858
    %8428 = vmatpush1.bf16.msra.mxu0 %v7857
    %8429 = vmatprep.subr.bf16.mxu0 %v7846
    %8430 = vmatpush1.bf16.msra.mxu0 %v7845
    %8431 = vmatprep.subr.bf16.mxu0 %v7834
    %8432 = vmatpush1.bf16.msra.mxu0 %v7833
    %8433 = vmatprep.subr.bf16.mxu0 %v7822
    %8434 = vmatpush1.bf16.msra.mxu0 %v7821
    %8435 = vmatprep.subr.bf16.mxu0 %v7810
    %8436 = vmatpush1.bf16.msra.mxu0 %v7809
    %8437 = vmatprep.subr.bf16.mxu0 %v7798
    %8438 = vmatpush1.bf16.msra.mxu0 %v7797
    %8439 = vmatprep.subr.bf16.mxu0 %v7786
    %8440 = vmatpush1.bf16.msra.mxu0 %v7785
    %8441 = vmatprep.subr.bf16.mxu0 %v7966
    %8442 = vmatpush2.bf16.msra.mxu0 %v7965
    %8443 = vmatprep.subr.bf16.mxu0 %v7954
    %8444 = vmatpush2.bf16.msra.mxu0 %v7953
    %8445 = vmatprep.subr.bf16.mxu0 %v7942
    %8446 = vmatpush2.bf16.msra.mxu0 %v7941
    %8447 = vmatprep.subr.bf16.mxu0 %v7930
    %8448 = vmatpush2.bf16.msra.mxu0 %v7929
    %8449 = vmatprep.subr.bf16.mxu0 %v7918
    %8450 = vmatpush2.bf16.msra.mxu0 %v7917
    %8451 = vmatprep.subr.bf16.mxu0 %v7906
    %8452 = vmatpush2.bf16.msra.mxu0 %v7905
    %8453 = vmatprep.subr.bf16.mxu0 %v7894
    %8454 = vmatpush2.bf16.msra.mxu0 %v7893
    %8455 = vmatprep.subr.bf16.mxu0 %v7882
    %8456 = vmatpush2.bf16.msra.mxu0 %v7881
    %8457 = vmatprep.mubr.bf16.mxu0 %v7012
    %8458 = vmatmul.mubr.bf16.gmra.mxu0 %v7011
    %v8459 = vpop.f32.mrf.mxu0
    %v8460 = vadd.f32 %v8417, %v8459
    %v8461 = vpop.f32.mrf.mxu0
    %v8462 = vadd.f32 %v8419, %v8461
    %v8463 = vpop.f32.mrf.mxu0
    %v8464 = vadd.f32 %v8421, %v8463
    %v8465 = vpop.f32.mrf.mxu0
    %v8466 = vadd.f32 %v8423, %v8465
    %8467 = vdwg.mxu0
    %8468 = vmatprep.subr.bf16.mxu0 %v8062
    %8469 = vmatpush1.bf16.msra.mxu0 %v8061
    %8470 = vmatprep.subr.bf16.mxu0 %v8050
    %8471 = vmatpush1.bf16.msra.mxu0 %v8049
    %8472 = vmatprep.subr.bf16.mxu0 %v8038
    %8473 = vmatpush1.bf16.msra.mxu0 %v8037
    %8474 = vmatprep.subr.bf16.mxu0 %v8026
    %8475 = vmatpush1.bf16.msra.mxu0 %v8025
    %8476 = vmatprep.subr.bf16.mxu0 %v8014
    %8477 = vmatpush1.bf16.msra.mxu0 %v8013
    %8478 = vmatprep.subr.bf16.mxu0 %v8002
    %8479 = vmatpush1.bf16.msra.mxu0 %v8001
    %8480 = vmatprep.subr.bf16.mxu0 %v7990
    %8481 = vmatpush1.bf16.msra.mxu0 %v7989
    %8482 = vmatprep.subr.bf16.mxu0 %v7978
    %8483 = vmatpush1.bf16.msra.mxu0 %v7977
    %8484 = vmatprep.subr.bf16.mxu0 %v8158
    %8485 = vmatpush2.bf16.msra.mxu0 %v8157
    %8486 = vmatprep.subr.bf16.mxu0 %v8146
    %8487 = vmatpush2.bf16.msra.mxu0 %v8145
    %8488 = vmatprep.subr.bf16.mxu0 %v8134
    %8489 = vmatpush2.bf16.msra.mxu0 %v8133
    %8490 = vmatprep.subr.bf16.mxu0 %v8122
    %8491 = vmatpush2.bf16.msra.mxu0 %v8121
    %8492 = vmatprep.subr.bf16.mxu0 %v8110
    %8493 = vmatpush2.bf16.msra.mxu0 %v8109
    %8494 = vmatprep.subr.bf16.mxu0 %v8098
    %8495 = vmatpush2.bf16.msra.mxu0 %v8097
    %8496 = vmatprep.subr.bf16.mxu0 %v8086
    %8497 = vmatpush2.bf16.msra.mxu0 %v8085
    %8498 = vmatprep.subr.bf16.mxu0 %v8074
    %8499 = vmatpush2.bf16.msra.mxu0 %v8073
    %8500 = vmatprep.mubr.bf16.mxu0 %v7014
    %8501 = vmatmul.mubr.bf16.gmra.mxu0 %v7013
    %v8502 = vpop.f32.mrf.mxu0
    %v8503 = vadd.f32 %v8460, %v8502
    %v8504 = vpop.f32.mrf.mxu0
    %v8505 = vadd.f32 %v8462, %v8504
    %v8506 = vpop.f32.mrf.mxu0
    %v8507 = vadd.f32 %v8464, %v8506
    %v8508 = vpop.f32.mrf.mxu0
    %v8509 = vadd.f32 %v8466, %v8508
    %8510 = vdwg.mxu0
    %8511 = vmatprep.subr.bf16.mxu0 %v7488
    %8512 = vmatpush1.bf16.msra.mxu0 %v7487
    %8513 = vmatprep.subr.bf16.mxu0 %v7476
    %8514 = vmatpush1.bf16.msra.mxu0 %v7475
    %8515 = vmatprep.subr.bf16.mxu0 %v7464
    %8516 = vmatpush1.bf16.msra.mxu0 %v7463
    %8517 = vmatprep.subr.bf16.mxu0 %v7452
    %8518 = vmatpush1.bf16.msra.mxu0 %v7451
    %8519 = vmatprep.subr.bf16.mxu0 %v7440
    %8520 = vmatpush1.bf16.msra.mxu0 %v7439
    %8521 = vmatprep.subr.bf16.mxu0 %v7428
    %8522 = vmatpush1.bf16.msra.mxu0 %v7427
    %8523 = vmatprep.subr.bf16.mxu0 %v7416
    %8524 = vmatpush1.bf16.msra.mxu0 %v7415
    %8525 = vmatprep.subr.bf16.mxu0 %v7404
    %8526 = vmatpush1.bf16.msra.mxu0 %v7403
    %8527 = vmatprep.subr.bf16.mxu0 %v7584
    %8528 = vmatpush2.bf16.msra.mxu0 %v7583
    %8529 = vmatprep.subr.bf16.mxu0 %v7572
    %8530 = vmatpush2.bf16.msra.mxu0 %v7571
    %8531 = vmatprep.subr.bf16.mxu0 %v7560
    %8532 = vmatpush2.bf16.msra.mxu0 %v7559
    %8533 = vmatprep.subr.bf16.mxu0 %v7548
    %8534 = vmatpush2.bf16.msra.mxu0 %v7547
    %8535 = vmatprep.subr.bf16.mxu0 %v7536
    %8536 = vmatpush2.bf16.msra.mxu0 %v7535
    %8537 = vmatprep.subr.bf16.mxu0 %v7524
    %8538 = vmatpush2.bf16.msra.mxu0 %v7523
    %8539 = vmatprep.subr.bf16.mxu0 %v7512
    %8540 = vmatpush2.bf16.msra.mxu0 %v7511
    %8541 = vmatprep.subr.bf16.mxu0 %v7500
    %8542 = vmatpush2.bf16.msra.mxu0 %v7499
    %8543 = vmatprep.mubr.bf16.mxu0 %v7008
    %8544 = vmatmul.mubr.bf16.gmra.mxu0 %v7007
    %v8545 = vpop.f32.mrf.mxu0
    %v8546 = vadd.f32 0.0, %v8545
    %v8547 = vpop.f32.mrf.mxu0
    %v8548 = vadd.f32 0.0, %v8547
    %v8549 = vpop.f32.mrf.mxu0
    %v8550 = vadd.f32 0.0, %v8549
    %v8551 = vpop.f32.mrf.mxu0
    %v8552 = vadd.f32 0.0, %v8551
    %8553 = vdwg.mxu0
    %8554 = vmatprep.subr.bf16.mxu0 %v7680
    %8555 = vmatpush1.bf16.msra.mxu0 %v7679
    %8556 = vmatprep.subr.bf16.mxu0 %v7668
    %8557 = vmatpush1.bf16.msra.mxu0 %v7667
    %8558 = vmatprep.subr.bf16.mxu0 %v7656
    %8559 = vmatpush1.bf16.msra.mxu0 %v7655
    %8560 = vmatprep.subr.bf16.mxu0 %v7644
    %8561 = vmatpush1.bf16.msra.mxu0 %v7643
    %8562 = vmatprep.subr.bf16.mxu0 %v7632
    %8563 = vmatpush1.bf16.msra.mxu0 %v7631
    %8564 = vmatprep.subr.bf16.mxu0 %v7620
    %8565 = vmatpush1.bf16.msra.mxu0 %v7619
    %8566 = vmatprep.subr.bf16.mxu0 %v7608
    %8567 = vmatpush1.bf16.msra.mxu0 %v7607
    %8568 = vmatprep.subr.bf16.mxu0 %v7596
    %8569 = vmatpush1.bf16.msra.mxu0 %v7595
    %8570 = vmatprep.subr.bf16.mxu0 %v7776
    %8571 = vmatpush2.bf16.msra.mxu0 %v7775
    %8572 = vmatprep.subr.bf16.mxu0 %v7764
    %8573 = vmatpush2.bf16.msra.mxu0 %v7763
    %8574 = vmatprep.subr.bf16.mxu0 %v7752
    %8575 = vmatpush2.bf16.msra.mxu0 %v7751
    %8576 = vmatprep.subr.bf16.mxu0 %v7740
    %8577 = vmatpush2.bf16.msra.mxu0 %v7739
    %8578 = vmatprep.subr.bf16.mxu0 %v7728
    %8579 = vmatpush2.bf16.msra.mxu0 %v7727
    %8580 = vmatprep.subr.bf16.mxu0 %v7716
    %8581 = vmatpush2.bf16.msra.mxu0 %v7715
    %8582 = vmatprep.subr.bf16.mxu0 %v7704
    %8583 = vmatpush2.bf16.msra.mxu0 %v7703
    %8584 = vmatprep.subr.bf16.mxu0 %v7692
    %8585 = vmatpush2.bf16.msra.mxu0 %v7691
    %8586 = vmatprep.mubr.bf16.mxu0 %v7010
    %8587 = vmatmul.mubr.bf16.gmra.mxu0 %v7009
    %v8588 = vpop.f32.mrf.mxu0
    %v8589 = vadd.f32 %v8546, %v8588
    %v8590 = vpop.f32.mrf.mxu0
    %v8591 = vadd.f32 %v8548, %v8590
    %v8592 = vpop.f32.mrf.mxu0
    %v8593 = vadd.f32 %v8550, %v8592
    %v8594 = vpop.f32.mrf.mxu0
    %v8595 = vadd.f32 %v8552, %v8594
    %8596 = vdwg.mxu0
    %8597 = vmatprep.subr.bf16.mxu0 %v7872
    %8598 = vmatpush1.bf16.msra.mxu0 %v7871
    %8599 = vmatprep.subr.bf16.mxu0 %v7860
    %8600 = vmatpush1.bf16.msra.mxu0 %v7859
    %8601 = vmatprep.subr.bf16.mxu0 %v7848
    %8602 = vmatpush1.bf16.msra.mxu0 %v7847
    %8603 = vmatprep.subr.bf16.mxu0 %v7836
    %8604 = vmatpush1.bf16.msra.mxu0 %v7835
    %8605 = vmatprep.subr.bf16.mxu0 %v7824
    %8606 = vmatpush1.bf16.msra.mxu0 %v7823
    %8607 = vmatprep.subr.bf16.mxu0 %v7812
    %8608 = vmatpush1.bf16.msra.mxu0 %v7811
    %8609 = vmatprep.subr.bf16.mxu0 %v7800
    %8610 = vmatpush1.bf16.msra.mxu0 %v7799
    %8611 = vmatprep.subr.bf16.mxu0 %v7788
    %8612 = vmatpush1.bf16.msra.mxu0 %v7787
    %8613 = vmatprep.subr.bf16.mxu0 %v7968
    %8614 = vmatpush2.bf16.msra.mxu0 %v7967
    %8615 = vmatprep.subr.bf16.mxu0 %v7956
    %8616 = vmatpush2.bf16.msra.mxu0 %v7955
    %8617 = vmatprep.subr.bf16.mxu0 %v7944
    %8618 = vmatpush2.bf16.msra.mxu0 %v7943
    %8619 = vmatprep.subr.bf16.mxu0 %v7932
    %8620 = vmatpush2.bf16.msra.mxu0 %v7931
    %8621 = vmatprep.subr.bf16.mxu0 %v7920
    %8622 = vmatpush2.bf16.msra.mxu0 %v7919
    %8623 = vmatprep.subr.bf16.mxu0 %v7908
    %8624 = vmatpush2.bf16.msra.mxu0 %v7907
    %8625 = vmatprep.subr.bf16.mxu0 %v7896
    %8626 = vmatpush2.bf16.msra.mxu0 %v7895
    %8627 = vmatprep.subr.bf16.mxu0 %v7884
    %8628 = vmatpush2.bf16.msra.mxu0 %v7883
    %8629 = vmatprep.mubr.bf16.mxu0 %v7012
    %8630 = vmatmul.mubr.bf16.gmra.mxu0 %v7011
    %v8631 = vpop.f32.mrf.mxu0
    %v8632 = vadd.f32 %v8589, %v8631
    %v8633 = vpop.f32.mrf.mxu0
    %v8634 = vadd.f32 %v8591, %v8633
    %v8635 = vpop.f32.mrf.mxu0
    %v8636 = vadd.f32 %v8593, %v8635
    %v8637 = vpop.f32.mrf.mxu0
    %v8638 = vadd.f32 %v8595, %v8637
    %8639 = vdwg.mxu0
    %8640 = vmatprep.subr.bf16.mxu0 %v8064
    %8641 = vmatpush1.bf16.msra.mxu0 %v8063
    %8642 = vmatprep.subr.bf16.mxu0 %v8052
    %8643 = vmatpush1.bf16.msra.mxu0 %v8051
    %8644 = vmatprep.subr.bf16.mxu0 %v8040
    %8645 = vmatpush1.bf16.msra.mxu0 %v8039
    %8646 = vmatprep.subr.bf16.mxu0 %v8028
    %8647 = vmatpush1.bf16.msra.mxu0 %v8027
    %8648 = vmatprep.subr.bf16.mxu0 %v8016
    %8649 = vmatpush1.bf16.msra.mxu0 %v8015
    %8650 = vmatprep.subr.bf16.mxu0 %v8004
    %8651 = vmatpush1.bf16.msra.mxu0 %v8003
    %8652 = vmatprep.subr.bf16.mxu0 %v7992
    %8653 = vmatpush1.bf16.msra.mxu0 %v7991
    %8654 = vmatprep.subr.bf16.mxu0 %v7980
    %8655 = vmatpush1.bf16.msra.mxu0 %v7979
    %8656 = vmatprep.subr.bf16.mxu0 %v8160
    %8657 = vmatpush2.bf16.msra.mxu0 %v8159
    %8658 = vmatprep.subr.bf16.mxu0 %v8148
    %8659 = vmatpush2.bf16.msra.mxu0 %v8147
    %8660 = vmatprep.subr.bf16.mxu0 %v8136
    %8661 = vmatpush2.bf16.msra.mxu0 %v8135
    %8662 = vmatprep.subr.bf16.mxu0 %v8124
    %8663 = vmatpush2.bf16.msra.mxu0 %v8123
    %8664 = vmatprep.subr.bf16.mxu0 %v8112
    %8665 = vmatpush2.bf16.msra.mxu0 %v8111
    %8666 = vmatprep.subr.bf16.mxu0 %v8100
    %8667 = vmatpush2.bf16.msra.mxu0 %v8099
    %8668 = vmatprep.subr.bf16.mxu0 %v8088
    %8669 = vmatpush2.bf16.msra.mxu0 %v8087
    %8670 = vmatprep.subr.bf16.mxu0 %v8076
    %8671 = vmatpush2.bf16.msra.mxu0 %v8075
    %8672 = vmatprep.mubr.bf16.mxu0 %v7014
    %8673 = vmatmul.mubr.bf16.gmra.mxu0 %v7013
    %v8674 = vpop.f32.mrf.mxu0
    %v8675 = vadd.f32 %v8632, %v8674
    %v8676 = vpop.f32.mrf.mxu0
    %v8677 = vadd.f32 %v8634, %v8676
    %v8678 = vpop.f32.mrf.mxu0
    %v8679 = vadd.f32 %v8636, %v8678
    %v8680 = vpop.f32.mrf.mxu0
    %v8681 = vadd.f32 %v8638, %v8680
    %8682 = vdwg.mxu0
    %8683 = vmatprep.subr.bf16.mxu0 %v7490
    %8684 = vmatpush1.bf16.msra.mxu0 %v7489
    %8685 = vmatprep.subr.bf16.mxu0 %v7478
    %8686 = vmatpush1.bf16.msra.mxu0 %v7477
    %8687 = vmatprep.subr.bf16.mxu0 %v7466
    %8688 = vmatpush1.bf16.msra.mxu0 %v7465
    %8689 = vmatprep.subr.bf16.mxu0 %v7454
    %8690 = vmatpush1.bf16.msra.mxu0 %v7453
    %8691 = vmatprep.subr.bf16.mxu0 %v7442
    %8692 = vmatpush1.bf16.msra.mxu0 %v7441
    %8693 = vmatprep.subr.bf16.mxu0 %v7430
    %8694 = vmatpush1.bf16.msra.mxu0 %v7429
    %8695 = vmatprep.subr.bf16.mxu0 %v7418
    %8696 = vmatpush1.bf16.msra.mxu0 %v7417
    %8697 = vmatprep.subr.bf16.mxu0 %v7406
    %8698 = vmatpush1.bf16.msra.mxu0 %v7405
    %8699 = vmatprep.subr.bf16.mxu0 %v7586
    %8700 = vmatpush2.bf16.msra.mxu0 %v7585
    %8701 = vmatprep.subr.bf16.mxu0 %v7574
    %8702 = vmatpush2.bf16.msra.mxu0 %v7573
    %8703 = vmatprep.subr.bf16.mxu0 %v7562
    %8704 = vmatpush2.bf16.msra.mxu0 %v7561
    %8705 = vmatprep.subr.bf16.mxu0 %v7550
    %8706 = vmatpush2.bf16.msra.mxu0 %v7549
    %8707 = vmatprep.subr.bf16.mxu0 %v7538
    %8708 = vmatpush2.bf16.msra.mxu0 %v7537
    %8709 = vmatprep.subr.bf16.mxu0 %v7526
    %8710 = vmatpush2.bf16.msra.mxu0 %v7525
    %8711 = vmatprep.subr.bf16.mxu0 %v7514
    %8712 = vmatpush2.bf16.msra.mxu0 %v7513
    %8713 = vmatprep.subr.bf16.mxu0 %v7502
    %8714 = vmatpush2.bf16.msra.mxu0 %v7501
    %8715 = vmatprep.mubr.bf16.mxu0 %v7008
    %8716 = vmatmul.mubr.bf16.gmra.mxu0 %v7007
    %v8717 = vpop.f32.mrf.mxu0
    %v8718 = vadd.f32 0.0, %v8717
    %v8719 = vpop.f32.mrf.mxu0
    %v8720 = vadd.f32 0.0, %v8719
    %v8721 = vpop.f32.mrf.mxu0
    %v8722 = vadd.f32 0.0, %v8721
    %v8723 = vpop.f32.mrf.mxu0
    %v8724 = vadd.f32 0.0, %v8723
    %8725 = vdwg.mxu0
    %8726 = vmatprep.subr.bf16.mxu0 %v7682
    %8727 = vmatpush1.bf16.msra.mxu0 %v7681
    %8728 = vmatprep.subr.bf16.mxu0 %v7670
    %8729 = vmatpush1.bf16.msra.mxu0 %v7669
    %8730 = vmatprep.subr.bf16.mxu0 %v7658
    %8731 = vmatpush1.bf16.msra.mxu0 %v7657
    %8732 = vmatprep.subr.bf16.mxu0 %v7646
    %8733 = vmatpush1.bf16.msra.mxu0 %v7645
    %8734 = vmatprep.subr.bf16.mxu0 %v7634
    %8735 = vmatpush1.bf16.msra.mxu0 %v7633
    %8736 = vmatprep.subr.bf16.mxu0 %v7622
    %8737 = vmatpush1.bf16.msra.mxu0 %v7621
    %8738 = vmatprep.subr.bf16.mxu0 %v7610
    %8739 = vmatpush1.bf16.msra.mxu0 %v7609
    %8740 = vmatprep.subr.bf16.mxu0 %v7598
    %8741 = vmatpush1.bf16.msra.mxu0 %v7597
    %8742 = vmatprep.subr.bf16.mxu0 %v7778
    %8743 = vmatpush2.bf16.msra.mxu0 %v7777
    %8744 = vmatprep.subr.bf16.mxu0 %v7766
    %8745 = vmatpush2.bf16.msra.mxu0 %v7765
    %8746 = vmatprep.subr.bf16.mxu0 %v7754
    %8747 = vmatpush2.bf16.msra.mxu0 %v7753
    %8748 = vmatprep.subr.bf16.mxu0 %v7742
    %8749 = vmatpush2.bf16.msra.mxu0 %v7741
    %8750 = vmatprep.subr.bf16.mxu0 %v7730
    %8751 = vmatpush2.bf16.msra.mxu0 %v7729
    %8752 = vmatprep.subr.bf16.mxu0 %v7718
    %8753 = vmatpush2.bf16.msra.mxu0 %v7717
    %8754 = vmatprep.subr.bf16.mxu0 %v7706
    %8755 = vmatpush2.bf16.msra.mxu0 %v7705
    %8756 = vmatprep.subr.bf16.mxu0 %v7694
    %8757 = vmatpush2.bf16.msra.mxu0 %v7693
    %8758 = vmatprep.mubr.bf16.mxu0 %v7010
    %8759 = vmatmul.mubr.bf16.gmra.mxu0 %v7009
    %v8760 = vpop.f32.mrf.mxu0
    %v8761 = vadd.f32 %v8718, %v8760
    %v8762 = vpop.f32.mrf.mxu0
    %v8763 = vadd.f32 %v8720, %v8762
    %v8764 = vpop.f32.mrf.mxu0
    %v8765 = vadd.f32 %v8722, %v8764
    %v8766 = vpop.f32.mrf.mxu0
    %v8767 = vadd.f32 %v8724, %v8766
    %8768 = vdwg.mxu0
    %8769 = vmatprep.subr.bf16.mxu0 %v7874
    %8770 = vmatpush1.bf16.msra.mxu0 %v7873
    %8771 = vmatprep.subr.bf16.mxu0 %v7862
    %8772 = vmatpush1.bf16.msra.mxu0 %v7861
    %8773 = vmatprep.subr.bf16.mxu0 %v7850
    %8774 = vmatpush1.bf16.msra.mxu0 %v7849
    %8775 = vmatprep.subr.bf16.mxu0 %v7838
    %8776 = vmatpush1.bf16.msra.mxu0 %v7837
    %8777 = vmatprep.subr.bf16.mxu0 %v7826
    %8778 = vmatpush1.bf16.msra.mxu0 %v7825
    %8779 = vmatprep.subr.bf16.mxu0 %v7814
    %8780 = vmatpush1.bf16.msra.mxu0 %v7813
    %8781 = vmatprep.subr.bf16.mxu0 %v7802
    %8782 = vmatpush1.bf16.msra.mxu0 %v7801
    %8783 = vmatprep.subr.bf16.mxu0 %v7790
    %8784 = vmatpush1.bf16.msra.mxu0 %v7789
    %8785 = vmatprep.subr.bf16.mxu0 %v7970
    %8786 = vmatpush2.bf16.msra.mxu0 %v7969
    %8787 = vmatprep.subr.bf16.mxu0 %v7958
    %8788 = vmatpush2.bf16.msra.mxu0 %v7957
    %8789 = vmatprep.subr.bf16.mxu0 %v7946
    %8790 = vmatpush2.bf16.msra.mxu0 %v7945
    %8791 = vmatprep.subr.bf16.mxu0 %v7934
    %8792 = vmatpush2.bf16.msra.mxu0 %v7933
    %8793 = vmatprep.subr.bf16.mxu0 %v7922
    %8794 = vmatpush2.bf16.msra.mxu0 %v7921
    %8795 = vmatprep.subr.bf16.mxu0 %v7910
    %8796 = vmatpush2.bf16.msra.mxu0 %v7909
    %8797 = vmatprep.subr.bf16.mxu0 %v7898
    %8798 = vmatpush2.bf16.msra.mxu0 %v7897
    %8799 = vmatprep.subr.bf16.mxu0 %v7886
    %8800 = vmatpush2.bf16.msra.mxu0 %v7885
    %8801 = vmatprep.mubr.bf16.mxu0 %v7012
    %8802 = vmatmul.mubr.bf16.gmra.mxu0 %v7011
    %v8803 = vpop.f32.mrf.mxu0
    %v8804 = vadd.f32 %v8761, %v8803
    %v8805 = vpop.f32.mrf.mxu0
    %v8806 = vadd.f32 %v8763, %v8805
    %v8807 = vpop.f32.mrf.mxu0
    %v8808 = vadd.f32 %v8765, %v8807
    %v8809 = vpop.f32.mrf.mxu0
    %v8810 = vadd.f32 %v8767, %v8809
    %8811 = vdwg.mxu0
    %8812 = vmatprep.subr.bf16.mxu0 %v8066
    %8813 = vmatpush1.bf16.msra.mxu0 %v8065
    %8814 = vmatprep.subr.bf16.mxu0 %v8054
    %8815 = vmatpush1.bf16.msra.mxu0 %v8053
    %8816 = vmatprep.subr.bf16.mxu0 %v8042
    %8817 = vmatpush1.bf16.msra.mxu0 %v8041
    %8818 = vmatprep.subr.bf16.mxu0 %v8030
    %8819 = vmatpush1.bf16.msra.mxu0 %v8029
    %8820 = vmatprep.subr.bf16.mxu0 %v8018
    %8821 = vmatpush1.bf16.msra.mxu0 %v8017
    %8822 = vmatprep.subr.bf16.mxu0 %v8006
    %8823 = vmatpush1.bf16.msra.mxu0 %v8005
    %8824 = vmatprep.subr.bf16.mxu0 %v7994
    %8825 = vmatpush1.bf16.msra.mxu0 %v7993
    %8826 = vmatprep.subr.bf16.mxu0 %v7982
    %8827 = vmatpush1.bf16.msra.mxu0 %v7981
    %8828 = vmatprep.subr.bf16.mxu0 %v8162
    %8829 = vmatpush2.bf16.msra.mxu0 %v8161
    %8830 = vmatprep.subr.bf16.mxu0 %v8150
    %8831 = vmatpush2.bf16.msra.mxu0 %v8149
    %8832 = vmatprep.subr.bf16.mxu0 %v8138
    %8833 = vmatpush2.bf16.msra.mxu0 %v8137
    %8834 = vmatprep.subr.bf16.mxu0 %v8126
    %8835 = vmatpush2.bf16.msra.mxu0 %v8125
    %8836 = vmatprep.subr.bf16.mxu0 %v8114
    %8837 = vmatpush2.bf16.msra.mxu0 %v8113
    %8838 = vmatprep.subr.bf16.mxu0 %v8102
    %8839 = vmatpush2.bf16.msra.mxu0 %v8101
    %8840 = vmatprep.subr.bf16.mxu0 %v8090
    %8841 = vmatpush2.bf16.msra.mxu0 %v8089
    %8842 = vmatprep.subr.bf16.mxu0 %v8078
    %8843 = vmatpush2.bf16.msra.mxu0 %v8077
    %8844 = vmatprep.mubr.bf16.mxu0 %v7014
    %8845 = vmatmul.mubr.bf16.gmra.mxu0 %v7013
    %v8846 = vpop.f32.mrf.mxu0
    %v8847 = vadd.f32 %v8804, %v8846
    %v8848 = vpop.f32.mrf.mxu0
    %v8849 = vadd.f32 %v8806, %v8848
    %v8850 = vpop.f32.mrf.mxu0
    %v8851 = vadd.f32 %v8808, %v8850
    %v8852 = vpop.f32.mrf.mxu0
    %v8853 = vadd.f32 %v8810, %v8852
    %8854 = vdwg.mxu0
    %8855 = vmatprep.subr.bf16.mxu0 %v7492
    %8856 = vmatpush1.bf16.msra.mxu0 %v7491
    %8857 = vmatprep.subr.bf16.mxu0 %v7480
    %8858 = vmatpush1.bf16.msra.mxu0 %v7479
    %8859 = vmatprep.subr.bf16.mxu0 %v7468
    %8860 = vmatpush1.bf16.msra.mxu0 %v7467
    %8861 = vmatprep.subr.bf16.mxu0 %v7456
    %8862 = vmatpush1.bf16.msra.mxu0 %v7455
    %8863 = vmatprep.subr.bf16.mxu0 %v7444
    %8864 = vmatpush1.bf16.msra.mxu0 %v7443
    %8865 = vmatprep.subr.bf16.mxu0 %v7432
    %8866 = vmatpush1.bf16.msra.mxu0 %v7431
    %8867 = vmatprep.subr.bf16.mxu0 %v7420
    %8868 = vmatpush1.bf16.msra.mxu0 %v7419
    %8869 = vmatprep.subr.bf16.mxu0 %v7408
    %8870 = vmatpush1.bf16.msra.mxu0 %v7407
    %8871 = vmatprep.subr.bf16.mxu0 %v7588
    %8872 = vmatpush2.bf16.msra.mxu0 %v7587
    %8873 = vmatprep.subr.bf16.mxu0 %v7576
    %8874 = vmatpush2.bf16.msra.mxu0 %v7575
    %8875 = vmatprep.subr.bf16.mxu0 %v7564
    %8876 = vmatpush2.bf16.msra.mxu0 %v7563
    %8877 = vmatprep.subr.bf16.mxu0 %v7552
    %8878 = vmatpush2.bf16.msra.mxu0 %v7551
    %8879 = vmatprep.subr.bf16.mxu0 %v7540
    %8880 = vmatpush2.bf16.msra.mxu0 %v7539
    %8881 = vmatprep.subr.bf16.mxu0 %v7528
    %8882 = vmatpush2.bf16.msra.mxu0 %v7527
    %8883 = vmatprep.subr.bf16.mxu0 %v7516
    %8884 = vmatpush2.bf16.msra.mxu0 %v7515
    %8885 = vmatprep.subr.bf16.mxu0 %v7504
    %8886 = vmatpush2.bf16.msra.mxu0 %v7503
    %8887 = vmatprep.mubr.bf16.mxu0 %v7008
    %8888 = vmatmul.mubr.bf16.gmra.mxu0 %v7007
    %v8889 = vpop.f32.mrf.mxu0
    %v8890 = vadd.f32 0.0, %v8889
    %v8891 = vpop.f32.mrf.mxu0
    %v8892 = vadd.f32 0.0, %v8891
    %v8893 = vpop.f32.mrf.mxu0
    %v8894 = vadd.f32 0.0, %v8893
    %v8895 = vpop.f32.mrf.mxu0
    %v8896 = vadd.f32 0.0, %v8895
    %8897 = vdwg.mxu0
    %8898 = vmatprep.subr.bf16.mxu0 %v7684
    %8899 = vmatpush1.bf16.msra.mxu0 %v7683
    %8900 = vmatprep.subr.bf16.mxu0 %v7672
    %8901 = vmatpush1.bf16.msra.mxu0 %v7671
    %8902 = vmatprep.subr.bf16.mxu0 %v7660
    %8903 = vmatpush1.bf16.msra.mxu0 %v7659
    %8904 = vmatprep.subr.bf16.mxu0 %v7648
    %8905 = vmatpush1.bf16.msra.mxu0 %v7647
    %8906 = vmatprep.subr.bf16.mxu0 %v7636
    %8907 = vmatpush1.bf16.msra.mxu0 %v7635
    %8908 = vmatprep.subr.bf16.mxu0 %v7624
    %8909 = vmatpush1.bf16.msra.mxu0 %v7623
    %8910 = vmatprep.subr.bf16.mxu0 %v7612
    %8911 = vmatpush1.bf16.msra.mxu0 %v7611
    %8912 = vmatprep.subr.bf16.mxu0 %v7600
    %8913 = vmatpush1.bf16.msra.mxu0 %v7599
    %8914 = vmatprep.subr.bf16.mxu0 %v7780
    %8915 = vmatpush2.bf16.msra.mxu0 %v7779
    %8916 = vmatprep.subr.bf16.mxu0 %v7768
    %8917 = vmatpush2.bf16.msra.mxu0 %v7767
    %8918 = vmatprep.subr.bf16.mxu0 %v7756
    %8919 = vmatpush2.bf16.msra.mxu0 %v7755
    %8920 = vmatprep.subr.bf16.mxu0 %v7744
    %8921 = vmatpush2.bf16.msra.mxu0 %v7743
    %8922 = vmatprep.subr.bf16.mxu0 %v7732
    %8923 = vmatpush2.bf16.msra.mxu0 %v7731
    %8924 = vmatprep.subr.bf16.mxu0 %v7720
    %8925 = vmatpush2.bf16.msra.mxu0 %v7719
    %8926 = vmatprep.subr.bf16.mxu0 %v7708
    %8927 = vmatpush2.bf16.msra.mxu0 %v7707
    %8928 = vmatprep.subr.bf16.mxu0 %v7696
    %8929 = vmatpush2.bf16.msra.mxu0 %v7695
    %8930 = vmatprep.mubr.bf16.mxu0 %v7010
    %8931 = vmatmul.mubr.bf16.gmra.mxu0 %v7009
    %v8932 = vpop.f32.mrf.mxu0
    %v8933 = vadd.f32 %v8890, %v8932
    %v8934 = vpop.f32.mrf.mxu0
    %v8935 = vadd.f32 %v8892, %v8934
    %v8936 = vpop.f32.mrf.mxu0
    %v8937 = vadd.f32 %v8894, %v8936
    %v8938 = vpop.f32.mrf.mxu0
    %v8939 = vadd.f32 %v8896, %v8938
    %8940 = vdwg.mxu0
    %8941 = vmatprep.subr.bf16.mxu0 %v7876
    %8942 = vmatpush1.bf16.msra.mxu0 %v7875
    %8943 = vmatprep.subr.bf16.mxu0 %v7864
    %8944 = vmatpush1.bf16.msra.mxu0 %v7863
    %8945 = vmatprep.subr.bf16.mxu0 %v7852
    %8946 = vmatpush1.bf16.msra.mxu0 %v7851
    %8947 = vmatprep.subr.bf16.mxu0 %v7840
    %8948 = vmatpush1.bf16.msra.mxu0 %v7839
    %8949 = vmatprep.subr.bf16.mxu0 %v7828
    %8950 = vmatpush1.bf16.msra.mxu0 %v7827
    %8951 = vmatprep.subr.bf16.mxu0 %v7816
    %8952 = vmatpush1.bf16.msra.mxu0 %v7815
    %8953 = vmatprep.subr.bf16.mxu0 %v7804
    %8954 = vmatpush1.bf16.msra.mxu0 %v7803
    %8955 = vmatprep.subr.bf16.mxu0 %v7792
    %8956 = vmatpush1.bf16.msra.mxu0 %v7791
    %8957 = vmatprep.subr.bf16.mxu0 %v7972
    %8958 = vmatpush2.bf16.msra.mxu0 %v7971
    %8959 = vmatprep.subr.bf16.mxu0 %v7960
    %8960 = vmatpush2.bf16.msra.mxu0 %v7959
    %8961 = vmatprep.subr.bf16.mxu0 %v7948
    %8962 = vmatpush2.bf16.msra.mxu0 %v7947
    %8963 = vmatprep.subr.bf16.mxu0 %v7936
    %8964 = vmatpush2.bf16.msra.mxu0 %v7935
    %8965 = vmatprep.subr.bf16.mxu0 %v7924
    %8966 = vmatpush2.bf16.msra.mxu0 %v7923
    %8967 = vmatprep.subr.bf16.mxu0 %v7912
    %8968 = vmatpush2.bf16.msra.mxu0 %v7911
    %8969 = vmatprep.subr.bf16.mxu0 %v7900
    %8970 = vmatpush2.bf16.msra.mxu0 %v7899
    %8971 = vmatprep.subr.bf16.mxu0 %v7888
    %8972 = vmatpush2.bf16.msra.mxu0 %v7887
    %8973 = vmatprep.mubr.bf16.mxu0 %v7012
    %8974 = vmatmul.mubr.bf16.gmra.mxu0 %v7011
    %v8975 = vpop.f32.mrf.mxu0
    %v8976 = vadd.f32 %v8933, %v8975
    %v8977 = vpop.f32.mrf.mxu0
    %v8978 = vadd.f32 %v8935, %v8977
    %v8979 = vpop.f32.mrf.mxu0
    %v8980 = vadd.f32 %v8937, %v8979
    %v8981 = vpop.f32.mrf.mxu0
    %v8982 = vadd.f32 %v8939, %v8981
    %8983 = vdwg.mxu0
    %8984 = vmatprep.subr.bf16.mxu0 %v8068
    %8985 = vmatpush1.bf16.msra.mxu0 %v8067
    %8986 = vmatprep.subr.bf16.mxu0 %v8056
    %8987 = vmatpush1.bf16.msra.mxu0 %v8055
    %8988 = vmatprep.subr.bf16.mxu0 %v8044
    %8989 = vmatpush1.bf16.msra.mxu0 %v8043
    %8990 = vmatprep.subr.bf16.mxu0 %v8032
    %8991 = vmatpush1.bf16.msra.mxu0 %v8031
    %8992 = vmatprep.subr.bf16.mxu0 %v8020
    %8993 = vmatpush1.bf16.msra.mxu0 %v8019
    %8994 = vmatprep.subr.bf16.mxu0 %v8008
    %8995 = vmatpush1.bf16.msra.mxu0 %v8007
    %8996 = vmatprep.subr.bf16.mxu0 %v7996
    %8997 = vmatpush1.bf16.msra.mxu0 %v7995
    %8998 = vmatprep.subr.bf16.mxu0 %v7984
    %8999 = vmatpush1.bf16.msra.mxu0 %v7983
    %9000 = vmatprep.subr.bf16.mxu0 %v8164
    %9001 = vmatpush2.bf16.msra.mxu0 %v8163
    %9002 = vmatprep.subr.bf16.mxu0 %v8152
    %9003 = vmatpush2.bf16.msra.mxu0 %v8151
    %9004 = vmatprep.subr.bf16.mxu0 %v8140
    %9005 = vmatpush2.bf16.msra.mxu0 %v8139
    %9006 = vmatprep.subr.bf16.mxu0 %v8128
    %9007 = vmatpush2.bf16.msra.mxu0 %v8127
    %9008 = vmatprep.subr.bf16.mxu0 %v8116
    %9009 = vmatpush2.bf16.msra.mxu0 %v8115
    %9010 = vmatprep.subr.bf16.mxu0 %v8104
    %9011 = vmatpush2.bf16.msra.mxu0 %v8103
    %9012 = vmatprep.subr.bf16.mxu0 %v8092
    %9013 = vmatpush2.bf16.msra.mxu0 %v8091
    %9014 = vmatprep.subr.bf16.mxu0 %v8080
    %9015 = vmatpush2.bf16.msra.mxu0 %v8079
    %9016 = vmatprep.mubr.bf16.mxu0 %v7014
    %9017 = vmatmul.mubr.bf16.gmra.mxu0 %v7013
    %v9018 = vpop.f32.mrf.mxu0
    %v9019 = vadd.f32 %v8976, %v9018
    %v9020 = vpop.f32.mrf.mxu0
    %v9021 = vadd.f32 %v8978, %v9020
    %v9022 = vpop.f32.mrf.mxu0
    %v9023 = vadd.f32 %v8980, %v9022
    %v9024 = vpop.f32.mrf.mxu0
    %v9025 = vadd.f32 %v8982, %v9024
    %9026 = vdwg.mxu0
    %9027 = vmatprep.subr.bf16.mxu0 %v7494
    %9028 = vmatpush1.bf16.msra.mxu0 %v7493
    %9029 = vmatprep.subr.bf16.mxu0 %v7482
    %9030 = vmatpush1.bf16.msra.mxu0 %v7481
    %9031 = vmatprep.subr.bf16.mxu0 %v7470
    %9032 = vmatpush1.bf16.msra.mxu0 %v7469
    %9033 = vmatprep.subr.bf16.mxu0 %v7458
    %9034 = vmatpush1.bf16.msra.mxu0 %v7457
    %9035 = vmatprep.subr.bf16.mxu0 %v7446
    %9036 = vmatpush1.bf16.msra.mxu0 %v7445
    %9037 = vmatprep.subr.bf16.mxu0 %v7434
    %9038 = vmatpush1.bf16.msra.mxu0 %v7433
    %9039 = vmatprep.subr.bf16.mxu0 %v7422
    %9040 = vmatpush1.bf16.msra.mxu0 %v7421
    %9041 = vmatprep.subr.bf16.mxu0 %v7410
    %9042 = vmatpush1.bf16.msra.mxu0 %v7409
    %9043 = vmatprep.subr.bf16.mxu0 %v7590
    %9044 = vmatpush2.bf16.msra.mxu0 %v7589
    %9045 = vmatprep.subr.bf16.mxu0 %v7578
    %9046 = vmatpush2.bf16.msra.mxu0 %v7577
    %9047 = vmatprep.subr.bf16.mxu0 %v7566
    %9048 = vmatpush2.bf16.msra.mxu0 %v7565
    %9049 = vmatprep.subr.bf16.mxu0 %v7554
    %9050 = vmatpush2.bf16.msra.mxu0 %v7553
    %9051 = vmatprep.subr.bf16.mxu0 %v7542
    %9052 = vmatpush2.bf16.msra.mxu0 %v7541
    %9053 = vmatprep.subr.bf16.mxu0 %v7530
    %9054 = vmatpush2.bf16.msra.mxu0 %v7529
    %9055 = vmatprep.subr.bf16.mxu0 %v7518
    %9056 = vmatpush2.bf16.msra.mxu0 %v7517
    %9057 = vmatprep.subr.bf16.mxu0 %v7506
    %9058 = vmatpush2.bf16.msra.mxu0 %v7505
    %9059 = vmatprep.mubr.bf16.mxu0 %v7008
    %9060 = vmatmul.mubr.bf16.gmra.mxu0 %v7007
    %v9061 = vpop.f32.mrf.mxu0
    %v9062 = vadd.f32 0.0, %v9061
    %v9063 = vpop.f32.mrf.mxu0
    %v9064 = vadd.f32 0.0, %v9063
    %v9065 = vpop.f32.mrf.mxu0
    %v9066 = vadd.f32 0.0, %v9065
    %v9067 = vpop.f32.mrf.mxu0
    %v9068 = vadd.f32 0.0, %v9067
    %9069 = vdwg.mxu0
    %9070 = vmatprep.subr.bf16.mxu0 %v7686
    %9071 = vmatpush1.bf16.msra.mxu0 %v7685
    %9072 = vmatprep.subr.bf16.mxu0 %v7674
    %9073 = vmatpush1.bf16.msra.mxu0 %v7673
    %9074 = vmatprep.subr.bf16.mxu0 %v7662
    %9075 = vmatpush1.bf16.msra.mxu0 %v7661
    %9076 = vmatprep.subr.bf16.mxu0 %v7650
    %9077 = vmatpush1.bf16.msra.mxu0 %v7649
    %9078 = vmatprep.subr.bf16.mxu0 %v7638
    %9079 = vmatpush1.bf16.msra.mxu0 %v7637
    %9080 = vmatprep.subr.bf16.mxu0 %v7626
    %9081 = vmatpush1.bf16.msra.mxu0 %v7625
    %9082 = vmatprep.subr.bf16.mxu0 %v7614
    %9083 = vmatpush1.bf16.msra.mxu0 %v7613
    %9084 = vmatprep.subr.bf16.mxu0 %v7602
    %9085 = vmatpush1.bf16.msra.mxu0 %v7601
    %9086 = vmatprep.subr.bf16.mxu0 %v7782
    %9087 = vmatpush2.bf16.msra.mxu0 %v7781
    %9088 = vmatprep.subr.bf16.mxu0 %v7770
    %9089 = vmatpush2.bf16.msra.mxu0 %v7769
    %9090 = vmatprep.subr.bf16.mxu0 %v7758
    %9091 = vmatpush2.bf16.msra.mxu0 %v7757
    %9092 = vmatprep.subr.bf16.mxu0 %v7746
    %9093 = vmatpush2.bf16.msra.mxu0 %v7745
    %9094 = vmatprep.subr.bf16.mxu0 %v7734
    %9095 = vmatpush2.bf16.msra.mxu0 %v7733
    %9096 = vmatprep.subr.bf16.mxu0 %v7722
    %9097 = vmatpush2.bf16.msra.mxu0 %v7721
    %9098 = vmatprep.subr.bf16.mxu0 %v7710
    %9099 = vmatpush2.bf16.msra.mxu0 %v7709
    %9100 = vmatprep.subr.bf16.mxu0 %v7698
    %9101 = vmatpush2.bf16.msra.mxu0 %v7697
    %9102 = vmatprep.mubr.bf16.mxu0 %v7010
    %9103 = vmatmul.mubr.bf16.gmra.mxu0 %v7009
    %v9104 = vpop.f32.mrf.mxu0
    %v9105 = vadd.f32 %v9062, %v9104
    %v9106 = vpop.f32.mrf.mxu0
    %v9107 = vadd.f32 %v9064, %v9106
    %v9108 = vpop.f32.mrf.mxu0
    %v9109 = vadd.f32 %v9066, %v9108
    %v9110 = vpop.f32.mrf.mxu0
    %v9111 = vadd.f32 %v9068, %v9110
    %9112 = vdwg.mxu0
    %9113 = vmatprep.subr.bf16.mxu0 %v7878
    %9114 = vmatpush1.bf16.msra.mxu0 %v7877
    %9115 = vmatprep.subr.bf16.mxu0 %v7866
    %9116 = vmatpush1.bf16.msra.mxu0 %v7865
    %9117 = vmatprep.subr.bf16.mxu0 %v7854
    %9118 = vmatpush1.bf16.msra.mxu0 %v7853
    %9119 = vmatprep.subr.bf16.mxu0 %v7842
    %9120 = vmatpush1.bf16.msra.mxu0 %v7841
    %9121 = vmatprep.subr.bf16.mxu0 %v7830
    %9122 = vmatpush1.bf16.msra.mxu0 %v7829
    %9123 = vmatprep.subr.bf16.mxu0 %v7818
    %9124 = vmatpush1.bf16.msra.mxu0 %v7817
    %9125 = vmatprep.subr.bf16.mxu0 %v7806
    %9126 = vmatpush1.bf16.msra.mxu0 %v7805
    %9127 = vmatprep.subr.bf16.mxu0 %v7794
    %9128 = vmatpush1.bf16.msra.mxu0 %v7793
    %9129 = vmatprep.subr.bf16.mxu0 %v7974
    %9130 = vmatpush2.bf16.msra.mxu0 %v7973
    %9131 = vmatprep.subr.bf16.mxu0 %v7962
    %9132 = vmatpush2.bf16.msra.mxu0 %v7961
    %9133 = vmatprep.subr.bf16.mxu0 %v7950
    %9134 = vmatpush2.bf16.msra.mxu0 %v7949
    %9135 = vmatprep.subr.bf16.mxu0 %v7938
    %9136 = vmatpush2.bf16.msra.mxu0 %v7937
    %9137 = vmatprep.subr.bf16.mxu0 %v7926
    %9138 = vmatpush2.bf16.msra.mxu0 %v7925
    %9139 = vmatprep.subr.bf16.mxu0 %v7914
    %9140 = vmatpush2.bf16.msra.mxu0 %v7913
    %9141 = vmatprep.subr.bf16.mxu0 %v7902
    %9142 = vmatpush2.bf16.msra.mxu0 %v7901
    %9143 = vmatprep.subr.bf16.mxu0 %v7890
    %9144 = vmatpush2.bf16.msra.mxu0 %v7889
    %9145 = vmatprep.mubr.bf16.mxu0 %v7012
    %9146 = vmatmul.mubr.bf16.gmra.mxu0 %v7011
    %v9147 = vpop.f32.mrf.mxu0
    %v9148 = vadd.f32 %v9105, %v9147
    %v9149 = vpop.f32.mrf.mxu0
    %v9150 = vadd.f32 %v9107, %v9149
    %v9151 = vpop.f32.mrf.mxu0
    %v9152 = vadd.f32 %v9109, %v9151
    %v9153 = vpop.f32.mrf.mxu0
    %v9154 = vadd.f32 %v9111, %v9153
    %9155 = vdwg.mxu0
    %9156 = vmatprep.subr.bf16.mxu0 %v8070
    %9157 = vmatpush1.bf16.msra.mxu0 %v8069
    %9158 = vmatprep.subr.bf16.mxu0 %v8058
    %9159 = vmatpush1.bf16.msra.mxu0 %v8057
    %9160 = vmatprep.subr.bf16.mxu0 %v8046
    %9161 = vmatpush1.bf16.msra.mxu0 %v8045
    %9162 = vmatprep.subr.bf16.mxu0 %v8034
    %9163 = vmatpush1.bf16.msra.mxu0 %v8033
    %9164 = vmatprep.subr.bf16.mxu0 %v8022
    %9165 = vmatpush1.bf16.msra.mxu0 %v8021
    %9166 = vmatprep.subr.bf16.mxu0 %v8010
    %9167 = vmatpush1.bf16.msra.mxu0 %v8009
    %9168 = vmatprep.subr.bf16.mxu0 %v7998
    %9169 = vmatpush1.bf16.msra.mxu0 %v7997
    %9170 = vmatprep.subr.bf16.mxu0 %v7986
    %9171 = vmatpush1.bf16.msra.mxu0 %v7985
    %9172 = vmatprep.subr.bf16.mxu0 %v8166
    %9173 = vmatpush2.bf16.msra.mxu0 %v8165
    %9174 = vmatprep.subr.bf16.mxu0 %v8154
    %9175 = vmatpush2.bf16.msra.mxu0 %v8153
    %9176 = vmatprep.subr.bf16.mxu0 %v8142
    %9177 = vmatpush2.bf16.msra.mxu0 %v8141
    %9178 = vmatprep.subr.bf16.mxu0 %v8130
    %9179 = vmatpush2.bf16.msra.mxu0 %v8129
    %9180 = vmatprep.subr.bf16.mxu0 %v8118
    %9181 = vmatpush2.bf16.msra.mxu0 %v8117
    %9182 = vmatprep.subr.bf16.mxu0 %v8106
    %9183 = vmatpush2.bf16.msra.mxu0 %v8105
    %9184 = vmatprep.subr.bf16.mxu0 %v8094
    %9185 = vmatpush2.bf16.msra.mxu0 %v8093
    %9186 = vmatprep.subr.bf16.mxu0 %v8082
    %9187 = vmatpush2.bf16.msra.mxu0 %v8081
    %9188 = vmatprep.mubr.bf16.mxu0 %v7014
    %9189 = vmatmul.mubr.bf16.gmra.mxu0 %v7013
    %v9190 = vpop.f32.mrf.mxu0
    %v9191 = vadd.f32 %v9148, %v9190
    %v9192 = vpop.f32.mrf.mxu0
    %v9193 = vadd.f32 %v9150, %v9192
    %v9194 = vpop.f32.mrf.mxu0
    %v9195 = vadd.f32 %v9152, %v9194
    %v9196 = vpop.f32.mrf.mxu0
    %v9197 = vadd.f32 %v9154, %v9196
    %9198 = vdwg.mxu0
    %s9199 = scalar_lea.vmem [#allocation5], 6
    %v9200 = vld [vmem:[%s9199] ss:$8 sm:$0xf]
    %v9201 = vld [vmem:[%s9199] ss:$8 sm:$0xf0]
    %v9202 = vor.u32 %v9200, %v9201
    %s9203 = scalar_lea.vmem [#allocation5], 70
    %v9204 = vld [vmem:[%s9203] ss:$8 sm:$0xf]
    %s9205 = scalar_lea.vmem [#allocation7], 6
    %v9206 = vld [vmem:[%s9205] ss:$8 sm:$0xf]
    %v9207 = vld [vmem:[%s9205] ss:$8 sm:$0xf0]
    %v9208 = vor.u32 %v9206, %v9207
    %s9209 = scalar_lea.vmem [#allocation7], 70
    %v9210 = vld [vmem:[%s9209] ss:$8 sm:$0xf]
    %v9213 = vlaneseq
    %v9214 = vshrl.u32 %v9213, 7
    %v9215 = vsub.s32 0, %v9214
    %v9216 = vrot.slane %v9202, %v9215
    %v9217 = vlaneseq
    %v9218 = vshrl.u32 %v9217, 7
    %v9219 = vsub.s32 1, %v9218
    %v9220 = vrot.slane %v9202, %v9219
    %v9221 = vlaneseq
    %v9222 = vshrl.u32 %v9221, 7
    %v9223 = vsub.s32 2, %v9222
    %v9224 = vrot.slane %v9202, %v9223
    %v9225 = vlaneseq
    %v9226 = vshrl.u32 %v9225, 7
    %v9227 = vsub.s32 3, %v9226
    %v9228 = vrot.slane %v9202, %v9227
    %v9229 = vlaneseq
    %v9230 = vshrl.u32 %v9229, 7
    %v9231 = vsub.s32 4, %v9230
    %v9232 = vrot.slane %v9202, %v9231
    %v9233 = vlaneseq
    %v9234 = vshrl.u32 %v9233, 7
    %v9235 = vsub.s32 5, %v9234
    %v9236 = vrot.slane %v9202, %v9235
    %v9237 = vlaneseq
    %v9238 = vshrl.u32 %v9237, 7
    %v9239 = vsub.s32 6, %v9238
    %v9240 = vrot.slane %v9202, %v9239
    %v9241 = vlaneseq
    %v9242 = vshrl.u32 %v9241, 7
    %v9243 = vsub.s32 7, %v9242
    %v9244 = vrot.slane %v9202, %v9243
    %v9245 = vlaneseq
    %v9246 = vshrl.u32 %v9245, 7
    %v9247 = vsub.s32 0, %v9246
    %v9248 = vrot.slane %v9204, %v9247
    %v9249 = vlaneseq
    %v9250 = vshrl.u32 %v9249, 7
    %v9251 = vsub.s32 1, %v9250
    %v9252 = vrot.slane %v9204, %v9251
    %v9253 = vlaneseq
    %v9254 = vshrl.u32 %v9253, 7
    %v9255 = vsub.s32 2, %v9254
    %v9256 = vrot.slane %v9204, %v9255
    %v9257 = vlaneseq
    %v9258 = vshrl.u32 %v9257, 7
    %v9259 = vsub.s32 3, %v9258
    %v9260 = vrot.slane %v9204, %v9259
    %v9273 = vmul.f32 %v8331, %v9216
    %v9274 = vmul.f32 %v8333, %v9220
    %v9275 = vmul.f32 %v8503, %v9224
    %v9276 = vmul.f32 %v8505, %v9228
    %v9277 = vmul.f32 %v8675, %v9232
    %v9278 = vmul.f32 %v8677, %v9236
    %v9279 = vmul.f32 %v8847, %v9240
    %v9280 = vmul.f32 %v8849, %v9244
    %v9281 = vmul.f32 %v9019, %v9248
    %v9282 = vmul.f32 %v9021, %v9252
    %v9283 = vmul.f32 %v9191, %v9256
    %v9284 = vmul.f32 %v9193, %v9260
    %v9285 = vmul.f32 %v8335, %v9216
    %v9286 = vmul.f32 %v8337, %v9220
    %v9287 = vmul.f32 %v8507, %v9224
    %v9288 = vmul.f32 %v8509, %v9228
    %v9289 = vmul.f32 %v8679, %v9232
    %v9290 = vmul.f32 %v8681, %v9236
    %v9291 = vmul.f32 %v8851, %v9240
    %v9292 = vmul.f32 %v8853, %v9244
    %v9293 = vmul.f32 %v9023, %v9248
    %v9294 = vmul.f32 %v9025, %v9252
    %v9295 = vmul.f32 %v9195, %v9256
    %v9296 = vmul.f32 %v9197, %v9260
    %v9299 = vlaneseq
    %v9300 = vshrl.u32 %v9299, 7
    %v9301 = vsub.s32 0, %v9300
    %v9302 = vrot.slane %v9208, %v9301
    %v9303 = vlaneseq
    %v9304 = vshrl.u32 %v9303, 7
    %v9305 = vsub.s32 1, %v9304
    %v9306 = vrot.slane %v9208, %v9305
    %v9307 = vlaneseq
    %v9308 = vshrl.u32 %v9307, 7
    %v9309 = vsub.s32 2, %v9308
    %v9310 = vrot.slane %v9208, %v9309
    %v9311 = vlaneseq
    %v9312 = vshrl.u32 %v9311, 7
    %v9313 = vsub.s32 3, %v9312
    %v9314 = vrot.slane %v9208, %v9313
    %v9315 = vlaneseq
    %v9316 = vshrl.u32 %v9315, 7
    %v9317 = vsub.s32 4, %v9316
    %v9318 = vrot.slane %v9208, %v9317
    %v9319 = vlaneseq
    %v9320 = vshrl.u32 %v9319, 7
    %v9321 = vsub.s32 5, %v9320
    %v9322 = vrot.slane %v9208, %v9321
    %v9323 = vlaneseq
    %v9324 = vshrl.u32 %v9323, 7
    %v9325 = vsub.s32 6, %v9324
    %v9326 = vrot.slane %v9208, %v9325
    %v9327 = vlaneseq
    %v9328 = vshrl.u32 %v9327, 7
    %v9329 = vsub.s32 7, %v9328
    %v9330 = vrot.slane %v9208, %v9329
    %v9331 = vlaneseq
    %v9332 = vshrl.u32 %v9331, 7
    %v9333 = vsub.s32 0, %v9332
    %v9334 = vrot.slane %v9210, %v9333
    %v9335 = vlaneseq
    %v9336 = vshrl.u32 %v9335, 7
    %v9337 = vsub.s32 1, %v9336
    %v9338 = vrot.slane %v9210, %v9337
    %v9339 = vlaneseq
    %v9340 = vshrl.u32 %v9339, 7
    %v9341 = vsub.s32 2, %v9340
    %v9342 = vrot.slane %v9210, %v9341
    %v9343 = vlaneseq
    %v9344 = vshrl.u32 %v9343, 7
    %v9345 = vsub.s32 3, %v9344
    %v9346 = vrot.slane %v9210, %v9345
    %v9359 = vadd.f32 %v9273, %v9302
    %v9360 = vadd.f32 %v9274, %v9306
    %v9361 = vadd.f32 %v9275, %v9310
    %v9362 = vadd.f32 %v9276, %v9314
    %v9363 = vadd.f32 %v9277, %v9318
    %v9364 = vadd.f32 %v9278, %v9322
    %v9365 = vadd.f32 %v9279, %v9326
    %v9366 = vadd.f32 %v9280, %v9330
    %v9367 = vadd.f32 %v9281, %v9334
    %v9368 = vadd.f32 %v9282, %v9338
    %v9369 = vadd.f32 %v9283, %v9342
    %v9370 = vadd.f32 %v9284, %v9346
    %v9371 = vadd.f32 %v9285, %v9302
    %v9372 = vadd.f32 %v9286, %v9306
    %v9373 = vadd.f32 %v9287, %v9310
    %v9374 = vadd.f32 %v9288, %v9314
    %v9375 = vadd.f32 %v9289, %v9318
    %v9376 = vadd.f32 %v9290, %v9322
    %v9377 = vadd.f32 %v9291, %v9326
    %v9378 = vadd.f32 %v9292, %v9330
    %v9379 = vadd.f32 %v9293, %v9334
    %v9380 = vadd.f32 %v9294, %v9338
    %v9381 = vadd.f32 %v9295, %v9342
    %v9382 = vadd.f32 %v9296, %v9346
    %v9383 = vtanh.pop %v9359
    %v9384 = vtanh.pop %v9360
    %v9385 = vtanh.pop %v9361
    %v9386 = vtanh.pop %v9362
    %v9387 = vtanh.pop %v9363
    %v9388 = vtanh.pop %v9364
    %v9389 = vtanh.pop %v9365
    %v9390 = vtanh.pop %v9366
    %v9391 = vtanh.pop %v9367
    %v9392 = vtanh.pop %v9368
    %v9393 = vtanh.pop %v9369
    %v9394 = vtanh.pop %v9370
    %v9395 = vtanh.pop %v9371
    %v9396 = vtanh.pop %v9372
    %v9397 = vtanh.pop %v9373
    %v9398 = vtanh.pop %v9374
    %v9399 = vtanh.pop %v9375
    %v9400 = vtanh.pop %v9376
    %v9401 = vtanh.pop %v9377
    %v9402 = vtanh.pop %v9378
    %v9403 = vtanh.pop %v9379
    %v9404 = vtanh.pop %v9380
    %v9405 = vtanh.pop %v9381
    %v9406 = vtanh.pop %v9382
    %v9407 = vpack.c.bf16 %v9395, %v9383
    %v9408 = vpack.c.bf16 %v9396, %v9384
    %v9409 = vpack.c.bf16 %v9397, %v9385
    %v9410 = vpack.c.bf16 %v9398, %v9386
    %v9411 = vpack.c.bf16 %v9399, %v9387
    %v9412 = vpack.c.bf16 %v9400, %v9388
    %v9413 = vpack.c.bf16 %v9401, %v9389
    %v9414 = vpack.c.bf16 %v9402, %v9390
    %v9415 = vpack.c.bf16 %v9403, %v9391
    %v9416 = vpack.c.bf16 %v9404, %v9392
    %v9417 = vpack.c.bf16 %v9405, %v9393
    %v9418 = vpack.c.bf16 %v9406, %v9394
    %v9419 = vld [vmem:[#allocation19] sm:$0xff]
    %v9420 = vld [vmem:[#allocation19 + $0x8] sm:$0xff]
    %v9421 = vld [vmem:[#allocation19 + $0x10] sm:$0xff]
    %v9422 = vld [vmem:[#allocation19 + $0x18] sm:$0xff]
    %v9423 = vld [vmem:[#allocation19 + $0x20] sm:$0xff]
    %v9424 = vld [vmem:[#allocation19 + $0x28] sm:$0xff]
    %v9425 = vld [vmem:[#allocation19 + $0x30] sm:$0xff]
    %v9426 = vld [vmem:[#allocation19 + $0x38] sm:$0xff]
    %v9427 = vld [vmem:[#allocation19 + $0x40] sm:$0xff]
    %v9428 = vld [vmem:[#allocation19 + $0x48] sm:$0xff]
    %v9429 = vld [vmem:[#allocation19 + $0x50] sm:$0xff]
    %v9430 = vld [vmem:[#allocation19 + $0x58] sm:$0xff]
    %v9431 = vld [vmem:[#allocation19 + $0x60] sm:$0xff]
    %v9432 = vld [vmem:[#allocation19 + $0x68] sm:$0xff]
    %v9433 = vld [vmem:[#allocation19 + $0x70] sm:$0xff]
    %v9434 = vld [vmem:[#allocation19 + $0x78] sm:$0xff]
    %v9435 = vld [vmem:[#allocation19 + $0x80] sm:$0xff]
    %v9436 = vld [vmem:[#allocation19 + $0x88] sm:$0xff]
    %v9437 = vld [vmem:[#allocation19 + $0x90] sm:$0xff]
    %v9438 = vld [vmem:[#allocation19 + $0x98] sm:$0xff]
    %v9439 = vld [vmem:[#allocation19 + $0xa0] sm:$0xff]
    %v9440 = vld [vmem:[#allocation19 + $0xa8] sm:$0xff]
    %v9441 = vld [vmem:[#allocation19 + $0xb0] sm:$0xff]
    %v9442 = vld [vmem:[#allocation19 + $0xb8] sm:$0xff]
    %v9443 = vld [vmem:[#allocation19 + $0xc0] sm:$0xff]
    %v9444 = vld [vmem:[#allocation19 + $0xc8] sm:$0xff]
    %v9445 = vld [vmem:[#allocation19 + $0xd0] sm:$0xff]
    %v9446 = vld [vmem:[#allocation19 + $0xd8] sm:$0xff]
    %v9447 = vld [vmem:[#allocation19 + $0xe0] sm:$0xff]
    %v9448 = vld [vmem:[#allocation19 + $0xe8] sm:$0xff]
    %v9449 = vld [vmem:[#allocation19 + $0xf0] sm:$0xff]
    %v9450 = vld [vmem:[#allocation19 + $0xf8] sm:$0xff]
    %v9451 = vld [vmem:[#allocation19 + $0x100] sm:$0xff]
    %v9452 = vld [vmem:[#allocation19 + $0x108] sm:$0xff]
    %v9453 = vld [vmem:[#allocation19 + $0x110] sm:$0xff]
    %v9454 = vld [vmem:[#allocation19 + $0x118] sm:$0xff]
    %v9455 = vld [vmem:[#allocation19 + $0x120] sm:$0xff]
    %v9456 = vld [vmem:[#allocation19 + $0x128] sm:$0xff]
    %v9457 = vld [vmem:[#allocation19 + $0x130] sm:$0xff]
    %v9458 = vld [vmem:[#allocation19 + $0x138] sm:$0xff]
    %v9459 = vld [vmem:[#allocation19 + $0x140] sm:$0xff]
    %v9460 = vld [vmem:[#allocation19 + $0x148] sm:$0xff]
    %v9461 = vld [vmem:[#allocation19 + $0x150] sm:$0xff]
    %v9462 = vld [vmem:[#allocation19 + $0x158] sm:$0xff]
    %v9463 = vld [vmem:[#allocation19 + $0x160] sm:$0xff]
    %v9464 = vld [vmem:[#allocation19 + $0x168] sm:$0xff]
    %v9465 = vld [vmem:[#allocation19 + $0x170] sm:$0xff]
    %v9466 = vld [vmem:[#allocation19 + $0x178] sm:$0xff]
    %v9467 = vld [vmem:[#allocation19 + $0x180] sm:$0xff]
    %v9468 = vld [vmem:[#allocation19 + $0x188] sm:$0xff]
    %v9469 = vld [vmem:[#allocation19 + $0x190] sm:$0xff]
    %v9470 = vld [vmem:[#allocation19 + $0x198] sm:$0xff]
    %v9471 = vld [vmem:[#allocation19 + $0x1a0] sm:$0xff]
    %v9472 = vld [vmem:[#allocation19 + $0x1a8] sm:$0xff]
    %v9473 = vld [vmem:[#allocation19 + $0x1b0] sm:$0xff]
    %v9474 = vld [vmem:[#allocation19 + $0x1b8] sm:$0xff]
    %v9475 = vld [vmem:[#allocation19 + $0x1c0] sm:$0xff]
    %v9476 = vld [vmem:[#allocation19 + $0x1c8] sm:$0xff]
    %v9477 = vld [vmem:[#allocation19 + $0x1d0] sm:$0xff]
    %v9478 = vld [vmem:[#allocation19 + $0x1d8] sm:$0xff]
    %v9479 = vld [vmem:[#allocation19 + $0x1e0] sm:$0xff]
    %v9480 = vld [vmem:[#allocation19 + $0x1e8] sm:$0xff]
    %v9481 = vld [vmem:[#allocation19 + $0x1f0] sm:$0xff]
    %v9482 = vld [vmem:[#allocation19 + $0x1f8] sm:$0xff]
    %v9483 = vld [vmem:[#allocation19 + $0x200] sm:$0xff]
    %v9484 = vld [vmem:[#allocation19 + $0x208] sm:$0xff]
    %v9485 = vld [vmem:[#allocation19 + $0x210] sm:$0xff]
    %v9486 = vld [vmem:[#allocation19 + $0x218] sm:$0xff]
    %v9487 = vld [vmem:[#allocation19 + $0x220] sm:$0xff]
    %v9488 = vld [vmem:[#allocation19 + $0x228] sm:$0xff]
    %v9489 = vld [vmem:[#allocation19 + $0x230] sm:$0xff]
    %v9490 = vld [vmem:[#allocation19 + $0x238] sm:$0xff]
    %v9491 = vld [vmem:[#allocation19 + $0x240] sm:$0xff]
    %v9492 = vld [vmem:[#allocation19 + $0x248] sm:$0xff]
    %v9493 = vld [vmem:[#allocation19 + $0x250] sm:$0xff]
    %v9494 = vld [vmem:[#allocation19 + $0x258] sm:$0xff]
    %v9495 = vld [vmem:[#allocation19 + $0x260] sm:$0xff]
    %v9496 = vld [vmem:[#allocation19 + $0x268] sm:$0xff]
    %v9497 = vld [vmem:[#allocation19 + $0x270] sm:$0xff]
    %v9498 = vld [vmem:[#allocation19 + $0x278] sm:$0xff]
    %v9499 = vld [vmem:[#allocation19 + $0x280] sm:$0xff]
    %v9500 = vld [vmem:[#allocation19 + $0x288] sm:$0xff]
    %v9501 = vld [vmem:[#allocation19 + $0x290] sm:$0xff]
    %v9502 = vld [vmem:[#allocation19 + $0x298] sm:$0xff]
    %v9503 = vld [vmem:[#allocation19 + $0x2a0] sm:$0xff]
    %v9504 = vld [vmem:[#allocation19 + $0x2a8] sm:$0xff]
    %v9505 = vld [vmem:[#allocation19 + $0x2b0] sm:$0xff]
    %v9506 = vld [vmem:[#allocation19 + $0x2b8] sm:$0xff]
    %v9507 = vld [vmem:[#allocation19 + $0x2c0] sm:$0xff]
    %v9508 = vld [vmem:[#allocation19 + $0x2c8] sm:$0xff]
    %v9509 = vld [vmem:[#allocation19 + $0x2d0] sm:$0xff]
    %v9510 = vld [vmem:[#allocation19 + $0x2d8] sm:$0xff]
    %v9511 = vld [vmem:[#allocation19 + $0x2e0] sm:$0xff]
    %v9512 = vld [vmem:[#allocation19 + $0x2e8] sm:$0xff]
    %v9513 = vld [vmem:[#allocation19 + $0x2f0] sm:$0xff]
    %v9514 = vld [vmem:[#allocation19 + $0x2f8] sm:$0xff]
    %v9515 = vunpack.c.l.s8.bf16 %v9419
    %v9516 = vunpack.c.l.s8.bf16 %v9420
    %v9517 = vunpack.c.h.s8.bf16 %v9419
    %v9518 = vunpack.c.h.s8.bf16 %v9420
    %v9519 = vunpack.c.l.s8.bf16 %v9421
    %v9520 = vunpack.c.l.s8.bf16 %v9422
    %v9521 = vunpack.c.h.s8.bf16 %v9421
    %v9522 = vunpack.c.h.s8.bf16 %v9422
    %v9523 = vunpack.c.l.s8.bf16 %v9423
    %v9524 = vunpack.c.l.s8.bf16 %v9424
    %v9525 = vunpack.c.h.s8.bf16 %v9423
    %v9526 = vunpack.c.h.s8.bf16 %v9424
    %v9527 = vunpack.c.l.s8.bf16 %v9425
    %v9528 = vunpack.c.l.s8.bf16 %v9426
    %v9529 = vunpack.c.h.s8.bf16 %v9425
    %v9530 = vunpack.c.h.s8.bf16 %v9426
    %v9531 = vunpack.c.l.s8.bf16 %v9427
    %v9532 = vunpack.c.l.s8.bf16 %v9428
    %v9533 = vunpack.c.h.s8.bf16 %v9427
    %v9534 = vunpack.c.h.s8.bf16 %v9428
    %v9535 = vunpack.c.l.s8.bf16 %v9429
    %v9536 = vunpack.c.l.s8.bf16 %v9430
    %v9537 = vunpack.c.h.s8.bf16 %v9429
    %v9538 = vunpack.c.h.s8.bf16 %v9430
    %v9539 = vunpack.c.l.s8.bf16 %v9431
    %v9540 = vunpack.c.l.s8.bf16 %v9432
    %v9541 = vunpack.c.h.s8.bf16 %v9431
    %v9542 = vunpack.c.h.s8.bf16 %v9432
    %v9543 = vunpack.c.l.s8.bf16 %v9433
    %v9544 = vunpack.c.l.s8.bf16 %v9434
    %v9545 = vunpack.c.h.s8.bf16 %v9433
    %v9546 = vunpack.c.h.s8.bf16 %v9434
    %v9547 = vunpack.c.l.s8.bf16 %v9435
    %v9548 = vunpack.c.l.s8.bf16 %v9436
    %v9549 = vunpack.c.h.s8.bf16 %v9435
    %v9550 = vunpack.c.h.s8.bf16 %v9436
    %v9551 = vunpack.c.l.s8.bf16 %v9437
    %v9552 = vunpack.c.l.s8.bf16 %v9438
    %v9553 = vunpack.c.h.s8.bf16 %v9437
    %v9554 = vunpack.c.h.s8.bf16 %v9438
    %v9555 = vunpack.c.l.s8.bf16 %v9439
    %v9556 = vunpack.c.l.s8.bf16 %v9440
    %v9557 = vunpack.c.h.s8.bf16 %v9439
    %v9558 = vunpack.c.h.s8.bf16 %v9440
    %v9559 = vunpack.c.l.s8.bf16 %v9441
    %v9560 = vunpack.c.l.s8.bf16 %v9442
    %v9561 = vunpack.c.h.s8.bf16 %v9441
    %v9562 = vunpack.c.h.s8.bf16 %v9442
    %v9563 = vunpack.c.l.s8.bf16 %v9443
    %v9564 = vunpack.c.l.s8.bf16 %v9444
    %v9565 = vunpack.c.h.s8.bf16 %v9443
    %v9566 = vunpack.c.h.s8.bf16 %v9444
    %v9567 = vunpack.c.l.s8.bf16 %v9445
    %v9568 = vunpack.c.l.s8.bf16 %v9446
    %v9569 = vunpack.c.h.s8.bf16 %v9445
    %v9570 = vunpack.c.h.s8.bf16 %v9446
    %v9571 = vunpack.c.l.s8.bf16 %v9447
    %v9572 = vunpack.c.l.s8.bf16 %v9448
    %v9573 = vunpack.c.h.s8.bf16 %v9447
    %v9574 = vunpack.c.h.s8.bf16 %v9448
    %v9575 = vunpack.c.l.s8.bf16 %v9449
    %v9576 = vunpack.c.l.s8.bf16 %v9450
    %v9577 = vunpack.c.h.s8.bf16 %v9449
    %v9578 = vunpack.c.h.s8.bf16 %v9450
    %v9579 = vunpack.c.l.s8.bf16 %v9451
    %v9580 = vunpack.c.l.s8.bf16 %v9452
    %v9581 = vunpack.c.h.s8.bf16 %v9451
    %v9582 = vunpack.c.h.s8.bf16 %v9452
    %v9583 = vunpack.c.l.s8.bf16 %v9453
    %v9584 = vunpack.c.l.s8.bf16 %v9454
    %v9585 = vunpack.c.h.s8.bf16 %v9453
    %v9586 = vunpack.c.h.s8.bf16 %v9454
    %v9587 = vunpack.c.l.s8.bf16 %v9455
    %v9588 = vunpack.c.l.s8.bf16 %v9456
    %v9589 = vunpack.c.h.s8.bf16 %v9455
    %v9590 = vunpack.c.h.s8.bf16 %v9456
    %v9591 = vunpack.c.l.s8.bf16 %v9457
    %v9592 = vunpack.c.l.s8.bf16 %v9458
    %v9593 = vunpack.c.h.s8.bf16 %v9457
    %v9594 = vunpack.c.h.s8.bf16 %v9458
    %v9595 = vunpack.c.l.s8.bf16 %v9459
    %v9596 = vunpack.c.l.s8.bf16 %v9460
    %v9597 = vunpack.c.h.s8.bf16 %v9459
    %v9598 = vunpack.c.h.s8.bf16 %v9460
    %v9599 = vunpack.c.l.s8.bf16 %v9461
    %v9600 = vunpack.c.l.s8.bf16 %v9462
    %v9601 = vunpack.c.h.s8.bf16 %v9461
    %v9602 = vunpack.c.h.s8.bf16 %v9462
    %v9603 = vunpack.c.l.s8.bf16 %v9463
    %v9604 = vunpack.c.l.s8.bf16 %v9464
    %v9605 = vunpack.c.h.s8.bf16 %v9463
    %v9606 = vunpack.c.h.s8.bf16 %v9464
    %v9607 = vunpack.c.l.s8.bf16 %v9465
    %v9608 = vunpack.c.l.s8.bf16 %v9466
    %v9609 = vunpack.c.h.s8.bf16 %v9465
    %v9610 = vunpack.c.h.s8.bf16 %v9466
    %v9611 = vunpack.c.l.s8.bf16 %v9467
    %v9612 = vunpack.c.l.s8.bf16 %v9468
    %v9613 = vunpack.c.h.s8.bf16 %v9467
    %v9614 = vunpack.c.h.s8.bf16 %v9468
    %v9615 = vunpack.c.l.s8.bf16 %v9469
    %v9616 = vunpack.c.l.s8.bf16 %v9470
    %v9617 = vunpack.c.h.s8.bf16 %v9469
    %v9618 = vunpack.c.h.s8.bf16 %v9470
    %v9619 = vunpack.c.l.s8.bf16 %v9471
    %v9620 = vunpack.c.l.s8.bf16 %v9472
    %v9621 = vunpack.c.h.s8.bf16 %v9471
    %v9622 = vunpack.c.h.s8.bf16 %v9472
    %v9623 = vunpack.c.l.s8.bf16 %v9473
    %v9624 = vunpack.c.l.s8.bf16 %v9474
    %v9625 = vunpack.c.h.s8.bf16 %v9473
    %v9626 = vunpack.c.h.s8.bf16 %v9474
    %v9627 = vunpack.c.l.s8.bf16 %v9475
    %v9628 = vunpack.c.l.s8.bf16 %v9476
    %v9629 = vunpack.c.h.s8.bf16 %v9475
    %v9630 = vunpack.c.h.s8.bf16 %v9476
    %v9631 = vunpack.c.l.s8.bf16 %v9477
    %v9632 = vunpack.c.l.s8.bf16 %v9478
    %v9633 = vunpack.c.h.s8.bf16 %v9477
    %v9634 = vunpack.c.h.s8.bf16 %v9478
    %v9635 = vunpack.c.l.s8.bf16 %v9479
    %v9636 = vunpack.c.l.s8.bf16 %v9480
    %v9637 = vunpack.c.h.s8.bf16 %v9479
    %v9638 = vunpack.c.h.s8.bf16 %v9480
    %v9639 = vunpack.c.l.s8.bf16 %v9481
    %v9640 = vunpack.c.l.s8.bf16 %v9482
    %v9641 = vunpack.c.h.s8.bf16 %v9481
    %v9642 = vunpack.c.h.s8.bf16 %v9482
    %v9643 = vunpack.c.l.s8.bf16 %v9483
    %v9644 = vunpack.c.l.s8.bf16 %v9484
    %v9645 = vunpack.c.h.s8.bf16 %v9483
    %v9646 = vunpack.c.h.s8.bf16 %v9484
    %v9647 = vunpack.c.l.s8.bf16 %v9485
    %v9648 = vunpack.c.l.s8.bf16 %v9486
    %v9649 = vunpack.c.h.s8.bf16 %v9485
    %v9650 = vunpack.c.h.s8.bf16 %v9486
    %v9651 = vunpack.c.l.s8.bf16 %v9487
    %v9652 = vunpack.c.l.s8.bf16 %v9488
    %v9653 = vunpack.c.h.s8.bf16 %v9487
    %v9654 = vunpack.c.h.s8.bf16 %v9488
    %v9655 = vunpack.c.l.s8.bf16 %v9489
    %v9656 = vunpack.c.l.s8.bf16 %v9490
    %v9657 = vunpack.c.h.s8.bf16 %v9489
    %v9658 = vunpack.c.h.s8.bf16 %v9490
    %v9659 = vunpack.c.l.s8.bf16 %v9491
    %v9660 = vunpack.c.l.s8.bf16 %v9492
    %v9661 = vunpack.c.h.s8.bf16 %v9491
    %v9662 = vunpack.c.h.s8.bf16 %v9492
    %v9663 = vunpack.c.l.s8.bf16 %v9493
    %v9664 = vunpack.c.l.s8.bf16 %v9494
    %v9665 = vunpack.c.h.s8.bf16 %v9493
    %v9666 = vunpack.c.h.s8.bf16 %v9494
    %v9667 = vunpack.c.l.s8.bf16 %v9495
    %v9668 = vunpack.c.l.s8.bf16 %v9496
    %v9669 = vunpack.c.h.s8.bf16 %v9495
    %v9670 = vunpack.c.h.s8.bf16 %v9496
    %v9671 = vunpack.c.l.s8.bf16 %v9497
    %v9672 = vunpack.c.l.s8.bf16 %v9498
    %v9673 = vunpack.c.h.s8.bf16 %v9497
    %v9674 = vunpack.c.h.s8.bf16 %v9498
    %v9675 = vunpack.c.l.s8.bf16 %v9499
    %v9676 = vunpack.c.l.s8.bf16 %v9500
    %v9677 = vunpack.c.h.s8.bf16 %v9499
    %v9678 = vunpack.c.h.s8.bf16 %v9500
    %v9679 = vunpack.c.l.s8.bf16 %v9501
    %v9680 = vunpack.c.l.s8.bf16 %v9502
    %v9681 = vunpack.c.h.s8.bf16 %v9501
    %v9682 = vunpack.c.h.s8.bf16 %v9502
    %v9683 = vunpack.c.l.s8.bf16 %v9503
    %v9684 = vunpack.c.l.s8.bf16 %v9504
    %v9685 = vunpack.c.h.s8.bf16 %v9503
    %v9686 = vunpack.c.h.s8.bf16 %v9504
    %v9687 = vunpack.c.l.s8.bf16 %v9505
    %v9688 = vunpack.c.l.s8.bf16 %v9506
    %v9689 = vunpack.c.h.s8.bf16 %v9505
    %v9690 = vunpack.c.h.s8.bf16 %v9506
    %v9691 = vunpack.c.l.s8.bf16 %v9507
    %v9692 = vunpack.c.l.s8.bf16 %v9508
    %v9693 = vunpack.c.h.s8.bf16 %v9507
    %v9694 = vunpack.c.h.s8.bf16 %v9508
    %v9695 = vunpack.c.l.s8.bf16 %v9509
    %v9696 = vunpack.c.l.s8.bf16 %v9510
    %v9697 = vunpack.c.h.s8.bf16 %v9509
    %v9698 = vunpack.c.h.s8.bf16 %v9510
    %v9699 = vunpack.c.l.s8.bf16 %v9511
    %v9700 = vunpack.c.l.s8.bf16 %v9512
    %v9701 = vunpack.c.h.s8.bf16 %v9511
    %v9702 = vunpack.c.h.s8.bf16 %v9512
    %v9703 = vunpack.c.l.s8.bf16 %v9513
    %v9704 = vunpack.c.l.s8.bf16 %v9514
    %v9705 = vunpack.c.h.s8.bf16 %v9513
    %v9706 = vunpack.c.h.s8.bf16 %v9514
    %9707 = vmatprep.subr.bf16.mxu0 %v9530
    %9708 = vmatpush1.bf16.msra.mxu0 %v9529
    %9709 = vmatprep.subr.bf16.mxu0 %v9528
    %9710 = vmatpush1.bf16.msra.mxu0 %v9527
    %9711 = vmatprep.subr.bf16.mxu0 %v9526
    %9712 = vmatpush1.bf16.msra.mxu0 %v9525
    %9713 = vmatprep.subr.bf16.mxu0 %v9524
    %9714 = vmatpush1.bf16.msra.mxu0 %v9523
    %9715 = vmatprep.subr.bf16.mxu0 %v9522
    %9716 = vmatpush1.bf16.msra.mxu0 %v9521
    %9717 = vmatprep.subr.bf16.mxu0 %v9520
    %9718 = vmatpush1.bf16.msra.mxu0 %v9519
    %9719 = vmatprep.subr.bf16.mxu0 %v9518
    %9720 = vmatpush1.bf16.msra.mxu0 %v9517
    %9721 = vmatprep.subr.bf16.mxu0 %v9516
    %9722 = vmatpush1.bf16.msra.mxu0 %v9515
    %9723 = vmatprep.subr.bf16.mxu0 %v9546
    %9724 = vmatpush2.bf16.msra.mxu0 %v9545
    %9725 = vmatprep.subr.bf16.mxu0 %v9544
    %9726 = vmatpush2.bf16.msra.mxu0 %v9543
    %9727 = vmatprep.subr.bf16.mxu0 %v9542
    %9728 = vmatpush2.bf16.msra.mxu0 %v9541
    %9729 = vmatprep.subr.bf16.mxu0 %v9540
    %9730 = vmatpush2.bf16.msra.mxu0 %v9539
    %9731 = vmatprep.subr.bf16.mxu0 %v9538
    %9732 = vmatpush2.bf16.msra.mxu0 %v9537
    %9733 = vmatprep.subr.bf16.mxu0 %v9536
    %9734 = vmatpush2.bf16.msra.mxu0 %v9535
    %9735 = vmatprep.subr.bf16.mxu0 %v9534
    %9736 = vmatpush2.bf16.msra.mxu0 %v9533
    %9737 = vmatprep.subr.bf16.mxu0 %v9532
    %9738 = vmatpush2.bf16.msra.mxu0 %v9531
    %9739 = vmatprep.mubr.bf16.mxu0 %v9408
    %9740 = vmatmul.mubr.bf16.gmra.mxu0 %v9407
    %v9741 = vpop.f32.mrf.mxu0
    %v9742 = vadd.f32 0.0, %v9741
    %v9743 = vpop.f32.mrf.mxu0
    %v9744 = vadd.f32 0.0, %v9743
    %v9745 = vpop.f32.mrf.mxu0
    %v9746 = vadd.f32 0.0, %v9745
    %v9747 = vpop.f32.mrf.mxu0
    %v9748 = vadd.f32 0.0, %v9747
    %9749 = vdwg.mxu0
    %9750 = vmatprep.subr.bf16.mxu0 %v9562
    %9751 = vmatpush1.bf16.msra.mxu0 %v9561
    %9752 = vmatprep.subr.bf16.mxu0 %v9560
    %9753 = vmatpush1.bf16.msra.mxu0 %v9559
    %9754 = vmatprep.subr.bf16.mxu0 %v9558
    %9755 = vmatpush1.bf16.msra.mxu0 %v9557
    %9756 = vmatprep.subr.bf16.mxu0 %v9556
    %9757 = vmatpush1.bf16.msra.mxu0 %v9555
    %9758 = vmatprep.subr.bf16.mxu0 %v9554
    %9759 = vmatpush1.bf16.msra.mxu0 %v9553
    %9760 = vmatprep.subr.bf16.mxu0 %v9552
    %9761 = vmatpush1.bf16.msra.mxu0 %v9551
    %9762 = vmatprep.subr.bf16.mxu0 %v9550
    %9763 = vmatpush1.bf16.msra.mxu0 %v9549
    %9764 = vmatprep.subr.bf16.mxu0 %v9548
    %9765 = vmatpush1.bf16.msra.mxu0 %v9547
    %9766 = vmatprep.subr.bf16.mxu0 %v9578
    %9767 = vmatpush2.bf16.msra.mxu0 %v9577
    %9768 = vmatprep.subr.bf16.mxu0 %v9576
    %9769 = vmatpush2.bf16.msra.mxu0 %v9575
    %9770 = vmatprep.subr.bf16.mxu0 %v9574
    %9771 = vmatpush2.bf16.msra.mxu0 %v9573
    %9772 = vmatprep.subr.bf16.mxu0 %v9572
    %9773 = vmatpush2.bf16.msra.mxu0 %v9571
    %9774 = vmatprep.subr.bf16.mxu0 %v9570
    %9775 = vmatpush2.bf16.msra.mxu0 %v9569
    %9776 = vmatprep.subr.bf16.mxu0 %v9568
    %9777 = vmatpush2.bf16.msra.mxu0 %v9567
    %9778 = vmatprep.subr.bf16.mxu0 %v9566
    %9779 = vmatpush2.bf16.msra.mxu0 %v9565
    %9780 = vmatprep.subr.bf16.mxu0 %v9564
    %9781 = vmatpush2.bf16.msra.mxu0 %v9563
    %9782 = vmatprep.mubr.bf16.mxu0 %v9410
    %9783 = vmatmul.mubr.bf16.gmra.mxu0 %v9409
    %v9784 = vpop.f32.mrf.mxu0
    %v9785 = vadd.f32 %v9742, %v9784
    %v9786 = vpop.f32.mrf.mxu0
    %v9787 = vadd.f32 %v9744, %v9786
    %v9788 = vpop.f32.mrf.mxu0
    %v9789 = vadd.f32 %v9746, %v9788
    %v9790 = vpop.f32.mrf.mxu0
    %v9791 = vadd.f32 %v9748, %v9790
    %9792 = vdwg.mxu0
    %9793 = vmatprep.subr.bf16.mxu0 %v9594
    %9794 = vmatpush1.bf16.msra.mxu0 %v9593
    %9795 = vmatprep.subr.bf16.mxu0 %v9592
    %9796 = vmatpush1.bf16.msra.mxu0 %v9591
    %9797 = vmatprep.subr.bf16.mxu0 %v9590
    %9798 = vmatpush1.bf16.msra.mxu0 %v9589
    %9799 = vmatprep.subr.bf16.mxu0 %v9588
    %9800 = vmatpush1.bf16.msra.mxu0 %v9587
    %9801 = vmatprep.subr.bf16.mxu0 %v9586
    %9802 = vmatpush1.bf16.msra.mxu0 %v9585
    %9803 = vmatprep.subr.bf16.mxu0 %v9584
    %9804 = vmatpush1.bf16.msra.mxu0 %v9583
    %9805 = vmatprep.subr.bf16.mxu0 %v9582
    %9806 = vmatpush1.bf16.msra.mxu0 %v9581
    %9807 = vmatprep.subr.bf16.mxu0 %v9580
    %9808 = vmatpush1.bf16.msra.mxu0 %v9579
    %9809 = vmatprep.subr.bf16.mxu0 %v9610
    %9810 = vmatpush2.bf16.msra.mxu0 %v9609
    %9811 = vmatprep.subr.bf16.mxu0 %v9608
    %9812 = vmatpush2.bf16.msra.mxu0 %v9607
    %9813 = vmatprep.subr.bf16.mxu0 %v9606
    %9814 = vmatpush2.bf16.msra.mxu0 %v9605
    %9815 = vmatprep.subr.bf16.mxu0 %v9604
    %9816 = vmatpush2.bf16.msra.mxu0 %v9603
    %9817 = vmatprep.subr.bf16.mxu0 %v9602
    %9818 = vmatpush2.bf16.msra.mxu0 %v9601
    %9819 = vmatprep.subr.bf16.mxu0 %v9600
    %9820 = vmatpush2.bf16.msra.mxu0 %v9599
    %9821 = vmatprep.subr.bf16.mxu0 %v9598
    %9822 = vmatpush2.bf16.msra.mxu0 %v9597
    %9823 = vmatprep.subr.bf16.mxu0 %v9596
    %9824 = vmatpush2.bf16.msra.mxu0 %v9595
    %9825 = vmatprep.mubr.bf16.mxu0 %v9412
    %9826 = vmatmul.mubr.bf16.gmra.mxu0 %v9411
    %v9827 = vpop.f32.mrf.mxu0
    %v9828 = vadd.f32 %v9785, %v9827
    %v9829 = vpop.f32.mrf.mxu0
    %v9830 = vadd.f32 %v9787, %v9829
    %v9831 = vpop.f32.mrf.mxu0
    %v9832 = vadd.f32 %v9789, %v9831
    %v9833 = vpop.f32.mrf.mxu0
    %v9834 = vadd.f32 %v9791, %v9833
    %9835 = vdwg.mxu0
    %9836 = vmatprep.subr.bf16.mxu0 %v9626
    %9837 = vmatpush1.bf16.msra.mxu0 %v9625
    %9838 = vmatprep.subr.bf16.mxu0 %v9624
    %9839 = vmatpush1.bf16.msra.mxu0 %v9623
    %9840 = vmatprep.subr.bf16.mxu0 %v9622
    %9841 = vmatpush1.bf16.msra.mxu0 %v9621
    %9842 = vmatprep.subr.bf16.mxu0 %v9620
    %9843 = vmatpush1.bf16.msra.mxu0 %v9619
    %9844 = vmatprep.subr.bf16.mxu0 %v9618
    %9845 = vmatpush1.bf16.msra.mxu0 %v9617
    %9846 = vmatprep.subr.bf16.mxu0 %v9616
    %9847 = vmatpush1.bf16.msra.mxu0 %v9615
    %9848 = vmatprep.subr.bf16.mxu0 %v9614
    %9849 = vmatpush1.bf16.msra.mxu0 %v9613
    %9850 = vmatprep.subr.bf16.mxu0 %v9612
    %9851 = vmatpush1.bf16.msra.mxu0 %v9611
    %9852 = vmatprep.subr.bf16.mxu0 %v9642
    %9853 = vmatpush2.bf16.msra.mxu0 %v9641
    %9854 = vmatprep.subr.bf16.mxu0 %v9640
    %9855 = vmatpush2.bf16.msra.mxu0 %v9639
    %9856 = vmatprep.subr.bf16.mxu0 %v9638
    %9857 = vmatpush2.bf16.msra.mxu0 %v9637
    %9858 = vmatprep.subr.bf16.mxu0 %v9636
    %9859 = vmatpush2.bf16.msra.mxu0 %v9635
    %9860 = vmatprep.subr.bf16.mxu0 %v9634
    %9861 = vmatpush2.bf16.msra.mxu0 %v9633
    %9862 = vmatprep.subr.bf16.mxu0 %v9632
    %9863 = vmatpush2.bf16.msra.mxu0 %v9631
    %9864 = vmatprep.subr.bf16.mxu0 %v9630
    %9865 = vmatpush2.bf16.msra.mxu0 %v9629
    %9866 = vmatprep.subr.bf16.mxu0 %v9628
    %9867 = vmatpush2.bf16.msra.mxu0 %v9627
    %9868 = vmatprep.mubr.bf16.mxu0 %v9414
    %9869 = vmatmul.mubr.bf16.gmra.mxu0 %v9413
    %v9870 = vpop.f32.mrf.mxu0
    %v9871 = vadd.f32 %v9828, %v9870
    %v9872 = vpop.f32.mrf.mxu0
    %v9873 = vadd.f32 %v9830, %v9872
    %v9874 = vpop.f32.mrf.mxu0
    %v9875 = vadd.f32 %v9832, %v9874
    %v9876 = vpop.f32.mrf.mxu0
    %v9877 = vadd.f32 %v9834, %v9876
    %9878 = vdwg.mxu0
    %9879 = vmatprep.subr.bf16.mxu0 %v9658
    %9880 = vmatpush1.bf16.msra.mxu0 %v9657
    %9881 = vmatprep.subr.bf16.mxu0 %v9656
    %9882 = vmatpush1.bf16.msra.mxu0 %v9655
    %9883 = vmatprep.subr.bf16.mxu0 %v9654
    %9884 = vmatpush1.bf16.msra.mxu0 %v9653
    %9885 = vmatprep.subr.bf16.mxu0 %v9652
    %9886 = vmatpush1.bf16.msra.mxu0 %v9651
    %9887 = vmatprep.subr.bf16.mxu0 %v9650
    %9888 = vmatpush1.bf16.msra.mxu0 %v9649
    %9889 = vmatprep.subr.bf16.mxu0 %v9648
    %9890 = vmatpush1.bf16.msra.mxu0 %v9647
    %9891 = vmatprep.subr.bf16.mxu0 %v9646
    %9892 = vmatpush1.bf16.msra.mxu0 %v9645
    %9893 = vmatprep.subr.bf16.mxu0 %v9644
    %9894 = vmatpush1.bf16.msra.mxu0 %v9643
    %9895 = vmatprep.subr.bf16.mxu0 %v9674
    %9896 = vmatpush2.bf16.msra.mxu0 %v9673
    %9897 = vmatprep.subr.bf16.mxu0 %v9672
    %9898 = vmatpush2.bf16.msra.mxu0 %v9671
    %9899 = vmatprep.subr.bf16.mxu0 %v9670
    %9900 = vmatpush2.bf16.msra.mxu0 %v9669
    %9901 = vmatprep.subr.bf16.mxu0 %v9668
    %9902 = vmatpush2.bf16.msra.mxu0 %v9667
    %9903 = vmatprep.subr.bf16.mxu0 %v9666
    %9904 = vmatpush2.bf16.msra.mxu0 %v9665
    %9905 = vmatprep.subr.bf16.mxu0 %v9664
    %9906 = vmatpush2.bf16.msra.mxu0 %v9663
    %9907 = vmatprep.subr.bf16.mxu0 %v9662
    %9908 = vmatpush2.bf16.msra.mxu0 %v9661
    %9909 = vmatprep.subr.bf16.mxu0 %v9660
    %9910 = vmatpush2.bf16.msra.mxu0 %v9659
    %9911 = vmatprep.mubr.bf16.mxu0 %v9416
    %9912 = vmatmul.mubr.bf16.gmra.mxu0 %v9415
    %v9913 = vpop.f32.mrf.mxu0
    %v9914 = vadd.f32 %v9871, %v9913
    %v9915 = vpop.f32.mrf.mxu0
    %v9916 = vadd.f32 %v9873, %v9915
    %v9917 = vpop.f32.mrf.mxu0
    %v9918 = vadd.f32 %v9875, %v9917
    %v9919 = vpop.f32.mrf.mxu0
    %v9920 = vadd.f32 %v9877, %v9919
    %9921 = vdwg.mxu0
    %9922 = vmatprep.subr.bf16.mxu0 %v9690
    %9923 = vmatpush1.bf16.msra.mxu0 %v9689
    %9924 = vmatprep.subr.bf16.mxu0 %v9688
    %9925 = vmatpush1.bf16.msra.mxu0 %v9687
    %9926 = vmatprep.subr.bf16.mxu0 %v9686
    %9927 = vmatpush1.bf16.msra.mxu0 %v9685
    %9928 = vmatprep.subr.bf16.mxu0 %v9684
    %9929 = vmatpush1.bf16.msra.mxu0 %v9683
    %9930 = vmatprep.subr.bf16.mxu0 %v9682
    %9931 = vmatpush1.bf16.msra.mxu0 %v9681
    %9932 = vmatprep.subr.bf16.mxu0 %v9680
    %9933 = vmatpush1.bf16.msra.mxu0 %v9679
    %9934 = vmatprep.subr.bf16.mxu0 %v9678
    %9935 = vmatpush1.bf16.msra.mxu0 %v9677
    %9936 = vmatprep.subr.bf16.mxu0 %v9676
    %9937 = vmatpush1.bf16.msra.mxu0 %v9675
    %9938 = vmatprep.subr.bf16.mxu0 %v9706
    %9939 = vmatpush2.bf16.msra.mxu0 %v9705
    %9940 = vmatprep.subr.bf16.mxu0 %v9704
    %9941 = vmatpush2.bf16.msra.mxu0 %v9703
    %9942 = vmatprep.subr.bf16.mxu0 %v9702
    %9943 = vmatpush2.bf16.msra.mxu0 %v9701
    %9944 = vmatprep.subr.bf16.mxu0 %v9700
    %9945 = vmatpush2.bf16.msra.mxu0 %v9699
    %9946 = vmatprep.subr.bf16.mxu0 %v9698
    %9947 = vmatpush2.bf16.msra.mxu0 %v9697
    %9948 = vmatprep.subr.bf16.mxu0 %v9696
    %9949 = vmatpush2.bf16.msra.mxu0 %v9695
    %9950 = vmatprep.subr.bf16.mxu0 %v9694
    %9951 = vmatpush2.bf16.msra.mxu0 %v9693
    %9952 = vmatprep.subr.bf16.mxu0 %v9692
    %9953 = vmatpush2.bf16.msra.mxu0 %v9691
    %9954 = vmatprep.mubr.bf16.mxu0 %v9418
    %9955 = vmatmul.mubr.bf16.gmra.mxu0 %v9417
    %v9956 = vpop.f32.mrf.mxu0
    %v9957 = vadd.f32 %v9914, %v9956
    %v9958 = vpop.f32.mrf.mxu0
    %v9959 = vadd.f32 %v9916, %v9958
    %v9960 = vpop.f32.mrf.mxu0
    %v9961 = vadd.f32 %v9918, %v9960
    %v9962 = vpop.f32.mrf.mxu0
    %v9963 = vadd.f32 %v9920, %v9962
    %9964 = vdwg.mxu0
    %s9965 = scalar_lea.vmem [#allocation5], 7
    %v9966 = vld [vmem:[%s9965] ss:$8 sm:$0x3]
    %s9967 = scalar_lea.vmem [#allocation7], 7
    %v9968 = vld [vmem:[%s9967] ss:$8 sm:$0x3]
    %v9970 = vlaneseq
    %v9971 = vshrl.u32 %v9970, 7
    %v9972 = vsub.s32 0, %v9971
    %v9973 = vrot.slane %v9966, %v9972
    %v9974 = vlaneseq
    %v9975 = vshrl.u32 %v9974, 7
    %v9976 = vsub.s32 1, %v9975
    %v9977 = vrot.slane %v9966, %v9976
    %v9980 = vmul.f32 %v9957, %v9973
    %v9981 = vmul.f32 %v9959, %v9977
    %v9982 = vmul.f32 %v9961, %v9973
    %v9983 = vmul.f32 %v9963, %v9977
    %v9985 = vlaneseq
    %v9986 = vshrl.u32 %v9985, 7
    %v9987 = vsub.s32 0, %v9986
    %v9988 = vrot.slane %v9968, %v9987
    %v9989 = vlaneseq
    %v9990 = vshrl.u32 %v9989, 7
    %v9991 = vsub.s32 1, %v9990
    %v9992 = vrot.slane %v9968, %v9991
    %v9995 = vadd.f32 %v9980, %v9988
    %v9996 = vadd.f32 %v9981, %v9992
    %v9997 = vadd.f32 %v9982, %v9988
    %v9998 = vadd.f32 %v9983, %v9992
    %v9999 = vtanh.pop %v9995
    %v10000 = vtanh.pop %v9996
    %v10001 = vtanh.pop %v9997
    %v10002 = vtanh.pop %v9998
    %10003 = vst [vmem:[#allocation20] sm:$0xff] %v9999
    %10004 = vst [vmem:[#allocation20 + $0x8] sm:$0xff] %v10000
    %10005 = vst [vmem:[#allocation20 + $0x10] sm:$0xff] %v10001
    %10006 = vst [vmem:[#allocation20 + $0x18] sm:$0xff] %v10002
    // Predicated region
    $region90: #{autoencoder_forward_fused.1} parent=1 // pred_check
      _
    $region91: #{autoencoder_forward_fused.1} parent=1 // pred_check_branch
      %10008 = sbr.rel (0) target = $region93
    $region92: #{autoencoder_forward_fused.1} parent=1 // pred_region
      %s10010 = ssub.s32 512, 512
      %10011 = vsyncadd [#allocation4], %s10010
      %s10012 = sshll.u32 [#allocation20], 4
      %s10013 = int_to_ptr.vmem [resolvable:$true] %s10012
      %10018 = dma.vmem_to_hbm [thread:$0]  %s10013, 512, %s11, [#allocation4], 256, 256, 16
    $region93: #{autoencoder_forward_fused.1} parent=1 // pred_fallthru
      _
    // Predicated region
    $region94: #{autoencoder_forward_fused.1} parent=1 // pred_check
      _
    $region95: #{autoencoder_forward_fused.1} parent=1 // pred_check_branch
      %10020 = sbr.rel (0) target = $region97
    $region96: #{autoencoder_forward_fused.1} parent=1 // pred_region
      %s10022 = ssub.s32 1024, 1024
      %10023 = vsyncadd [#allocation22], %s10022
      %s10024 = sshll.u32 [#allocation21], 4
      %s10025 = int_to_ptr.vmem [resolvable:$true] %s10024
      %10030 = dma.vmem_to_hbm [thread:$0]  %s10025, 1024, %s12, [#allocation22], 512, 512, 32
    $region97: #{autoencoder_forward_fused.1} parent=1 // pred_fallthru
      _
    // Predicated region
    $region98: #{autoencoder_forward_fused.1} parent=1 // pred_check
      _
    $region99: #{autoencoder_forward_fused.1} parent=1 // pred_check_branch
      %10032 = sbr.rel (0) target = $region101
    $region100: #{autoencoder_forward_fused.1} parent=1 // pred_region
      %10033 = dma.done [#allocation4], 512
    $region101: #{autoencoder_forward_fused.1} parent=1 // pred_fallthru
      _
    // Predicated region
    $region102: #{autoencoder_forward_fused.1} parent=1 // pred_check
      _
    $region103: #{autoencoder_forward_fused.1} parent=1 // pred_check_branch
      %10035 = sbr.rel (0) target = $region105
    $region104: #{autoencoder_forward_fused.1} parent=1 // pred_region
      %10036 = dma.done [#allocation22], 1024
    $region105: #{autoencoder_forward_fused.1} parent=1 // pred_fallthru
      _
    %10037 = vsyncpa [#allocation3], 1
    %10038 = vsyncpa [#allocation6], 1
    %10039 = vsyncpa [#allocation9], 1
    %10040 = vsyncpa [#allocation12], 1
    %10041 = vsyncpa [#allocation15], 1
    %10042 = vsyncpa [#allocation18], 1
    %10043 = vsyncpa [#allocation4], 1
    %10044 = vsyncpa [#allocation22], 1

</llo_original>
